<compile_context>
chip_gen: v7x
topology: tpu7x:2x2x1
jax: 0.10.0
libtpu: 0.0.40
codegen_flags: <defaults>
</compile_context>

<pallas_src>
import functools

import jax
import jax.numpy as jnp
from jax.experimental import pallas as pl
from jax.experimental.pallas import tpu as pltpu


LOSS_WEIGHTS = {
    "velocity_weight": 1.0,
    "flf_weight": 0.1,
    "vae_recon_weight": 1.0,
    "vae_kl_weight": 0.01,
    "vae_temporal_weight": 0.1,
    "mid_loss_weight": 1.0,
    "tv_loss_weight": 0.001,
}
FREEZE_VAE_AFTER = 5000
TRAINING_STEP = 0          # TODO(synk): trace-time constant; runtime VAE-freeze toggling not captured
VAE_FROZEN = False

# Lane index of each loss partial sum in the packed (B, 1, 128) output.
_KL, _REC, _TMP, _VEL, _MID, _TV, _FF, _FL = range(8)


# -----------------------------------------------------------------------------
# Single fused kernel: VAE encode (+first/last), decode losses, DiT + flow losses
# -----------------------------------------------------------------------------
def _fused_flf2v_kernel(t_ref, x_ref, noise_ref,
                        enc_w_ref, enc_b_ref, dec_w_ref, dec_b_ref,
                        wz_ref, wfl_t_ref, wt_col_ref, b1_col_ref,
                        w2_ref, b2_ref,
                        loss_ref, hconst_ref, *, compute_vae):
    # t_ref       : SMEM (B,)                      x_ref  : VMEM (1, C, T, HW)
    # noise_ref   : VMEM (1, Cz, 2T+2, HW)  rows [0:T]=eps_full, [T:2T]=z0,
    #                                       [2T]=eps_first, [2T+1]=eps_last
    # enc_w/enc_b : SMEM (C,2Cz)/(2Cz,)     dec_w/dec_b : SMEM (Cz,C)/(C,)
    # wz_ref      : SMEM (Cz, Hd)           w2_ref : SMEM (Hd, Cz)   b2 : SMEM (Cz,)
    # wfl_t_ref   : VMEM (Hd, 2Cz)          wt_col/b1_col : VMEM (Hd, 1)
    # loss_ref    : VMEM (1, 1, 128) packed per-batch loss partial sums
    # hconst_ref  : VMEM scratch (Hd, HW)
    b = pl.program_id(0)
    C = x_ref.shape[1]
    T = x_ref.shape[2]
    HW = x_ref.shape[3]
    Cz = noise_ref.shape[1]
    Hd = wfl_t_ref.shape[0]

    t = t_ref[b]
    omt = 1.0 - t

    # ------------------ VAE encode: 1x1 conv C -> 2Cz, reparam, KL ----------
    xs = [x_ref[0, c] for c in range(C)]                    # each (T, HW)
    z1, first_rows, last_rows = [], [], []
    kl_vec = jnp.zeros((T, HW), jnp.float32) if compute_vae else None
    for j in range(Cz):
        mu = xs[0] * enc_w_ref[0, j]
        lv = xs[0] * enc_w_ref[0, Cz + j]
        for c in range(1, C):
            mu = mu + xs[c] * enc_w_ref[c, j]
            lv = lv + xs[c] * enc_w_ref[c, Cz + j]
        mu = mu + enc_b_ref[j]
        lv = lv + enc_b_ref[Cz + j]
        std = jnp.exp(0.5 * lv)
        # full-video latent (stays in registers / VMEM temporaries only)
        z1.append(mu + std * noise_ref[0, j, 0:T, :])
        # first/last-frame latents: same mu/std rows, independent eps draws
        first_rows.append(mu[0:1, :] + std[0:1, :] * noise_ref[0, j, 2 * T:2 * T + 1, :])
        last_rows.append(mu[T - 1:T, :] + std[T - 1:T, :] * noise_ref[0, j, 2 * T + 1:2 * T + 2, :])
        if compute_vae:
            kl_vec = kl_vec + (1.0 + lv - mu * mu - jnp.exp(lv))
    kl_sum = jnp.sum(kl_vec) if compute_vae else jnp.float32(0.0)

    # ------------------ VAE decode + recon / temporal losses ----------------
    if compute_vae:
        rec_vec = jnp.zeros((T, HW), jnp.float32)
        tmp_vec = jnp.zeros((T - 1, HW), jnp.float32) if T > 1 else None
        for c in range(C):
            r = z1[0] * dec_w_ref[0, c]
            for j in range(1, Cz):
                r = r + z1[j] * dec_w_ref[j, c]
            r = r + dec_b_ref[c]                             # recon never hits HBM
            d = r - xs[c]
            rec_vec = rec_vec + d * d
            if T > 1:
                dd = (r[1:] - r[:-1]) - (xs[c][1:] - xs[c][:-1])
                tmp_vec = tmp_vec + dd * dd
        rec_sum = jnp.sum(rec_vec)
        tmp_sum = jnp.sum(tmp_vec) if T > 1 else jnp.float32(0.0)
    else:
        rec_sum = jnp.float32(0.0)
        tmp_sum = jnp.float32(0.0)

    # ------------------ DiT velocity MLP (batched over T, VPU only) ---------
    z0 = [noise_ref[0, j, T:2 * T, :] for j in range(Cz)]    # flow source noise
    zt = [omt * z0[j] + t * z1[j] for j in range(Cz)]        # whole-slab lerp

    # Per-hidden-unit constant term (first/last/t/bias), hoisted out of the
    # hidden-unit loop: (Hd,1)x(1,HW) broadcast products, no concat, no MXU.
    hconst = wt_col_ref[...] * t + b1_col_ref[...]           # (Hd, 1)
    for r in range(Cz):
        hconst = hconst + wfl_t_ref[:, r:r + 1] * first_rows[r]
        hconst = hconst + wfl_t_ref[:, Cz + r:Cz + r + 1] * last_rows[r]
    hconst_ref[...] = hconst                                 # (Hd, HW) scratch

    # Two contractions (K=Cz and K=Hd) as VPU weighted sums, interleaved per
    # hidden unit so only ~20 vregs are live at any point (weights stationary,
    # no per-timestep slices, MXU skipped entirely at these sizes).
    vpred = [jnp.zeros((T, HW), jnp.float32) for _ in range(Cz)]
    for hd in range(Hd):
        h = zt[0] * wz_ref[0, hd]
        for j in range(1, Cz):
            h = h + zt[j] * wz_ref[j, hd]
        h = h + hconst_ref[hd]                               # (HW,) broadcast over T
        # TODO(synk): PyTorch nn.GELU default is the exact erf form; tanh
        # approximation is used here (synthetic DiT head).
        h = jax.nn.gelu(h, approximate=True)
        for c in range(Cz):
            vpred[c] = vpred[c] + h * w2_ref[hd, c]

    # ------------------ flow-matching losses (whole-slab ops) ---------------
    vel_vec = jnp.zeros((T, HW), jnp.float32)
    mid_vec = jnp.zeros((T, HW), jnp.float32)
    tv_vec = jnp.zeros((T - 1, HW), jnp.float32) if T > 1 else None
    ff_vec = jnp.zeros((1, HW), jnp.float32)
    fl_vec = jnp.zeros((1, HW), jnp.float32)
    for c in range(Cz):
        vp = vpred[c] + b2_ref[c]
        dv = vp - (z1[c] - z0[c])                            # velocity target
        vel_vec = vel_vec + dv * dv
        z1p = zt[c] + omt * vp                               # predicted clean latent
        dm = z1p - z1[c]
        mid_vec = mid_vec + dm * dm
        if T > 1:
            dtv = z1p[1:] - z1p[:-1]
            tv_vec = tv_vec + dtv * dtv
        dff = z1p[0:1] - first_rows[c]
        ff_vec = ff_vec + dff * dff
        dfl = z1p[T - 1:T] - last_rows[c]
        fl_vec = fl_vec + dfl * dfl
    vel_sum = jnp.sum(vel_vec)
    mid_sum = jnp.sum(mid_vec)
    tv_sum = jnp.sum(tv_vec) if T > 1 else jnp.float32(0.0)
    ff_sum = jnp.sum(ff_vec)
    fl_sum = jnp.sum(fl_vec)

    # ------------------ single lane-dense packed loss store -----------------
    vals = [kl_sum, rec_sum, tmp_sum, vel_sum, mid_sum, tv_sum, ff_sum, fl_sum]
    lane = jax.lax.broadcasted_iota(jnp.int32, (1, 1, 128), 2)
    packed = jnp.zeros((1, 1, 128), jnp.float32)
    for i, v in enumerate(vals):
        packed = jnp.where(lane == i, v, packed)
    loss_ref[...] = packed


# -----------------------------------------------------------------------------
# Pallas wrapper (one launch per forward)
# -----------------------------------------------------------------------------
def _fused_forward_sums(video4, noise, t, params, compute_vae):
    """video4: [B,C,T,HW]; noise: [B,Cz,2T+2,HW]; t: [B].  Returns (128,) sums."""
    B, C, T, HW = video4.shape
    Cz = params["dec_w"].shape[0]
    Hd = params["dit_wfl_t"].shape[0]

    kernel = functools.partial(_fused_flf2v_kernel, compute_vae=compute_vae)
    smem = pl.BlockSpec(memory_space=pltpu.MemorySpace.SMEM)

    packed = pl.pallas_call(
        kernel,
        out_shape=jax.ShapeDtypeStruct((B, 1, 128), jnp.float32),
        grid=(B,),
        in_specs=[
            smem,                                                     # t (B,)
            pl.BlockSpec((1, C, T, HW), lambda b: (b, 0, 0, 0)),      # video
            pl.BlockSpec((1, Cz, 2 * T + 2, HW), lambda b: (b, 0, 0, 0)),  # noise
            smem,                                                     # enc_w (C,2Cz)
            smem,                                                     # enc_b (2Cz,)
            smem,                                                     # dec_w (Cz,C)
            smem,                                                     # dec_b (C,)
            smem,                                                     # dit_wz (Cz,Hd)
            pl.BlockSpec((Hd, 2 * Cz), lambda b: (0, 0)),             # dit_wfl_t
            pl.BlockSpec((Hd, 1), lambda b: (0, 0)),                  # dit_wt_col
            pl.BlockSpec((Hd, 1), lambda b: (0, 0)),                  # dit_b1_col
            smem,                                                     # dit_w2 (Hd,Cz)
            smem,                                                     # dit_b2 (Cz,)
        ],
        out_specs=pl.BlockSpec((1, 1, 128), lambda b: (b, 0, 0)),
        scratch_shapes=[pltpu.VMEM((Hd, HW), jnp.float32)],
        compiler_params=pltpu.CompilerParams(
            dimension_semantics=("parallel",)),
    )(t, video4, noise,
      params["enc_w"], params["enc_b"], params["dec_w"], params["dec_b"],
      params["dit_wz"], params["dit_wfl_t"], params["dit_wt_col"],
      params["dit_b1_col"], params["dit_w2"], params["dit_b2"])

    # one reduction over B in XLA; individual losses are cheap lane slices
    return jnp.sum(packed, axis=0).reshape(128)


# -----------------------------------------------------------------------------
# Parameters (synthetic VAE / DiT realizations; DiT weights pre-split at init)
# -----------------------------------------------------------------------------
def init_params(key, c_in, c_lat, hidden):
    k = jax.random.split(key, 4)
    s = 0.1
    w1 = jax.random.normal(k[2], (3 * c_lat + 1, hidden), jnp.float32) * s
    return {
        "enc_w": jax.random.normal(k[0], (c_in, 2 * c_lat), jnp.float32) * s,
        "enc_b": jnp.zeros((2 * c_lat,), jnp.float32),
        "dec_w": jax.random.normal(k[1], (c_lat, c_in), jnp.float32) * s,
        "dec_b": jnp.zeros((c_in,), jnp.float32),
        # DiT weights pre-split / pre-transposed once here (hoisted from forward)
        "dit_wz": w1[0:c_lat],                                   # (Cz, Hd)
        "dit_wfl_t": jnp.transpose(w1[c_lat:3 * c_lat]),         # (Hd, 2Cz)
        "dit_wt_col": jnp.transpose(w1[3 * c_lat:3 * c_lat + 1]),  # (Hd, 1)
        "dit_b1_col": jnp.zeros((hidden, 1), jnp.float32),
        "dit_w2": jax.random.normal(k[3], (hidden, c_lat), jnp.float32) * s,  # (Hd, Cz)
        "dit_b2": jnp.zeros((c_lat,), jnp.float32),
    }


# -----------------------------------------------------------------------------
# LungCTFLF2V forward (plain-JAX glue around the single fused kernel)
# -----------------------------------------------------------------------------
def crop_sequence_runtime(video, target_length, crop_strategy="center"):
    B, C, T, H, W = video.shape
    if target_length is None or target_length >= T:
        return video
    if crop_strategy == "center":
        start = (T - target_length) // 2
    elif crop_strategy == "start":
        start = 0
    elif crop_strategy == "end":
        start = T - target_length
    else:
        start = 0  # TODO(synk): 'phase_0_to_5' repeat-padding branch not reproduced
    return video[:, :, start:start + target_length]


def lungct_flf2v_forward(video, params, key,
                         target_sequence_length=None, crop_strategy="center",
                         return_dict=True):
    """video: [B, C, T, H, W] f32. Returns loss dict (or scalar loss_total)."""
    if target_sequence_length is not None:
        video = crop_sequence_runtime(video, target_sequence_length, crop_strategy)
    B, C, T, H, W = video.shape
    HW = H * W
    Cz = params["dec_w"].shape[0]

    # Channels-leading, spatial-on-lanes layout: pure reshape, no transposes.
    v4 = video.reshape(B, C, T, HW)

    # One fused normal draw: [0:T]=eps_full, [T:2T]=z0, [2T]=eps_first, [2T+1]=eps_last.
    # TODO(synk): could move inside the kernel with pltpu.prng_* (changes RNG stream).
    k_noise, k_t = jax.random.split(key, 2)
    noise = jax.random.normal(k_noise, (B, Cz, 2 * T + 2, HW), jnp.float32)
    t = jax.random.uniform(k_t, (B,), jnp.float32)

    compute_vae = TRAINING_STEP < FREEZE_VAE_AFTER and not VAE_FROZEN
    sums = _fused_forward_sums(v4, noise, t, params, compute_vae)

    n_lat = float(B * Cz * T * HW)
    n_fl = float(B * Cz * HW)
    losses = {
        "loss_velocity": sums[_VEL] / n_lat,
        "loss_mid": sums[_MID] / n_lat,
        "loss_flf": 0.5 * (sums[_FF] + sums[_FL]) / n_fl,
        "loss_tv": (sums[_TV] / float(B * Cz * (T - 1) * HW)
                    if T > 1 else jnp.float32(0.0)),
    }
    if compute_vae:
        losses["loss_vae_recon"] = sums[_REC] / float(B * C * T * HW)
        losses["loss_vae_kl"] = -0.5 * sums[_KL] / n_lat
        losses["loss_vae_temporal"] = (sums[_TMP] / float(B * C * (T - 1) * HW)
                                       if T > 1 else jnp.float32(0.0))
    else:
        losses["loss_vae_recon"] = jnp.float32(0.0)
        losses["loss_vae_kl"] = jnp.float32(0.0)
        losses["loss_vae_temporal"] = jnp.float32(0.0)

    w = LOSS_WEIGHTS
    loss_total = (w["velocity_weight"] * losses["loss_velocity"]
                  + w["flf_weight"] * losses["loss_flf"]
                  + w.get("mid_loss_weight", 1.0) * losses["loss_mid"]
                  + w.get("tv_loss_weight", 0.001) * losses["loss_tv"]
                  + w["vae_recon_weight"] * losses["loss_vae_recon"]
                  + w["vae_kl_weight"] * losses["loss_vae_kl"]
                  + w["vae_temporal_weight"] * losses["loss_vae_temporal"])
    losses["loss_total"] = loss_total
    return losses if return_dict else loss_total


# -----------------------------------------------------------------------------
if __name__ == "__main__":
    B, C, T, H, W = 2, 1, 8, 16, 16   # small lung-CT-like video
    C_LAT, HIDDEN = 4, 32

    root = jax.random.PRNGKey(0)
    k_data, k_params, k_fwd = jax.random.split(root, 3)

    video = jax.random.normal(k_data, (B, C, T, H, W), jnp.float32)
    params = init_params(k_params, C, C_LAT, HIDDEN)

    forward_jit = jax.jit(lambda v, p, k: lungct_flf2v_forward(v, p, k, return_dict=True))
    losses = forward_jit(video, params, k_fwd)
    losses = jax.tree_util.tree_map(jax.block_until_ready, losses)

    total = float(losses["loss_total"])
    assert total == total, "loss_total is NaN"
    print("KERNEL_OK")
</pallas_src>

<mosaic_0001>
module attributes {stable_mosaic.version = 11 : i64} {
  func.func @_fused_flf2v_kernel(%arg0: i32, %arg1: memref<2xf32, #tpu.memory_space<smem>>, %arg2: memref<1x1x8x256xf32, #tpu.memory_space<vmem>>, %arg3: memref<1x4x18x256xf32, #tpu.memory_space<vmem>>, %arg4: memref<1x8xf32, #tpu.memory_space<smem>>, %arg5: memref<8xf32, #tpu.memory_space<smem>>, %arg6: memref<4x1xf32, #tpu.memory_space<smem>>, %arg7: memref<1xf32, #tpu.memory_space<smem>>, %arg8: memref<4x32xf32, #tpu.memory_space<smem>>, %arg9: memref<32x8xf32, #tpu.memory_space<vmem>>, %arg10: memref<32x1xf32, #tpu.memory_space<vmem>>, %arg11: memref<32x1xf32, #tpu.memory_space<vmem>>, %arg12: memref<32x4xf32, #tpu.memory_space<smem>>, %arg13: memref<4xf32, #tpu.memory_space<smem>>, %arg14: memref<1x1x128xf32, #tpu.memory_space<vmem>>, %arg15: memref<32x256xf32, #tpu.memory_space<vmem>>) attributes {dimension_semantics = [#tpu.dimension_semantics<parallel>], iteration_bounds = array<i64: 2>, scalar_prefetch = 0 : i64, scratch_operands = 1 : i64, tpu.core_type = #tpu.core_type<tc>, window_params = [{transform_indices = @transform_0, window_bounds = array<i64: 2>}, {transform_indices = @transform_1, window_bounds = array<i64: 1, 1, 8, 256>}, {transform_indices = @transform_2, window_bounds = array<i64: 1, 4, 18, 256>}, {transform_indices = @transform_3, window_bounds = array<i64: 1, 8>}, {transform_indices = @transform_4, window_bounds = array<i64: 8>}, {transform_indices = @transform_5, window_bounds = array<i64: 4, 1>}, {transform_indices = @transform_6, window_bounds = array<i64: 1>}, {transform_indices = @transform_7, window_bounds = array<i64: 4, 32>}, {pipeline_mode = #tpu.pipeline_mode<synchronous>, transform_indices = @transform_8, window_bounds = array<i64: 32, 8>}, {pipeline_mode = #tpu.pipeline_mode<synchronous>, transform_indices = @transform_9, window_bounds = array<i64: 32, 1>}, {pipeline_mode = #tpu.pipeline_mode<synchronous>, transform_indices = @transform_10, window_bounds = array<i64: 32, 1>}, {transform_indices = @transform_11, window_bounds = array<i64: 32, 4>}, {transform_indices = @transform_12, window_bounds = array<i64: 4>}, {transform_indices = @transform_13, window_bounds = array<i64: 1, 1, 128>}]} {
    %0 = arith.index_cast %arg0 : i32 to index
    %1 = memref.load %arg1[%0] : memref<2xf32, #tpu.memory_space<smem>>
    %cst = arith.constant 1.000000e+00 : f32
    %2 = arith.subf %cst, %1 : f32
    %c0 = arith.constant 0 : index
    %c0_0 = arith.constant 0 : index
    %c0_1 = arith.constant 0 : index
    %c0_2 = arith.constant 0 : index
    %3 = vector.load %arg2[%c0, %c0_0, %c0_1, %c0_2] : memref<1x1x8x256xf32, #tpu.memory_space<vmem>>, vector<1x1x8x256xf32>
    %4 = vector.shape_cast %3 : vector<1x1x8x256xf32> to vector<8x256xf32>
    %cst_3 = arith.constant 0.000000e+00 : f32
    %5 = vector.broadcast %cst_3 : f32 to vector<8x256xf32>
    %c0_4 = arith.constant 0 : index
    %c0_5 = arith.constant 0 : index
    %6 = memref.load %arg4[%c0_4, %c0_5] : memref<1x8xf32, #tpu.memory_space<smem>>
    %7 = vector.broadcast %6 : f32 to vector<8x256xf32>
    %8 = arith.mulf %4, %7 : vector<8x256xf32>
    %c0_6 = arith.constant 0 : index
    %c4 = arith.constant 4 : index
    %9 = memref.load %arg4[%c0_6, %c4] : memref<1x8xf32, #tpu.memory_space<smem>>
    %10 = vector.broadcast %9 : f32 to vector<8x256xf32>
    %11 = arith.mulf %4, %10 : vector<8x256xf32>
    %c0_7 = arith.constant 0 : index
    %12 = memref.load %arg5[%c0_7] : memref<8xf32, #tpu.memory_space<smem>>
    %13 = vector.broadcast %12 : f32 to vector<8x256xf32>
    %14 = arith.addf %8, %13 : vector<8x256xf32>
    %c4_8 = arith.constant 4 : index
    %15 = memref.load %arg5[%c4_8] : memref<8xf32, #tpu.memory_space<smem>>
    %16 = vector.broadcast %15 : f32 to vector<8x256xf32>
    %17 = arith.addf %11, %16 : vector<8x256xf32>
    %cst_9 = arith.constant 5.000000e-01 : f32
    %18 = vector.broadcast %cst_9 : f32 to vector<8x256xf32>
    %19 = arith.mulf %18, %17 : vector<8x256xf32>
    %20 = math.exp %19 : vector<8x256xf32>
    %c0_10 = arith.constant 0 : index
    %c0_11 = arith.constant 0 : index
    %c0_12 = arith.constant 0 : index
    %c0_13 = arith.constant 0 : index
    %21 = vector.load %arg3[%c0_10, %c0_11, %c0_12, %c0_13] : memref<1x4x18x256xf32, #tpu.memory_space<vmem>>, vector<1x1x8x256xf32>
    %22 = vector.shape_cast %21 : vector<1x1x8x256xf32> to vector<8x256xf32>
    %23 = arith.mulf %20, %22 : vector<8x256xf32>
    %24 = arith.addf %14, %23 : vector<8x256xf32>
    %25 = vector.extract_strided_slice %14 {offsets = [0, 0], sizes = [1, 256], strides = [1, 1]} : vector<8x256xf32> to vector<1x256xf32>
    %26 = vector.extract_strided_slice %20 {offsets = [0, 0], sizes = [1, 256], strides = [1, 1]} : vector<8x256xf32> to vector<1x256xf32>
    %c0_14 = arith.constant 0 : index
    %c0_15 = arith.constant 0 : index
    %c16 = arith.constant 16 : index
    %c0_16 = arith.constant 0 : index
    %27 = vector.load %arg3[%c0_14, %c0_15, %c16, %c0_16] : memref<1x4x18x256xf32, #tpu.memory_space<vmem>>, vector<1x1x1x256xf32>
    %28 = vector.shape_cast %27 : vector<1x1x1x256xf32> to vector<1x256xf32>
    %29 = arith.mulf %26, %28 : vector<1x256xf32>
    %30 = arith.addf %25, %29 : vector<1x256xf32>
    %31 = vector.extract_strided_slice %14 {offsets = [7, 0], sizes = [1, 256], strides = [1, 1]} : vector<8x256xf32> to vector<1x256xf32>
    %32 = vector.extract_strided_slice %20 {offsets = [7, 0], sizes = [1, 256], strides = [1, 1]} : vector<8x256xf32> to vector<1x256xf32>
    %c0_17 = arith.constant 0 : index
    %c0_18 = arith.constant 0 : index
    %c17 = arith.constant 17 : index
    %c0_19 = arith.constant 0 : index
    %33 = vector.load %arg3[%c0_17, %c0_18, %c17, %c0_19] : memref<1x4x18x256xf32, #tpu.memory_space<vmem>>, vector<1x1x1x256xf32>
    %34 = vector.shape_cast %33 : vector<1x1x1x256xf32> to vector<1x256xf32>
    %35 = arith.mulf %32, %34 : vector<1x256xf32>
    %36 = arith.addf %31, %35 : vector<1x256xf32>
    %cst_20 = arith.constant 1.000000e+00 : f32
    %37 = vector.broadcast %cst_20 : f32 to vector<8x256xf32>
    %38 = arith.addf %37, %17 : vector<8x256xf32>
    %39 = arith.mulf %14, %14 : vector<8x256xf32>
    %40 = arith.subf %38, %39 : vector<8x256xf32>
    %41 = math.exp %17 : vector<8x256xf32>
    %42 = arith.subf %40, %41 : vector<8x256xf32>
    %43 = arith.addf %5, %42 : vector<8x256xf32>
    %c0_21 = arith.constant 0 : index
    %c1 = arith.constant 1 : index
    %44 = memref.load %arg4[%c0_21, %c1] : memref<1x8xf32, #tpu.memory_space<smem>>
    %45 = vector.broadcast %44 : f32 to vector<8x256xf32>
    %46 = arith.mulf %4, %45 : vector<8x256xf32>
    %c0_22 = arith.constant 0 : index
    %c5 = arith.constant 5 : index
    %47 = memref.load %arg4[%c0_22, %c5] : memref<1x8xf32, #tpu.memory_space<smem>>
    %48 = vector.broadcast %47 : f32 to vector<8x256xf32>
    %49 = arith.mulf %4, %48 : vector<8x256xf32>
    %c1_23 = arith.constant 1 : index
    %50 = memref.load %arg5[%c1_23] : memref<8xf32, #tpu.memory_space<smem>>
    %51 = vector.broadcast %50 : f32 to vector<8x256xf32>
    %52 = arith.addf %46, %51 : vector<8x256xf32>
    %c5_24 = arith.constant 5 : index
    %53 = memref.load %arg5[%c5_24] : memref<8xf32, #tpu.memory_space<smem>>
    %54 = vector.broadcast %53 : f32 to vector<8x256xf32>
    %55 = arith.addf %49, %54 : vector<8x256xf32>
    %cst_25 = arith.constant 5.000000e-01 : f32
    %56 = vector.broadcast %cst_25 : f32 to vector<8x256xf32>
    %57 = arith.mulf %56, %55 : vector<8x256xf32>
    %58 = math.exp %57 : vector<8x256xf32>
    %c0_26 = arith.constant 0 : index
    %c1_27 = arith.constant 1 : index
    %c0_28 = arith.constant 0 : index
    %c0_29 = arith.constant 0 : index
    %59 = vector.load %arg3[%c0_26, %c1_27, %c0_28, %c0_29] : memref<1x4x18x256xf32, #tpu.memory_space<vmem>>, vector<1x1x8x256xf32>
    %60 = vector.shape_cast %59 : vector<1x1x8x256xf32> to vector<8x256xf32>
    %61 = arith.mulf %58, %60 : vector<8x256xf32>
    %62 = arith.addf %52, %61 : vector<8x256xf32>
    %63 = vector.extract_strided_slice %52 {offsets = [0, 0], sizes = [1, 256], strides = [1, 1]} : vector<8x256xf32> to vector<1x256xf32>
    %64 = vector.extract_strided_slice %58 {offsets = [0, 0], sizes = [1, 256], strides = [1, 1]} : vector<8x256xf32> to vector<1x256xf32>
    %c0_30 = arith.constant 0 : index
    %c1_31 = arith.constant 1 : index
    %c16_32 = arith.constant 16 : index
    %c0_33 = arith.constant 0 : index
    %65 = vector.load %arg3[%c0_30, %c1_31, %c16_32, %c0_33] : memref<1x4x18x256xf32, #tpu.memory_space<vmem>>, vector<1x1x1x256xf32>
    %66 = vector.shape_cast %65 : vector<1x1x1x256xf32> to vector<1x256xf32>
    %67 = arith.mulf %64, %66 : vector<1x256xf32>
    %68 = arith.addf %63, %67 : vector<1x256xf32>
    %69 = vector.extract_strided_slice %52 {offsets = [7, 0], sizes = [1, 256], strides = [1, 1]} : vector<8x256xf32> to vector<1x256xf32>
    %70 = vector.extract_strided_slice %58 {offsets = [7, 0], sizes = [1, 256], strides = [1, 1]} : vector<8x256xf32> to vector<1x256xf32>
    %c0_34 = arith.constant 0 : index
    %c1_35 = arith.constant 1 : index
    %c17_36 = arith.constant 17 : index
    %c0_37 = arith.constant 0 : index
    %71 = vector.load %arg3[%c0_34, %c1_35, %c17_36, %c0_37] : memref<1x4x18x256xf32, #tpu.memory_space<vmem>>, vector<1x1x1x256xf32>
    %72 = vector.shape_cast %71 : vector<1x1x1x256xf32> to vector<1x256xf32>
    %73 = arith.mulf %70, %72 : vector<1x256xf32>
    %74 = arith.addf %69, %73 : vector<1x256xf32>
    %cst_38 = arith.constant 1.000000e+00 : f32
    %75 = vector.broadcast %cst_38 : f32 to vector<8x256xf32>
    %76 = arith.addf %75, %55 : vector<8x256xf32>
    %77 = arith.mulf %52, %52 : vector<8x256xf32>
    %78 = arith.subf %76, %77 : vector<8x256xf32>
    %79 = math.exp %55 : vector<8x256xf32>
    %80 = arith.subf %78, %79 : vector<8x256xf32>
    %81 = arith.addf %43, %80 : vector<8x256xf32>
    %c0_39 = arith.constant 0 : index
    %c2 = arith.constant 2 : index
    %82 = memref.load %arg4[%c0_39, %c2] : memref<1x8xf32, #tpu.memory_space<smem>>
    %83 = vector.broadcast %82 : f32 to vector<8x256xf32>
    %84 = arith.mulf %4, %83 : vector<8x256xf32>
    %c0_40 = arith.constant 0 : index
    %c6 = arith.constant 6 : index
    %85 = memref.load %arg4[%c0_40, %c6] : memref<1x8xf32, #tpu.memory_space<smem>>
    %86 = vector.broadcast %85 : f32 to vector<8x256xf32>
    %87 = arith.mulf %4, %86 : vector<8x256xf32>
    %c2_41 = arith.constant 2 : index
    %88 = memref.load %arg5[%c2_41] : memref<8xf32, #tpu.memory_space<smem>>
    %89 = vector.broadcast %88 : f32 to vector<8x256xf32>
    %90 = arith.addf %84, %89 : vector<8x256xf32>
    %c6_42 = arith.constant 6 : index
    %91 = memref.load %arg5[%c6_42] : memref<8xf32, #tpu.memory_space<smem>>
    %92 = vector.broadcast %91 : f32 to vector<8x256xf32>
    %93 = arith.addf %87, %92 : vector<8x256xf32>
    %cst_43 = arith.constant 5.000000e-01 : f32
    %94 = vector.broadcast %cst_43 : f32 to vector<8x256xf32>
    %95 = arith.mulf %94, %93 : vector<8x256xf32>
    %96 = math.exp %95 : vector<8x256xf32>
    %c0_44 = arith.constant 0 : index
    %c2_45 = arith.constant 2 : index
    %c0_46 = arith.constant 0 : index
    %c0_47 = arith.constant 0 : index
    %97 = vector.load %arg3[%c0_44, %c2_45, %c0_46, %c0_47] : memref<1x4x18x256xf32, #tpu.memory_space<vmem>>, vector<1x1x8x256xf32>
    %98 = vector.shape_cast %97 : vector<1x1x8x256xf32> to vector<8x256xf32>
    %99 = arith.mulf %96, %98 : vector<8x256xf32>
    %100 = arith.addf %90, %99 : vector<8x256xf32>
    %101 = vector.extract_strided_slice %90 {offsets = [0, 0], sizes = [1, 256], strides = [1, 1]} : vector<8x256xf32> to vector<1x256xf32>
    %102 = vector.extract_strided_slice %96 {offsets = [0, 0], sizes = [1, 256], strides = [1, 1]} : vector<8x256xf32> to vector<1x256xf32>
    %c0_48 = arith.constant 0 : index
    %c2_49 = arith.constant 2 : index
    %c16_50 = arith.constant 16 : index
    %c0_51 = arith.constant 0 : index
    %103 = vector.load %arg3[%c0_48, %c2_49, %c16_50, %c0_51] : memref<1x4x18x256xf32, #tpu.memory_space<vmem>>, vector<1x1x1x256xf32>
    %104 = vector.shape_cast %103 : vector<1x1x1x256xf32> to vector<1x256xf32>
    %105 = arith.mulf %102, %104 : vector<1x256xf32>
    %106 = arith.addf %101, %105 : vector<1x256xf32>
    %107 = vector.extract_strided_slice %90 {offsets = [7, 0], sizes = [1, 256], strides = [1, 1]} : vector<8x256xf32> to vector<1x256xf32>
    %108 = vector.extract_strided_slice %96 {offsets = [7, 0], sizes = [1, 256], strides = [1, 1]} : vector<8x256xf32> to vector<1x256xf32>
    %c0_52 = arith.constant 0 : index
    %c2_53 = arith.constant 2 : index
    %c17_54 = arith.constant 17 : index
    %c0_55 = arith.constant 0 : index
    %109 = vector.load %arg3[%c0_52, %c2_53, %c17_54, %c0_55] : memref<1x4x18x256xf32, #tpu.memory_space<vmem>>, vector<1x1x1x256xf32>
    %110 = vector.shape_cast %109 : vector<1x1x1x256xf32> to vector<1x256xf32>
    %111 = arith.mulf %108, %110 : vector<1x256xf32>
    %112 = arith.addf %107, %111 : vector<1x256xf32>
    %cst_56 = arith.constant 1.000000e+00 : f32
    %113 = vector.broadcast %cst_56 : f32 to vector<8x256xf32>
    %114 = arith.addf %113, %93 : vector<8x256xf32>
    %115 = arith.mulf %90, %90 : vector<8x256xf32>
    %116 = arith.subf %114, %115 : vector<8x256xf32>
    %117 = math.exp %93 : vector<8x256xf32>
    %118 = arith.subf %116, %117 : vector<8x256xf32>
    %119 = arith.addf %81, %118 : vector<8x256xf32>
    %c0_57 = arith.constant 0 : index
    %c3 = arith.constant 3 : index
    %120 = memref.load %arg4[%c0_57, %c3] : memref<1x8xf32, #tpu.memory_space<smem>>
    %121 = vector.broadcast %120 : f32 to vector<8x256xf32>
    %122 = arith.mulf %4, %121 : vector<8x256xf32>
    %c0_58 = arith.constant 0 : index
    %c7 = arith.constant 7 : index
    %123 = memref.load %arg4[%c0_58, %c7] : memref<1x8xf32, #tpu.memory_space<smem>>
    %124 = vector.broadcast %123 : f32 to vector<8x256xf32>
    %125 = arith.mulf %4, %124 : vector<8x256xf32>
    %c3_59 = arith.constant 3 : index
    %126 = memref.load %arg5[%c3_59] : memref<8xf32, #tpu.memory_space<smem>>
    %127 = vector.broadcast %126 : f32 to vector<8x256xf32>
    %128 = arith.addf %122, %127 : vector<8x256xf32>
    %c7_60 = arith.constant 7 : index
    %129 = memref.load %arg5[%c7_60] : memref<8xf32, #tpu.memory_space<smem>>
    %130 = vector.broadcast %129 : f32 to vector<8x256xf32>
    %131 = arith.addf %125, %130 : vector<8x256xf32>
    %cst_61 = arith.constant 5.000000e-01 : f32
    %132 = vector.broadcast %cst_61 : f32 to vector<8x256xf32>
    %133 = arith.mulf %132, %131 : vector<8x256xf32>
    %134 = math.exp %133 : vector<8x256xf32>
    %c0_62 = arith.constant 0 : index
    %c3_63 = arith.constant 3 : index
    %c0_64 = arith.constant 0 : index
    %c0_65 = arith.constant 0 : index
    %135 = vector.load %arg3[%c0_62, %c3_63, %c0_64, %c0_65] : memref<1x4x18x256xf32, #tpu.memory_space<vmem>>, vector<1x1x8x256xf32>
    %136 = vector.shape_cast %135 : vector<1x1x8x256xf32> to vector<8x256xf32>
    %137 = arith.mulf %134, %136 : vector<8x256xf32>
    %138 = arith.addf %128, %137 : vector<8x256xf32>
    %139 = vector.extract_strided_slice %128 {offsets = [0, 0], sizes = [1, 256], strides = [1, 1]} : vector<8x256xf32> to vector<1x256xf32>
    %140 = vector.extract_strided_slice %134 {offsets = [0, 0], sizes = [1, 256], strides = [1, 1]} : vector<8x256xf32> to vector<1x256xf32>
    %c0_66 = arith.constant 0 : index
    %c3_67 = arith.constant 3 : index
    %c16_68 = arith.constant 16 : index
    %c0_69 = arith.constant 0 : index
    %141 = vector.load %arg3[%c0_66, %c3_67, %c16_68, %c0_69] : memref<1x4x18x256xf32, #tpu.memory_space<vmem>>, vector<1x1x1x256xf32>
    %142 = vector.shape_cast %141 : vector<1x1x1x256xf32> to vector<1x256xf32>
    %143 = arith.mulf %140, %142 : vector<1x256xf32>
    %144 = arith.addf %139, %143 : vector<1x256xf32>
    %145 = vector.extract_strided_slice %128 {offsets = [7, 0], sizes = [1, 256], strides = [1, 1]} : vector<8x256xf32> to vector<1x256xf32>
    %146 = vector.extract_strided_slice %134 {offsets = [7, 0], sizes = [1, 256], strides = [1, 1]} : vector<8x256xf32> to vector<1x256xf32>
    %c0_70 = arith.constant 0 : index
    %c3_71 = arith.constant 3 : index
    %c17_72 = arith.constant 17 : index
    %c0_73 = arith.constant 0 : index
    %147 = vector.load %arg3[%c0_70, %c3_71, %c17_72, %c0_73] : memref<1x4x18x256xf32, #tpu.memory_space<vmem>>, vector<1x1x1x256xf32>
    %148 = vector.shape_cast %147 : vector<1x1x1x256xf32> to vector<1x256xf32>
    %149 = arith.mulf %146, %148 : vector<1x256xf32>
    %150 = arith.addf %145, %149 : vector<1x256xf32>
    %cst_74 = arith.constant 1.000000e+00 : f32
    %151 = vector.broadcast %cst_74 : f32 to vector<8x256xf32>
    %152 = arith.addf %151, %131 : vector<8x256xf32>
    %153 = arith.mulf %128, %128 : vector<8x256xf32>
    %154 = arith.subf %152, %153 : vector<8x256xf32>
    %155 = math.exp %131 : vector<8x256xf32>
    %156 = arith.subf %154, %155 : vector<8x256xf32>
    %157 = arith.addf %119, %156 : vector<8x256xf32>
    %158 = vector.shape_cast %157 : vector<8x256xf32> to vector<1x8x256xf32>
    %cst_75 = arith.constant dense<0.000000e+00> : vector<1xf32>
    %159 = vector.multi_reduction <add>, %158, %cst_75 [1, 2] : vector<1x8x256xf32> to vector<1xf32>
    %160 = vector.shape_cast %159 : vector<1xf32> to vector<1x1x1xf32>
    %161 = vector.extract %160[0, 0, 0] : f32 from vector<1x1x1xf32>
    %cst_76 = arith.constant 0.000000e+00 : f32
    %162 = vector.broadcast %cst_76 : f32 to vector<8x256xf32>
    %cst_77 = arith.constant 0.000000e+00 : f32
    %163 = vector.broadcast %cst_77 : f32 to vector<7x256xf32>
    %c0_78 = arith.constant 0 : index
    %c0_79 = arith.constant 0 : index
    %164 = memref.load %arg6[%c0_78, %c0_79] : memref<4x1xf32, #tpu.memory_space<smem>>
    %165 = vector.broadcast %164 : f32 to vector<8x256xf32>
    %166 = arith.mulf %24, %165 : vector<8x256xf32>
    %c1_80 = arith.constant 1 : index
    %c0_81 = arith.constant 0 : index
    %167 = memref.load %arg6[%c1_80, %c0_81] : memref<4x1xf32, #tpu.memory_space<smem>>
    %168 = vector.broadcast %167 : f32 to vector<8x256xf32>
    %169 = arith.mulf %62, %168 : vector<8x256xf32>
    %170 = arith.addf %166, %169 : vector<8x256xf32>
    %c2_82 = arith.constant 2 : index
    %c0_83 = arith.constant 0 : index
    %171 = memref.load %arg6[%c2_82, %c0_83] : memref<4x1xf32, #tpu.memory_space<smem>>
    %172 = vector.broadcast %171 : f32 to vector<8x256xf32>
    %173 = arith.mulf %100, %172 : vector<8x256xf32>
    %174 = arith.addf %170, %173 : vector<8x256xf32>
    %c3_84 = arith.constant 3 : index
    %c0_85 = arith.constant 0 : index
    %175 = memref.load %arg6[%c3_84, %c0_85] : memref<4x1xf32, #tpu.memory_space<smem>>
    %176 = vector.broadcast %175 : f32 to vector<8x256xf32>
    %177 = arith.mulf %138, %176 : vector<8x256xf32>
    %178 = arith.addf %174, %177 : vector<8x256xf32>
    %c0_86 = arith.constant 0 : index
    %179 = memref.load %arg7[%c0_86] : memref<1xf32, #tpu.memory_space<smem>>
    %180 = vector.broadcast %179 : f32 to vector<8x256xf32>
    %181 = arith.addf %178, %180 : vector<8x256xf32>
    %182 = arith.subf %181, %4 : vector<8x256xf32>
    %183 = arith.mulf %182, %182 : vector<8x256xf32>
    %184 = arith.addf %162, %183 : vector<8x256xf32>
    %185 = vector.extract_strided_slice %181 {offsets = [1, 0], sizes = [7, 256], strides = [1, 1]} : vector<8x256xf32> to vector<7x256xf32>
    %186 = vector.extract_strided_slice %181 {offsets = [0, 0], sizes = [7, 256], strides = [1, 1]} : vector<8x256xf32> to vector<7x256xf32>
    %187 = arith.subf %185, %186 : vector<7x256xf32>
    %188 = vector.extract_strided_slice %4 {offsets = [1, 0], sizes = [7, 256], strides = [1, 1]} : vector<8x256xf32> to vector<7x256xf32>
    %189 = vector.extract_strided_slice %4 {offsets = [0, 0], sizes = [7, 256], strides = [1, 1]} : vector<8x256xf32> to vector<7x256xf32>
    %190 = arith.subf %188, %189 : vector<7x256xf32>
    %191 = arith.subf %187, %190 : vector<7x256xf32>
    %192 = arith.mulf %191, %191 : vector<7x256xf32>
    %193 = arith.addf %163, %192 : vector<7x256xf32>
    %194 = vector.shape_cast %184 : vector<8x256xf32> to vector<1x8x256xf32>
    %cst_87 = arith.constant dense<0.000000e+00> : vector<1xf32>
    %195 = vector.multi_reduction <add>, %194, %cst_87 [1, 2] : vector<1x8x256xf32> to vector<1xf32>
    %196 = vector.shape_cast %195 : vector<1xf32> to vector<1x1x1xf32>
    %197 = vector.extract %196[0, 0, 0] : f32 from vector<1x1x1xf32>
    %198 = vector.shape_cast %193 : vector<7x256xf32> to vector<1x7x256xf32>
    %cst_88 = arith.constant dense<0.000000e+00> : vector<1xf32>
    %199 = vector.multi_reduction <add>, %198, %cst_88 [1, 2] : vector<1x7x256xf32> to vector<1xf32>
    %200 = vector.shape_cast %199 : vector<1xf32> to vector<1x1x1xf32>
    %201 = vector.extract %200[0, 0, 0] : f32 from vector<1x1x1xf32>
    %c0_89 = arith.constant 0 : index
    %c0_90 = arith.constant 0 : index
    %c8 = arith.constant 8 : index
    %c0_91 = arith.constant 0 : index
    %202 = vector.load %arg3[%c0_89, %c0_90, %c8, %c0_91] : memref<1x4x18x256xf32, #tpu.memory_space<vmem>>, vector<1x1x8x256xf32>
    %203 = vector.shape_cast %202 : vector<1x1x8x256xf32> to vector<8x256xf32>
    %c0_92 = arith.constant 0 : index
    %c1_93 = arith.constant 1 : index
    %c8_94 = arith.constant 8 : index
    %c0_95 = arith.constant 0 : index
    %204 = vector.load %arg3[%c0_92, %c1_93, %c8_94, %c0_95] : memref<1x4x18x256xf32, #tpu.memory_space<vmem>>, vector<1x1x8x256xf32>
    %205 = vector.shape_cast %204 : vector<1x1x8x256xf32> to vector<8x256xf32>
    %c0_96 = arith.constant 0 : index
    %c2_97 = arith.constant 2 : index
    %c8_98 = arith.constant 8 : index
    %c0_99 = arith.constant 0 : index
    %206 = vector.load %arg3[%c0_96, %c2_97, %c8_98, %c0_99] : memref<1x4x18x256xf32, #tpu.memory_space<vmem>>, vector<1x1x8x256xf32>
    %207 = vector.shape_cast %206 : vector<1x1x8x256xf32> to vector<8x256xf32>
    %c0_100 = arith.constant 0 : index
    %c3_101 = arith.constant 3 : index
    %c8_102 = arith.constant 8 : index
    %c0_103 = arith.constant 0 : index
    %208 = vector.load %arg3[%c0_100, %c3_101, %c8_102, %c0_103] : memref<1x4x18x256xf32, #tpu.memory_space<vmem>>, vector<1x1x8x256xf32>
    %209 = vector.shape_cast %208 : vector<1x1x8x256xf32> to vector<8x256xf32>
    %210 = vector.broadcast %2 : f32 to vector<8x256xf32>
    %211 = arith.mulf %210, %203 : vector<8x256xf32>
    %212 = vector.broadcast %1 : f32 to vector<8x256xf32>
    %213 = arith.mulf %212, %24 : vector<8x256xf32>
    %214 = arith.addf %211, %213 : vector<8x256xf32>
    %215 = vector.broadcast %2 : f32 to vector<8x256xf32>
    %216 = arith.mulf %215, %205 : vector<8x256xf32>
    %217 = vector.broadcast %1 : f32 to vector<8x256xf32>
    %218 = arith.mulf %217, %62 : vector<8x256xf32>
    %219 = arith.addf %216, %218 : vector<8x256xf32>
    %220 = vector.broadcast %2 : f32 to vector<8x256xf32>
    %221 = arith.mulf %220, %207 : vector<8x256xf32>
    %222 = vector.broadcast %1 : f32 to vector<8x256xf32>
    %223 = arith.mulf %222, %100 : vector<8x256xf32>
    %224 = arith.addf %221, %223 : vector<8x256xf32>
    %225 = vector.broadcast %2 : f32 to vector<8x256xf32>
    %226 = arith.mulf %225, %209 : vector<8x256xf32>
    %227 = vector.broadcast %1 : f32 to vector<8x256xf32>
    %228 = arith.mulf %227, %138 : vector<8x256xf32>
    %229 = arith.addf %226, %228 : vector<8x256xf32>
    %c0_104 = arith.constant 0 : index
    %c0_105 = arith.constant 0 : index
    %230 = vector.load %arg10[%c0_104, %c0_105] : memref<32x1xf32, #tpu.memory_space<vmem>>, vector<32x1xf32>
    %231 = vector.broadcast %1 : f32 to vector<32x1xf32>
    %232 = arith.mulf %230, %231 : vector<32x1xf32>
    %c0_106 = arith.constant 0 : index
    %c0_107 = arith.constant 0 : index
    %233 = vector.load %arg11[%c0_106, %c0_107] : memref<32x1xf32, #tpu.memory_space<vmem>>, vector<32x1xf32>
    %234 = arith.addf %232, %233 : vector<32x1xf32>
    %c0_108 = arith.constant 0 : index
    %c0_109 = arith.constant 0 : index
    %235 = vector.load %arg9[%c0_108, %c0_109] : memref<32x8xf32, #tpu.memory_space<vmem>>, vector<32x1xf32>
    %236 = vector.broadcast %235 : vector<32x1xf32> to vector<32x256xf32>
    %237 = vector.broadcast %30 : vector<1x256xf32> to vector<32x256xf32>
    %238 = arith.mulf %236, %237 : vector<32x256xf32>
    %239 = vector.broadcast %234 : vector<32x1xf32> to vector<32x256xf32>
    %240 = arith.addf %239, %238 : vector<32x256xf32>
    %c0_110 = arith.constant 0 : index
    %c4_111 = arith.constant 4 : index
    %241 = vector.load %arg9[%c0_110, %c4_111] : memref<32x8xf32, #tpu.memory_space<vmem>>, vector<32x1xf32>
    %242 = vector.broadcast %241 : vector<32x1xf32> to vector<32x256xf32>
    %243 = vector.broadcast %36 : vector<1x256xf32> to vector<32x256xf32>
    %244 = arith.mulf %242, %243 : vector<32x256xf32>
    %245 = arith.addf %240, %244 : vector<32x256xf32>
    %c0_112 = arith.constant 0 : index
    %c1_113 = arith.constant 1 : index
    %246 = vector.load %arg9[%c0_112, %c1_113] : memref<32x8xf32, #tpu.memory_space<vmem>>, vector<32x1xf32>
    %247 = vector.broadcast %246 : vector<32x1xf32> to vector<32x256xf32>
    %248 = vector.broadcast %68 : vector<1x256xf32> to vector<32x256xf32>
    %249 = arith.mulf %247, %248 : vector<32x256xf32>
    %250 = arith.addf %245, %249 : vector<32x256xf32>
    %c0_114 = arith.constant 0 : index
    %c5_115 = arith.constant 5 : index
    %251 = vector.load %arg9[%c0_114, %c5_115] : memref<32x8xf32, #tpu.memory_space<vmem>>, vector<32x1xf32>
    %252 = vector.broadcast %251 : vector<32x1xf32> to vector<32x256xf32>
    %253 = vector.broadcast %74 : vector<1x256xf32> to vector<32x256xf32>
    %254 = arith.mulf %252, %253 : vector<32x256xf32>
    %255 = arith.addf %250, %254 : vector<32x256xf32>
    %c0_116 = arith.constant 0 : index
    %c2_117 = arith.constant 2 : index
    %256 = vector.load %arg9[%c0_116, %c2_117] : memref<32x8xf32, #tpu.memory_space<vmem>>, vector<32x1xf32>
    %257 = vector.broadcast %256 : vector<32x1xf32> to vector<32x256xf32>
    %258 = vector.broadcast %106 : vector<1x256xf32> to vector<32x256xf32>
    %259 = arith.mulf %257, %258 : vector<32x256xf32>
    %260 = arith.addf %255, %259 : vector<32x256xf32>
    %c0_118 = arith.constant 0 : index
    %c6_119 = arith.constant 6 : index
    %261 = vector.load %arg9[%c0_118, %c6_119] : memref<32x8xf32, #tpu.memory_space<vmem>>, vector<32x1xf32>
    %262 = vector.broadcast %261 : vector<32x1xf32> to vector<32x256xf32>
    %263 = vector.broadcast %112 : vector<1x256xf32> to vector<32x256xf32>
    %264 = arith.mulf %262, %263 : vector<32x256xf32>
    %265 = arith.addf %260, %264 : vector<32x256xf32>
    %c0_120 = arith.constant 0 : index
    %c3_121 = arith.constant 3 : index
    %266 = vector.load %arg9[%c0_120, %c3_121] : memref<32x8xf32, #tpu.memory_space<vmem>>, vector<32x1xf32>
    %267 = vector.broadcast %266 : vector<32x1xf32> to vector<32x256xf32>
    %268 = vector.broadcast %144 : vector<1x256xf32> to vector<32x256xf32>
    %269 = arith.mulf %267, %268 : vector<32x256xf32>
    %270 = arith.addf %265, %269 : vector<32x256xf32>
    %c0_122 = arith.constant 0 : index
    %c7_123 = arith.constant 7 : index
    %271 = vector.load %arg9[%c0_122, %c7_123] : memref<32x8xf32, #tpu.memory_space<vmem>>, vector<32x1xf32>
    %272 = vector.broadcast %271 : vector<32x1xf32> to vector<32x256xf32>
    %273 = vector.broadcast %150 : vector<1x256xf32> to vector<32x256xf32>
    %274 = arith.mulf %272, %273 : vector<32x256xf32>
    %275 = arith.addf %270, %274 : vector<32x256xf32>
    %c0_124 = arith.constant 0 : index
    %c0_125 = arith.constant 0 : index
    %276 = vector.load %arg15[%c0_124, %c0_125] : memref<32x256xf32, #tpu.memory_space<vmem>>, vector<32x256xf32>
    tpu.vector_store %arg15[%c0_124, %c0_125], %275 {strides = array<i32>} : memref<32x256xf32, #tpu.memory_space<vmem>>, vector<32x256xf32>,
    %cst_126 = arith.constant 0.000000e+00 : f32
    %277 = vector.broadcast %cst_126 : f32 to vector<8x256xf32>
    %cst_127 = arith.constant 0.000000e+00 : f32
    %278 = vector.broadcast %cst_127 : f32 to vector<8x256xf32>
    %cst_128 = arith.constant 0.000000e+00 : f32
    %279 = vector.broadcast %cst_128 : f32 to vector<8x256xf32>
    %cst_129 = arith.constant 0.000000e+00 : f32
    %280 = vector.broadcast %cst_129 : f32 to vector<8x256xf32>
    %c0_130 = arith.constant 0 : index
    %c0_131 = arith.constant 0 : index
    %281 = memref.load %arg8[%c0_130, %c0_131] : memref<4x32xf32, #tpu.memory_space<smem>>
    %282 = vector.broadcast %281 : f32 to vector<8x256xf32>
    %283 = arith.mulf %214, %282 : vector<8x256xf32>
    %c1_132 = arith.constant 1 : index
    %c0_133 = arith.constant 0 : index
    %284 = memref.load %arg8[%c1_132, %c0_133] : memref<4x32xf32, #tpu.memory_space<smem>>
    %285 = vector.broadcast %284 : f32 to vector<8x256xf32>
    %286 = arith.mulf %219, %285 : vector<8x256xf32>
    %287 = arith.addf %283, %286 : vector<8x256xf32>
    %c2_134 = arith.constant 2 : index
    %c0_135 = arith.constant 0 : index
    %288 = memref.load %arg8[%c2_134, %c0_135] : memref<4x32xf32, #tpu.memory_space<smem>>
    %289 = vector.broadcast %288 : f32 to vector<8x256xf32>
    %290 = arith.mulf %224, %289 : vector<8x256xf32>
    %291 = arith.addf %287, %290 : vector<8x256xf32>
    %c3_136 = arith.constant 3 : index
    %c0_137 = arith.constant 0 : index
    %292 = memref.load %arg8[%c3_136, %c0_137] : memref<4x32xf32, #tpu.memory_space<smem>>
    %293 = vector.broadcast %292 : f32 to vector<8x256xf32>
    %294 = arith.mulf %229, %293 : vector<8x256xf32>
    %295 = arith.addf %291, %294 : vector<8x256xf32>
    %c0_138 = arith.constant 0 : index
    %c0_139 = arith.constant 0 : index
    %296 = vector.load %arg15[%c0_138, %c0_139] : memref<32x256xf32, #tpu.memory_space<vmem>>, vector<1x256xf32>
    %297 = vector.shape_cast %296 : vector<1x256xf32> to vector<256xf32>
    %298 = vector.shape_cast %297 : vector<256xf32> to vector<1x256xf32>
    %299 = vector.broadcast %298 : vector<1x256xf32> to vector<8x256xf32>
    %300 = arith.addf %295, %299 : vector<8x256xf32>
    %301 = arith.mulf %300, %300 : vector<8x256xf32>
    %302 = arith.mulf %300, %301 : vector<8x256xf32>
    %cst_140 = arith.constant 4.471500e-02 : f32
    %303 = vector.broadcast %cst_140 : f32 to vector<8x256xf32>
    %304 = arith.mulf %303, %302 : vector<8x256xf32>
    %305 = arith.addf %300, %304 : vector<8x256xf32>
    %cst_141 = arith.constant 0.797884583 : f32
    %306 = vector.broadcast %cst_141 : f32 to vector<8x256xf32>
    %307 = arith.mulf %306, %305 : vector<8x256xf32>
    %308 = math.tanh %307 : vector<8x256xf32>
    %cst_142 = arith.constant 1.000000e+00 : f32
    %309 = vector.broadcast %cst_142 : f32 to vector<8x256xf32>
    %310 = arith.addf %309, %308 : vector<8x256xf32>
    %cst_143 = arith.constant 5.000000e-01 : f32
    %311 = vector.broadcast %cst_143 : f32 to vector<8x256xf32>
    %312 = arith.mulf %311, %310 : vector<8x256xf32>
    %313 = arith.mulf %300, %312 : vector<8x256xf32>
    %c0_144 = arith.constant 0 : index
    %c0_145 = arith.constant 0 : index
    %314 = memref.load %arg12[%c0_144, %c0_145] : memref<32x4xf32, #tpu.memory_space<smem>>
    %315 = vector.broadcast %314 : f32 to vector<8x256xf32>
    %316 = arith.mulf %313, %315 : vector<8x256xf32>
    %317 = arith.addf %277, %316 : vector<8x256xf32>
    %c0_146 = arith.constant 0 : index
    %c1_147 = arith.constant 1 : index
    %318 = memref.load %arg12[%c0_146, %c1_147] : memref<32x4xf32, #tpu.memory_space<smem>>
    %319 = vector.broadcast %318 : f32 to vector<8x256xf32>
    %320 = arith.mulf %313, %319 : vector<8x256xf32>
    %321 = arith.addf %278, %320 : vector<8x256xf32>
    %c0_148 = arith.constant 0 : index
    %c2_149 = arith.constant 2 : index
    %322 = memref.load %arg12[%c0_148, %c2_149] : memref<32x4xf32, #tpu.memory_space<smem>>
    %323 = vector.broadcast %322 : f32 to vector<8x256xf32>
    %324 = arith.mulf %313, %323 : vector<8x256xf32>
    %325 = arith.addf %279, %324 : vector<8x256xf32>
    %c0_150 = arith.constant 0 : index
    %c3_151 = arith.constant 3 : index
    %326 = memref.load %arg12[%c0_150, %c3_151] : memref<32x4xf32, #tpu.memory_space<smem>>
    %327 = vector.broadcast %326 : f32 to vector<8x256xf32>
    %328 = arith.mulf %313, %327 : vector<8x256xf32>
    %329 = arith.addf %280, %328 : vector<8x256xf32>
    %c0_152 = arith.constant 0 : index
    %c1_153 = arith.constant 1 : index
    %330 = memref.load %arg8[%c0_152, %c1_153] : memref<4x32xf32, #tpu.memory_space<smem>>
    %331 = vector.broadcast %330 : f32 to vector<8x256xf32>
    %332 = arith.mulf %214, %331 : vector<8x256xf32>
    %c1_154 = arith.constant 1 : index
    %c1_155 = arith.constant 1 : index
    %333 = memref.load %arg8[%c1_154, %c1_155] : memref<4x32xf32, #tpu.memory_space<smem>>
    %334 = vector.broadcast %333 : f32 to vector<8x256xf32>
    %335 = arith.mulf %219, %334 : vector<8x256xf32>
    %336 = arith.addf %332, %335 : vector<8x256xf32>
    %c2_156 = arith.constant 2 : index
    %c1_157 = arith.constant 1 : index
    %337 = memref.load %arg8[%c2_156, %c1_157] : memref<4x32xf32, #tpu.memory_space<smem>>
    %338 = vector.broadcast %337 : f32 to vector<8x256xf32>
    %339 = arith.mulf %224, %338 : vector<8x256xf32>
    %340 = arith.addf %336, %339 : vector<8x256xf32>
    %c3_158 = arith.constant 3 : index
    %c1_159 = arith.constant 1 : index
    %341 = memref.load %arg8[%c3_158, %c1_159] : memref<4x32xf32, #tpu.memory_space<smem>>
    %342 = vector.broadcast %341 : f32 to vector<8x256xf32>
    %343 = arith.mulf %229, %342 : vector<8x256xf32>
    %344 = arith.addf %340, %343 : vector<8x256xf32>
    %c1_160 = arith.constant 1 : index
    %c0_161 = arith.constant 0 : index
    %345 = vector.load %arg15[%c1_160, %c0_161] : memref<32x256xf32, #tpu.memory_space<vmem>>, vector<1x256xf32>
    %346 = vector.shape_cast %345 : vector<1x256xf32> to vector<256xf32>
    %347 = vector.shape_cast %346 : vector<256xf32> to vector<1x256xf32>
    %348 = vector.broadcast %347 : vector<1x256xf32> to vector<8x256xf32>
    %349 = arith.addf %344, %348 : vector<8x256xf32>
    %350 = arith.mulf %349, %349 : vector<8x256xf32>
    %351 = arith.mulf %349, %350 : vector<8x256xf32>
    %cst_162 = arith.constant 4.471500e-02 : f32
    %352 = vector.broadcast %cst_162 : f32 to vector<8x256xf32>
    %353 = arith.mulf %352, %351 : vector<8x256xf32>
    %354 = arith.addf %349, %353 : vector<8x256xf32>
    %cst_163 = arith.constant 0.797884583 : f32
    %355 = vector.broadcast %cst_163 : f32 to vector<8x256xf32>
    %356 = arith.mulf %355, %354 : vector<8x256xf32>
    %357 = math.tanh %356 : vector<8x256xf32>
    %cst_164 = arith.constant 1.000000e+00 : f32
    %358 = vector.broadcast %cst_164 : f32 to vector<8x256xf32>
    %359 = arith.addf %358, %357 : vector<8x256xf32>
    %cst_165 = arith.constant 5.000000e-01 : f32
    %360 = vector.broadcast %cst_165 : f32 to vector<8x256xf32>
    %361 = arith.mulf %360, %359 : vector<8x256xf32>
    %362 = arith.mulf %349, %361 : vector<8x256xf32>
    %c1_166 = arith.constant 1 : index
    %c0_167 = arith.constant 0 : index
    %363 = memref.load %arg12[%c1_166, %c0_167] : memref<32x4xf32, #tpu.memory_space<smem>>
    %364 = vector.broadcast %363 : f32 to vector<8x256xf32>
    %365 = arith.mulf %362, %364 : vector<8x256xf32>
    %366 = arith.addf %317, %365 : vector<8x256xf32>
    %c1_168 = arith.constant 1 : index
    %c1_169 = arith.constant 1 : index
    %367 = memref.load %arg12[%c1_168, %c1_169] : memref<32x4xf32, #tpu.memory_space<smem>>
    %368 = vector.broadcast %367 : f32 to vector<8x256xf32>
    %369 = arith.mulf %362, %368 : vector<8x256xf32>
    %370 = arith.addf %321, %369 : vector<8x256xf32>
    %c1_170 = arith.constant 1 : index
    %c2_171 = arith.constant 2 : index
    %371 = memref.load %arg12[%c1_170, %c2_171] : memref<32x4xf32, #tpu.memory_space<smem>>
    %372 = vector.broadcast %371 : f32 to vector<8x256xf32>
    %373 = arith.mulf %362, %372 : vector<8x256xf32>
    %374 = arith.addf %325, %373 : vector<8x256xf32>
    %c1_172 = arith.constant 1 : index
    %c3_173 = arith.constant 3 : index
    %375 = memref.load %arg12[%c1_172, %c3_173] : memref<32x4xf32, #tpu.memory_space<smem>>
    %376 = vector.broadcast %375 : f32 to vector<8x256xf32>
    %377 = arith.mulf %362, %376 : vector<8x256xf32>
    %378 = arith.addf %329, %377 : vector<8x256xf32>
    %c0_174 = arith.constant 0 : index
    %c2_175 = arith.constant 2 : index
    %379 = memref.load %arg8[%c0_174, %c2_175] : memref<4x32xf32, #tpu.memory_space<smem>>
    %380 = vector.broadcast %379 : f32 to vector<8x256xf32>
    %381 = arith.mulf %214, %380 : vector<8x256xf32>
    %c1_176 = arith.constant 1 : index
    %c2_177 = arith.constant 2 : index
    %382 = memref.load %arg8[%c1_176, %c2_177] : memref<4x32xf32, #tpu.memory_space<smem>>
    %383 = vector.broadcast %382 : f32 to vector<8x256xf32>
    %384 = arith.mulf %219, %383 : vector<8x256xf32>
    %385 = arith.addf %381, %384 : vector<8x256xf32>
    %c2_178 = arith.constant 2 : index
    %c2_179 = arith.constant 2 : index
    %386 = memref.load %arg8[%c2_178, %c2_179] : memref<4x32xf32, #tpu.memory_space<smem>>
    %387 = vector.broadcast %386 : f32 to vector<8x256xf32>
    %388 = arith.mulf %224, %387 : vector<8x256xf32>
    %389 = arith.addf %385, %388 : vector<8x256xf32>
    %c3_180 = arith.constant 3 : index
    %c2_181 = arith.constant 2 : index
    %390 = memref.load %arg8[%c3_180, %c2_181] : memref<4x32xf32, #tpu.memory_space<smem>>
    %391 = vector.broadcast %390 : f32 to vector<8x256xf32>
    %392 = arith.mulf %229, %391 : vector<8x256xf32>
    %393 = arith.addf %389, %392 : vector<8x256xf32>
    %c2_182 = arith.constant 2 : index
    %c0_183 = arith.constant 0 : index
    %394 = vector.load %arg15[%c2_182, %c0_183] : memref<32x256xf32, #tpu.memory_space<vmem>>, vector<1x256xf32>
    %395 = vector.shape_cast %394 : vector<1x256xf32> to vector<256xf32>
    %396 = vector.shape_cast %395 : vector<256xf32> to vector<1x256xf32>
    %397 = vector.broadcast %396 : vector<1x256xf32> to vector<8x256xf32>
    %398 = arith.addf %393, %397 : vector<8x256xf32>
    %399 = arith.mulf %398, %398 : vector<8x256xf32>
    %400 = arith.mulf %398, %399 : vector<8x256xf32>
    %cst_184 = arith.constant 4.471500e-02 : f32
    %401 = vector.broadcast %cst_184 : f32 to vector<8x256xf32>
    %402 = arith.mulf %401, %400 : vector<8x256xf32>
    %403 = arith.addf %398, %402 : vector<8x256xf32>
    %cst_185 = arith.constant 0.797884583 : f32
    %404 = vector.broadcast %cst_185 : f32 to vector<8x256xf32>
    %405 = arith.mulf %404, %403 : vector<8x256xf32>
    %406 = math.tanh %405 : vector<8x256xf32>
    %cst_186 = arith.constant 1.000000e+00 : f32
    %407 = vector.broadcast %cst_186 : f32 to vector<8x256xf32>
    %408 = arith.addf %407, %406 : vector<8x256xf32>
    %cst_187 = arith.constant 5.000000e-01 : f32
    %409 = vector.broadcast %cst_187 : f32 to vector<8x256xf32>
    %410 = arith.mulf %409, %408 : vector<8x256xf32>
    %411 = arith.mulf %398, %410 : vector<8x256xf32>
    %c2_188 = arith.constant 2 : index
    %c0_189 = arith.constant 0 : index
    %412 = memref.load %arg12[%c2_188, %c0_189] : memref<32x4xf32, #tpu.memory_space<smem>>
    %413 = vector.broadcast %412 : f32 to vector<8x256xf32>
    %414 = arith.mulf %411, %413 : vector<8x256xf32>
    %415 = arith.addf %366, %414 : vector<8x256xf32>
    %c2_190 = arith.constant 2 : index
    %c1_191 = arith.constant 1 : index
    %416 = memref.load %arg12[%c2_190, %c1_191] : memref<32x4xf32, #tpu.memory_space<smem>>
    %417 = vector.broadcast %416 : f32 to vector<8x256xf32>
    %418 = arith.mulf %411, %417 : vector<8x256xf32>
    %419 = arith.addf %370, %418 : vector<8x256xf32>
    %c2_192 = arith.constant 2 : index
    %c2_193 = arith.constant 2 : index
    %420 = memref.load %arg12[%c2_192, %c2_193] : memref<32x4xf32, #tpu.memory_space<smem>>
    %421 = vector.broadcast %420 : f32 to vector<8x256xf32>
    %422 = arith.mulf %411, %421 : vector<8x256xf32>
    %423 = arith.addf %374, %422 : vector<8x256xf32>
    %c2_194 = arith.constant 2 : index
    %c3_195 = arith.constant 3 : index
    %424 = memref.load %arg12[%c2_194, %c3_195] : memref<32x4xf32, #tpu.memory_space<smem>>
    %425 = vector.broadcast %424 : f32 to vector<8x256xf32>
    %426 = arith.mulf %411, %425 : vector<8x256xf32>
    %427 = arith.addf %378, %426 : vector<8x256xf32>
    %c0_196 = arith.constant 0 : index
    %c3_197 = arith.constant 3 : index
    %428 = memref.load %arg8[%c0_196, %c3_197] : memref<4x32xf32, #tpu.memory_space<smem>>
    %429 = vector.broadcast %428 : f32 to vector<8x256xf32>
    %430 = arith.mulf %214, %429 : vector<8x256xf32>
    %c1_198 = arith.constant 1 : index
    %c3_199 = arith.constant 3 : index
    %431 = memref.load %arg8[%c1_198, %c3_199] : memref<4x32xf32, #tpu.memory_space<smem>>
    %432 = vector.broadcast %431 : f32 to vector<8x256xf32>
    %433 = arith.mulf %219, %432 : vector<8x256xf32>
    %434 = arith.addf %430, %433 : vector<8x256xf32>
    %c2_200 = arith.constant 2 : index
    %c3_201 = arith.constant 3 : index
    %435 = memref.load %arg8[%c2_200, %c3_201] : memref<4x32xf32, #tpu.memory_space<smem>>
    %436 = vector.broadcast %435 : f32 to vector<8x256xf32>
    %437 = arith.mulf %224, %436 : vector<8x256xf32>
    %438 = arith.addf %434, %437 : vector<8x256xf32>
    %c3_202 = arith.constant 3 : index
    %c3_203 = arith.constant 3 : index
    %439 = memref.load %arg8[%c3_202, %c3_203] : memref<4x32xf32, #tpu.memory_space<smem>>
    %440 = vector.broadcast %439 : f32 to vector<8x256xf32>
    %441 = arith.mulf %229, %440 : vector<8x256xf32>
    %442 = arith.addf %438, %441 : vector<8x256xf32>
    %c3_204 = arith.constant 3 : index
    %c0_205 = arith.constant 0 : index
    %443 = vector.load %arg15[%c3_204, %c0_205] : memref<32x256xf32, #tpu.memory_space<vmem>>, vector<1x256xf32>
    %444 = vector.shape_cast %443 : vector<1x256xf32> to vector<256xf32>
    %445 = vector.shape_cast %444 : vector<256xf32> to vector<1x256xf32>
    %446 = vector.broadcast %445 : vector<1x256xf32> to vector<8x256xf32>
    %447 = arith.addf %442, %446 : vector<8x256xf32>
    %448 = arith.mulf %447, %447 : vector<8x256xf32>
    %449 = arith.mulf %447, %448 : vector<8x256xf32>
    %cst_206 = arith.constant 4.471500e-02 : f32
    %450 = vector.broadcast %cst_206 : f32 to vector<8x256xf32>
    %451 = arith.mulf %450, %449 : vector<8x256xf32>
    %452 = arith.addf %447, %451 : vector<8x256xf32>
    %cst_207 = arith.constant 0.797884583 : f32
    %453 = vector.broadcast %cst_207 : f32 to vector<8x256xf32>
    %454 = arith.mulf %453, %452 : vector<8x256xf32>
    %455 = math.tanh %454 : vector<8x256xf32>
    %cst_208 = arith.constant 1.000000e+00 : f32
    %456 = vector.broadcast %cst_208 : f32 to vector<8x256xf32>
    %457 = arith.addf %456, %455 : vector<8x256xf32>
    %cst_209 = arith.constant 5.000000e-01 : f32
    %458 = vector.broadcast %cst_209 : f32 to vector<8x256xf32>
    %459 = arith.mulf %458, %457 : vector<8x256xf32>
    %460 = arith.mulf %447, %459 : vector<8x256xf32>
    %c3_210 = arith.constant 3 : index
    %c0_211 = arith.constant 0 : index
    %461 = memref.load %arg12[%c3_210, %c0_211] : memref<32x4xf32, #tpu.memory_space<smem>>
    %462 = vector.broadcast %461 : f32 to vector<8x256xf32>
    %463 = arith.mulf %460, %462 : vector<8x256xf32>
    %464 = arith.addf %415, %463 : vector<8x256xf32>
    %c3_212 = arith.constant 3 : index
    %c1_213 = arith.constant 1 : index
    %465 = memref.load %arg12[%c3_212, %c1_213] : memref<32x4xf32, #tpu.memory_space<smem>>
    %466 = vector.broadcast %465 : f32 to vector<8x256xf32>
    %467 = arith.mulf %460, %466 : vector<8x256xf32>
    %468 = arith.addf %419, %467 : vector<8x256xf32>
    %c3_214 = arith.constant 3 : index
    %c2_215 = arith.constant 2 : index
    %469 = memref.load %arg12[%c3_214, %c2_215] : memref<32x4xf32, #tpu.memory_space<smem>>
    %470 = vector.broadcast %469 : f32 to vector<8x256xf32>
    %471 = arith.mulf %460, %470 : vector<8x256xf32>
    %472 = arith.addf %423, %471 : vector<8x256xf32>
    %c3_216 = arith.constant 3 : index
    %c3_217 = arith.constant 3 : index
    %473 = memref.load %arg12[%c3_216, %c3_217] : memref<32x4xf32, #tpu.memory_space<smem>>
    %474 = vector.broadcast %473 : f32 to vector<8x256xf32>
    %475 = arith.mulf %460, %474 : vector<8x256xf32>
    %476 = arith.addf %427, %475 : vector<8x256xf32>
    %c0_218 = arith.constant 0 : index
    %c4_219 = arith.constant 4 : index
    %477 = memref.load %arg8[%c0_218, %c4_219] : memref<4x32xf32, #tpu.memory_space<smem>>
    %478 = vector.broadcast %477 : f32 to vector<8x256xf32>
    %479 = arith.mulf %214, %478 : vector<8x256xf32>
    %c1_220 = arith.constant 1 : index
    %c4_221 = arith.constant 4 : index
    %480 = memref.load %arg8[%c1_220, %c4_221] : memref<4x32xf32, #tpu.memory_space<smem>>
    %481 = vector.broadcast %480 : f32 to vector<8x256xf32>
    %482 = arith.mulf %219, %481 : vector<8x256xf32>
    %483 = arith.addf %479, %482 : vector<8x256xf32>
    %c2_222 = arith.constant 2 : index
    %c4_223 = arith.constant 4 : index
    %484 = memref.load %arg8[%c2_222, %c4_223] : memref<4x32xf32, #tpu.memory_space<smem>>
    %485 = vector.broadcast %484 : f32 to vector<8x256xf32>
    %486 = arith.mulf %224, %485 : vector<8x256xf32>
    %487 = arith.addf %483, %486 : vector<8x256xf32>
    %c3_224 = arith.constant 3 : index
    %c4_225 = arith.constant 4 : index
    %488 = memref.load %arg8[%c3_224, %c4_225] : memref<4x32xf32, #tpu.memory_space<smem>>
    %489 = vector.broadcast %488 : f32 to vector<8x256xf32>
    %490 = arith.mulf %229, %489 : vector<8x256xf32>
    %491 = arith.addf %487, %490 : vector<8x256xf32>
    %c4_226 = arith.constant 4 : index
    %c0_227 = arith.constant 0 : index
    %492 = vector.load %arg15[%c4_226, %c0_227] : memref<32x256xf32, #tpu.memory_space<vmem>>, vector<1x256xf32>
    %493 = vector.shape_cast %492 : vector<1x256xf32> to vector<256xf32>
    %494 = vector.shape_cast %493 : vector<256xf32> to vector<1x256xf32>
    %495 = vector.broadcast %494 : vector<1x256xf32> to vector<8x256xf32>
    %496 = arith.addf %491, %495 : vector<8x256xf32>
    %497 = arith.mulf %496, %496 : vector<8x256xf32>
    %498 = arith.mulf %496, %497 : vector<8x256xf32>
    %cst_228 = arith.constant 4.471500e-02 : f32
    %499 = vector.broadcast %cst_228 : f32 to vector<8x256xf32>
    %500 = arith.mulf %499, %498 : vector<8x256xf32>
    %501 = arith.addf %496, %500 : vector<8x256xf32>
    %cst_229 = arith.constant 0.797884583 : f32
    %502 = vector.broadcast %cst_229 : f32 to vector<8x256xf32>
    %503 = arith.mulf %502, %501 : vector<8x256xf32>
    %504 = math.tanh %503 : vector<8x256xf32>
    %cst_230 = arith.constant 1.000000e+00 : f32
    %505 = vector.broadcast %cst_230 : f32 to vector<8x256xf32>
    %506 = arith.addf %505, %504 : vector<8x256xf32>
    %cst_231 = arith.constant 5.000000e-01 : f32
    %507 = vector.broadcast %cst_231 : f32 to vector<8x256xf32>
    %508 = arith.mulf %507, %506 : vector<8x256xf32>
    %509 = arith.mulf %496, %508 : vector<8x256xf32>
    %c4_232 = arith.constant 4 : index
    %c0_233 = arith.constant 0 : index
    %510 = memref.load %arg12[%c4_232, %c0_233] : memref<32x4xf32, #tpu.memory_space<smem>>
    %511 = vector.broadcast %510 : f32 to vector<8x256xf32>
    %512 = arith.mulf %509, %511 : vector<8x256xf32>
    %513 = arith.addf %464, %512 : vector<8x256xf32>
    %c4_234 = arith.constant 4 : index
    %c1_235 = arith.constant 1 : index
    %514 = memref.load %arg12[%c4_234, %c1_235] : memref<32x4xf32, #tpu.memory_space<smem>>
    %515 = vector.broadcast %514 : f32 to vector<8x256xf32>
    %516 = arith.mulf %509, %515 : vector<8x256xf32>
    %517 = arith.addf %468, %516 : vector<8x256xf32>
    %c4_236 = arith.constant 4 : index
    %c2_237 = arith.constant 2 : index
    %518 = memref.load %arg12[%c4_236, %c2_237] : memref<32x4xf32, #tpu.memory_space<smem>>
    %519 = vector.broadcast %518 : f32 to vector<8x256xf32>
    %520 = arith.mulf %509, %519 : vector<8x256xf32>
    %521 = arith.addf %472, %520 : vector<8x256xf32>
    %c4_238 = arith.constant 4 : index
    %c3_239 = arith.constant 3 : index
    %522 = memref.load %arg12[%c4_238, %c3_239] : memref<32x4xf32, #tpu.memory_space<smem>>
    %523 = vector.broadcast %522 : f32 to vector<8x256xf32>
    %524 = arith.mulf %509, %523 : vector<8x256xf32>
    %525 = arith.addf %476, %524 : vector<8x256xf32>
    %c0_240 = arith.constant 0 : index
    %c5_241 = arith.constant 5 : index
    %526 = memref.load %arg8[%c0_240, %c5_241] : memref<4x32xf32, #tpu.memory_space<smem>>
    %527 = vector.broadcast %526 : f32 to vector<8x256xf32>
    %528 = arith.mulf %214, %527 : vector<8x256xf32>
    %c1_242 = arith.constant 1 : index
    %c5_243 = arith.constant 5 : index
    %529 = memref.load %arg8[%c1_242, %c5_243] : memref<4x32xf32, #tpu.memory_space<smem>>
    %530 = vector.broadcast %529 : f32 to vector<8x256xf32>
    %531 = arith.mulf %219, %530 : vector<8x256xf32>
    %532 = arith.addf %528, %531 : vector<8x256xf32>
    %c2_244 = arith.constant 2 : index
    %c5_245 = arith.constant 5 : index
    %533 = memref.load %arg8[%c2_244, %c5_245] : memref<4x32xf32, #tpu.memory_space<smem>>
    %534 = vector.broadcast %533 : f32 to vector<8x256xf32>
    %535 = arith.mulf %224, %534 : vector<8x256xf32>
    %536 = arith.addf %532, %535 : vector<8x256xf32>
    %c3_246 = arith.constant 3 : index
    %c5_247 = arith.constant 5 : index
    %537 = memref.load %arg8[%c3_246, %c5_247] : memref<4x32xf32, #tpu.memory_space<smem>>
    %538 = vector.broadcast %537 : f32 to vector<8x256xf32>
    %539 = arith.mulf %229, %538 : vector<8x256xf32>
    %540 = arith.addf %536, %539 : vector<8x256xf32>
    %c5_248 = arith.constant 5 : index
    %c0_249 = arith.constant 0 : index
    %541 = vector.load %arg15[%c5_248, %c0_249] : memref<32x256xf32, #tpu.memory_space<vmem>>, vector<1x256xf32>
    %542 = vector.shape_cast %541 : vector<1x256xf32> to vector<256xf32>
    %543 = vector.shape_cast %542 : vector<256xf32> to vector<1x256xf32>
    %544 = vector.broadcast %543 : vector<1x256xf32> to vector<8x256xf32>
    %545 = arith.addf %540, %544 : vector<8x256xf32>
    %546 = arith.mulf %545, %545 : vector<8x256xf32>
    %547 = arith.mulf %545, %546 : vector<8x256xf32>
    %cst_250 = arith.constant 4.471500e-02 : f32
    %548 = vector.broadcast %cst_250 : f32 to vector<8x256xf32>
    %549 = arith.mulf %548, %547 : vector<8x256xf32>
    %550 = arith.addf %545, %549 : vector<8x256xf32>
    %cst_251 = arith.constant 0.797884583 : f32
    %551 = vector.broadcast %cst_251 : f32 to vector<8x256xf32>
    %552 = arith.mulf %551, %550 : vector<8x256xf32>
    %553 = math.tanh %552 : vector<8x256xf32>
    %cst_252 = arith.constant 1.000000e+00 : f32
    %554 = vector.broadcast %cst_252 : f32 to vector<8x256xf32>
    %555 = arith.addf %554, %553 : vector<8x256xf32>
    %cst_253 = arith.constant 5.000000e-01 : f32
    %556 = vector.broadcast %cst_253 : f32 to vector<8x256xf32>
    %557 = arith.mulf %556, %555 : vector<8x256xf32>
    %558 = arith.mulf %545, %557 : vector<8x256xf32>
    %c5_254 = arith.constant 5 : index
    %c0_255 = arith.constant 0 : index
    %559 = memref.load %arg12[%c5_254, %c0_255] : memref<32x4xf32, #tpu.memory_space<smem>>
    %560 = vector.broadcast %559 : f32 to vector<8x256xf32>
    %561 = arith.mulf %558, %560 : vector<8x256xf32>
    %562 = arith.addf %513, %561 : vector<8x256xf32>
    %c5_256 = arith.constant 5 : index
    %c1_257 = arith.constant 1 : index
    %563 = memref.load %arg12[%c5_256, %c1_257] : memref<32x4xf32, #tpu.memory_space<smem>>
    %564 = vector.broadcast %563 : f32 to vector<8x256xf32>
    %565 = arith.mulf %558, %564 : vector<8x256xf32>
    %566 = arith.addf %517, %565 : vector<8x256xf32>
    %c5_258 = arith.constant 5 : index
    %c2_259 = arith.constant 2 : index
    %567 = memref.load %arg12[%c5_258, %c2_259] : memref<32x4xf32, #tpu.memory_space<smem>>
    %568 = vector.broadcast %567 : f32 to vector<8x256xf32>
    %569 = arith.mulf %558, %568 : vector<8x256xf32>
    %570 = arith.addf %521, %569 : vector<8x256xf32>
    %c5_260 = arith.constant 5 : index
    %c3_261 = arith.constant 3 : index
    %571 = memref.load %arg12[%c5_260, %c3_261] : memref<32x4xf32, #tpu.memory_space<smem>>
    %572 = vector.broadcast %571 : f32 to vector<8x256xf32>
    %573 = arith.mulf %558, %572 : vector<8x256xf32>
    %574 = arith.addf %525, %573 : vector<8x256xf32>
    %c0_262 = arith.constant 0 : index
    %c6_263 = arith.constant 6 : index
    %575 = memref.load %arg8[%c0_262, %c6_263] : memref<4x32xf32, #tpu.memory_space<smem>>
    %576 = vector.broadcast %575 : f32 to vector<8x256xf32>
    %577 = arith.mulf %214, %576 : vector<8x256xf32>
    %c1_264 = arith.constant 1 : index
    %c6_265 = arith.constant 6 : index
    %578 = memref.load %arg8[%c1_264, %c6_265] : memref<4x32xf32, #tpu.memory_space<smem>>
    %579 = vector.broadcast %578 : f32 to vector<8x256xf32>
    %580 = arith.mulf %219, %579 : vector<8x256xf32>
    %581 = arith.addf %577, %580 : vector<8x256xf32>
    %c2_266 = arith.constant 2 : index
    %c6_267 = arith.constant 6 : index
    %582 = memref.load %arg8[%c2_266, %c6_267] : memref<4x32xf32, #tpu.memory_space<smem>>
    %583 = vector.broadcast %582 : f32 to vector<8x256xf32>
    %584 = arith.mulf %224, %583 : vector<8x256xf32>
    %585 = arith.addf %581, %584 : vector<8x256xf32>
    %c3_268 = arith.constant 3 : index
    %c6_269 = arith.constant 6 : index
    %586 = memref.load %arg8[%c3_268, %c6_269] : memref<4x32xf32, #tpu.memory_space<smem>>
    %587 = vector.broadcast %586 : f32 to vector<8x256xf32>
    %588 = arith.mulf %229, %587 : vector<8x256xf32>
    %589 = arith.addf %585, %588 : vector<8x256xf32>
    %c6_270 = arith.constant 6 : index
    %c0_271 = arith.constant 0 : index
    %590 = vector.load %arg15[%c6_270, %c0_271] : memref<32x256xf32, #tpu.memory_space<vmem>>, vector<1x256xf32>
    %591 = vector.shape_cast %590 : vector<1x256xf32> to vector<256xf32>
    %592 = vector.shape_cast %591 : vector<256xf32> to vector<1x256xf32>
    %593 = vector.broadcast %592 : vector<1x256xf32> to vector<8x256xf32>
    %594 = arith.addf %589, %593 : vector<8x256xf32>
    %595 = arith.mulf %594, %594 : vector<8x256xf32>
    %596 = arith.mulf %594, %595 : vector<8x256xf32>
    %cst_272 = arith.constant 4.471500e-02 : f32
    %597 = vector.broadcast %cst_272 : f32 to vector<8x256xf32>
    %598 = arith.mulf %597, %596 : vector<8x256xf32>
    %599 = arith.addf %594, %598 : vector<8x256xf32>
    %cst_273 = arith.constant 0.797884583 : f32
    %600 = vector.broadcast %cst_273 : f32 to vector<8x256xf32>
    %601 = arith.mulf %600, %599 : vector<8x256xf32>
    %602 = math.tanh %601 : vector<8x256xf32>
    %cst_274 = arith.constant 1.000000e+00 : f32
    %603 = vector.broadcast %cst_274 : f32 to vector<8x256xf32>
    %604 = arith.addf %603, %602 : vector<8x256xf32>
    %cst_275 = arith.constant 5.000000e-01 : f32
    %605 = vector.broadcast %cst_275 : f32 to vector<8x256xf32>
    %606 = arith.mulf %605, %604 : vector<8x256xf32>
    %607 = arith.mulf %594, %606 : vector<8x256xf32>
    %c6_276 = arith.constant 6 : index
    %c0_277 = arith.constant 0 : index
    %608 = memref.load %arg12[%c6_276, %c0_277] : memref<32x4xf32, #tpu.memory_space<smem>>
    %609 = vector.broadcast %608 : f32 to vector<8x256xf32>
    %610 = arith.mulf %607, %609 : vector<8x256xf32>
    %611 = arith.addf %562, %610 : vector<8x256xf32>
    %c6_278 = arith.constant 6 : index
    %c1_279 = arith.constant 1 : index
    %612 = memref.load %arg12[%c6_278, %c1_279] : memref<32x4xf32, #tpu.memory_space<smem>>
    %613 = vector.broadcast %612 : f32 to vector<8x256xf32>
    %614 = arith.mulf %607, %613 : vector<8x256xf32>
    %615 = arith.addf %566, %614 : vector<8x256xf32>
    %c6_280 = arith.constant 6 : index
    %c2_281 = arith.constant 2 : index
    %616 = memref.load %arg12[%c6_280, %c2_281] : memref<32x4xf32, #tpu.memory_space<smem>>
    %617 = vector.broadcast %616 : f32 to vector<8x256xf32>
    %618 = arith.mulf %607, %617 : vector<8x256xf32>
    %619 = arith.addf %570, %618 : vector<8x256xf32>
    %c6_282 = arith.constant 6 : index
    %c3_283 = arith.constant 3 : index
    %620 = memref.load %arg12[%c6_282, %c3_283] : memref<32x4xf32, #tpu.memory_space<smem>>
    %621 = vector.broadcast %620 : f32 to vector<8x256xf32>
    %622 = arith.mulf %607, %621 : vector<8x256xf32>
    %623 = arith.addf %574, %622 : vector<8x256xf32>
    %c0_284 = arith.constant 0 : index
    %c7_285 = arith.constant 7 : index
    %624 = memref.load %arg8[%c0_284, %c7_285] : memref<4x32xf32, #tpu.memory_space<smem>>
    %625 = vector.broadcast %624 : f32 to vector<8x256xf32>
    %626 = arith.mulf %214, %625 : vector<8x256xf32>
    %c1_286 = arith.constant 1 : index
    %c7_287 = arith.constant 7 : index
    %627 = memref.load %arg8[%c1_286, %c7_287] : memref<4x32xf32, #tpu.memory_space<smem>>
    %628 = vector.broadcast %627 : f32 to vector<8x256xf32>
    %629 = arith.mulf %219, %628 : vector<8x256xf32>
    %630 = arith.addf %626, %629 : vector<8x256xf32>
    %c2_288 = arith.constant 2 : index
    %c7_289 = arith.constant 7 : index
    %631 = memref.load %arg8[%c2_288, %c7_289] : memref<4x32xf32, #tpu.memory_space<smem>>
    %632 = vector.broadcast %631 : f32 to vector<8x256xf32>
    %633 = arith.mulf %224, %632 : vector<8x256xf32>
    %634 = arith.addf %630, %633 : vector<8x256xf32>
    %c3_290 = arith.constant 3 : index
    %c7_291 = arith.constant 7 : index
    %635 = memref.load %arg8[%c3_290, %c7_291] : memref<4x32xf32, #tpu.memory_space<smem>>
    %636 = vector.broadcast %635 : f32 to vector<8x256xf32>
    %637 = arith.mulf %229, %636 : vector<8x256xf32>
    %638 = arith.addf %634, %637 : vector<8x256xf32>
    %c7_292 = arith.constant 7 : index
    %c0_293 = arith.constant 0 : index
    %639 = vector.load %arg15[%c7_292, %c0_293] : memref<32x256xf32, #tpu.memory_space<vmem>>, vector<1x256xf32>
    %640 = vector.shape_cast %639 : vector<1x256xf32> to vector<256xf32>
    %641 = vector.shape_cast %640 : vector<256xf32> to vector<1x256xf32>
    %642 = vector.broadcast %641 : vector<1x256xf32> to vector<8x256xf32>
    %643 = arith.addf %638, %642 : vector<8x256xf32>
    %644 = arith.mulf %643, %643 : vector<8x256xf32>
    %645 = arith.mulf %643, %644 : vector<8x256xf32>
    %cst_294 = arith.constant 4.471500e-02 : f32
    %646 = vector.broadcast %cst_294 : f32 to vector<8x256xf32>
    %647 = arith.mulf %646, %645 : vector<8x256xf32>
    %648 = arith.addf %643, %647 : vector<8x256xf32>
    %cst_295 = arith.constant 0.797884583 : f32
    %649 = vector.broadcast %cst_295 : f32 to vector<8x256xf32>
    %650 = arith.mulf %649, %648 : vector<8x256xf32>
    %651 = math.tanh %650 : vector<8x256xf32>
    %cst_296 = arith.constant 1.000000e+00 : f32
    %652 = vector.broadcast %cst_296 : f32 to vector<8x256xf32>
    %653 = arith.addf %652, %651 : vector<8x256xf32>
    %cst_297 = arith.constant 5.000000e-01 : f32
    %654 = vector.broadcast %cst_297 : f32 to vector<8x256xf32>
    %655 = arith.mulf %654, %653 : vector<8x256xf32>
    %656 = arith.mulf %643, %655 : vector<8x256xf32>
    %c7_298 = arith.constant 7 : index
    %c0_299 = arith.constant 0 : index
    %657 = memref.load %arg12[%c7_298, %c0_299] : memref<32x4xf32, #tpu.memory_space<smem>>
    %658 = vector.broadcast %657 : f32 to vector<8x256xf32>
    %659 = arith.mulf %656, %658 : vector<8x256xf32>
    %660 = arith.addf %611, %659 : vector<8x256xf32>
    %c7_300 = arith.constant 7 : index
    %c1_301 = arith.constant 1 : index
    %661 = memref.load %arg12[%c7_300, %c1_301] : memref<32x4xf32, #tpu.memory_space<smem>>
    %662 = vector.broadcast %661 : f32 to vector<8x256xf32>
    %663 = arith.mulf %656, %662 : vector<8x256xf32>
    %664 = arith.addf %615, %663 : vector<8x256xf32>
    %c7_302 = arith.constant 7 : index
    %c2_303 = arith.constant 2 : index
    %665 = memref.load %arg12[%c7_302, %c2_303] : memref<32x4xf32, #tpu.memory_space<smem>>
    %666 = vector.broadcast %665 : f32 to vector<8x256xf32>
    %667 = arith.mulf %656, %666 : vector<8x256xf32>
    %668 = arith.addf %619, %667 : vector<8x256xf32>
    %c7_304 = arith.constant 7 : index
    %c3_305 = arith.constant 3 : index
    %669 = memref.load %arg12[%c7_304, %c3_305] : memref<32x4xf32, #tpu.memory_space<smem>>
    %670 = vector.broadcast %669 : f32 to vector<8x256xf32>
    %671 = arith.mulf %656, %670 : vector<8x256xf32>
    %672 = arith.addf %623, %671 : vector<8x256xf32>
    %c0_306 = arith.constant 0 : index
    %c8_307 = arith.constant 8 : index
    %673 = memref.load %arg8[%c0_306, %c8_307] : memref<4x32xf32, #tpu.memory_space<smem>>
    %674 = vector.broadcast %673 : f32 to vector<8x256xf32>
    %675 = arith.mulf %214, %674 : vector<8x256xf32>
    %c1_308 = arith.constant 1 : index
    %c8_309 = arith.constant 8 : index
    %676 = memref.load %arg8[%c1_308, %c8_309] : memref<4x32xf32, #tpu.memory_space<smem>>
    %677 = vector.broadcast %676 : f32 to vector<8x256xf32>
    %678 = arith.mulf %219, %677 : vector<8x256xf32>
    %679 = arith.addf %675, %678 : vector<8x256xf32>
    %c2_310 = arith.constant 2 : index
    %c8_311 = arith.constant 8 : index
    %680 = memref.load %arg8[%c2_310, %c8_311] : memref<4x32xf32, #tpu.memory_space<smem>>
    %681 = vector.broadcast %680 : f32 to vector<8x256xf32>
    %682 = arith.mulf %224, %681 : vector<8x256xf32>
    %683 = arith.addf %679, %682 : vector<8x256xf32>
    %c3_312 = arith.constant 3 : index
    %c8_313 = arith.constant 8 : index
    %684 = memref.load %arg8[%c3_312, %c8_313] : memref<4x32xf32, #tpu.memory_space<smem>>
    %685 = vector.broadcast %684 : f32 to vector<8x256xf32>
    %686 = arith.mulf %229, %685 : vector<8x256xf32>
    %687 = arith.addf %683, %686 : vector<8x256xf32>
    %c8_314 = arith.constant 8 : index
    %c0_315 = arith.constant 0 : index
    %688 = vector.load %arg15[%c8_314, %c0_315] : memref<32x256xf32, #tpu.memory_space<vmem>>, vector<1x256xf32>
    %689 = vector.shape_cast %688 : vector<1x256xf32> to vector<256xf32>
    %690 = vector.shape_cast %689 : vector<256xf32> to vector<1x256xf32>
    %691 = vector.broadcast %690 : vector<1x256xf32> to vector<8x256xf32>
    %692 = arith.addf %687, %691 : vector<8x256xf32>
    %693 = arith.mulf %692, %692 : vector<8x256xf32>
    %694 = arith.mulf %692, %693 : vector<8x256xf32>
    %cst_316 = arith.constant 4.471500e-02 : f32
    %695 = vector.broadcast %cst_316 : f32 to vector<8x256xf32>
    %696 = arith.mulf %695, %694 : vector<8x256xf32>
    %697 = arith.addf %692, %696 : vector<8x256xf32>
    %cst_317 = arith.constant 0.797884583 : f32
    %698 = vector.broadcast %cst_317 : f32 to vector<8x256xf32>
    %699 = arith.mulf %698, %697 : vector<8x256xf32>
    %700 = math.tanh %699 : vector<8x256xf32>
    %cst_318 = arith.constant 1.000000e+00 : f32
    %701 = vector.broadcast %cst_318 : f32 to vector<8x256xf32>
    %702 = arith.addf %701, %700 : vector<8x256xf32>
    %cst_319 = arith.constant 5.000000e-01 : f32
    %703 = vector.broadcast %cst_319 : f32 to vector<8x256xf32>
    %704 = arith.mulf %703, %702 : vector<8x256xf32>
    %705 = arith.mulf %692, %704 : vector<8x256xf32>
    %c8_320 = arith.constant 8 : index
    %c0_321 = arith.constant 0 : index
    %706 = memref.load %arg12[%c8_320, %c0_321] : memref<32x4xf32, #tpu.memory_space<smem>>
    %707 = vector.broadcast %706 : f32 to vector<8x256xf32>
    %708 = arith.mulf %705, %707 : vector<8x256xf32>
    %709 = arith.addf %660, %708 : vector<8x256xf32>
    %c8_322 = arith.constant 8 : index
    %c1_323 = arith.constant 1 : index
    %710 = memref.load %arg12[%c8_322, %c1_323] : memref<32x4xf32, #tpu.memory_space<smem>>
    %711 = vector.broadcast %710 : f32 to vector<8x256xf32>
    %712 = arith.mulf %705, %711 : vector<8x256xf32>
    %713 = arith.addf %664, %712 : vector<8x256xf32>
    %c8_324 = arith.constant 8 : index
    %c2_325 = arith.constant 2 : index
    %714 = memref.load %arg12[%c8_324, %c2_325] : memref<32x4xf32, #tpu.memory_space<smem>>
    %715 = vector.broadcast %714 : f32 to vector<8x256xf32>
    %716 = arith.mulf %705, %715 : vector<8x256xf32>
    %717 = arith.addf %668, %716 : vector<8x256xf32>
    %c8_326 = arith.constant 8 : index
    %c3_327 = arith.constant 3 : index
    %718 = memref.load %arg12[%c8_326, %c3_327] : memref<32x4xf32, #tpu.memory_space<smem>>
    %719 = vector.broadcast %718 : f32 to vector<8x256xf32>
    %720 = arith.mulf %705, %719 : vector<8x256xf32>
    %721 = arith.addf %672, %720 : vector<8x256xf32>
    %c0_328 = arith.constant 0 : index
    %c9 = arith.constant 9 : index
    %722 = memref.load %arg8[%c0_328, %c9] : memref<4x32xf32, #tpu.memory_space<smem>>
    %723 = vector.broadcast %722 : f32 to vector<8x256xf32>
    %724 = arith.mulf %214, %723 : vector<8x256xf32>
    %c1_329 = arith.constant 1 : index
    %c9_330 = arith.constant 9 : index
    %725 = memref.load %arg8[%c1_329, %c9_330] : memref<4x32xf32, #tpu.memory_space<smem>>
    %726 = vector.broadcast %725 : f32 to vector<8x256xf32>
    %727 = arith.mulf %219, %726 : vector<8x256xf32>
    %728 = arith.addf %724, %727 : vector<8x256xf32>
    %c2_331 = arith.constant 2 : index
    %c9_332 = arith.constant 9 : index
    %729 = memref.load %arg8[%c2_331, %c9_332] : memref<4x32xf32, #tpu.memory_space<smem>>
    %730 = vector.broadcast %729 : f32 to vector<8x256xf32>
    %731 = arith.mulf %224, %730 : vector<8x256xf32>
    %732 = arith.addf %728, %731 : vector<8x256xf32>
    %c3_333 = arith.constant 3 : index
    %c9_334 = arith.constant 9 : index
    %733 = memref.load %arg8[%c3_333, %c9_334] : memref<4x32xf32, #tpu.memory_space<smem>>
    %734 = vector.broadcast %733 : f32 to vector<8x256xf32>
    %735 = arith.mulf %229, %734 : vector<8x256xf32>
    %736 = arith.addf %732, %735 : vector<8x256xf32>
    %c9_335 = arith.constant 9 : index
    %c0_336 = arith.constant 0 : index
    %737 = vector.load %arg15[%c9_335, %c0_336] : memref<32x256xf32, #tpu.memory_space<vmem>>, vector<1x256xf32>
    %738 = vector.shape_cast %737 : vector<1x256xf32> to vector<256xf32>
    %739 = vector.shape_cast %738 : vector<256xf32> to vector<1x256xf32>
    %740 = vector.broadcast %739 : vector<1x256xf32> to vector<8x256xf32>
    %741 = arith.addf %736, %740 : vector<8x256xf32>
    %742 = arith.mulf %741, %741 : vector<8x256xf32>
    %743 = arith.mulf %741, %742 : vector<8x256xf32>
    %cst_337 = arith.constant 4.471500e-02 : f32
    %744 = vector.broadcast %cst_337 : f32 to vector<8x256xf32>
    %745 = arith.mulf %744, %743 : vector<8x256xf32>
    %746 = arith.addf %741, %745 : vector<8x256xf32>
    %cst_338 = arith.constant 0.797884583 : f32
    %747 = vector.broadcast %cst_338 : f32 to vector<8x256xf32>
    %748 = arith.mulf %747, %746 : vector<8x256xf32>
    %749 = math.tanh %748 : vector<8x256xf32>
    %cst_339 = arith.constant 1.000000e+00 : f32
    %750 = vector.broadcast %cst_339 : f32 to vector<8x256xf32>
    %751 = arith.addf %750, %749 : vector<8x256xf32>
    %cst_340 = arith.constant 5.000000e-01 : f32
    %752 = vector.broadcast %cst_340 : f32 to vector<8x256xf32>
    %753 = arith.mulf %752, %751 : vector<8x256xf32>
    %754 = arith.mulf %741, %753 : vector<8x256xf32>
    %c9_341 = arith.constant 9 : index
    %c0_342 = arith.constant 0 : index
    %755 = memref.load %arg12[%c9_341, %c0_342] : memref<32x4xf32, #tpu.memory_space<smem>>
    %756 = vector.broadcast %755 : f32 to vector<8x256xf32>
    %757 = arith.mulf %754, %756 : vector<8x256xf32>
    %758 = arith.addf %709, %757 : vector<8x256xf32>
    %c9_343 = arith.constant 9 : index
    %c1_344 = arith.constant 1 : index
    %759 = memref.load %arg12[%c9_343, %c1_344] : memref<32x4xf32, #tpu.memory_space<smem>>
    %760 = vector.broadcast %759 : f32 to vector<8x256xf32>
    %761 = arith.mulf %754, %760 : vector<8x256xf32>
    %762 = arith.addf %713, %761 : vector<8x256xf32>
    %c9_345 = arith.constant 9 : index
    %c2_346 = arith.constant 2 : index
    %763 = memref.load %arg12[%c9_345, %c2_346] : memref<32x4xf32, #tpu.memory_space<smem>>
    %764 = vector.broadcast %763 : f32 to vector<8x256xf32>
    %765 = arith.mulf %754, %764 : vector<8x256xf32>
    %766 = arith.addf %717, %765 : vector<8x256xf32>
    %c9_347 = arith.constant 9 : index
    %c3_348 = arith.constant 3 : index
    %767 = memref.load %arg12[%c9_347, %c3_348] : memref<32x4xf32, #tpu.memory_space<smem>>
    %768 = vector.broadcast %767 : f32 to vector<8x256xf32>
    %769 = arith.mulf %754, %768 : vector<8x256xf32>
    %770 = arith.addf %721, %769 : vector<8x256xf32>
    %c0_349 = arith.constant 0 : index
    %c10 = arith.constant 10 : index
    %771 = memref.load %arg8[%c0_349, %c10] : memref<4x32xf32, #tpu.memory_space<smem>>
    %772 = vector.broadcast %771 : f32 to vector<8x256xf32>
    %773 = arith.mulf %214, %772 : vector<8x256xf32>
    %c1_350 = arith.constant 1 : index
    %c10_351 = arith.constant 10 : index
    %774 = memref.load %arg8[%c1_350, %c10_351] : memref<4x32xf32, #tpu.memory_space<smem>>
    %775 = vector.broadcast %774 : f32 to vector<8x256xf32>
    %776 = arith.mulf %219, %775 : vector<8x256xf32>
    %777 = arith.addf %773, %776 : vector<8x256xf32>
    %c2_352 = arith.constant 2 : index
    %c10_353 = arith.constant 10 : index
    %778 = memref.load %arg8[%c2_352, %c10_353] : memref<4x32xf32, #tpu.memory_space<smem>>
    %779 = vector.broadcast %778 : f32 to vector<8x256xf32>
    %780 = arith.mulf %224, %779 : vector<8x256xf32>
    %781 = arith.addf %777, %780 : vector<8x256xf32>
    %c3_354 = arith.constant 3 : index
    %c10_355 = arith.constant 10 : index
    %782 = memref.load %arg8[%c3_354, %c10_355] : memref<4x32xf32, #tpu.memory_space<smem>>
    %783 = vector.broadcast %782 : f32 to vector<8x256xf32>
    %784 = arith.mulf %229, %783 : vector<8x256xf32>
    %785 = arith.addf %781, %784 : vector<8x256xf32>
    %c10_356 = arith.constant 10 : index
    %c0_357 = arith.constant 0 : index
    %786 = vector.load %arg15[%c10_356, %c0_357] : memref<32x256xf32, #tpu.memory_space<vmem>>, vector<1x256xf32>
    %787 = vector.shape_cast %786 : vector<1x256xf32> to vector<256xf32>
    %788 = vector.shape_cast %787 : vector<256xf32> to vector<1x256xf32>
    %789 = vector.broadcast %788 : vector<1x256xf32> to vector<8x256xf32>
    %790 = arith.addf %785, %789 : vector<8x256xf32>
    %791 = arith.mulf %790, %790 : vector<8x256xf32>
    %792 = arith.mulf %790, %791 : vector<8x256xf32>
    %cst_358 = arith.constant 4.471500e-02 : f32
    %793 = vector.broadcast %cst_358 : f32 to vector<8x256xf32>
    %794 = arith.mulf %793, %792 : vector<8x256xf32>
    %795 = arith.addf %790, %794 : vector<8x256xf32>
    %cst_359 = arith.constant 0.797884583 : f32
    %796 = vector.broadcast %cst_359 : f32 to vector<8x256xf32>
    %797 = arith.mulf %796, %795 : vector<8x256xf32>
    %798 = math.tanh %797 : vector<8x256xf32>
    %cst_360 = arith.constant 1.000000e+00 : f32
    %799 = vector.broadcast %cst_360 : f32 to vector<8x256xf32>
    %800 = arith.addf %799, %798 : vector<8x256xf32>
    %cst_361 = arith.constant 5.000000e-01 : f32
    %801 = vector.broadcast %cst_361 : f32 to vector<8x256xf32>
    %802 = arith.mulf %801, %800 : vector<8x256xf32>
    %803 = arith.mulf %790, %802 : vector<8x256xf32>
    %c10_362 = arith.constant 10 : index
    %c0_363 = arith.constant 0 : index
    %804 = memref.load %arg12[%c10_362, %c0_363] : memref<32x4xf32, #tpu.memory_space<smem>>
    %805 = vector.broadcast %804 : f32 to vector<8x256xf32>
    %806 = arith.mulf %803, %805 : vector<8x256xf32>
    %807 = arith.addf %758, %806 : vector<8x256xf32>
    %c10_364 = arith.constant 10 : index
    %c1_365 = arith.constant 1 : index
    %808 = memref.load %arg12[%c10_364, %c1_365] : memref<32x4xf32, #tpu.memory_space<smem>>
    %809 = vector.broadcast %808 : f32 to vector<8x256xf32>
    %810 = arith.mulf %803, %809 : vector<8x256xf32>
    %811 = arith.addf %762, %810 : vector<8x256xf32>
    %c10_366 = arith.constant 10 : index
    %c2_367 = arith.constant 2 : index
    %812 = memref.load %arg12[%c10_366, %c2_367] : memref<32x4xf32, #tpu.memory_space<smem>>
    %813 = vector.broadcast %812 : f32 to vector<8x256xf32>
    %814 = arith.mulf %803, %813 : vector<8x256xf32>
    %815 = arith.addf %766, %814 : vector<8x256xf32>
    %c10_368 = arith.constant 10 : index
    %c3_369 = arith.constant 3 : index
    %816 = memref.load %arg12[%c10_368, %c3_369] : memref<32x4xf32, #tpu.memory_space<smem>>
    %817 = vector.broadcast %816 : f32 to vector<8x256xf32>
    %818 = arith.mulf %803, %817 : vector<8x256xf32>
    %819 = arith.addf %770, %818 : vector<8x256xf32>
    %c0_370 = arith.constant 0 : index
    %c11 = arith.constant 11 : index
    %820 = memref.load %arg8[%c0_370, %c11] : memref<4x32xf32, #tpu.memory_space<smem>>
    %821 = vector.broadcast %820 : f32 to vector<8x256xf32>
    %822 = arith.mulf %214, %821 : vector<8x256xf32>
    %c1_371 = arith.constant 1 : index
    %c11_372 = arith.constant 11 : index
    %823 = memref.load %arg8[%c1_371, %c11_372] : memref<4x32xf32, #tpu.memory_space<smem>>
    %824 = vector.broadcast %823 : f32 to vector<8x256xf32>
    %825 = arith.mulf %219, %824 : vector<8x256xf32>
    %826 = arith.addf %822, %825 : vector<8x256xf32>
    %c2_373 = arith.constant 2 : index
    %c11_374 = arith.constant 11 : index
    %827 = memref.load %arg8[%c2_373, %c11_374] : memref<4x32xf32, #tpu.memory_space<smem>>
    %828 = vector.broadcast %827 : f32 to vector<8x256xf32>
    %829 = arith.mulf %224, %828 : vector<8x256xf32>
    %830 = arith.addf %826, %829 : vector<8x256xf32>
    %c3_375 = arith.constant 3 : index
    %c11_376 = arith.constant 11 : index
    %831 = memref.load %arg8[%c3_375, %c11_376] : memref<4x32xf32, #tpu.memory_space<smem>>
    %832 = vector.broadcast %831 : f32 to vector<8x256xf32>
    %833 = arith.mulf %229, %832 : vector<8x256xf32>
    %834 = arith.addf %830, %833 : vector<8x256xf32>
    %c11_377 = arith.constant 11 : index
    %c0_378 = arith.constant 0 : index
    %835 = vector.load %arg15[%c11_377, %c0_378] : memref<32x256xf32, #tpu.memory_space<vmem>>, vector<1x256xf32>
    %836 = vector.shape_cast %835 : vector<1x256xf32> to vector<256xf32>
    %837 = vector.shape_cast %836 : vector<256xf32> to vector<1x256xf32>
    %838 = vector.broadcast %837 : vector<1x256xf32> to vector<8x256xf32>
    %839 = arith.addf %834, %838 : vector<8x256xf32>
    %840 = arith.mulf %839, %839 : vector<8x256xf32>
    %841 = arith.mulf %839, %840 : vector<8x256xf32>
    %cst_379 = arith.constant 4.471500e-02 : f32
    %842 = vector.broadcast %cst_379 : f32 to vector<8x256xf32>
    %843 = arith.mulf %842, %841 : vector<8x256xf32>
    %844 = arith.addf %839, %843 : vector<8x256xf32>
    %cst_380 = arith.constant 0.797884583 : f32
    %845 = vector.broadcast %cst_380 : f32 to vector<8x256xf32>
    %846 = arith.mulf %845, %844 : vector<8x256xf32>
    %847 = math.tanh %846 : vector<8x256xf32>
    %cst_381 = arith.constant 1.000000e+00 : f32
    %848 = vector.broadcast %cst_381 : f32 to vector<8x256xf32>
    %849 = arith.addf %848, %847 : vector<8x256xf32>
    %cst_382 = arith.constant 5.000000e-01 : f32
    %850 = vector.broadcast %cst_382 : f32 to vector<8x256xf32>
    %851 = arith.mulf %850, %849 : vector<8x256xf32>
    %852 = arith.mulf %839, %851 : vector<8x256xf32>
    %c11_383 = arith.constant 11 : index
    %c0_384 = arith.constant 0 : index
    %853 = memref.load %arg12[%c11_383, %c0_384] : memref<32x4xf32, #tpu.memory_space<smem>>
    %854 = vector.broadcast %853 : f32 to vector<8x256xf32>
    %855 = arith.mulf %852, %854 : vector<8x256xf32>
    %856 = arith.addf %807, %855 : vector<8x256xf32>
    %c11_385 = arith.constant 11 : index
    %c1_386 = arith.constant 1 : index
    %857 = memref.load %arg12[%c11_385, %c1_386] : memref<32x4xf32, #tpu.memory_space<smem>>
    %858 = vector.broadcast %857 : f32 to vector<8x256xf32>
    %859 = arith.mulf %852, %858 : vector<8x256xf32>
    %860 = arith.addf %811, %859 : vector<8x256xf32>
    %c11_387 = arith.constant 11 : index
    %c2_388 = arith.constant 2 : index
    %861 = memref.load %arg12[%c11_387, %c2_388] : memref<32x4xf32, #tpu.memory_space<smem>>
    %862 = vector.broadcast %861 : f32 to vector<8x256xf32>
    %863 = arith.mulf %852, %862 : vector<8x256xf32>
    %864 = arith.addf %815, %863 : vector<8x256xf32>
    %c11_389 = arith.constant 11 : index
    %c3_390 = arith.constant 3 : index
    %865 = memref.load %arg12[%c11_389, %c3_390] : memref<32x4xf32, #tpu.memory_space<smem>>
    %866 = vector.broadcast %865 : f32 to vector<8x256xf32>
    %867 = arith.mulf %852, %866 : vector<8x256xf32>
    %868 = arith.addf %819, %867 : vector<8x256xf32>
    %c0_391 = arith.constant 0 : index
    %c12 = arith.constant 12 : index
    %869 = memref.load %arg8[%c0_391, %c12] : memref<4x32xf32, #tpu.memory_space<smem>>
    %870 = vector.broadcast %869 : f32 to vector<8x256xf32>
    %871 = arith.mulf %214, %870 : vector<8x256xf32>
    %c1_392 = arith.constant 1 : index
    %c12_393 = arith.constant 12 : index
    %872 = memref.load %arg8[%c1_392, %c12_393] : memref<4x32xf32, #tpu.memory_space<smem>>
    %873 = vector.broadcast %872 : f32 to vector<8x256xf32>
    %874 = arith.mulf %219, %873 : vector<8x256xf32>
    %875 = arith.addf %871, %874 : vector<8x256xf32>
    %c2_394 = arith.constant 2 : index
    %c12_395 = arith.constant 12 : index
    %876 = memref.load %arg8[%c2_394, %c12_395] : memref<4x32xf32, #tpu.memory_space<smem>>
    %877 = vector.broadcast %876 : f32 to vector<8x256xf32>
    %878 = arith.mulf %224, %877 : vector<8x256xf32>
    %879 = arith.addf %875, %878 : vector<8x256xf32>
    %c3_396 = arith.constant 3 : index
    %c12_397 = arith.constant 12 : index
    %880 = memref.load %arg8[%c3_396, %c12_397] : memref<4x32xf32, #tpu.memory_space<smem>>
    %881 = vector.broadcast %880 : f32 to vector<8x256xf32>
    %882 = arith.mulf %229, %881 : vector<8x256xf32>
    %883 = arith.addf %879, %882 : vector<8x256xf32>
    %c12_398 = arith.constant 12 : index
    %c0_399 = arith.constant 0 : index
    %884 = vector.load %arg15[%c12_398, %c0_399] : memref<32x256xf32, #tpu.memory_space<vmem>>, vector<1x256xf32>
    %885 = vector.shape_cast %884 : vector<1x256xf32> to vector<256xf32>
    %886 = vector.shape_cast %885 : vector<256xf32> to vector<1x256xf32>
    %887 = vector.broadcast %886 : vector<1x256xf32> to vector<8x256xf32>
    %888 = arith.addf %883, %887 : vector<8x256xf32>
    %889 = arith.mulf %888, %888 : vector<8x256xf32>
    %890 = arith.mulf %888, %889 : vector<8x256xf32>
    %cst_400 = arith.constant 4.471500e-02 : f32
    %891 = vector.broadcast %cst_400 : f32 to vector<8x256xf32>
    %892 = arith.mulf %891, %890 : vector<8x256xf32>
    %893 = arith.addf %888, %892 : vector<8x256xf32>
    %cst_401 = arith.constant 0.797884583 : f32
    %894 = vector.broadcast %cst_401 : f32 to vector<8x256xf32>
    %895 = arith.mulf %894, %893 : vector<8x256xf32>
    %896 = math.tanh %895 : vector<8x256xf32>
    %cst_402 = arith.constant 1.000000e+00 : f32
    %897 = vector.broadcast %cst_402 : f32 to vector<8x256xf32>
    %898 = arith.addf %897, %896 : vector<8x256xf32>
    %cst_403 = arith.constant 5.000000e-01 : f32
    %899 = vector.broadcast %cst_403 : f32 to vector<8x256xf32>
    %900 = arith.mulf %899, %898 : vector<8x256xf32>
    %901 = arith.mulf %888, %900 : vector<8x256xf32>
    %c12_404 = arith.constant 12 : index
    %c0_405 = arith.constant 0 : index
    %902 = memref.load %arg12[%c12_404, %c0_405] : memref<32x4xf32, #tpu.memory_space<smem>>
    %903 = vector.broadcast %902 : f32 to vector<8x256xf32>
    %904 = arith.mulf %901, %903 : vector<8x256xf32>
    %905 = arith.addf %856, %904 : vector<8x256xf32>
    %c12_406 = arith.constant 12 : index
    %c1_407 = arith.constant 1 : index
    %906 = memref.load %arg12[%c12_406, %c1_407] : memref<32x4xf32, #tpu.memory_space<smem>>
    %907 = vector.broadcast %906 : f32 to vector<8x256xf32>
    %908 = arith.mulf %901, %907 : vector<8x256xf32>
    %909 = arith.addf %860, %908 : vector<8x256xf32>
    %c12_408 = arith.constant 12 : index
    %c2_409 = arith.constant 2 : index
    %910 = memref.load %arg12[%c12_408, %c2_409] : memref<32x4xf32, #tpu.memory_space<smem>>
    %911 = vector.broadcast %910 : f32 to vector<8x256xf32>
    %912 = arith.mulf %901, %911 : vector<8x256xf32>
    %913 = arith.addf %864, %912 : vector<8x256xf32>
    %c12_410 = arith.constant 12 : index
    %c3_411 = arith.constant 3 : index
    %914 = memref.load %arg12[%c12_410, %c3_411] : memref<32x4xf32, #tpu.memory_space<smem>>
    %915 = vector.broadcast %914 : f32 to vector<8x256xf32>
    %916 = arith.mulf %901, %915 : vector<8x256xf32>
    %917 = arith.addf %868, %916 : vector<8x256xf32>
    %c0_412 = arith.constant 0 : index
    %c13 = arith.constant 13 : index
    %918 = memref.load %arg8[%c0_412, %c13] : memref<4x32xf32, #tpu.memory_space<smem>>
    %919 = vector.broadcast %918 : f32 to vector<8x256xf32>
    %920 = arith.mulf %214, %919 : vector<8x256xf32>
    %c1_413 = arith.constant 1 : index
    %c13_414 = arith.constant 13 : index
    %921 = memref.load %arg8[%c1_413, %c13_414] : memref<4x32xf32, #tpu.memory_space<smem>>
    %922 = vector.broadcast %921 : f32 to vector<8x256xf32>
    %923 = arith.mulf %219, %922 : vector<8x256xf32>
    %924 = arith.addf %920, %923 : vector<8x256xf32>
    %c2_415 = arith.constant 2 : index
    %c13_416 = arith.constant 13 : index
    %925 = memref.load %arg8[%c2_415, %c13_416] : memref<4x32xf32, #tpu.memory_space<smem>>
    %926 = vector.broadcast %925 : f32 to vector<8x256xf32>
    %927 = arith.mulf %224, %926 : vector<8x256xf32>
    %928 = arith.addf %924, %927 : vector<8x256xf32>
    %c3_417 = arith.constant 3 : index
    %c13_418 = arith.constant 13 : index
    %929 = memref.load %arg8[%c3_417, %c13_418] : memref<4x32xf32, #tpu.memory_space<smem>>
    %930 = vector.broadcast %929 : f32 to vector<8x256xf32>
    %931 = arith.mulf %229, %930 : vector<8x256xf32>
    %932 = arith.addf %928, %931 : vector<8x256xf32>
    %c13_419 = arith.constant 13 : index
    %c0_420 = arith.constant 0 : index
    %933 = vector.load %arg15[%c13_419, %c0_420] : memref<32x256xf32, #tpu.memory_space<vmem>>, vector<1x256xf32>
    %934 = vector.shape_cast %933 : vector<1x256xf32> to vector<256xf32>
    %935 = vector.shape_cast %934 : vector<256xf32> to vector<1x256xf32>
    %936 = vector.broadcast %935 : vector<1x256xf32> to vector<8x256xf32>
    %937 = arith.addf %932, %936 : vector<8x256xf32>
    %938 = arith.mulf %937, %937 : vector<8x256xf32>
    %939 = arith.mulf %937, %938 : vector<8x256xf32>
    %cst_421 = arith.constant 4.471500e-02 : f32
    %940 = vector.broadcast %cst_421 : f32 to vector<8x256xf32>
    %941 = arith.mulf %940, %939 : vector<8x256xf32>
    %942 = arith.addf %937, %941 : vector<8x256xf32>
    %cst_422 = arith.constant 0.797884583 : f32
    %943 = vector.broadcast %cst_422 : f32 to vector<8x256xf32>
    %944 = arith.mulf %943, %942 : vector<8x256xf32>
    %945 = math.tanh %944 : vector<8x256xf32>
    %cst_423 = arith.constant 1.000000e+00 : f32
    %946 = vector.broadcast %cst_423 : f32 to vector<8x256xf32>
    %947 = arith.addf %946, %945 : vector<8x256xf32>
    %cst_424 = arith.constant 5.000000e-01 : f32
    %948 = vector.broadcast %cst_424 : f32 to vector<8x256xf32>
    %949 = arith.mulf %948, %947 : vector<8x256xf32>
    %950 = arith.mulf %937, %949 : vector<8x256xf32>
    %c13_425 = arith.constant 13 : index
    %c0_426 = arith.constant 0 : index
    %951 = memref.load %arg12[%c13_425, %c0_426] : memref<32x4xf32, #tpu.memory_space<smem>>
    %952 = vector.broadcast %951 : f32 to vector<8x256xf32>
    %953 = arith.mulf %950, %952 : vector<8x256xf32>
    %954 = arith.addf %905, %953 : vector<8x256xf32>
    %c13_427 = arith.constant 13 : index
    %c1_428 = arith.constant 1 : index
    %955 = memref.load %arg12[%c13_427, %c1_428] : memref<32x4xf32, #tpu.memory_space<smem>>
    %956 = vector.broadcast %955 : f32 to vector<8x256xf32>
    %957 = arith.mulf %950, %956 : vector<8x256xf32>
    %958 = arith.addf %909, %957 : vector<8x256xf32>
    %c13_429 = arith.constant 13 : index
    %c2_430 = arith.constant 2 : index
    %959 = memref.load %arg12[%c13_429, %c2_430] : memref<32x4xf32, #tpu.memory_space<smem>>
    %960 = vector.broadcast %959 : f32 to vector<8x256xf32>
    %961 = arith.mulf %950, %960 : vector<8x256xf32>
    %962 = arith.addf %913, %961 : vector<8x256xf32>
    %c13_431 = arith.constant 13 : index
    %c3_432 = arith.constant 3 : index
    %963 = memref.load %arg12[%c13_431, %c3_432] : memref<32x4xf32, #tpu.memory_space<smem>>
    %964 = vector.broadcast %963 : f32 to vector<8x256xf32>
    %965 = arith.mulf %950, %964 : vector<8x256xf32>
    %966 = arith.addf %917, %965 : vector<8x256xf32>
    %c0_433 = arith.constant 0 : index
    %c14 = arith.constant 14 : index
    %967 = memref.load %arg8[%c0_433, %c14] : memref<4x32xf32, #tpu.memory_space<smem>>
    %968 = vector.broadcast %967 : f32 to vector<8x256xf32>
    %969 = arith.mulf %214, %968 : vector<8x256xf32>
    %c1_434 = arith.constant 1 : index
    %c14_435 = arith.constant 14 : index
    %970 = memref.load %arg8[%c1_434, %c14_435] : memref<4x32xf32, #tpu.memory_space<smem>>
    %971 = vector.broadcast %970 : f32 to vector<8x256xf32>
    %972 = arith.mulf %219, %971 : vector<8x256xf32>
    %973 = arith.addf %969, %972 : vector<8x256xf32>
    %c2_436 = arith.constant 2 : index
    %c14_437 = arith.constant 14 : index
    %974 = memref.load %arg8[%c2_436, %c14_437] : memref<4x32xf32, #tpu.memory_space<smem>>
    %975 = vector.broadcast %974 : f32 to vector<8x256xf32>
    %976 = arith.mulf %224, %975 : vector<8x256xf32>
    %977 = arith.addf %973, %976 : vector<8x256xf32>
    %c3_438 = arith.constant 3 : index
    %c14_439 = arith.constant 14 : index
    %978 = memref.load %arg8[%c3_438, %c14_439] : memref<4x32xf32, #tpu.memory_space<smem>>
    %979 = vector.broadcast %978 : f32 to vector<8x256xf32>
    %980 = arith.mulf %229, %979 : vector<8x256xf32>
    %981 = arith.addf %977, %980 : vector<8x256xf32>
    %c14_440 = arith.constant 14 : index
    %c0_441 = arith.constant 0 : index
    %982 = vector.load %arg15[%c14_440, %c0_441] : memref<32x256xf32, #tpu.memory_space<vmem>>, vector<1x256xf32>
    %983 = vector.shape_cast %982 : vector<1x256xf32> to vector<256xf32>
    %984 = vector.shape_cast %983 : vector<256xf32> to vector<1x256xf32>
    %985 = vector.broadcast %984 : vector<1x256xf32> to vector<8x256xf32>
    %986 = arith.addf %981, %985 : vector<8x256xf32>
    %987 = arith.mulf %986, %986 : vector<8x256xf32>
    %988 = arith.mulf %986, %987 : vector<8x256xf32>
    %cst_442 = arith.constant 4.471500e-02 : f32
    %989 = vector.broadcast %cst_442 : f32 to vector<8x256xf32>
    %990 = arith.mulf %989, %988 : vector<8x256xf32>
    %991 = arith.addf %986, %990 : vector<8x256xf32>
    %cst_443 = arith.constant 0.797884583 : f32
    %992 = vector.broadcast %cst_443 : f32 to vector<8x256xf32>
    %993 = arith.mulf %992, %991 : vector<8x256xf32>
    %994 = math.tanh %993 : vector<8x256xf32>
    %cst_444 = arith.constant 1.000000e+00 : f32
    %995 = vector.broadcast %cst_444 : f32 to vector<8x256xf32>
    %996 = arith.addf %995, %994 : vector<8x256xf32>
    %cst_445 = arith.constant 5.000000e-01 : f32
    %997 = vector.broadcast %cst_445 : f32 to vector<8x256xf32>
    %998 = arith.mulf %997, %996 : vector<8x256xf32>
    %999 = arith.mulf %986, %998 : vector<8x256xf32>
    %c14_446 = arith.constant 14 : index
    %c0_447 = arith.constant 0 : index
    %1000 = memref.load %arg12[%c14_446, %c0_447] : memref<32x4xf32, #tpu.memory_space<smem>>
    %1001 = vector.broadcast %1000 : f32 to vector<8x256xf32>
    %1002 = arith.mulf %999, %1001 : vector<8x256xf32>
    %1003 = arith.addf %954, %1002 : vector<8x256xf32>
    %c14_448 = arith.constant 14 : index
    %c1_449 = arith.constant 1 : index
    %1004 = memref.load %arg12[%c14_448, %c1_449] : memref<32x4xf32, #tpu.memory_space<smem>>
    %1005 = vector.broadcast %1004 : f32 to vector<8x256xf32>
    %1006 = arith.mulf %999, %1005 : vector<8x256xf32>
    %1007 = arith.addf %958, %1006 : vector<8x256xf32>
    %c14_450 = arith.constant 14 : index
    %c2_451 = arith.constant 2 : index
    %1008 = memref.load %arg12[%c14_450, %c2_451] : memref<32x4xf32, #tpu.memory_space<smem>>
    %1009 = vector.broadcast %1008 : f32 to vector<8x256xf32>
    %1010 = arith.mulf %999, %1009 : vector<8x256xf32>
    %1011 = arith.addf %962, %1010 : vector<8x256xf32>
    %c14_452 = arith.constant 14 : index
    %c3_453 = arith.constant 3 : index
    %1012 = memref.load %arg12[%c14_452, %c3_453] : memref<32x4xf32, #tpu.memory_space<smem>>
    %1013 = vector.broadcast %1012 : f32 to vector<8x256xf32>
    %1014 = arith.mulf %999, %1013 : vector<8x256xf32>
    %1015 = arith.addf %966, %1014 : vector<8x256xf32>
    %c0_454 = arith.constant 0 : index
    %c15 = arith.constant 15 : index
    %1016 = memref.load %arg8[%c0_454, %c15] : memref<4x32xf32, #tpu.memory_space<smem>>
    %1017 = vector.broadcast %1016 : f32 to vector<8x256xf32>
    %1018 = arith.mulf %214, %1017 : vector<8x256xf32>
    %c1_455 = arith.constant 1 : index
    %c15_456 = arith.constant 15 : index
    %1019 = memref.load %arg8[%c1_455, %c15_456] : memref<4x32xf32, #tpu.memory_space<smem>>
    %1020 = vector.broadcast %1019 : f32 to vector<8x256xf32>
    %1021 = arith.mulf %219, %1020 : vector<8x256xf32>
    %1022 = arith.addf %1018, %1021 : vector<8x256xf32>
    %c2_457 = arith.constant 2 : index
    %c15_458 = arith.constant 15 : index
    %1023 = memref.load %arg8[%c2_457, %c15_458] : memref<4x32xf32, #tpu.memory_space<smem>>
    %1024 = vector.broadcast %1023 : f32 to vector<8x256xf32>
    %1025 = arith.mulf %224, %1024 : vector<8x256xf32>
    %1026 = arith.addf %1022, %1025 : vector<8x256xf32>
    %c3_459 = arith.constant 3 : index
    %c15_460 = arith.constant 15 : index
    %1027 = memref.load %arg8[%c3_459, %c15_460] : memref<4x32xf32, #tpu.memory_space<smem>>
    %1028 = vector.broadcast %1027 : f32 to vector<8x256xf32>
    %1029 = arith.mulf %229, %1028 : vector<8x256xf32>
    %1030 = arith.addf %1026, %1029 : vector<8x256xf32>
    %c15_461 = arith.constant 15 : index
    %c0_462 = arith.constant 0 : index
    %1031 = vector.load %arg15[%c15_461, %c0_462] : memref<32x256xf32, #tpu.memory_space<vmem>>, vector<1x256xf32>
    %1032 = vector.shape_cast %1031 : vector<1x256xf32> to vector<256xf32>
    %1033 = vector.shape_cast %1032 : vector<256xf32> to vector<1x256xf32>
    %1034 = vector.broadcast %1033 : vector<1x256xf32> to vector<8x256xf32>
    %1035 = arith.addf %1030, %1034 : vector<8x256xf32>
    %1036 = arith.mulf %1035, %1035 : vector<8x256xf32>
    %1037 = arith.mulf %1035, %1036 : vector<8x256xf32>
    %cst_463 = arith.constant 4.471500e-02 : f32
    %1038 = vector.broadcast %cst_463 : f32 to vector<8x256xf32>
    %1039 = arith.mulf %1038, %1037 : vector<8x256xf32>
    %1040 = arith.addf %1035, %1039 : vector<8x256xf32>
    %cst_464 = arith.constant 0.797884583 : f32
    %1041 = vector.broadcast %cst_464 : f32 to vector<8x256xf32>
    %1042 = arith.mulf %1041, %1040 : vector<8x256xf32>
    %1043 = math.tanh %1042 : vector<8x256xf32>
    %cst_465 = arith.constant 1.000000e+00 : f32
    %1044 = vector.broadcast %cst_465 : f32 to vector<8x256xf32>
    %1045 = arith.addf %1044, %1043 : vector<8x256xf32>
    %cst_466 = arith.constant 5.000000e-01 : f32
    %1046 = vector.broadcast %cst_466 : f32 to vector<8x256xf32>
    %1047 = arith.mulf %1046, %1045 : vector<8x256xf32>
    %1048 = arith.mulf %1035, %1047 : vector<8x256xf32>
    %c15_467 = arith.constant 15 : index
    %c0_468 = arith.constant 0 : index
    %1049 = memref.load %arg12[%c15_467, %c0_468] : memref<32x4xf32, #tpu.memory_space<smem>>
    %1050 = vector.broadcast %1049 : f32 to vector<8x256xf32>
    %1051 = arith.mulf %1048, %1050 : vector<8x256xf32>
    %1052 = arith.addf %1003, %1051 : vector<8x256xf32>
    %c15_469 = arith.constant 15 : index
    %c1_470 = arith.constant 1 : index
    %1053 = memref.load %arg12[%c15_469, %c1_470] : memref<32x4xf32, #tpu.memory_space<smem>>
    %1054 = vector.broadcast %1053 : f32 to vector<8x256xf32>
    %1055 = arith.mulf %1048, %1054 : vector<8x256xf32>
    %1056 = arith.addf %1007, %1055 : vector<8x256xf32>
    %c15_471 = arith.constant 15 : index
    %c2_472 = arith.constant 2 : index
    %1057 = memref.load %arg12[%c15_471, %c2_472] : memref<32x4xf32, #tpu.memory_space<smem>>
    %1058 = vector.broadcast %1057 : f32 to vector<8x256xf32>
    %1059 = arith.mulf %1048, %1058 : vector<8x256xf32>
    %1060 = arith.addf %1011, %1059 : vector<8x256xf32>
    %c15_473 = arith.constant 15 : index
    %c3_474 = arith.constant 3 : index
    %1061 = memref.load %arg12[%c15_473, %c3_474] : memref<32x4xf32, #tpu.memory_space<smem>>
    %1062 = vector.broadcast %1061 : f32 to vector<8x256xf32>
    %1063 = arith.mulf %1048, %1062 : vector<8x256xf32>
    %1064 = arith.addf %1015, %1063 : vector<8x256xf32>
    %c0_475 = arith.constant 0 : index
    %c16_476 = arith.constant 16 : index
    %1065 = memref.load %arg8[%c0_475, %c16_476] : memref<4x32xf32, #tpu.memory_space<smem>>
    %1066 = vector.broadcast %1065 : f32 to vector<8x256xf32>
    %1067 = arith.mulf %214, %1066 : vector<8x256xf32>
    %c1_477 = arith.constant 1 : index
    %c16_478 = arith.constant 16 : index
    %1068 = memref.load %arg8[%c1_477, %c16_478] : memref<4x32xf32, #tpu.memory_space<smem>>
    %1069 = vector.broadcast %1068 : f32 to vector<8x256xf32>
    %1070 = arith.mulf %219, %1069 : vector<8x256xf32>
    %1071 = arith.addf %1067, %1070 : vector<8x256xf32>
    %c2_479 = arith.constant 2 : index
    %c16_480 = arith.constant 16 : index
    %1072 = memref.load %arg8[%c2_479, %c16_480] : memref<4x32xf32, #tpu.memory_space<smem>>
    %1073 = vector.broadcast %1072 : f32 to vector<8x256xf32>
    %1074 = arith.mulf %224, %1073 : vector<8x256xf32>
    %1075 = arith.addf %1071, %1074 : vector<8x256xf32>
    %c3_481 = arith.constant 3 : index
    %c16_482 = arith.constant 16 : index
    %1076 = memref.load %arg8[%c3_481, %c16_482] : memref<4x32xf32, #tpu.memory_space<smem>>
    %1077 = vector.broadcast %1076 : f32 to vector<8x256xf32>
    %1078 = arith.mulf %229, %1077 : vector<8x256xf32>
    %1079 = arith.addf %1075, %1078 : vector<8x256xf32>
    %c16_483 = arith.constant 16 : index
    %c0_484 = arith.constant 0 : index
    %1080 = vector.load %arg15[%c16_483, %c0_484] : memref<32x256xf32, #tpu.memory_space<vmem>>, vector<1x256xf32>
    %1081 = vector.shape_cast %1080 : vector<1x256xf32> to vector<256xf32>
    %1082 = vector.shape_cast %1081 : vector<256xf32> to vector<1x256xf32>
    %1083 = vector.broadcast %1082 : vector<1x256xf32> to vector<8x256xf32>
    %1084 = arith.addf %1079, %1083 : vector<8x256xf32>
    %1085 = arith.mulf %1084, %1084 : vector<8x256xf32>
    %1086 = arith.mulf %1084, %1085 : vector<8x256xf32>
    %cst_485 = arith.constant 4.471500e-02 : f32
    %1087 = vector.broadcast %cst_485 : f32 to vector<8x256xf32>
    %1088 = arith.mulf %1087, %1086 : vector<8x256xf32>
    %1089 = arith.addf %1084, %1088 : vector<8x256xf32>
    %cst_486 = arith.constant 0.797884583 : f32
    %1090 = vector.broadcast %cst_486 : f32 to vector<8x256xf32>
    %1091 = arith.mulf %1090, %1089 : vector<8x256xf32>
    %1092 = math.tanh %1091 : vector<8x256xf32>
    %cst_487 = arith.constant 1.000000e+00 : f32
    %1093 = vector.broadcast %cst_487 : f32 to vector<8x256xf32>
    %1094 = arith.addf %1093, %1092 : vector<8x256xf32>
    %cst_488 = arith.constant 5.000000e-01 : f32
    %1095 = vector.broadcast %cst_488 : f32 to vector<8x256xf32>
    %1096 = arith.mulf %1095, %1094 : vector<8x256xf32>
    %1097 = arith.mulf %1084, %1096 : vector<8x256xf32>
    %c16_489 = arith.constant 16 : index
    %c0_490 = arith.constant 0 : index
    %1098 = memref.load %arg12[%c16_489, %c0_490] : memref<32x4xf32, #tpu.memory_space<smem>>
    %1099 = vector.broadcast %1098 : f32 to vector<8x256xf32>
    %1100 = arith.mulf %1097, %1099 : vector<8x256xf32>
    %1101 = arith.addf %1052, %1100 : vector<8x256xf32>
    %c16_491 = arith.constant 16 : index
    %c1_492 = arith.constant 1 : index
    %1102 = memref.load %arg12[%c16_491, %c1_492] : memref<32x4xf32, #tpu.memory_space<smem>>
    %1103 = vector.broadcast %1102 : f32 to vector<8x256xf32>
    %1104 = arith.mulf %1097, %1103 : vector<8x256xf32>
    %1105 = arith.addf %1056, %1104 : vector<8x256xf32>
    %c16_493 = arith.constant 16 : index
    %c2_494 = arith.constant 2 : index
    %1106 = memref.load %arg12[%c16_493, %c2_494] : memref<32x4xf32, #tpu.memory_space<smem>>
    %1107 = vector.broadcast %1106 : f32 to vector<8x256xf32>
    %1108 = arith.mulf %1097, %1107 : vector<8x256xf32>
    %1109 = arith.addf %1060, %1108 : vector<8x256xf32>
    %c16_495 = arith.constant 16 : index
    %c3_496 = arith.constant 3 : index
    %1110 = memref.load %arg12[%c16_495, %c3_496] : memref<32x4xf32, #tpu.memory_space<smem>>
    %1111 = vector.broadcast %1110 : f32 to vector<8x256xf32>
    %1112 = arith.mulf %1097, %1111 : vector<8x256xf32>
    %1113 = arith.addf %1064, %1112 : vector<8x256xf32>
    %c0_497 = arith.constant 0 : index
    %c17_498 = arith.constant 17 : index
    %1114 = memref.load %arg8[%c0_497, %c17_498] : memref<4x32xf32, #tpu.memory_space<smem>>
    %1115 = vector.broadcast %1114 : f32 to vector<8x256xf32>
    %1116 = arith.mulf %214, %1115 : vector<8x256xf32>
    %c1_499 = arith.constant 1 : index
    %c17_500 = arith.constant 17 : index
    %1117 = memref.load %arg8[%c1_499, %c17_500] : memref<4x32xf32, #tpu.memory_space<smem>>
    %1118 = vector.broadcast %1117 : f32 to vector<8x256xf32>
    %1119 = arith.mulf %219, %1118 : vector<8x256xf32>
    %1120 = arith.addf %1116, %1119 : vector<8x256xf32>
    %c2_501 = arith.constant 2 : index
    %c17_502 = arith.constant 17 : index
    %1121 = memref.load %arg8[%c2_501, %c17_502] : memref<4x32xf32, #tpu.memory_space<smem>>
    %1122 = vector.broadcast %1121 : f32 to vector<8x256xf32>
    %1123 = arith.mulf %224, %1122 : vector<8x256xf32>
    %1124 = arith.addf %1120, %1123 : vector<8x256xf32>
    %c3_503 = arith.constant 3 : index
    %c17_504 = arith.constant 17 : index
    %1125 = memref.load %arg8[%c3_503, %c17_504] : memref<4x32xf32, #tpu.memory_space<smem>>
    %1126 = vector.broadcast %1125 : f32 to vector<8x256xf32>
    %1127 = arith.mulf %229, %1126 : vector<8x256xf32>
    %1128 = arith.addf %1124, %1127 : vector<8x256xf32>
    %c17_505 = arith.constant 17 : index
    %c0_506 = arith.constant 0 : index
    %1129 = vector.load %arg15[%c17_505, %c0_506] : memref<32x256xf32, #tpu.memory_space<vmem>>, vector<1x256xf32>
    %1130 = vector.shape_cast %1129 : vector<1x256xf32> to vector<256xf32>
    %1131 = vector.shape_cast %1130 : vector<256xf32> to vector<1x256xf32>
    %1132 = vector.broadcast %1131 : vector<1x256xf32> to vector<8x256xf32>
    %1133 = arith.addf %1128, %1132 : vector<8x256xf32>
    %1134 = arith.mulf %1133, %1133 : vector<8x256xf32>
    %1135 = arith.mulf %1133, %1134 : vector<8x256xf32>
    %cst_507 = arith.constant 4.471500e-02 : f32
    %1136 = vector.broadcast %cst_507 : f32 to vector<8x256xf32>
    %1137 = arith.mulf %1136, %1135 : vector<8x256xf32>
    %1138 = arith.addf %1133, %1137 : vector<8x256xf32>
    %cst_508 = arith.constant 0.797884583 : f32
    %1139 = vector.broadcast %cst_508 : f32 to vector<8x256xf32>
    %1140 = arith.mulf %1139, %1138 : vector<8x256xf32>
    %1141 = math.tanh %1140 : vector<8x256xf32>
    %cst_509 = arith.constant 1.000000e+00 : f32
    %1142 = vector.broadcast %cst_509 : f32 to vector<8x256xf32>
    %1143 = arith.addf %1142, %1141 : vector<8x256xf32>
    %cst_510 = arith.constant 5.000000e-01 : f32
    %1144 = vector.broadcast %cst_510 : f32 to vector<8x256xf32>
    %1145 = arith.mulf %1144, %1143 : vector<8x256xf32>
    %1146 = arith.mulf %1133, %1145 : vector<8x256xf32>
    %c17_511 = arith.constant 17 : index
    %c0_512 = arith.constant 0 : index
    %1147 = memref.load %arg12[%c17_511, %c0_512] : memref<32x4xf32, #tpu.memory_space<smem>>
    %1148 = vector.broadcast %1147 : f32 to vector<8x256xf32>
    %1149 = arith.mulf %1146, %1148 : vector<8x256xf32>
    %1150 = arith.addf %1101, %1149 : vector<8x256xf32>
    %c17_513 = arith.constant 17 : index
    %c1_514 = arith.constant 1 : index
    %1151 = memref.load %arg12[%c17_513, %c1_514] : memref<32x4xf32, #tpu.memory_space<smem>>
    %1152 = vector.broadcast %1151 : f32 to vector<8x256xf32>
    %1153 = arith.mulf %1146, %1152 : vector<8x256xf32>
    %1154 = arith.addf %1105, %1153 : vector<8x256xf32>
    %c17_515 = arith.constant 17 : index
    %c2_516 = arith.constant 2 : index
    %1155 = memref.load %arg12[%c17_515, %c2_516] : memref<32x4xf32, #tpu.memory_space<smem>>
    %1156 = vector.broadcast %1155 : f32 to vector<8x256xf32>
    %1157 = arith.mulf %1146, %1156 : vector<8x256xf32>
    %1158 = arith.addf %1109, %1157 : vector<8x256xf32>
    %c17_517 = arith.constant 17 : index
    %c3_518 = arith.constant 3 : index
    %1159 = memref.load %arg12[%c17_517, %c3_518] : memref<32x4xf32, #tpu.memory_space<smem>>
    %1160 = vector.broadcast %1159 : f32 to vector<8x256xf32>
    %1161 = arith.mulf %1146, %1160 : vector<8x256xf32>
    %1162 = arith.addf %1113, %1161 : vector<8x256xf32>
    %c0_519 = arith.constant 0 : index
    %c18 = arith.constant 18 : index
    %1163 = memref.load %arg8[%c0_519, %c18] : memref<4x32xf32, #tpu.memory_space<smem>>
    %1164 = vector.broadcast %1163 : f32 to vector<8x256xf32>
    %1165 = arith.mulf %214, %1164 : vector<8x256xf32>
    %c1_520 = arith.constant 1 : index
    %c18_521 = arith.constant 18 : index
    %1166 = memref.load %arg8[%c1_520, %c18_521] : memref<4x32xf32, #tpu.memory_space<smem>>
    %1167 = vector.broadcast %1166 : f32 to vector<8x256xf32>
    %1168 = arith.mulf %219, %1167 : vector<8x256xf32>
    %1169 = arith.addf %1165, %1168 : vector<8x256xf32>
    %c2_522 = arith.constant 2 : index
    %c18_523 = arith.constant 18 : index
    %1170 = memref.load %arg8[%c2_522, %c18_523] : memref<4x32xf32, #tpu.memory_space<smem>>
    %1171 = vector.broadcast %1170 : f32 to vector<8x256xf32>
    %1172 = arith.mulf %224, %1171 : vector<8x256xf32>
    %1173 = arith.addf %1169, %1172 : vector<8x256xf32>
    %c3_524 = arith.constant 3 : index
    %c18_525 = arith.constant 18 : index
    %1174 = memref.load %arg8[%c3_524, %c18_525] : memref<4x32xf32, #tpu.memory_space<smem>>
    %1175 = vector.broadcast %1174 : f32 to vector<8x256xf32>
    %1176 = arith.mulf %229, %1175 : vector<8x256xf32>
    %1177 = arith.addf %1173, %1176 : vector<8x256xf32>
    %c18_526 = arith.constant 18 : index
    %c0_527 = arith.constant 0 : index
    %1178 = vector.load %arg15[%c18_526, %c0_527] : memref<32x256xf32, #tpu.memory_space<vmem>>, vector<1x256xf32>
    %1179 = vector.shape_cast %1178 : vector<1x256xf32> to vector<256xf32>
    %1180 = vector.shape_cast %1179 : vector<256xf32> to vector<1x256xf32>
    %1181 = vector.broadcast %1180 : vector<1x256xf32> to vector<8x256xf32>
    %1182 = arith.addf %1177, %1181 : vector<8x256xf32>
    %1183 = arith.mulf %1182, %1182 : vector<8x256xf32>
    %1184 = arith.mulf %1182, %1183 : vector<8x256xf32>
    %cst_528 = arith.constant 4.471500e-02 : f32
    %1185 = vector.broadcast %cst_528 : f32 to vector<8x256xf32>
    %1186 = arith.mulf %1185, %1184 : vector<8x256xf32>
    %1187 = arith.addf %1182, %1186 : vector<8x256xf32>
    %cst_529 = arith.constant 0.797884583 : f32
    %1188 = vector.broadcast %cst_529 : f32 to vector<8x256xf32>
    %1189 = arith.mulf %1188, %1187 : vector<8x256xf32>
    %1190 = math.tanh %1189 : vector<8x256xf32>
    %cst_530 = arith.constant 1.000000e+00 : f32
    %1191 = vector.broadcast %cst_530 : f32 to vector<8x256xf32>
    %1192 = arith.addf %1191, %1190 : vector<8x256xf32>
    %cst_531 = arith.constant 5.000000e-01 : f32
    %1193 = vector.broadcast %cst_531 : f32 to vector<8x256xf32>
    %1194 = arith.mulf %1193, %1192 : vector<8x256xf32>
    %1195 = arith.mulf %1182, %1194 : vector<8x256xf32>
    %c18_532 = arith.constant 18 : index
    %c0_533 = arith.constant 0 : index
    %1196 = memref.load %arg12[%c18_532, %c0_533] : memref<32x4xf32, #tpu.memory_space<smem>>
    %1197 = vector.broadcast %1196 : f32 to vector<8x256xf32>
    %1198 = arith.mulf %1195, %1197 : vector<8x256xf32>
    %1199 = arith.addf %1150, %1198 : vector<8x256xf32>
    %c18_534 = arith.constant 18 : index
    %c1_535 = arith.constant 1 : index
    %1200 = memref.load %arg12[%c18_534, %c1_535] : memref<32x4xf32, #tpu.memory_space<smem>>
    %1201 = vector.broadcast %1200 : f32 to vector<8x256xf32>
    %1202 = arith.mulf %1195, %1201 : vector<8x256xf32>
    %1203 = arith.addf %1154, %1202 : vector<8x256xf32>
    %c18_536 = arith.constant 18 : index
    %c2_537 = arith.constant 2 : index
    %1204 = memref.load %arg12[%c18_536, %c2_537] : memref<32x4xf32, #tpu.memory_space<smem>>
    %1205 = vector.broadcast %1204 : f32 to vector<8x256xf32>
    %1206 = arith.mulf %1195, %1205 : vector<8x256xf32>
    %1207 = arith.addf %1158, %1206 : vector<8x256xf32>
    %c18_538 = arith.constant 18 : index
    %c3_539 = arith.constant 3 : index
    %1208 = memref.load %arg12[%c18_538, %c3_539] : memref<32x4xf32, #tpu.memory_space<smem>>
    %1209 = vector.broadcast %1208 : f32 to vector<8x256xf32>
    %1210 = arith.mulf %1195, %1209 : vector<8x256xf32>
    %1211 = arith.addf %1162, %1210 : vector<8x256xf32>
    %c0_540 = arith.constant 0 : index
    %c19 = arith.constant 19 : index
    %1212 = memref.load %arg8[%c0_540, %c19] : memref<4x32xf32, #tpu.memory_space<smem>>
    %1213 = vector.broadcast %1212 : f32 to vector<8x256xf32>
    %1214 = arith.mulf %214, %1213 : vector<8x256xf32>
    %c1_541 = arith.constant 1 : index
    %c19_542 = arith.constant 19 : index
    %1215 = memref.load %arg8[%c1_541, %c19_542] : memref<4x32xf32, #tpu.memory_space<smem>>
    %1216 = vector.broadcast %1215 : f32 to vector<8x256xf32>
    %1217 = arith.mulf %219, %1216 : vector<8x256xf32>
    %1218 = arith.addf %1214, %1217 : vector<8x256xf32>
    %c2_543 = arith.constant 2 : index
    %c19_544 = arith.constant 19 : index
    %1219 = memref.load %arg8[%c2_543, %c19_544] : memref<4x32xf32, #tpu.memory_space<smem>>
    %1220 = vector.broadcast %1219 : f32 to vector<8x256xf32>
    %1221 = arith.mulf %224, %1220 : vector<8x256xf32>
    %1222 = arith.addf %1218, %1221 : vector<8x256xf32>
    %c3_545 = arith.constant 3 : index
    %c19_546 = arith.constant 19 : index
    %1223 = memref.load %arg8[%c3_545, %c19_546] : memref<4x32xf32, #tpu.memory_space<smem>>
    %1224 = vector.broadcast %1223 : f32 to vector<8x256xf32>
    %1225 = arith.mulf %229, %1224 : vector<8x256xf32>
    %1226 = arith.addf %1222, %1225 : vector<8x256xf32>
    %c19_547 = arith.constant 19 : index
    %c0_548 = arith.constant 0 : index
    %1227 = vector.load %arg15[%c19_547, %c0_548] : memref<32x256xf32, #tpu.memory_space<vmem>>, vector<1x256xf32>
    %1228 = vector.shape_cast %1227 : vector<1x256xf32> to vector<256xf32>
    %1229 = vector.shape_cast %1228 : vector<256xf32> to vector<1x256xf32>
    %1230 = vector.broadcast %1229 : vector<1x256xf32> to vector<8x256xf32>
    %1231 = arith.addf %1226, %1230 : vector<8x256xf32>
    %1232 = arith.mulf %1231, %1231 : vector<8x256xf32>
    %1233 = arith.mulf %1231, %1232 : vector<8x256xf32>
    %cst_549 = arith.constant 4.471500e-02 : f32
    %1234 = vector.broadcast %cst_549 : f32 to vector<8x256xf32>
    %1235 = arith.mulf %1234, %1233 : vector<8x256xf32>
    %1236 = arith.addf %1231, %1235 : vector<8x256xf32>
    %cst_550 = arith.constant 0.797884583 : f32
    %1237 = vector.broadcast %cst_550 : f32 to vector<8x256xf32>
    %1238 = arith.mulf %1237, %1236 : vector<8x256xf32>
    %1239 = math.tanh %1238 : vector<8x256xf32>
    %cst_551 = arith.constant 1.000000e+00 : f32
    %1240 = vector.broadcast %cst_551 : f32 to vector<8x256xf32>
    %1241 = arith.addf %1240, %1239 : vector<8x256xf32>
    %cst_552 = arith.constant 5.000000e-01 : f32
    %1242 = vector.broadcast %cst_552 : f32 to vector<8x256xf32>
    %1243 = arith.mulf %1242, %1241 : vector<8x256xf32>
    %1244 = arith.mulf %1231, %1243 : vector<8x256xf32>
    %c19_553 = arith.constant 19 : index
    %c0_554 = arith.constant 0 : index
    %1245 = memref.load %arg12[%c19_553, %c0_554] : memref<32x4xf32, #tpu.memory_space<smem>>
    %1246 = vector.broadcast %1245 : f32 to vector<8x256xf32>
    %1247 = arith.mulf %1244, %1246 : vector<8x256xf32>
    %1248 = arith.addf %1199, %1247 : vector<8x256xf32>
    %c19_555 = arith.constant 19 : index
    %c1_556 = arith.constant 1 : index
    %1249 = memref.load %arg12[%c19_555, %c1_556] : memref<32x4xf32, #tpu.memory_space<smem>>
    %1250 = vector.broadcast %1249 : f32 to vector<8x256xf32>
    %1251 = arith.mulf %1244, %1250 : vector<8x256xf32>
    %1252 = arith.addf %1203, %1251 : vector<8x256xf32>
    %c19_557 = arith.constant 19 : index
    %c2_558 = arith.constant 2 : index
    %1253 = memref.load %arg12[%c19_557, %c2_558] : memref<32x4xf32, #tpu.memory_space<smem>>
    %1254 = vector.broadcast %1253 : f32 to vector<8x256xf32>
    %1255 = arith.mulf %1244, %1254 : vector<8x256xf32>
    %1256 = arith.addf %1207, %1255 : vector<8x256xf32>
    %c19_559 = arith.constant 19 : index
    %c3_560 = arith.constant 3 : index
    %1257 = memref.load %arg12[%c19_559, %c3_560] : memref<32x4xf32, #tpu.memory_space<smem>>
    %1258 = vector.broadcast %1257 : f32 to vector<8x256xf32>
    %1259 = arith.mulf %1244, %1258 : vector<8x256xf32>
    %1260 = arith.addf %1211, %1259 : vector<8x256xf32>
    %c0_561 = arith.constant 0 : index
    %c20 = arith.constant 20 : index
    %1261 = memref.load %arg8[%c0_561, %c20] : memref<4x32xf32, #tpu.memory_space<smem>>
    %1262 = vector.broadcast %1261 : f32 to vector<8x256xf32>
    %1263 = arith.mulf %214, %1262 : vector<8x256xf32>
    %c1_562 = arith.constant 1 : index
    %c20_563 = arith.constant 20 : index
    %1264 = memref.load %arg8[%c1_562, %c20_563] : memref<4x32xf32, #tpu.memory_space<smem>>
    %1265 = vector.broadcast %1264 : f32 to vector<8x256xf32>
    %1266 = arith.mulf %219, %1265 : vector<8x256xf32>
    %1267 = arith.addf %1263, %1266 : vector<8x256xf32>
    %c2_564 = arith.constant 2 : index
    %c20_565 = arith.constant 20 : index
    %1268 = memref.load %arg8[%c2_564, %c20_565] : memref<4x32xf32, #tpu.memory_space<smem>>
    %1269 = vector.broadcast %1268 : f32 to vector<8x256xf32>
    %1270 = arith.mulf %224, %1269 : vector<8x256xf32>
    %1271 = arith.addf %1267, %1270 : vector<8x256xf32>
    %c3_566 = arith.constant 3 : index
    %c20_567 = arith.constant 20 : index
    %1272 = memref.load %arg8[%c3_566, %c20_567] : memref<4x32xf32, #tpu.memory_space<smem>>
    %1273 = vector.broadcast %1272 : f32 to vector<8x256xf32>
    %1274 = arith.mulf %229, %1273 : vector<8x256xf32>
    %1275 = arith.addf %1271, %1274 : vector<8x256xf32>
    %c20_568 = arith.constant 20 : index
    %c0_569 = arith.constant 0 : index
    %1276 = vector.load %arg15[%c20_568, %c0_569] : memref<32x256xf32, #tpu.memory_space<vmem>>, vector<1x256xf32>
    %1277 = vector.shape_cast %1276 : vector<1x256xf32> to vector<256xf32>
    %1278 = vector.shape_cast %1277 : vector<256xf32> to vector<1x256xf32>
    %1279 = vector.broadcast %1278 : vector<1x256xf32> to vector<8x256xf32>
    %1280 = arith.addf %1275, %1279 : vector<8x256xf32>
    %1281 = arith.mulf %1280, %1280 : vector<8x256xf32>
    %1282 = arith.mulf %1280, %1281 : vector<8x256xf32>
    %cst_570 = arith.constant 4.471500e-02 : f32
    %1283 = vector.broadcast %cst_570 : f32 to vector<8x256xf32>
    %1284 = arith.mulf %1283, %1282 : vector<8x256xf32>
    %1285 = arith.addf %1280, %1284 : vector<8x256xf32>
    %cst_571 = arith.constant 0.797884583 : f32
    %1286 = vector.broadcast %cst_571 : f32 to vector<8x256xf32>
    %1287 = arith.mulf %1286, %1285 : vector<8x256xf32>
    %1288 = math.tanh %1287 : vector<8x256xf32>
    %cst_572 = arith.constant 1.000000e+00 : f32
    %1289 = vector.broadcast %cst_572 : f32 to vector<8x256xf32>
    %1290 = arith.addf %1289, %1288 : vector<8x256xf32>
    %cst_573 = arith.constant 5.000000e-01 : f32
    %1291 = vector.broadcast %cst_573 : f32 to vector<8x256xf32>
    %1292 = arith.mulf %1291, %1290 : vector<8x256xf32>
    %1293 = arith.mulf %1280, %1292 : vector<8x256xf32>
    %c20_574 = arith.constant 20 : index
    %c0_575 = arith.constant 0 : index
    %1294 = memref.load %arg12[%c20_574, %c0_575] : memref<32x4xf32, #tpu.memory_space<smem>>
    %1295 = vector.broadcast %1294 : f32 to vector<8x256xf32>
    %1296 = arith.mulf %1293, %1295 : vector<8x256xf32>
    %1297 = arith.addf %1248, %1296 : vector<8x256xf32>
    %c20_576 = arith.constant 20 : index
    %c1_577 = arith.constant 1 : index
    %1298 = memref.load %arg12[%c20_576, %c1_577] : memref<32x4xf32, #tpu.memory_space<smem>>
    %1299 = vector.broadcast %1298 : f32 to vector<8x256xf32>
    %1300 = arith.mulf %1293, %1299 : vector<8x256xf32>
    %1301 = arith.addf %1252, %1300 : vector<8x256xf32>
    %c20_578 = arith.constant 20 : index
    %c2_579 = arith.constant 2 : index
    %1302 = memref.load %arg12[%c20_578, %c2_579] : memref<32x4xf32, #tpu.memory_space<smem>>
    %1303 = vector.broadcast %1302 : f32 to vector<8x256xf32>
    %1304 = arith.mulf %1293, %1303 : vector<8x256xf32>
    %1305 = arith.addf %1256, %1304 : vector<8x256xf32>
    %c20_580 = arith.constant 20 : index
    %c3_581 = arith.constant 3 : index
    %1306 = memref.load %arg12[%c20_580, %c3_581] : memref<32x4xf32, #tpu.memory_space<smem>>
    %1307 = vector.broadcast %1306 : f32 to vector<8x256xf32>
    %1308 = arith.mulf %1293, %1307 : vector<8x256xf32>
    %1309 = arith.addf %1260, %1308 : vector<8x256xf32>
    %c0_582 = arith.constant 0 : index
    %c21 = arith.constant 21 : index
    %1310 = memref.load %arg8[%c0_582, %c21] : memref<4x32xf32, #tpu.memory_space<smem>>
    %1311 = vector.broadcast %1310 : f32 to vector<8x256xf32>
    %1312 = arith.mulf %214, %1311 : vector<8x256xf32>
    %c1_583 = arith.constant 1 : index
    %c21_584 = arith.constant 21 : index
    %1313 = memref.load %arg8[%c1_583, %c21_584] : memref<4x32xf32, #tpu.memory_space<smem>>
    %1314 = vector.broadcast %1313 : f32 to vector<8x256xf32>
    %1315 = arith.mulf %219, %1314 : vector<8x256xf32>
    %1316 = arith.addf %1312, %1315 : vector<8x256xf32>
    %c2_585 = arith.constant 2 : index
    %c21_586 = arith.constant 21 : index
    %1317 = memref.load %arg8[%c2_585, %c21_586] : memref<4x32xf32, #tpu.memory_space<smem>>
    %1318 = vector.broadcast %1317 : f32 to vector<8x256xf32>
    %1319 = arith.mulf %224, %1318 : vector<8x256xf32>
    %1320 = arith.addf %1316, %1319 : vector<8x256xf32>
    %c3_587 = arith.constant 3 : index
    %c21_588 = arith.constant 21 : index
    %1321 = memref.load %arg8[%c3_587, %c21_588] : memref<4x32xf32, #tpu.memory_space<smem>>
    %1322 = vector.broadcast %1321 : f32 to vector<8x256xf32>
    %1323 = arith.mulf %229, %1322 : vector<8x256xf32>
    %1324 = arith.addf %1320, %1323 : vector<8x256xf32>
    %c21_589 = arith.constant 21 : index
    %c0_590 = arith.constant 0 : index
    %1325 = vector.load %arg15[%c21_589, %c0_590] : memref<32x256xf32, #tpu.memory_space<vmem>>, vector<1x256xf32>
    %1326 = vector.shape_cast %1325 : vector<1x256xf32> to vector<256xf32>
    %1327 = vector.shape_cast %1326 : vector<256xf32> to vector<1x256xf32>
    %1328 = vector.broadcast %1327 : vector<1x256xf32> to vector<8x256xf32>
    %1329 = arith.addf %1324, %1328 : vector<8x256xf32>
    %1330 = arith.mulf %1329, %1329 : vector<8x256xf32>
    %1331 = arith.mulf %1329, %1330 : vector<8x256xf32>
    %cst_591 = arith.constant 4.471500e-02 : f32
    %1332 = vector.broadcast %cst_591 : f32 to vector<8x256xf32>
    %1333 = arith.mulf %1332, %1331 : vector<8x256xf32>
    %1334 = arith.addf %1329, %1333 : vector<8x256xf32>
    %cst_592 = arith.constant 0.797884583 : f32
    %1335 = vector.broadcast %cst_592 : f32 to vector<8x256xf32>
    %1336 = arith.mulf %1335, %1334 : vector<8x256xf32>
    %1337 = math.tanh %1336 : vector<8x256xf32>
    %cst_593 = arith.constant 1.000000e+00 : f32
    %1338 = vector.broadcast %cst_593 : f32 to vector<8x256xf32>
    %1339 = arith.addf %1338, %1337 : vector<8x256xf32>
    %cst_594 = arith.constant 5.000000e-01 : f32
    %1340 = vector.broadcast %cst_594 : f32 to vector<8x256xf32>
    %1341 = arith.mulf %1340, %1339 : vector<8x256xf32>
    %1342 = arith.mulf %1329, %1341 : vector<8x256xf32>
    %c21_595 = arith.constant 21 : index
    %c0_596 = arith.constant 0 : index
    %1343 = memref.load %arg12[%c21_595, %c0_596] : memref<32x4xf32, #tpu.memory_space<smem>>
    %1344 = vector.broadcast %1343 : f32 to vector<8x256xf32>
    %1345 = arith.mulf %1342, %1344 : vector<8x256xf32>
    %1346 = arith.addf %1297, %1345 : vector<8x256xf32>
    %c21_597 = arith.constant 21 : index
    %c1_598 = arith.constant 1 : index
    %1347 = memref.load %arg12[%c21_597, %c1_598] : memref<32x4xf32, #tpu.memory_space<smem>>
    %1348 = vector.broadcast %1347 : f32 to vector<8x256xf32>
    %1349 = arith.mulf %1342, %1348 : vector<8x256xf32>
    %1350 = arith.addf %1301, %1349 : vector<8x256xf32>
    %c21_599 = arith.constant 21 : index
    %c2_600 = arith.constant 2 : index
    %1351 = memref.load %arg12[%c21_599, %c2_600] : memref<32x4xf32, #tpu.memory_space<smem>>
    %1352 = vector.broadcast %1351 : f32 to vector<8x256xf32>
    %1353 = arith.mulf %1342, %1352 : vector<8x256xf32>
    %1354 = arith.addf %1305, %1353 : vector<8x256xf32>
    %c21_601 = arith.constant 21 : index
    %c3_602 = arith.constant 3 : index
    %1355 = memref.load %arg12[%c21_601, %c3_602] : memref<32x4xf32, #tpu.memory_space<smem>>
    %1356 = vector.broadcast %1355 : f32 to vector<8x256xf32>
    %1357 = arith.mulf %1342, %1356 : vector<8x256xf32>
    %1358 = arith.addf %1309, %1357 : vector<8x256xf32>
    %c0_603 = arith.constant 0 : index
    %c22 = arith.constant 22 : index
    %1359 = memref.load %arg8[%c0_603, %c22] : memref<4x32xf32, #tpu.memory_space<smem>>
    %1360 = vector.broadcast %1359 : f32 to vector<8x256xf32>
    %1361 = arith.mulf %214, %1360 : vector<8x256xf32>
    %c1_604 = arith.constant 1 : index
    %c22_605 = arith.constant 22 : index
    %1362 = memref.load %arg8[%c1_604, %c22_605] : memref<4x32xf32, #tpu.memory_space<smem>>
    %1363 = vector.broadcast %1362 : f32 to vector<8x256xf32>
    %1364 = arith.mulf %219, %1363 : vector<8x256xf32>
    %1365 = arith.addf %1361, %1364 : vector<8x256xf32>
    %c2_606 = arith.constant 2 : index
    %c22_607 = arith.constant 22 : index
    %1366 = memref.load %arg8[%c2_606, %c22_607] : memref<4x32xf32, #tpu.memory_space<smem>>
    %1367 = vector.broadcast %1366 : f32 to vector<8x256xf32>
    %1368 = arith.mulf %224, %1367 : vector<8x256xf32>
    %1369 = arith.addf %1365, %1368 : vector<8x256xf32>
    %c3_608 = arith.constant 3 : index
    %c22_609 = arith.constant 22 : index
    %1370 = memref.load %arg8[%c3_608, %c22_609] : memref<4x32xf32, #tpu.memory_space<smem>>
    %1371 = vector.broadcast %1370 : f32 to vector<8x256xf32>
    %1372 = arith.mulf %229, %1371 : vector<8x256xf32>
    %1373 = arith.addf %1369, %1372 : vector<8x256xf32>
    %c22_610 = arith.constant 22 : index
    %c0_611 = arith.constant 0 : index
    %1374 = vector.load %arg15[%c22_610, %c0_611] : memref<32x256xf32, #tpu.memory_space<vmem>>, vector<1x256xf32>
    %1375 = vector.shape_cast %1374 : vector<1x256xf32> to vector<256xf32>
    %1376 = vector.shape_cast %1375 : vector<256xf32> to vector<1x256xf32>
    %1377 = vector.broadcast %1376 : vector<1x256xf32> to vector<8x256xf32>
    %1378 = arith.addf %1373, %1377 : vector<8x256xf32>
    %1379 = arith.mulf %1378, %1378 : vector<8x256xf32>
    %1380 = arith.mulf %1378, %1379 : vector<8x256xf32>
    %cst_612 = arith.constant 4.471500e-02 : f32
    %1381 = vector.broadcast %cst_612 : f32 to vector<8x256xf32>
    %1382 = arith.mulf %1381, %1380 : vector<8x256xf32>
    %1383 = arith.addf %1378, %1382 : vector<8x256xf32>
    %cst_613 = arith.constant 0.797884583 : f32
    %1384 = vector.broadcast %cst_613 : f32 to vector<8x256xf32>
    %1385 = arith.mulf %1384, %1383 : vector<8x256xf32>
    %1386 = math.tanh %1385 : vector<8x256xf32>
    %cst_614 = arith.constant 1.000000e+00 : f32
    %1387 = vector.broadcast %cst_614 : f32 to vector<8x256xf32>
    %1388 = arith.addf %1387, %1386 : vector<8x256xf32>
    %cst_615 = arith.constant 5.000000e-01 : f32
    %1389 = vector.broadcast %cst_615 : f32 to vector<8x256xf32>
    %1390 = arith.mulf %1389, %1388 : vector<8x256xf32>
    %1391 = arith.mulf %1378, %1390 : vector<8x256xf32>
    %c22_616 = arith.constant 22 : index
    %c0_617 = arith.constant 0 : index
    %1392 = memref.load %arg12[%c22_616, %c0_617] : memref<32x4xf32, #tpu.memory_space<smem>>
    %1393 = vector.broadcast %1392 : f32 to vector<8x256xf32>
    %1394 = arith.mulf %1391, %1393 : vector<8x256xf32>
    %1395 = arith.addf %1346, %1394 : vector<8x256xf32>
    %c22_618 = arith.constant 22 : index
    %c1_619 = arith.constant 1 : index
    %1396 = memref.load %arg12[%c22_618, %c1_619] : memref<32x4xf32, #tpu.memory_space<smem>>
    %1397 = vector.broadcast %1396 : f32 to vector<8x256xf32>
    %1398 = arith.mulf %1391, %1397 : vector<8x256xf32>
    %1399 = arith.addf %1350, %1398 : vector<8x256xf32>
    %c22_620 = arith.constant 22 : index
    %c2_621 = arith.constant 2 : index
    %1400 = memref.load %arg12[%c22_620, %c2_621] : memref<32x4xf32, #tpu.memory_space<smem>>
    %1401 = vector.broadcast %1400 : f32 to vector<8x256xf32>
    %1402 = arith.mulf %1391, %1401 : vector<8x256xf32>
    %1403 = arith.addf %1354, %1402 : vector<8x256xf32>
    %c22_622 = arith.constant 22 : index
    %c3_623 = arith.constant 3 : index
    %1404 = memref.load %arg12[%c22_622, %c3_623] : memref<32x4xf32, #tpu.memory_space<smem>>
    %1405 = vector.broadcast %1404 : f32 to vector<8x256xf32>
    %1406 = arith.mulf %1391, %1405 : vector<8x256xf32>
    %1407 = arith.addf %1358, %1406 : vector<8x256xf32>
    %c0_624 = arith.constant 0 : index
    %c23 = arith.constant 23 : index
    %1408 = memref.load %arg8[%c0_624, %c23] : memref<4x32xf32, #tpu.memory_space<smem>>
    %1409 = vector.broadcast %1408 : f32 to vector<8x256xf32>
    %1410 = arith.mulf %214, %1409 : vector<8x256xf32>
    %c1_625 = arith.constant 1 : index
    %c23_626 = arith.constant 23 : index
    %1411 = memref.load %arg8[%c1_625, %c23_626] : memref<4x32xf32, #tpu.memory_space<smem>>
    %1412 = vector.broadcast %1411 : f32 to vector<8x256xf32>
    %1413 = arith.mulf %219, %1412 : vector<8x256xf32>
    %1414 = arith.addf %1410, %1413 : vector<8x256xf32>
    %c2_627 = arith.constant 2 : index
    %c23_628 = arith.constant 23 : index
    %1415 = memref.load %arg8[%c2_627, %c23_628] : memref<4x32xf32, #tpu.memory_space<smem>>
    %1416 = vector.broadcast %1415 : f32 to vector<8x256xf32>
    %1417 = arith.mulf %224, %1416 : vector<8x256xf32>
    %1418 = arith.addf %1414, %1417 : vector<8x256xf32>
    %c3_629 = arith.constant 3 : index
    %c23_630 = arith.constant 23 : index
    %1419 = memref.load %arg8[%c3_629, %c23_630] : memref<4x32xf32, #tpu.memory_space<smem>>
    %1420 = vector.broadcast %1419 : f32 to vector<8x256xf32>
    %1421 = arith.mulf %229, %1420 : vector<8x256xf32>
    %1422 = arith.addf %1418, %1421 : vector<8x256xf32>
    %c23_631 = arith.constant 23 : index
    %c0_632 = arith.constant 0 : index
    %1423 = vector.load %arg15[%c23_631, %c0_632] : memref<32x256xf32, #tpu.memory_space<vmem>>, vector<1x256xf32>
    %1424 = vector.shape_cast %1423 : vector<1x256xf32> to vector<256xf32>
    %1425 = vector.shape_cast %1424 : vector<256xf32> to vector<1x256xf32>
    %1426 = vector.broadcast %1425 : vector<1x256xf32> to vector<8x256xf32>
    %1427 = arith.addf %1422, %1426 : vector<8x256xf32>
    %1428 = arith.mulf %1427, %1427 : vector<8x256xf32>
    %1429 = arith.mulf %1427, %1428 : vector<8x256xf32>
    %cst_633 = arith.constant 4.471500e-02 : f32
    %1430 = vector.broadcast %cst_633 : f32 to vector<8x256xf32>
    %1431 = arith.mulf %1430, %1429 : vector<8x256xf32>
    %1432 = arith.addf %1427, %1431 : vector<8x256xf32>
    %cst_634 = arith.constant 0.797884583 : f32
    %1433 = vector.broadcast %cst_634 : f32 to vector<8x256xf32>
    %1434 = arith.mulf %1433, %1432 : vector<8x256xf32>
    %1435 = math.tanh %1434 : vector<8x256xf32>
    %cst_635 = arith.constant 1.000000e+00 : f32
    %1436 = vector.broadcast %cst_635 : f32 to vector<8x256xf32>
    %1437 = arith.addf %1436, %1435 : vector<8x256xf32>
    %cst_636 = arith.constant 5.000000e-01 : f32
    %1438 = vector.broadcast %cst_636 : f32 to vector<8x256xf32>
    %1439 = arith.mulf %1438, %1437 : vector<8x256xf32>
    %1440 = arith.mulf %1427, %1439 : vector<8x256xf32>
    %c23_637 = arith.constant 23 : index
    %c0_638 = arith.constant 0 : index
    %1441 = memref.load %arg12[%c23_637, %c0_638] : memref<32x4xf32, #tpu.memory_space<smem>>
    %1442 = vector.broadcast %1441 : f32 to vector<8x256xf32>
    %1443 = arith.mulf %1440, %1442 : vector<8x256xf32>
    %1444 = arith.addf %1395, %1443 : vector<8x256xf32>
    %c23_639 = arith.constant 23 : index
    %c1_640 = arith.constant 1 : index
    %1445 = memref.load %arg12[%c23_639, %c1_640] : memref<32x4xf32, #tpu.memory_space<smem>>
    %1446 = vector.broadcast %1445 : f32 to vector<8x256xf32>
    %1447 = arith.mulf %1440, %1446 : vector<8x256xf32>
    %1448 = arith.addf %1399, %1447 : vector<8x256xf32>
    %c23_641 = arith.constant 23 : index
    %c2_642 = arith.constant 2 : index
    %1449 = memref.load %arg12[%c23_641, %c2_642] : memref<32x4xf32, #tpu.memory_space<smem>>
    %1450 = vector.broadcast %1449 : f32 to vector<8x256xf32>
    %1451 = arith.mulf %1440, %1450 : vector<8x256xf32>
    %1452 = arith.addf %1403, %1451 : vector<8x256xf32>
    %c23_643 = arith.constant 23 : index
    %c3_644 = arith.constant 3 : index
    %1453 = memref.load %arg12[%c23_643, %c3_644] : memref<32x4xf32, #tpu.memory_space<smem>>
    %1454 = vector.broadcast %1453 : f32 to vector<8x256xf32>
    %1455 = arith.mulf %1440, %1454 : vector<8x256xf32>
    %1456 = arith.addf %1407, %1455 : vector<8x256xf32>
    %c0_645 = arith.constant 0 : index
    %c24 = arith.constant 24 : index
    %1457 = memref.load %arg8[%c0_645, %c24] : memref<4x32xf32, #tpu.memory_space<smem>>
    %1458 = vector.broadcast %1457 : f32 to vector<8x256xf32>
    %1459 = arith.mulf %214, %1458 : vector<8x256xf32>
    %c1_646 = arith.constant 1 : index
    %c24_647 = arith.constant 24 : index
    %1460 = memref.load %arg8[%c1_646, %c24_647] : memref<4x32xf32, #tpu.memory_space<smem>>
    %1461 = vector.broadcast %1460 : f32 to vector<8x256xf32>
    %1462 = arith.mulf %219, %1461 : vector<8x256xf32>
    %1463 = arith.addf %1459, %1462 : vector<8x256xf32>
    %c2_648 = arith.constant 2 : index
    %c24_649 = arith.constant 24 : index
    %1464 = memref.load %arg8[%c2_648, %c24_649] : memref<4x32xf32, #tpu.memory_space<smem>>
    %1465 = vector.broadcast %1464 : f32 to vector<8x256xf32>
    %1466 = arith.mulf %224, %1465 : vector<8x256xf32>
    %1467 = arith.addf %1463, %1466 : vector<8x256xf32>
    %c3_650 = arith.constant 3 : index
    %c24_651 = arith.constant 24 : index
    %1468 = memref.load %arg8[%c3_650, %c24_651] : memref<4x32xf32, #tpu.memory_space<smem>>
    %1469 = vector.broadcast %1468 : f32 to vector<8x256xf32>
    %1470 = arith.mulf %229, %1469 : vector<8x256xf32>
    %1471 = arith.addf %1467, %1470 : vector<8x256xf32>
    %c24_652 = arith.constant 24 : index
    %c0_653 = arith.constant 0 : index
    %1472 = vector.load %arg15[%c24_652, %c0_653] : memref<32x256xf32, #tpu.memory_space<vmem>>, vector<1x256xf32>
    %1473 = vector.shape_cast %1472 : vector<1x256xf32> to vector<256xf32>
    %1474 = vector.shape_cast %1473 : vector<256xf32> to vector<1x256xf32>
    %1475 = vector.broadcast %1474 : vector<1x256xf32> to vector<8x256xf32>
    %1476 = arith.addf %1471, %1475 : vector<8x256xf32>
    %1477 = arith.mulf %1476, %1476 : vector<8x256xf32>
    %1478 = arith.mulf %1476, %1477 : vector<8x256xf32>
    %cst_654 = arith.constant 4.471500e-02 : f32
    %1479 = vector.broadcast %cst_654 : f32 to vector<8x256xf32>
    %1480 = arith.mulf %1479, %1478 : vector<8x256xf32>
    %1481 = arith.addf %1476, %1480 : vector<8x256xf32>
    %cst_655 = arith.constant 0.797884583 : f32
    %1482 = vector.broadcast %cst_655 : f32 to vector<8x256xf32>
    %1483 = arith.mulf %1482, %1481 : vector<8x256xf32>
    %1484 = math.tanh %1483 : vector<8x256xf32>
    %cst_656 = arith.constant 1.000000e+00 : f32
    %1485 = vector.broadcast %cst_656 : f32 to vector<8x256xf32>
    %1486 = arith.addf %1485, %1484 : vector<8x256xf32>
    %cst_657 = arith.constant 5.000000e-01 : f32
    %1487 = vector.broadcast %cst_657 : f32 to vector<8x256xf32>
    %1488 = arith.mulf %1487, %1486 : vector<8x256xf32>
    %1489 = arith.mulf %1476, %1488 : vector<8x256xf32>
    %c24_658 = arith.constant 24 : index
    %c0_659 = arith.constant 0 : index
    %1490 = memref.load %arg12[%c24_658, %c0_659] : memref<32x4xf32, #tpu.memory_space<smem>>
    %1491 = vector.broadcast %1490 : f32 to vector<8x256xf32>
    %1492 = arith.mulf %1489, %1491 : vector<8x256xf32>
    %1493 = arith.addf %1444, %1492 : vector<8x256xf32>
    %c24_660 = arith.constant 24 : index
    %c1_661 = arith.constant 1 : index
    %1494 = memref.load %arg12[%c24_660, %c1_661] : memref<32x4xf32, #tpu.memory_space<smem>>
    %1495 = vector.broadcast %1494 : f32 to vector<8x256xf32>
    %1496 = arith.mulf %1489, %1495 : vector<8x256xf32>
    %1497 = arith.addf %1448, %1496 : vector<8x256xf32>
    %c24_662 = arith.constant 24 : index
    %c2_663 = arith.constant 2 : index
    %1498 = memref.load %arg12[%c24_662, %c2_663] : memref<32x4xf32, #tpu.memory_space<smem>>
    %1499 = vector.broadcast %1498 : f32 to vector<8x256xf32>
    %1500 = arith.mulf %1489, %1499 : vector<8x256xf32>
    %1501 = arith.addf %1452, %1500 : vector<8x256xf32>
    %c24_664 = arith.constant 24 : index
    %c3_665 = arith.constant 3 : index
    %1502 = memref.load %arg12[%c24_664, %c3_665] : memref<32x4xf32, #tpu.memory_space<smem>>
    %1503 = vector.broadcast %1502 : f32 to vector<8x256xf32>
    %1504 = arith.mulf %1489, %1503 : vector<8x256xf32>
    %1505 = arith.addf %1456, %1504 : vector<8x256xf32>
    %c0_666 = arith.constant 0 : index
    %c25 = arith.constant 25 : index
    %1506 = memref.load %arg8[%c0_666, %c25] : memref<4x32xf32, #tpu.memory_space<smem>>
    %1507 = vector.broadcast %1506 : f32 to vector<8x256xf32>
    %1508 = arith.mulf %214, %1507 : vector<8x256xf32>
    %c1_667 = arith.constant 1 : index
    %c25_668 = arith.constant 25 : index
    %1509 = memref.load %arg8[%c1_667, %c25_668] : memref<4x32xf32, #tpu.memory_space<smem>>
    %1510 = vector.broadcast %1509 : f32 to vector<8x256xf32>
    %1511 = arith.mulf %219, %1510 : vector<8x256xf32>
    %1512 = arith.addf %1508, %1511 : vector<8x256xf32>
    %c2_669 = arith.constant 2 : index
    %c25_670 = arith.constant 25 : index
    %1513 = memref.load %arg8[%c2_669, %c25_670] : memref<4x32xf32, #tpu.memory_space<smem>>
    %1514 = vector.broadcast %1513 : f32 to vector<8x256xf32>
    %1515 = arith.mulf %224, %1514 : vector<8x256xf32>
    %1516 = arith.addf %1512, %1515 : vector<8x256xf32>
    %c3_671 = arith.constant 3 : index
    %c25_672 = arith.constant 25 : index
    %1517 = memref.load %arg8[%c3_671, %c25_672] : memref<4x32xf32, #tpu.memory_space<smem>>
    %1518 = vector.broadcast %1517 : f32 to vector<8x256xf32>
    %1519 = arith.mulf %229, %1518 : vector<8x256xf32>
    %1520 = arith.addf %1516, %1519 : vector<8x256xf32>
    %c25_673 = arith.constant 25 : index
    %c0_674 = arith.constant 0 : index
    %1521 = vector.load %arg15[%c25_673, %c0_674] : memref<32x256xf32, #tpu.memory_space<vmem>>, vector<1x256xf32>
    %1522 = vector.shape_cast %1521 : vector<1x256xf32> to vector<256xf32>
    %1523 = vector.shape_cast %1522 : vector<256xf32> to vector<1x256xf32>
    %1524 = vector.broadcast %1523 : vector<1x256xf32> to vector<8x256xf32>
    %1525 = arith.addf %1520, %1524 : vector<8x256xf32>
    %1526 = arith.mulf %1525, %1525 : vector<8x256xf32>
    %1527 = arith.mulf %1525, %1526 : vector<8x256xf32>
    %cst_675 = arith.constant 4.471500e-02 : f32
    %1528 = vector.broadcast %cst_675 : f32 to vector<8x256xf32>
    %1529 = arith.mulf %1528, %1527 : vector<8x256xf32>
    %1530 = arith.addf %1525, %1529 : vector<8x256xf32>
    %cst_676 = arith.constant 0.797884583 : f32
    %1531 = vector.broadcast %cst_676 : f32 to vector<8x256xf32>
    %1532 = arith.mulf %1531, %1530 : vector<8x256xf32>
    %1533 = math.tanh %1532 : vector<8x256xf32>
    %cst_677 = arith.constant 1.000000e+00 : f32
    %1534 = vector.broadcast %cst_677 : f32 to vector<8x256xf32>
    %1535 = arith.addf %1534, %1533 : vector<8x256xf32>
    %cst_678 = arith.constant 5.000000e-01 : f32
    %1536 = vector.broadcast %cst_678 : f32 to vector<8x256xf32>
    %1537 = arith.mulf %1536, %1535 : vector<8x256xf32>
    %1538 = arith.mulf %1525, %1537 : vector<8x256xf32>
    %c25_679 = arith.constant 25 : index
    %c0_680 = arith.constant 0 : index
    %1539 = memref.load %arg12[%c25_679, %c0_680] : memref<32x4xf32, #tpu.memory_space<smem>>
    %1540 = vector.broadcast %1539 : f32 to vector<8x256xf32>
    %1541 = arith.mulf %1538, %1540 : vector<8x256xf32>
    %1542 = arith.addf %1493, %1541 : vector<8x256xf32>
    %c25_681 = arith.constant 25 : index
    %c1_682 = arith.constant 1 : index
    %1543 = memref.load %arg12[%c25_681, %c1_682] : memref<32x4xf32, #tpu.memory_space<smem>>
    %1544 = vector.broadcast %1543 : f32 to vector<8x256xf32>
    %1545 = arith.mulf %1538, %1544 : vector<8x256xf32>
    %1546 = arith.addf %1497, %1545 : vector<8x256xf32>
    %c25_683 = arith.constant 25 : index
    %c2_684 = arith.constant 2 : index
    %1547 = memref.load %arg12[%c25_683, %c2_684] : memref<32x4xf32, #tpu.memory_space<smem>>
    %1548 = vector.broadcast %1547 : f32 to vector<8x256xf32>
    %1549 = arith.mulf %1538, %1548 : vector<8x256xf32>
    %1550 = arith.addf %1501, %1549 : vector<8x256xf32>
    %c25_685 = arith.constant 25 : index
    %c3_686 = arith.constant 3 : index
    %1551 = memref.load %arg12[%c25_685, %c3_686] : memref<32x4xf32, #tpu.memory_space<smem>>
    %1552 = vector.broadcast %1551 : f32 to vector<8x256xf32>
    %1553 = arith.mulf %1538, %1552 : vector<8x256xf32>
    %1554 = arith.addf %1505, %1553 : vector<8x256xf32>
    %c0_687 = arith.constant 0 : index
    %c26 = arith.constant 26 : index
    %1555 = memref.load %arg8[%c0_687, %c26] : memref<4x32xf32, #tpu.memory_space<smem>>
    %1556 = vector.broadcast %1555 : f32 to vector<8x256xf32>
    %1557 = arith.mulf %214, %1556 : vector<8x256xf32>
    %c1_688 = arith.constant 1 : index
    %c26_689 = arith.constant 26 : index
    %1558 = memref.load %arg8[%c1_688, %c26_689] : memref<4x32xf32, #tpu.memory_space<smem>>
    %1559 = vector.broadcast %1558 : f32 to vector<8x256xf32>
    %1560 = arith.mulf %219, %1559 : vector<8x256xf32>
    %1561 = arith.addf %1557, %1560 : vector<8x256xf32>
    %c2_690 = arith.constant 2 : index
    %c26_691 = arith.constant 26 : index
    %1562 = memref.load %arg8[%c2_690, %c26_691] : memref<4x32xf32, #tpu.memory_space<smem>>
    %1563 = vector.broadcast %1562 : f32 to vector<8x256xf32>
    %1564 = arith.mulf %224, %1563 : vector<8x256xf32>
    %1565 = arith.addf %1561, %1564 : vector<8x256xf32>
    %c3_692 = arith.constant 3 : index
    %c26_693 = arith.constant 26 : index
    %1566 = memref.load %arg8[%c3_692, %c26_693] : memref<4x32xf32, #tpu.memory_space<smem>>
    %1567 = vector.broadcast %1566 : f32 to vector<8x256xf32>
    %1568 = arith.mulf %229, %1567 : vector<8x256xf32>
    %1569 = arith.addf %1565, %1568 : vector<8x256xf32>
    %c26_694 = arith.constant 26 : index
    %c0_695 = arith.constant 0 : index
    %1570 = vector.load %arg15[%c26_694, %c0_695] : memref<32x256xf32, #tpu.memory_space<vmem>>, vector<1x256xf32>
    %1571 = vector.shape_cast %1570 : vector<1x256xf32> to vector<256xf32>
    %1572 = vector.shape_cast %1571 : vector<256xf32> to vector<1x256xf32>
    %1573 = vector.broadcast %1572 : vector<1x256xf32> to vector<8x256xf32>
    %1574 = arith.addf %1569, %1573 : vector<8x256xf32>
    %1575 = arith.mulf %1574, %1574 : vector<8x256xf32>
    %1576 = arith.mulf %1574, %1575 : vector<8x256xf32>
    %cst_696 = arith.constant 4.471500e-02 : f32
    %1577 = vector.broadcast %cst_696 : f32 to vector<8x256xf32>
    %1578 = arith.mulf %1577, %1576 : vector<8x256xf32>
    %1579 = arith.addf %1574, %1578 : vector<8x256xf32>
    %cst_697 = arith.constant 0.797884583 : f32
    %1580 = vector.broadcast %cst_697 : f32 to vector<8x256xf32>
    %1581 = arith.mulf %1580, %1579 : vector<8x256xf32>
    %1582 = math.tanh %1581 : vector<8x256xf32>
    %cst_698 = arith.constant 1.000000e+00 : f32
    %1583 = vector.broadcast %cst_698 : f32 to vector<8x256xf32>
    %1584 = arith.addf %1583, %1582 : vector<8x256xf32>
    %cst_699 = arith.constant 5.000000e-01 : f32
    %1585 = vector.broadcast %cst_699 : f32 to vector<8x256xf32>
    %1586 = arith.mulf %1585, %1584 : vector<8x256xf32>
    %1587 = arith.mulf %1574, %1586 : vector<8x256xf32>
    %c26_700 = arith.constant 26 : index
    %c0_701 = arith.constant 0 : index
    %1588 = memref.load %arg12[%c26_700, %c0_701] : memref<32x4xf32, #tpu.memory_space<smem>>
    %1589 = vector.broadcast %1588 : f32 to vector<8x256xf32>
    %1590 = arith.mulf %1587, %1589 : vector<8x256xf32>
    %1591 = arith.addf %1542, %1590 : vector<8x256xf32>
    %c26_702 = arith.constant 26 : index
    %c1_703 = arith.constant 1 : index
    %1592 = memref.load %arg12[%c26_702, %c1_703] : memref<32x4xf32, #tpu.memory_space<smem>>
    %1593 = vector.broadcast %1592 : f32 to vector<8x256xf32>
    %1594 = arith.mulf %1587, %1593 : vector<8x256xf32>
    %1595 = arith.addf %1546, %1594 : vector<8x256xf32>
    %c26_704 = arith.constant 26 : index
    %c2_705 = arith.constant 2 : index
    %1596 = memref.load %arg12[%c26_704, %c2_705] : memref<32x4xf32, #tpu.memory_space<smem>>
    %1597 = vector.broadcast %1596 : f32 to vector<8x256xf32>
    %1598 = arith.mulf %1587, %1597 : vector<8x256xf32>
    %1599 = arith.addf %1550, %1598 : vector<8x256xf32>
    %c26_706 = arith.constant 26 : index
    %c3_707 = arith.constant 3 : index
    %1600 = memref.load %arg12[%c26_706, %c3_707] : memref<32x4xf32, #tpu.memory_space<smem>>
    %1601 = vector.broadcast %1600 : f32 to vector<8x256xf32>
    %1602 = arith.mulf %1587, %1601 : vector<8x256xf32>
    %1603 = arith.addf %1554, %1602 : vector<8x256xf32>
    %c0_708 = arith.constant 0 : index
    %c27 = arith.constant 27 : index
    %1604 = memref.load %arg8[%c0_708, %c27] : memref<4x32xf32, #tpu.memory_space<smem>>
    %1605 = vector.broadcast %1604 : f32 to vector<8x256xf32>
    %1606 = arith.mulf %214, %1605 : vector<8x256xf32>
    %c1_709 = arith.constant 1 : index
    %c27_710 = arith.constant 27 : index
    %1607 = memref.load %arg8[%c1_709, %c27_710] : memref<4x32xf32, #tpu.memory_space<smem>>
    %1608 = vector.broadcast %1607 : f32 to vector<8x256xf32>
    %1609 = arith.mulf %219, %1608 : vector<8x256xf32>
    %1610 = arith.addf %1606, %1609 : vector<8x256xf32>
    %c2_711 = arith.constant 2 : index
    %c27_712 = arith.constant 27 : index
    %1611 = memref.load %arg8[%c2_711, %c27_712] : memref<4x32xf32, #tpu.memory_space<smem>>
    %1612 = vector.broadcast %1611 : f32 to vector<8x256xf32>
    %1613 = arith.mulf %224, %1612 : vector<8x256xf32>
    %1614 = arith.addf %1610, %1613 : vector<8x256xf32>
    %c3_713 = arith.constant 3 : index
    %c27_714 = arith.constant 27 : index
    %1615 = memref.load %arg8[%c3_713, %c27_714] : memref<4x32xf32, #tpu.memory_space<smem>>
    %1616 = vector.broadcast %1615 : f32 to vector<8x256xf32>
    %1617 = arith.mulf %229, %1616 : vector<8x256xf32>
    %1618 = arith.addf %1614, %1617 : vector<8x256xf32>
    %c27_715 = arith.constant 27 : index
    %c0_716 = arith.constant 0 : index
    %1619 = vector.load %arg15[%c27_715, %c0_716] : memref<32x256xf32, #tpu.memory_space<vmem>>, vector<1x256xf32>
    %1620 = vector.shape_cast %1619 : vector<1x256xf32> to vector<256xf32>
    %1621 = vector.shape_cast %1620 : vector<256xf32> to vector<1x256xf32>
    %1622 = vector.broadcast %1621 : vector<1x256xf32> to vector<8x256xf32>
    %1623 = arith.addf %1618, %1622 : vector<8x256xf32>
    %1624 = arith.mulf %1623, %1623 : vector<8x256xf32>
    %1625 = arith.mulf %1623, %1624 : vector<8x256xf32>
    %cst_717 = arith.constant 4.471500e-02 : f32
    %1626 = vector.broadcast %cst_717 : f32 to vector<8x256xf32>
    %1627 = arith.mulf %1626, %1625 : vector<8x256xf32>
    %1628 = arith.addf %1623, %1627 : vector<8x256xf32>
    %cst_718 = arith.constant 0.797884583 : f32
    %1629 = vector.broadcast %cst_718 : f32 to vector<8x256xf32>
    %1630 = arith.mulf %1629, %1628 : vector<8x256xf32>
    %1631 = math.tanh %1630 : vector<8x256xf32>
    %cst_719 = arith.constant 1.000000e+00 : f32
    %1632 = vector.broadcast %cst_719 : f32 to vector<8x256xf32>
    %1633 = arith.addf %1632, %1631 : vector<8x256xf32>
    %cst_720 = arith.constant 5.000000e-01 : f32
    %1634 = vector.broadcast %cst_720 : f32 to vector<8x256xf32>
    %1635 = arith.mulf %1634, %1633 : vector<8x256xf32>
    %1636 = arith.mulf %1623, %1635 : vector<8x256xf32>
    %c27_721 = arith.constant 27 : index
    %c0_722 = arith.constant 0 : index
    %1637 = memref.load %arg12[%c27_721, %c0_722] : memref<32x4xf32, #tpu.memory_space<smem>>
    %1638 = vector.broadcast %1637 : f32 to vector<8x256xf32>
    %1639 = arith.mulf %1636, %1638 : vector<8x256xf32>
    %1640 = arith.addf %1591, %1639 : vector<8x256xf32>
    %c27_723 = arith.constant 27 : index
    %c1_724 = arith.constant 1 : index
    %1641 = memref.load %arg12[%c27_723, %c1_724] : memref<32x4xf32, #tpu.memory_space<smem>>
    %1642 = vector.broadcast %1641 : f32 to vector<8x256xf32>
    %1643 = arith.mulf %1636, %1642 : vector<8x256xf32>
    %1644 = arith.addf %1595, %1643 : vector<8x256xf32>
    %c27_725 = arith.constant 27 : index
    %c2_726 = arith.constant 2 : index
    %1645 = memref.load %arg12[%c27_725, %c2_726] : memref<32x4xf32, #tpu.memory_space<smem>>
    %1646 = vector.broadcast %1645 : f32 to vector<8x256xf32>
    %1647 = arith.mulf %1636, %1646 : vector<8x256xf32>
    %1648 = arith.addf %1599, %1647 : vector<8x256xf32>
    %c27_727 = arith.constant 27 : index
    %c3_728 = arith.constant 3 : index
    %1649 = memref.load %arg12[%c27_727, %c3_728] : memref<32x4xf32, #tpu.memory_space<smem>>
    %1650 = vector.broadcast %1649 : f32 to vector<8x256xf32>
    %1651 = arith.mulf %1636, %1650 : vector<8x256xf32>
    %1652 = arith.addf %1603, %1651 : vector<8x256xf32>
    %c0_729 = arith.constant 0 : index
    %c28 = arith.constant 28 : index
    %1653 = memref.load %arg8[%c0_729, %c28] : memref<4x32xf32, #tpu.memory_space<smem>>
    %1654 = vector.broadcast %1653 : f32 to vector<8x256xf32>
    %1655 = arith.mulf %214, %1654 : vector<8x256xf32>
    %c1_730 = arith.constant 1 : index
    %c28_731 = arith.constant 28 : index
    %1656 = memref.load %arg8[%c1_730, %c28_731] : memref<4x32xf32, #tpu.memory_space<smem>>
    %1657 = vector.broadcast %1656 : f32 to vector<8x256xf32>
    %1658 = arith.mulf %219, %1657 : vector<8x256xf32>
    %1659 = arith.addf %1655, %1658 : vector<8x256xf32>
    %c2_732 = arith.constant 2 : index
    %c28_733 = arith.constant 28 : index
    %1660 = memref.load %arg8[%c2_732, %c28_733] : memref<4x32xf32, #tpu.memory_space<smem>>
    %1661 = vector.broadcast %1660 : f32 to vector<8x256xf32>
    %1662 = arith.mulf %224, %1661 : vector<8x256xf32>
    %1663 = arith.addf %1659, %1662 : vector<8x256xf32>
    %c3_734 = arith.constant 3 : index
    %c28_735 = arith.constant 28 : index
    %1664 = memref.load %arg8[%c3_734, %c28_735] : memref<4x32xf32, #tpu.memory_space<smem>>
    %1665 = vector.broadcast %1664 : f32 to vector<8x256xf32>
    %1666 = arith.mulf %229, %1665 : vector<8x256xf32>
    %1667 = arith.addf %1663, %1666 : vector<8x256xf32>
    %c28_736 = arith.constant 28 : index
    %c0_737 = arith.constant 0 : index
    %1668 = vector.load %arg15[%c28_736, %c0_737] : memref<32x256xf32, #tpu.memory_space<vmem>>, vector<1x256xf32>
    %1669 = vector.shape_cast %1668 : vector<1x256xf32> to vector<256xf32>
    %1670 = vector.shape_cast %1669 : vector<256xf32> to vector<1x256xf32>
    %1671 = vector.broadcast %1670 : vector<1x256xf32> to vector<8x256xf32>
    %1672 = arith.addf %1667, %1671 : vector<8x256xf32>
    %1673 = arith.mulf %1672, %1672 : vector<8x256xf32>
    %1674 = arith.mulf %1672, %1673 : vector<8x256xf32>
    %cst_738 = arith.constant 4.471500e-02 : f32
    %1675 = vector.broadcast %cst_738 : f32 to vector<8x256xf32>
    %1676 = arith.mulf %1675, %1674 : vector<8x256xf32>
    %1677 = arith.addf %1672, %1676 : vector<8x256xf32>
    %cst_739 = arith.constant 0.797884583 : f32
    %1678 = vector.broadcast %cst_739 : f32 to vector<8x256xf32>
    %1679 = arith.mulf %1678, %1677 : vector<8x256xf32>
    %1680 = math.tanh %1679 : vector<8x256xf32>
    %cst_740 = arith.constant 1.000000e+00 : f32
    %1681 = vector.broadcast %cst_740 : f32 to vector<8x256xf32>
    %1682 = arith.addf %1681, %1680 : vector<8x256xf32>
    %cst_741 = arith.constant 5.000000e-01 : f32
    %1683 = vector.broadcast %cst_741 : f32 to vector<8x256xf32>
    %1684 = arith.mulf %1683, %1682 : vector<8x256xf32>
    %1685 = arith.mulf %1672, %1684 : vector<8x256xf32>
    %c28_742 = arith.constant 28 : index
    %c0_743 = arith.constant 0 : index
    %1686 = memref.load %arg12[%c28_742, %c0_743] : memref<32x4xf32, #tpu.memory_space<smem>>
    %1687 = vector.broadcast %1686 : f32 to vector<8x256xf32>
    %1688 = arith.mulf %1685, %1687 : vector<8x256xf32>
    %1689 = arith.addf %1640, %1688 : vector<8x256xf32>
    %c28_744 = arith.constant 28 : index
    %c1_745 = arith.constant 1 : index
    %1690 = memref.load %arg12[%c28_744, %c1_745] : memref<32x4xf32, #tpu.memory_space<smem>>
    %1691 = vector.broadcast %1690 : f32 to vector<8x256xf32>
    %1692 = arith.mulf %1685, %1691 : vector<8x256xf32>
    %1693 = arith.addf %1644, %1692 : vector<8x256xf32>
    %c28_746 = arith.constant 28 : index
    %c2_747 = arith.constant 2 : index
    %1694 = memref.load %arg12[%c28_746, %c2_747] : memref<32x4xf32, #tpu.memory_space<smem>>
    %1695 = vector.broadcast %1694 : f32 to vector<8x256xf32>
    %1696 = arith.mulf %1685, %1695 : vector<8x256xf32>
    %1697 = arith.addf %1648, %1696 : vector<8x256xf32>
    %c28_748 = arith.constant 28 : index
    %c3_749 = arith.constant 3 : index
    %1698 = memref.load %arg12[%c28_748, %c3_749] : memref<32x4xf32, #tpu.memory_space<smem>>
    %1699 = vector.broadcast %1698 : f32 to vector<8x256xf32>
    %1700 = arith.mulf %1685, %1699 : vector<8x256xf32>
    %1701 = arith.addf %1652, %1700 : vector<8x256xf32>
    %c0_750 = arith.constant 0 : index
    %c29 = arith.constant 29 : index
    %1702 = memref.load %arg8[%c0_750, %c29] : memref<4x32xf32, #tpu.memory_space<smem>>
    %1703 = vector.broadcast %1702 : f32 to vector<8x256xf32>
    %1704 = arith.mulf %214, %1703 : vector<8x256xf32>
    %c1_751 = arith.constant 1 : index
    %c29_752 = arith.constant 29 : index
    %1705 = memref.load %arg8[%c1_751, %c29_752] : memref<4x32xf32, #tpu.memory_space<smem>>
    %1706 = vector.broadcast %1705 : f32 to vector<8x256xf32>
    %1707 = arith.mulf %219, %1706 : vector<8x256xf32>
    %1708 = arith.addf %1704, %1707 : vector<8x256xf32>
    %c2_753 = arith.constant 2 : index
    %c29_754 = arith.constant 29 : index
    %1709 = memref.load %arg8[%c2_753, %c29_754] : memref<4x32xf32, #tpu.memory_space<smem>>
    %1710 = vector.broadcast %1709 : f32 to vector<8x256xf32>
    %1711 = arith.mulf %224, %1710 : vector<8x256xf32>
    %1712 = arith.addf %1708, %1711 : vector<8x256xf32>
    %c3_755 = arith.constant 3 : index
    %c29_756 = arith.constant 29 : index
    %1713 = memref.load %arg8[%c3_755, %c29_756] : memref<4x32xf32, #tpu.memory_space<smem>>
    %1714 = vector.broadcast %1713 : f32 to vector<8x256xf32>
    %1715 = arith.mulf %229, %1714 : vector<8x256xf32>
    %1716 = arith.addf %1712, %1715 : vector<8x256xf32>
    %c29_757 = arith.constant 29 : index
    %c0_758 = arith.constant 0 : index
    %1717 = vector.load %arg15[%c29_757, %c0_758] : memref<32x256xf32, #tpu.memory_space<vmem>>, vector<1x256xf32>
    %1718 = vector.shape_cast %1717 : vector<1x256xf32> to vector<256xf32>
    %1719 = vector.shape_cast %1718 : vector<256xf32> to vector<1x256xf32>
    %1720 = vector.broadcast %1719 : vector<1x256xf32> to vector<8x256xf32>
    %1721 = arith.addf %1716, %1720 : vector<8x256xf32>
    %1722 = arith.mulf %1721, %1721 : vector<8x256xf32>
    %1723 = arith.mulf %1721, %1722 : vector<8x256xf32>
    %cst_759 = arith.constant 4.471500e-02 : f32
    %1724 = vector.broadcast %cst_759 : f32 to vector<8x256xf32>
    %1725 = arith.mulf %1724, %1723 : vector<8x256xf32>
    %1726 = arith.addf %1721, %1725 : vector<8x256xf32>
    %cst_760 = arith.constant 0.797884583 : f32
    %1727 = vector.broadcast %cst_760 : f32 to vector<8x256xf32>
    %1728 = arith.mulf %1727, %1726 : vector<8x256xf32>
    %1729 = math.tanh %1728 : vector<8x256xf32>
    %cst_761 = arith.constant 1.000000e+00 : f32
    %1730 = vector.broadcast %cst_761 : f32 to vector<8x256xf32>
    %1731 = arith.addf %1730, %1729 : vector<8x256xf32>
    %cst_762 = arith.constant 5.000000e-01 : f32
    %1732 = vector.broadcast %cst_762 : f32 to vector<8x256xf32>
    %1733 = arith.mulf %1732, %1731 : vector<8x256xf32>
    %1734 = arith.mulf %1721, %1733 : vector<8x256xf32>
    %c29_763 = arith.constant 29 : index
    %c0_764 = arith.constant 0 : index
    %1735 = memref.load %arg12[%c29_763, %c0_764] : memref<32x4xf32, #tpu.memory_space<smem>>
    %1736 = vector.broadcast %1735 : f32 to vector<8x256xf32>
    %1737 = arith.mulf %1734, %1736 : vector<8x256xf32>
    %1738 = arith.addf %1689, %1737 : vector<8x256xf32>
    %c29_765 = arith.constant 29 : index
    %c1_766 = arith.constant 1 : index
    %1739 = memref.load %arg12[%c29_765, %c1_766] : memref<32x4xf32, #tpu.memory_space<smem>>
    %1740 = vector.broadcast %1739 : f32 to vector<8x256xf32>
    %1741 = arith.mulf %1734, %1740 : vector<8x256xf32>
    %1742 = arith.addf %1693, %1741 : vector<8x256xf32>
    %c29_767 = arith.constant 29 : index
    %c2_768 = arith.constant 2 : index
    %1743 = memref.load %arg12[%c29_767, %c2_768] : memref<32x4xf32, #tpu.memory_space<smem>>
    %1744 = vector.broadcast %1743 : f32 to vector<8x256xf32>
    %1745 = arith.mulf %1734, %1744 : vector<8x256xf32>
    %1746 = arith.addf %1697, %1745 : vector<8x256xf32>
    %c29_769 = arith.constant 29 : index
    %c3_770 = arith.constant 3 : index
    %1747 = memref.load %arg12[%c29_769, %c3_770] : memref<32x4xf32, #tpu.memory_space<smem>>
    %1748 = vector.broadcast %1747 : f32 to vector<8x256xf32>
    %1749 = arith.mulf %1734, %1748 : vector<8x256xf32>
    %1750 = arith.addf %1701, %1749 : vector<8x256xf32>
    %c0_771 = arith.constant 0 : index
    %c30 = arith.constant 30 : index
    %1751 = memref.load %arg8[%c0_771, %c30] : memref<4x32xf32, #tpu.memory_space<smem>>
    %1752 = vector.broadcast %1751 : f32 to vector<8x256xf32>
    %1753 = arith.mulf %214, %1752 : vector<8x256xf32>
    %c1_772 = arith.constant 1 : index
    %c30_773 = arith.constant 30 : index
    %1754 = memref.load %arg8[%c1_772, %c30_773] : memref<4x32xf32, #tpu.memory_space<smem>>
    %1755 = vector.broadcast %1754 : f32 to vector<8x256xf32>
    %1756 = arith.mulf %219, %1755 : vector<8x256xf32>
    %1757 = arith.addf %1753, %1756 : vector<8x256xf32>
    %c2_774 = arith.constant 2 : index
    %c30_775 = arith.constant 30 : index
    %1758 = memref.load %arg8[%c2_774, %c30_775] : memref<4x32xf32, #tpu.memory_space<smem>>
    %1759 = vector.broadcast %1758 : f32 to vector<8x256xf32>
    %1760 = arith.mulf %224, %1759 : vector<8x256xf32>
    %1761 = arith.addf %1757, %1760 : vector<8x256xf32>
    %c3_776 = arith.constant 3 : index
    %c30_777 = arith.constant 30 : index
    %1762 = memref.load %arg8[%c3_776, %c30_777] : memref<4x32xf32, #tpu.memory_space<smem>>
    %1763 = vector.broadcast %1762 : f32 to vector<8x256xf32>
    %1764 = arith.mulf %229, %1763 : vector<8x256xf32>
    %1765 = arith.addf %1761, %1764 : vector<8x256xf32>
    %c30_778 = arith.constant 30 : index
    %c0_779 = arith.constant 0 : index
    %1766 = vector.load %arg15[%c30_778, %c0_779] : memref<32x256xf32, #tpu.memory_space<vmem>>, vector<1x256xf32>
    %1767 = vector.shape_cast %1766 : vector<1x256xf32> to vector<256xf32>
    %1768 = vector.shape_cast %1767 : vector<256xf32> to vector<1x256xf32>
    %1769 = vector.broadcast %1768 : vector<1x256xf32> to vector<8x256xf32>
    %1770 = arith.addf %1765, %1769 : vector<8x256xf32>
    %1771 = arith.mulf %1770, %1770 : vector<8x256xf32>
    %1772 = arith.mulf %1770, %1771 : vector<8x256xf32>
    %cst_780 = arith.constant 4.471500e-02 : f32
    %1773 = vector.broadcast %cst_780 : f32 to vector<8x256xf32>
    %1774 = arith.mulf %1773, %1772 : vector<8x256xf32>
    %1775 = arith.addf %1770, %1774 : vector<8x256xf32>
    %cst_781 = arith.constant 0.797884583 : f32
    %1776 = vector.broadcast %cst_781 : f32 to vector<8x256xf32>
    %1777 = arith.mulf %1776, %1775 : vector<8x256xf32>
    %1778 = math.tanh %1777 : vector<8x256xf32>
    %cst_782 = arith.constant 1.000000e+00 : f32
    %1779 = vector.broadcast %cst_782 : f32 to vector<8x256xf32>
    %1780 = arith.addf %1779, %1778 : vector<8x256xf32>
    %cst_783 = arith.constant 5.000000e-01 : f32
    %1781 = vector.broadcast %cst_783 : f32 to vector<8x256xf32>
    %1782 = arith.mulf %1781, %1780 : vector<8x256xf32>
    %1783 = arith.mulf %1770, %1782 : vector<8x256xf32>
    %c30_784 = arith.constant 30 : index
    %c0_785 = arith.constant 0 : index
    %1784 = memref.load %arg12[%c30_784, %c0_785] : memref<32x4xf32, #tpu.memory_space<smem>>
    %1785 = vector.broadcast %1784 : f32 to vector<8x256xf32>
    %1786 = arith.mulf %1783, %1785 : vector<8x256xf32>
    %1787 = arith.addf %1738, %1786 : vector<8x256xf32>
    %c30_786 = arith.constant 30 : index
    %c1_787 = arith.constant 1 : index
    %1788 = memref.load %arg12[%c30_786, %c1_787] : memref<32x4xf32, #tpu.memory_space<smem>>
    %1789 = vector.broadcast %1788 : f32 to vector<8x256xf32>
    %1790 = arith.mulf %1783, %1789 : vector<8x256xf32>
    %1791 = arith.addf %1742, %1790 : vector<8x256xf32>
    %c30_788 = arith.constant 30 : index
    %c2_789 = arith.constant 2 : index
    %1792 = memref.load %arg12[%c30_788, %c2_789] : memref<32x4xf32, #tpu.memory_space<smem>>
    %1793 = vector.broadcast %1792 : f32 to vector<8x256xf32>
    %1794 = arith.mulf %1783, %1793 : vector<8x256xf32>
    %1795 = arith.addf %1746, %1794 : vector<8x256xf32>
    %c30_790 = arith.constant 30 : index
    %c3_791 = arith.constant 3 : index
    %1796 = memref.load %arg12[%c30_790, %c3_791] : memref<32x4xf32, #tpu.memory_space<smem>>
    %1797 = vector.broadcast %1796 : f32 to vector<8x256xf32>
    %1798 = arith.mulf %1783, %1797 : vector<8x256xf32>
    %1799 = arith.addf %1750, %1798 : vector<8x256xf32>
    %c0_792 = arith.constant 0 : index
    %c31 = arith.constant 31 : index
    %1800 = memref.load %arg8[%c0_792, %c31] : memref<4x32xf32, #tpu.memory_space<smem>>
    %1801 = vector.broadcast %1800 : f32 to vector<8x256xf32>
    %1802 = arith.mulf %214, %1801 : vector<8x256xf32>
    %c1_793 = arith.constant 1 : index
    %c31_794 = arith.constant 31 : index
    %1803 = memref.load %arg8[%c1_793, %c31_794] : memref<4x32xf32, #tpu.memory_space<smem>>
    %1804 = vector.broadcast %1803 : f32 to vector<8x256xf32>
    %1805 = arith.mulf %219, %1804 : vector<8x256xf32>
    %1806 = arith.addf %1802, %1805 : vector<8x256xf32>
    %c2_795 = arith.constant 2 : index
    %c31_796 = arith.constant 31 : index
    %1807 = memref.load %arg8[%c2_795, %c31_796] : memref<4x32xf32, #tpu.memory_space<smem>>
    %1808 = vector.broadcast %1807 : f32 to vector<8x256xf32>
    %1809 = arith.mulf %224, %1808 : vector<8x256xf32>
    %1810 = arith.addf %1806, %1809 : vector<8x256xf32>
    %c3_797 = arith.constant 3 : index
    %c31_798 = arith.constant 31 : index
    %1811 = memref.load %arg8[%c3_797, %c31_798] : memref<4x32xf32, #tpu.memory_space<smem>>
    %1812 = vector.broadcast %1811 : f32 to vector<8x256xf32>
    %1813 = arith.mulf %229, %1812 : vector<8x256xf32>
    %1814 = arith.addf %1810, %1813 : vector<8x256xf32>
    %c31_799 = arith.constant 31 : index
    %c0_800 = arith.constant 0 : index
    %1815 = vector.load %arg15[%c31_799, %c0_800] : memref<32x256xf32, #tpu.memory_space<vmem>>, vector<1x256xf32>
    %1816 = vector.shape_cast %1815 : vector<1x256xf32> to vector<256xf32>
    %1817 = vector.shape_cast %1816 : vector<256xf32> to vector<1x256xf32>
    %1818 = vector.broadcast %1817 : vector<1x256xf32> to vector<8x256xf32>
    %1819 = arith.addf %1814, %1818 : vector<8x256xf32>
    %1820 = arith.mulf %1819, %1819 : vector<8x256xf32>
    %1821 = arith.mulf %1819, %1820 : vector<8x256xf32>
    %cst_801 = arith.constant 4.471500e-02 : f32
    %1822 = vector.broadcast %cst_801 : f32 to vector<8x256xf32>
    %1823 = arith.mulf %1822, %1821 : vector<8x256xf32>
    %1824 = arith.addf %1819, %1823 : vector<8x256xf32>
    %cst_802 = arith.constant 0.797884583 : f32
    %1825 = vector.broadcast %cst_802 : f32 to vector<8x256xf32>
    %1826 = arith.mulf %1825, %1824 : vector<8x256xf32>
    %1827 = math.tanh %1826 : vector<8x256xf32>
    %cst_803 = arith.constant 1.000000e+00 : f32
    %1828 = vector.broadcast %cst_803 : f32 to vector<8x256xf32>
    %1829 = arith.addf %1828, %1827 : vector<8x256xf32>
    %cst_804 = arith.constant 5.000000e-01 : f32
    %1830 = vector.broadcast %cst_804 : f32 to vector<8x256xf32>
    %1831 = arith.mulf %1830, %1829 : vector<8x256xf32>
    %1832 = arith.mulf %1819, %1831 : vector<8x256xf32>
    %c31_805 = arith.constant 31 : index
    %c0_806 = arith.constant 0 : index
    %1833 = memref.load %arg12[%c31_805, %c0_806] : memref<32x4xf32, #tpu.memory_space<smem>>
    %1834 = vector.broadcast %1833 : f32 to vector<8x256xf32>
    %1835 = arith.mulf %1832, %1834 : vector<8x256xf32>
    %1836 = arith.addf %1787, %1835 : vector<8x256xf32>
    %c31_807 = arith.constant 31 : index
    %c1_808 = arith.constant 1 : index
    %1837 = memref.load %arg12[%c31_807, %c1_808] : memref<32x4xf32, #tpu.memory_space<smem>>
    %1838 = vector.broadcast %1837 : f32 to vector<8x256xf32>
    %1839 = arith.mulf %1832, %1838 : vector<8x256xf32>
    %1840 = arith.addf %1791, %1839 : vector<8x256xf32>
    %c31_809 = arith.constant 31 : index
    %c2_810 = arith.constant 2 : index
    %1841 = memref.load %arg12[%c31_809, %c2_810] : memref<32x4xf32, #tpu.memory_space<smem>>
    %1842 = vector.broadcast %1841 : f32 to vector<8x256xf32>
    %1843 = arith.mulf %1832, %1842 : vector<8x256xf32>
    %1844 = arith.addf %1795, %1843 : vector<8x256xf32>
    %c31_811 = arith.constant 31 : index
    %c3_812 = arith.constant 3 : index
    %1845 = memref.load %arg12[%c31_811, %c3_812] : memref<32x4xf32, #tpu.memory_space<smem>>
    %1846 = vector.broadcast %1845 : f32 to vector<8x256xf32>
    %1847 = arith.mulf %1832, %1846 : vector<8x256xf32>
    %1848 = arith.addf %1799, %1847 : vector<8x256xf32>
    %cst_813 = arith.constant 0.000000e+00 : f32
    %1849 = vector.broadcast %cst_813 : f32 to vector<8x256xf32>
    %cst_814 = arith.constant 0.000000e+00 : f32
    %1850 = vector.broadcast %cst_814 : f32 to vector<8x256xf32>
    %cst_815 = arith.constant 0.000000e+00 : f32
    %1851 = vector.broadcast %cst_815 : f32 to vector<7x256xf32>
    %cst_816 = arith.constant 0.000000e+00 : f32
    %1852 = vector.broadcast %cst_816 : f32 to vector<1x256xf32>
    %cst_817 = arith.constant 0.000000e+00 : f32
    %1853 = vector.broadcast %cst_817 : f32 to vector<1x256xf32>
    %c0_818 = arith.constant 0 : index
    %1854 = memref.load %arg13[%c0_818] : memref<4xf32, #tpu.memory_space<smem>>
    %1855 = vector.broadcast %1854 : f32 to vector<8x256xf32>
    %1856 = arith.addf %1836, %1855 : vector<8x256xf32>
    %1857 = arith.subf %24, %203 : vector<8x256xf32>
    %1858 = arith.subf %1856, %1857 : vector<8x256xf32>
    %1859 = arith.mulf %1858, %1858 : vector<8x256xf32>
    %1860 = arith.addf %1849, %1859 : vector<8x256xf32>
    %1861 = vector.broadcast %2 : f32 to vector<8x256xf32>
    %1862 = arith.mulf %1861, %1856 : vector<8x256xf32>
    %1863 = arith.addf %214, %1862 : vector<8x256xf32>
    %1864 = arith.subf %1863, %24 : vector<8x256xf32>
    %1865 = arith.mulf %1864, %1864 : vector<8x256xf32>
    %1866 = arith.addf %1850, %1865 : vector<8x256xf32>
    %1867 = vector.extract_strided_slice %1863 {offsets = [1, 0], sizes = [7, 256], strides = [1, 1]} : vector<8x256xf32> to vector<7x256xf32>
    %1868 = vector.extract_strided_slice %1863 {offsets = [0, 0], sizes = [7, 256], strides = [1, 1]} : vector<8x256xf32> to vector<7x256xf32>
    %1869 = arith.subf %1867, %1868 : vector<7x256xf32>
    %1870 = arith.mulf %1869, %1869 : vector<7x256xf32>
    %1871 = arith.addf %1851, %1870 : vector<7x256xf32>
    %1872 = vector.extract_strided_slice %1863 {offsets = [0, 0], sizes = [1, 256], strides = [1, 1]} : vector<8x256xf32> to vector<1x256xf32>
    %1873 = arith.subf %1872, %30 : vector<1x256xf32>
    %1874 = arith.mulf %1873, %1873 : vector<1x256xf32>
    %1875 = arith.addf %1852, %1874 : vector<1x256xf32>
    %1876 = vector.extract_strided_slice %1863 {offsets = [7, 0], sizes = [1, 256], strides = [1, 1]} : vector<8x256xf32> to vector<1x256xf32>
    %1877 = arith.subf %1876, %36 : vector<1x256xf32>
    %1878 = arith.mulf %1877, %1877 : vector<1x256xf32>
    %1879 = arith.addf %1853, %1878 : vector<1x256xf32>
    %c1_819 = arith.constant 1 : index
    %1880 = memref.load %arg13[%c1_819] : memref<4xf32, #tpu.memory_space<smem>>
    %1881 = vector.broadcast %1880 : f32 to vector<8x256xf32>
    %1882 = arith.addf %1840, %1881 : vector<8x256xf32>
    %1883 = arith.subf %62, %205 : vector<8x256xf32>
    %1884 = arith.subf %1882, %1883 : vector<8x256xf32>
    %1885 = arith.mulf %1884, %1884 : vector<8x256xf32>
    %1886 = arith.addf %1860, %1885 : vector<8x256xf32>
    %1887 = vector.broadcast %2 : f32 to vector<8x256xf32>
    %1888 = arith.mulf %1887, %1882 : vector<8x256xf32>
    %1889 = arith.addf %219, %1888 : vector<8x256xf32>
    %1890 = arith.subf %1889, %62 : vector<8x256xf32>
    %1891 = arith.mulf %1890, %1890 : vector<8x256xf32>
    %1892 = arith.addf %1866, %1891 : vector<8x256xf32>
    %1893 = vector.extract_strided_slice %1889 {offsets = [1, 0], sizes = [7, 256], strides = [1, 1]} : vector<8x256xf32> to vector<7x256xf32>
    %1894 = vector.extract_strided_slice %1889 {offsets = [0, 0], sizes = [7, 256], strides = [1, 1]} : vector<8x256xf32> to vector<7x256xf32>
    %1895 = arith.subf %1893, %1894 : vector<7x256xf32>
    %1896 = arith.mulf %1895, %1895 : vector<7x256xf32>
    %1897 = arith.addf %1871, %1896 : vector<7x256xf32>
    %1898 = vector.extract_strided_slice %1889 {offsets = [0, 0], sizes = [1, 256], strides = [1, 1]} : vector<8x256xf32> to vector<1x256xf32>
    %1899 = arith.subf %1898, %68 : vector<1x256xf32>
    %1900 = arith.mulf %1899, %1899 : vector<1x256xf32>
    %1901 = arith.addf %1875, %1900 : vector<1x256xf32>
    %1902 = vector.extract_strided_slice %1889 {offsets = [7, 0], sizes = [1, 256], strides = [1, 1]} : vector<8x256xf32> to vector<1x256xf32>
    %1903 = arith.subf %1902, %74 : vector<1x256xf32>
    %1904 = arith.mulf %1903, %1903 : vector<1x256xf32>
    %1905 = arith.addf %1879, %1904 : vector<1x256xf32>
    %c2_820 = arith.constant 2 : index
    %1906 = memref.load %arg13[%c2_820] : memref<4xf32, #tpu.memory_space<smem>>
    %1907 = vector.broadcast %1906 : f32 to vector<8x256xf32>
    %1908 = arith.addf %1844, %1907 : vector<8x256xf32>
    %1909 = arith.subf %100, %207 : vector<8x256xf32>
    %1910 = arith.subf %1908, %1909 : vector<8x256xf32>
    %1911 = arith.mulf %1910, %1910 : vector<8x256xf32>
    %1912 = arith.addf %1886, %1911 : vector<8x256xf32>
    %1913 = vector.broadcast %2 : f32 to vector<8x256xf32>
    %1914 = arith.mulf %1913, %1908 : vector<8x256xf32>
    %1915 = arith.addf %224, %1914 : vector<8x256xf32>
    %1916 = arith.subf %1915, %100 : vector<8x256xf32>
    %1917 = arith.mulf %1916, %1916 : vector<8x256xf32>
    %1918 = arith.addf %1892, %1917 : vector<8x256xf32>
    %1919 = vector.extract_strided_slice %1915 {offsets = [1, 0], sizes = [7, 256], strides = [1, 1]} : vector<8x256xf32> to vector<7x256xf32>
    %1920 = vector.extract_strided_slice %1915 {offsets = [0, 0], sizes = [7, 256], strides = [1, 1]} : vector<8x256xf32> to vector<7x256xf32>
    %1921 = arith.subf %1919, %1920 : vector<7x256xf32>
    %1922 = arith.mulf %1921, %1921 : vector<7x256xf32>
    %1923 = arith.addf %1897, %1922 : vector<7x256xf32>
    %1924 = vector.extract_strided_slice %1915 {offsets = [0, 0], sizes = [1, 256], strides = [1, 1]} : vector<8x256xf32> to vector<1x256xf32>
    %1925 = arith.subf %1924, %106 : vector<1x256xf32>
    %1926 = arith.mulf %1925, %1925 : vector<1x256xf32>
    %1927 = arith.addf %1901, %1926 : vector<1x256xf32>
    %1928 = vector.extract_strided_slice %1915 {offsets = [7, 0], sizes = [1, 256], strides = [1, 1]} : vector<8x256xf32> to vector<1x256xf32>
    %1929 = arith.subf %1928, %112 : vector<1x256xf32>
    %1930 = arith.mulf %1929, %1929 : vector<1x256xf32>
    %1931 = arith.addf %1905, %1930 : vector<1x256xf32>
    %c3_821 = arith.constant 3 : index
    %1932 = memref.load %arg13[%c3_821] : memref<4xf32, #tpu.memory_space<smem>>
    %1933 = vector.broadcast %1932 : f32 to vector<8x256xf32>
    %1934 = arith.addf %1848, %1933 : vector<8x256xf32>
    %1935 = arith.subf %138, %209 : vector<8x256xf32>
    %1936 = arith.subf %1934, %1935 : vector<8x256xf32>
    %1937 = arith.mulf %1936, %1936 : vector<8x256xf32>
    %1938 = arith.addf %1912, %1937 : vector<8x256xf32>
    %1939 = vector.broadcast %2 : f32 to vector<8x256xf32>
    %1940 = arith.mulf %1939, %1934 : vector<8x256xf32>
    %1941 = arith.addf %229, %1940 : vector<8x256xf32>
    %1942 = arith.subf %1941, %138 : vector<8x256xf32>
    %1943 = arith.mulf %1942, %1942 : vector<8x256xf32>
    %1944 = arith.addf %1918, %1943 : vector<8x256xf32>
    %1945 = vector.extract_strided_slice %1941 {offsets = [1, 0], sizes = [7, 256], strides = [1, 1]} : vector<8x256xf32> to vector<7x256xf32>
    %1946 = vector.extract_strided_slice %1941 {offsets = [0, 0], sizes = [7, 256], strides = [1, 1]} : vector<8x256xf32> to vector<7x256xf32>
    %1947 = arith.subf %1945, %1946 : vector<7x256xf32>
    %1948 = arith.mulf %1947, %1947 : vector<7x256xf32>
    %1949 = arith.addf %1923, %1948 : vector<7x256xf32>
    %1950 = vector.extract_strided_slice %1941 {offsets = [0, 0], sizes = [1, 256], strides = [1, 1]} : vector<8x256xf32> to vector<1x256xf32>
    %1951 = arith.subf %1950, %144 : vector<1x256xf32>
    %1952 = arith.mulf %1951, %1951 : vector<1x256xf32>
    %1953 = arith.addf %1927, %1952 : vector<1x256xf32>
    %1954 = vector.extract_strided_slice %1941 {offsets = [7, 0], sizes = [1, 256], strides = [1, 1]} : vector<8x256xf32> to vector<1x256xf32>
    %1955 = arith.subf %1954, %150 : vector<1x256xf32>
    %1956 = arith.mulf %1955, %1955 : vector<1x256xf32>
    %1957 = arith.addf %1931, %1956 : vector<1x256xf32>
    %1958 = vector.shape_cast %1938 : vector<8x256xf32> to vector<1x8x256xf32>
    %cst_822 = arith.constant dense<0.000000e+00> : vector<1xf32>
    %1959 = vector.multi_reduction <add>, %1958, %cst_822 [1, 2] : vector<1x8x256xf32> to vector<1xf32>
    %1960 = vector.shape_cast %1959 : vector<1xf32> to vector<1x1x1xf32>
    %1961 = vector.extract %1960[0, 0, 0] : f32 from vector<1x1x1xf32>
    %1962 = vector.shape_cast %1944 : vector<8x256xf32> to vector<1x8x256xf32>
    %cst_823 = arith.constant dense<0.000000e+00> : vector<1xf32>
    %1963 = vector.multi_reduction <add>, %1962, %cst_823 [1, 2] : vector<1x8x256xf32> to vector<1xf32>
    %1964 = vector.shape_cast %1963 : vector<1xf32> to vector<1x1x1xf32>
    %1965 = vector.extract %1964[0, 0, 0] : f32 from vector<1x1x1xf32>
    %1966 = vector.shape_cast %1949 : vector<7x256xf32> to vector<1x7x256xf32>
    %cst_824 = arith.constant dense<0.000000e+00> : vector<1xf32>
    %1967 = vector.multi_reduction <add>, %1966, %cst_824 [1, 2] : vector<1x7x256xf32> to vector<1xf32>
    %1968 = vector.shape_cast %1967 : vector<1xf32> to vector<1x1x1xf32>
    %1969 = vector.extract %1968[0, 0, 0] : f32 from vector<1x1x1xf32>
    %1970 = vector.shape_cast %1953 : vector<1x256xf32> to vector<1x1x256xf32>
    %cst_825 = arith.constant dense<0.000000e+00> : vector<1xf32>
    %1971 = vector.multi_reduction <add>, %1970, %cst_825 [1, 2] : vector<1x1x256xf32> to vector<1xf32>
    %1972 = vector.shape_cast %1971 : vector<1xf32> to vector<1x1x1xf32>
    %1973 = vector.extract %1972[0, 0, 0] : f32 from vector<1x1x1xf32>
    %1974 = vector.shape_cast %1957 : vector<1x256xf32> to vector<1x1x256xf32>
    %cst_826 = arith.constant dense<0.000000e+00> : vector<1xf32>
    %1975 = vector.multi_reduction <add>, %1974, %cst_826 [1, 2] : vector<1x1x256xf32> to vector<1xf32>
    %1976 = vector.shape_cast %1975 : vector<1xf32> to vector<1x1x1xf32>
    %1977 = vector.extract %1976[0, 0, 0] : f32 from vector<1x1x1xf32>
    %1978 = tpu.iota {dimensions = array<i32: 2>} : vector<1x1x128xi32>
    %cst_827 = arith.constant 0.000000e+00 : f32
    %1979 = vector.broadcast %cst_827 : f32 to vector<1x1x128xf32>
    %c0_i32 = arith.constant 0 : i32
    %1980 = vector.broadcast %c0_i32 : i32 to vector<1x1x128xi32>
    %1981 = arith.cmpi eq, %1978, %1980 : vector<1x1x128xi32>
    %1982 = vector.broadcast %161 : f32 to vector<1x1x128xf32>
    %1983 = arith.select %1981, %1982, %1979 : vector<1x1x128xi1>, vector<1x1x128xf32>
    %c1_i32 = arith.constant 1 : i32
    %1984 = vector.broadcast %c1_i32 : i32 to vector<1x1x128xi32>
    %1985 = arith.cmpi eq, %1978, %1984 : vector<1x1x128xi32>
    %1986 = vector.broadcast %197 : f32 to vector<1x1x128xf32>
    %1987 = arith.select %1985, %1986, %1983 : vector<1x1x128xi1>, vector<1x1x128xf32>
    %c2_i32 = arith.constant 2 : i32
    %1988 = vector.broadcast %c2_i32 : i32 to vector<1x1x128xi32>
    %1989 = arith.cmpi eq, %1978, %1988 : vector<1x1x128xi32>
    %1990 = vector.broadcast %201 : f32 to vector<1x1x128xf32>
    %1991 = arith.select %1989, %1990, %1987 : vector<1x1x128xi1>, vector<1x1x128xf32>
    %c3_i32 = arith.constant 3 : i32
    %1992 = vector.broadcast %c3_i32 : i32 to vector<1x1x128xi32>
    %1993 = arith.cmpi eq, %1978, %1992 : vector<1x1x128xi32>
    %1994 = vector.broadcast %1961 : f32 to vector<1x1x128xf32>
    %1995 = arith.select %1993, %1994, %1991 : vector<1x1x128xi1>, vector<1x1x128xf32>
    %c4_i32 = arith.constant 4 : i32
    %1996 = vector.broadcast %c4_i32 : i32 to vector<1x1x128xi32>
    %1997 = arith.cmpi eq, %1978, %1996 : vector<1x1x128xi32>
    %1998 = vector.broadcast %1965 : f32 to vector<1x1x128xf32>
    %1999 = arith.select %1997, %1998, %1995 : vector<1x1x128xi1>, vector<1x1x128xf32>
    %c5_i32 = arith.constant 5 : i32
    %2000 = vector.broadcast %c5_i32 : i32 to vector<1x1x128xi32>
    %2001 = arith.cmpi eq, %1978, %2000 : vector<1x1x128xi32>
    %2002 = vector.broadcast %1969 : f32 to vector<1x1x128xf32>
    %2003 = arith.select %2001, %2002, %1999 : vector<1x1x128xi1>, vector<1x1x128xf32>
    %c6_i32 = arith.constant 6 : i32
    %2004 = vector.broadcast %c6_i32 : i32 to vector<1x1x128xi32>
    %2005 = arith.cmpi eq, %1978, %2004 : vector<1x1x128xi32>
    %2006 = vector.broadcast %1973 : f32 to vector<1x1x128xf32>
    %2007 = arith.select %2005, %2006, %2003 : vector<1x1x128xi1>, vector<1x1x128xf32>
    %c7_i32 = arith.constant 7 : i32
    %2008 = vector.broadcast %c7_i32 : i32 to vector<1x1x128xi32>
    %2009 = arith.cmpi eq, %1978, %2008 : vector<1x1x128xi32>
    %2010 = vector.broadcast %1977 : f32 to vector<1x1x128xf32>
    %2011 = arith.select %2009, %2010, %2007 : vector<1x1x128xi1>, vector<1x1x128xf32>
    %c0_828 = arith.constant 0 : index
    %c0_829 = arith.constant 0 : index
    %c0_830 = arith.constant 0 : index
    %2012 = vector.load %arg14[%c0_828, %c0_829, %c0_830] : memref<1x1x128xf32, #tpu.memory_space<vmem>>, vector<1x1x128xf32>
    tpu.vector_store %arg14[%c0_828, %c0_829, %c0_830], %2011 {strides = array<i32>} : memref<1x1x128xf32, #tpu.memory_space<vmem>>, vector<1x1x128xf32>,
    return
  }
  func.func @transform_0(%arg0: i32) -> i32 {
    %c0_i32 = arith.constant 0 : i32
    %c0_i32_0 = arith.constant 0 : i32
    return %c0_i32 : i32
  }
  func.func @transform_1(%arg0: i32) -> (i32, i32, i32, i32) {
    %c0_i32 = arith.constant 0 : i32
    %c0_i32_0 = arith.constant 0 : i32
    %c0_i32_1 = arith.constant 0 : i32
    %c0_i32_2 = arith.constant 0 : i32
    return %arg0, %c0_i32, %c0_i32_0, %c0_i32_1 : i32, i32, i32, i32
  }
  func.func @transform_2(%arg0: i32) -> (i32, i32, i32, i32) {
    %c0_i32 = arith.constant 0 : i32
    %c0_i32_0 = arith.constant 0 : i32
    %c0_i32_1 = arith.constant 0 : i32
    %c0_i32_2 = arith.constant 0 : i32
    return %arg0, %c0_i32, %c0_i32_0, %c0_i32_1 : i32, i32, i32, i32
  }
  func.func @transform_3(%arg0: i32) -> (i32, i32) {
    %c0_i32 = arith.constant 0 : i32
    %c0_i32_0 = arith.constant 0 : i32
    %c0_i32_1 = arith.constant 0 : i32
    return %c0_i32, %c0_i32_0 : i32, i32
  }
  func.func @transform_4(%arg0: i32) -> i32 {
    %c0_i32 = arith.constant 0 : i32
    %c0_i32_0 = arith.constant 0 : i32
    return %c0_i32 : i32
  }
  func.func @transform_5(%arg0: i32) -> (i32, i32) {
    %c0_i32 = arith.constant 0 : i32
    %c0_i32_0 = arith.constant 0 : i32
    %c0_i32_1 = arith.constant 0 : i32
    return %c0_i32, %c0_i32_0 : i32, i32
  }
  func.func @transform_6(%arg0: i32) -> i32 {
    %c0_i32 = arith.constant 0 : i32
    %c0_i32_0 = arith.constant 0 : i32
    return %c0_i32 : i32
  }
  func.func @transform_7(%arg0: i32) -> (i32, i32) {
    %c0_i32 = arith.constant 0 : i32
    %c0_i32_0 = arith.constant 0 : i32
    %c0_i32_1 = arith.constant 0 : i32
    return %c0_i32, %c0_i32_0 : i32, i32
  }
  func.func @transform_8(%arg0: i32) -> (i32, i32) {
    %c0_i32 = arith.constant 0 : i32
    %c0_i32_0 = arith.constant 0 : i32
    %c0_i32_1 = arith.constant 0 : i32
    return %c0_i32, %c0_i32_0 : i32, i32
  }
  func.func @transform_9(%arg0: i32) -> (i32, i32) {
    %c0_i32 = arith.constant 0 : i32
    %c0_i32_0 = arith.constant 0 : i32
    %c0_i32_1 = arith.constant 0 : i32
    return %c0_i32, %c0_i32_0 : i32, i32
  }
  func.func @transform_10(%arg0: i32) -> (i32, i32) {
    %c0_i32 = arith.constant 0 : i32
    %c0_i32_0 = arith.constant 0 : i32
    %c0_i32_1 = arith.constant 0 : i32
    return %c0_i32, %c0_i32_0 : i32, i32
  }
  func.func @transform_11(%arg0: i32) -> (i32, i32) {
    %c0_i32 = arith.constant 0 : i32
    %c0_i32_0 = arith.constant 0 : i32
    %c0_i32_1 = arith.constant 0 : i32
    return %c0_i32, %c0_i32_0 : i32, i32
  }
  func.func @transform_12(%arg0: i32) -> i32 {
    %c0_i32 = arith.constant 0 : i32
    %c0_i32_0 = arith.constant 0 : i32
    return %c0_i32 : i32
  }
  func.func @transform_13(%arg0: i32) -> (i32, i32, i32) {
    %c0_i32 = arith.constant 0 : i32
    %c0_i32_0 = arith.constant 0 : i32
    %c0_i32_1 = arith.constant 0 : i32
    return %arg0, %c0_i32, %c0_i32_0 : i32, i32, i32
  }
}

</mosaic_0001>

<llo_original>
// kernel: _lambda_.1
$region0: #{_lambda_.1}
  #allocation0 [shape = 'u32[]', space=smem, size = 0x4, offset = 0x4, fixed_abs, tag = 'smem constant byte address 0x4 - core index']
  #allocation1 [shape = 'u32[144,128]{1,0:T(1,128)}', space=vmem, size = 0x12000, scoped, tag = 'internal scratch']
  #allocation2 [shape = 'f32[32,256]{1,0:T(8,128)}', space=vmem, size = 0x8000, scoped, tag = 'scratch operand']
  #allocation3 [shape = 'f32[1]{0:T(128)S(6)}', space=smem, size = 0x200, scoped, tag = 'scoped memory for _lambda_.1']
  %s0 = inlined_call_operand.vmem [shape: f32[2], index: 0, kind: input, shape index: {}]
  %s1 = inlined_call_operand.vmem [shape: f32[2,1,8,256], index: 1, kind: input, shape index: {}]
  %s2 = inlined_call_operand.vmem [shape: f32[2,4,18,256], index: 2, kind: input, shape index: {}]
  %s3 = inlined_call_operand.vmem [shape: f32[1,8], index: 3, kind: input, shape index: {}]
  %s4 = inlined_call_operand.vmem [shape: f32[8], index: 4, kind: input, shape index: {}]
  %s5 = inlined_call_operand.vmem [shape: f32[4,1], index: 5, kind: input, shape index: {}]
  %s6 = inlined_call_operand.<no memory space> [shape: f32[1], index: 6, kind: input, shape index: {}]
  %s7 = inlined_call_operand.vmem [shape: f32[4,32], index: 7, kind: input, shape index: {}]
  %s8 = inlined_call_operand.vmem [shape: f32[32,8], index: 8, kind: input, shape index: {}]
  %s9 = inlined_call_operand.vmem [shape: f32[32,1], index: 9, kind: input, shape index: {}]
  %s10 = inlined_call_operand.vmem [shape: f32[32,1], index: 10, kind: input, shape index: {}]
  %s11 = inlined_call_operand.vmem [shape: f32[32,4], index: 11, kind: input, shape index: {}]
  %s12 = inlined_call_operand.vmem [shape: f32[4], index: 12, kind: input, shape index: {}]
  %s13 = inlined_call_operand.vmem [shape: f32[2,1,128], index: 13, kind: output, shape index: {}]
  %s14 = sld [smem:[#allocation0]]
  $region113: #{_lambda_.1} parent=0
    _
  %s16 = ssub.s32 1, %s14
  %s17 = scalar_select 0, %s16, %s14
  %18 = sst [smem:[#allocation3]] %s6
  $region1: #{_lambda_.1} parent=0
    #allocation4 [shape = 'u8[512]{0}', space=smem, size = 0x200, scoped, tag = 'input window, operand 0, single buffered']
    #allocation5 [shape = 's32[2]{0}', space=sflag, size = 0x8, scoped, tag = 'scoped memory for _lambda_.1']
    #allocation6 [shape = 'u8[512]{0}', space=smem, size = 0x200, scoped, tag = 'input window, operand 3, single buffered']
    #allocation7 [shape = 's32[1]{0}', space=sflag, size = 0x4, scoped, tag = 'scoped memory for _lambda_.1']
    #allocation8 [shape = 'u8[512]{0}', space=smem, size = 0x200, scoped, tag = 'input window, operand 4, single buffered']
    #allocation9 [shape = 'u8[2048]{0}', space=smem, size = 0x800, scoped, tag = 'input window, operand 5, single buffered']
    #allocation10 [shape = 's32[1]{0}', space=sflag, size = 0x4, scoped, tag = 'scoped memory for _lambda_.1']
    #allocation11 [shape = 'u8[2048]{0}', space=smem, size = 0x800, scoped, tag = 'input window, operand 7, single buffered']
    #allocation12 [shape = 'u8[16384]{0}', space=smem, size = 0x4000, scoped, tag = 'input window, operand 11, single buffered']
    #allocation13 [shape = 's32[1]{0}', space=sflag, size = 0x4, scoped, tag = 'scoped memory for _lambda_.1']
    #allocation14 [shape = 'u8[512]{0}', space=smem, size = 0x200, scoped, tag = 'input window, operand 12, single buffered']
    %19 = vsyncpa [#allocation5], 0
    %20 = vsyncpa [#allocation7], 0
    %21 = vsyncpa [#allocation10], 0
    %22 = vsyncpa [#allocation13], 0
    loop: start=0, step=1, limit=4
    $region2: #{_lambda_.1} parent=1 // loop_pre_header
      _
    $region3: #{_lambda_.1} parent=1 // loop_header
      %s24 = sphi 0, %s28
      %p25 = scmp.ge.s32.totalorder %s24, 4
      %s32 = sphi 0, %s32
      %s34 = sphi 0, %s32
      %s35 = sphi 0, %s34
      %s49 = sphi 0, %s35
      %s55 = sphi 0, %s57
      %s58 = sphi 0, %s55
      %s59 = sphi 0, %s58
      %s75 = sphi 0, %s59
      %s81 = sphi 0, %s83
      %s84 = sphi 0, %s81
      %s85 = sphi 0, %s84
      %s101 = sphi 0, %s85
      %s105 = sphi 0, %s105
      %s107 = sphi 0, %s105
      %s108 = sphi 0, %s107
      %s122 = sphi 0, %s108
      %s126 = sphi 0, %s126
      %s128 = sphi 0, %s126
      %s129 = sphi 0, %s128
      %s143 = sphi 0, %s129
      %s147 = sphi 0, %s147
      %s149 = sphi 0, %s147
      %s150 = sphi 0, %s149
      %s164 = sphi 0, %s150
      %s168 = sphi 0, %s168
      %s170 = sphi 0, %s168
      %s171 = sphi 0, %s170
      %s185 = sphi 0, %s171
      %s189 = sphi 0, %s189
      %s191 = sphi 0, %s189
      %s192 = sphi 0, %s191
      %s206 = sphi 0, %s192
      %s210 = sphi 0, %s210
      %s212 = sphi 0, %s210
      %s213 = sphi 0, %s212
      %s227 = sphi 0, %s213
      %s231 = sphi 0, %s231
      %s233 = sphi 0, %s231
      %s234 = sphi 0, %s233
      %s248 = sphi 0, %s234
      %s252 = sphi 0, %s252
      %s254 = sphi 0, %s252
      %s255 = sphi 0, %s254
      %s269 = sphi 0, %s255
      %s273 = sphi 0, %s273
      %s275 = sphi 0, %s273
      %s276 = sphi 0, %s275
      %s290 = sphi 0, %s276
      %s294 = sphi 0, %s294
      %s296 = sphi 0, %s294
      %s297 = sphi 0, %s296
      %s311 = sphi 0, %s297
      %s317 = sphi 0, %s319
      %s320 = sphi 0, %s317
      %s321 = sphi 0, %s320
      %s337 = sphi 0, %s321
    $region4: #{_lambda_.1} parent=1 // loop_header_branch
      %27 = sbr.rel (%p25) target = $region8
    $region5: #{_lambda_.1} parent=1 // loop_body
      %s29 = ssub.s32 %s24, 1
      %s30 = ssub.s32 %s24, 2
      %s31 = sadd.s32 %s24, 1
      %s33 = sadd.s32 %s32, 1
      %p36 = scmp.eq.s32.totalorder %s24, 1
      %p37 = scmp.ne.s32.totalorder %s32, %s34
      %p38 = scmp.eq.s32.totalorder %s24, 0
      %p39 = por %p37, %p38
      %p40 = scmp.ne.s32.totalorder %s32, %s34
      %p41 = scmp.eq.s32.totalorder %s29, 1
      %p42 = por %p40, %p41
      %p43 = scmp.ne.s32.totalorder %s34, %s35
      %p44 = scmp.eq.s32.totalorder %s29, 0
      %p45 = por %p43, %p44
      %p46 = scmp.ne.s32.totalorder %s34, %s35
      %p47 = scmp.eq.s32.totalorder %s30, 1
      %p48 = por %p46, %p47
      %p50 = scmp.ne.s32.totalorder %s35, %s49
      %p51 = scmp.eq.s32.totalorder %s30, 0
      %p52 = por %p50, %p51
      %s53 = ssub.s32 %s24, %s31
      %p54 = scmp.eq.s32.totalorder %s53, 0
      %s56 = sadd.s32 %s55, 1
      %s57 = scalar_select %p54, %s55, %s56
      %p60 = pneg %p54
      %p61 = scmp.eq.s32.totalorder %s24, 1
      %p62 = por %p60, %p61
      %p63 = scmp.ne.s32.totalorder %s55, %s58
      %p64 = scmp.eq.s32.totalorder %s24, 0
      %p65 = por %p63, %p64
      %p66 = scmp.ne.s32.totalorder %s55, %s58
      %p67 = scmp.eq.s32.totalorder %s29, 1
      %p68 = por %p66, %p67
      %p69 = scmp.ne.s32.totalorder %s58, %s59
      %p70 = scmp.eq.s32.totalorder %s29, 0
      %p71 = por %p69, %p70
      %p72 = scmp.ne.s32.totalorder %s58, %s59
      %p73 = scmp.eq.s32.totalorder %s30, 1
      %p74 = por %p72, %p73
      %p76 = scmp.ne.s32.totalorder %s59, %s75
      %p77 = scmp.eq.s32.totalorder %s30, 0
      %p78 = por %p76, %p77
      %s79 = ssub.s32 %s24, %s31
      %p80 = scmp.eq.s32.totalorder %s79, 0
      %s82 = sadd.s32 %s81, 1
      %s83 = scalar_select %p80, %s81, %s82
      %p86 = pneg %p80
      %p87 = scmp.eq.s32.totalorder %s24, 1
      %p88 = por %p86, %p87
      %p89 = scmp.ne.s32.totalorder %s81, %s84
      %p90 = scmp.eq.s32.totalorder %s24, 0
      %p91 = por %p89, %p90
      %p92 = scmp.ne.s32.totalorder %s81, %s84
      %p93 = scmp.eq.s32.totalorder %s29, 1
      %p94 = por %p92, %p93
      %p95 = scmp.ne.s32.totalorder %s84, %s85
      %p96 = scmp.eq.s32.totalorder %s29, 0
      %p97 = por %p95, %p96
      %p98 = scmp.ne.s32.totalorder %s84, %s85
      %p99 = scmp.eq.s32.totalorder %s30, 1
      %p100 = por %p98, %p99
      %p102 = scmp.ne.s32.totalorder %s85, %s101
      %p103 = scmp.eq.s32.totalorder %s30, 0
      %p104 = por %p102, %p103
      %s106 = sadd.s32 %s105, 1
      %p109 = scmp.eq.s32.totalorder %s24, 1
      %p110 = scmp.ne.s32.totalorder %s105, %s107
      %p111 = scmp.eq.s32.totalorder %s24, 0
      %p112 = por %p110, %p111
      %p113 = scmp.ne.s32.totalorder %s105, %s107
      %p114 = scmp.eq.s32.totalorder %s29, 1
      %p115 = por %p113, %p114
      %p116 = scmp.ne.s32.totalorder %s107, %s108
      %p117 = scmp.eq.s32.totalorder %s29, 0
      %p118 = por %p116, %p117
      %p119 = scmp.ne.s32.totalorder %s107, %s108
      %p120 = scmp.eq.s32.totalorder %s30, 1
      %p121 = por %p119, %p120
      %p123 = scmp.ne.s32.totalorder %s108, %s122
      %p124 = scmp.eq.s32.totalorder %s30, 0
      %p125 = por %p123, %p124
      %s127 = sadd.s32 %s126, 1
      %p130 = scmp.eq.s32.totalorder %s24, 1
      %p131 = scmp.ne.s32.totalorder %s126, %s128
      %p132 = scmp.eq.s32.totalorder %s24, 0
      %p133 = por %p131, %p132
      %p134 = scmp.ne.s32.totalorder %s126, %s128
      %p135 = scmp.eq.s32.totalorder %s29, 1
      %p136 = por %p134, %p135
      %p137 = scmp.ne.s32.totalorder %s128, %s129
      %p138 = scmp.eq.s32.totalorder %s29, 0
      %p139 = por %p137, %p138
      %p140 = scmp.ne.s32.totalorder %s128, %s129
      %p141 = scmp.eq.s32.totalorder %s30, 1
      %p142 = por %p140, %p141
      %p144 = scmp.ne.s32.totalorder %s129, %s143
      %p145 = scmp.eq.s32.totalorder %s30, 0
      %p146 = por %p144, %p145
      %s148 = sadd.s32 %s147, 1
      %p151 = scmp.eq.s32.totalorder %s24, 1
      %p152 = scmp.ne.s32.totalorder %s147, %s149
      %p153 = scmp.eq.s32.totalorder %s24, 0
      %p154 = por %p152, %p153
      %p155 = scmp.ne.s32.totalorder %s147, %s149
      %p156 = scmp.eq.s32.totalorder %s29, 1
      %p157 = por %p155, %p156
      %p158 = scmp.ne.s32.totalorder %s149, %s150
      %p159 = scmp.eq.s32.totalorder %s29, 0
      %p160 = por %p158, %p159
      %p161 = scmp.ne.s32.totalorder %s149, %s150
      %p162 = scmp.eq.s32.totalorder %s30, 1
      %p163 = por %p161, %p162
      %p165 = scmp.ne.s32.totalorder %s150, %s164
      %p166 = scmp.eq.s32.totalorder %s30, 0
      %p167 = por %p165, %p166
      %s169 = sadd.s32 %s168, 1
      %p172 = scmp.eq.s32.totalorder %s24, 1
      %p173 = scmp.ne.s32.totalorder %s168, %s170
      %p174 = scmp.eq.s32.totalorder %s24, 0
      %p175 = por %p173, %p174
      %p176 = scmp.ne.s32.totalorder %s168, %s170
      %p177 = scmp.eq.s32.totalorder %s29, 1
      %p178 = por %p176, %p177
      %p179 = scmp.ne.s32.totalorder %s170, %s171
      %p180 = scmp.eq.s32.totalorder %s29, 0
      %p181 = por %p179, %p180
      %p182 = scmp.ne.s32.totalorder %s170, %s171
      %p183 = scmp.eq.s32.totalorder %s30, 1
      %p184 = por %p182, %p183
      %p186 = scmp.ne.s32.totalorder %s171, %s185
      %p187 = scmp.eq.s32.totalorder %s30, 0
      %p188 = por %p186, %p187
      %s190 = sadd.s32 %s189, 1
      %p193 = scmp.eq.s32.totalorder %s24, 1
      %p194 = scmp.ne.s32.totalorder %s189, %s191
      %p195 = scmp.eq.s32.totalorder %s24, 0
      %p196 = por %p194, %p195
      %p197 = scmp.ne.s32.totalorder %s189, %s191
      %p198 = scmp.eq.s32.totalorder %s29, 1
      %p199 = por %p197, %p198
      %p200 = scmp.ne.s32.totalorder %s191, %s192
      %p201 = scmp.eq.s32.totalorder %s29, 0
      %p202 = por %p200, %p201
      %p203 = scmp.ne.s32.totalorder %s191, %s192
      %p204 = scmp.eq.s32.totalorder %s30, 1
      %p205 = por %p203, %p204
      %p207 = scmp.ne.s32.totalorder %s192, %s206
      %p208 = scmp.eq.s32.totalorder %s30, 0
      %p209 = por %p207, %p208
      %s211 = sadd.s32 %s210, 1
      %p214 = scmp.eq.s32.totalorder %s24, 1
      %p215 = scmp.ne.s32.totalorder %s210, %s212
      %p216 = scmp.eq.s32.totalorder %s24, 0
      %p217 = por %p215, %p216
      %p218 = scmp.ne.s32.totalorder %s210, %s212
      %p219 = scmp.eq.s32.totalorder %s29, 1
      %p220 = por %p218, %p219
      %p221 = scmp.ne.s32.totalorder %s212, %s213
      %p222 = scmp.eq.s32.totalorder %s29, 0
      %p223 = por %p221, %p222
      %p224 = scmp.ne.s32.totalorder %s212, %s213
      %p225 = scmp.eq.s32.totalorder %s30, 1
      %p226 = por %p224, %p225
      %p228 = scmp.ne.s32.totalorder %s213, %s227
      %p229 = scmp.eq.s32.totalorder %s30, 0
      %p230 = por %p228, %p229
      %s232 = sadd.s32 %s231, 1
      %p235 = scmp.eq.s32.totalorder %s24, 1
      %p236 = scmp.ne.s32.totalorder %s231, %s233
      %p237 = scmp.eq.s32.totalorder %s24, 0
      %p238 = por %p236, %p237
      %p239 = scmp.ne.s32.totalorder %s231, %s233
      %p240 = scmp.eq.s32.totalorder %s29, 1
      %p241 = por %p239, %p240
      %p242 = scmp.ne.s32.totalorder %s233, %s234
      %p243 = scmp.eq.s32.totalorder %s29, 0
      %p244 = por %p242, %p243
      %p245 = scmp.ne.s32.totalorder %s233, %s234
      %p246 = scmp.eq.s32.totalorder %s30, 1
      %p247 = por %p245, %p246
      %p249 = scmp.ne.s32.totalorder %s234, %s248
      %p250 = scmp.eq.s32.totalorder %s30, 0
      %p251 = por %p249, %p250
      %s253 = sadd.s32 %s252, 1
      %p256 = scmp.eq.s32.totalorder %s24, 1
      %p257 = scmp.ne.s32.totalorder %s252, %s254
      %p258 = scmp.eq.s32.totalorder %s24, 0
      %p259 = por %p257, %p258
      %p260 = scmp.ne.s32.totalorder %s252, %s254
      %p261 = scmp.eq.s32.totalorder %s29, 1
      %p262 = por %p260, %p261
      %p263 = scmp.ne.s32.totalorder %s254, %s255
      %p264 = scmp.eq.s32.totalorder %s29, 0
      %p265 = por %p263, %p264
      %p266 = scmp.ne.s32.totalorder %s254, %s255
      %p267 = scmp.eq.s32.totalorder %s30, 1
      %p268 = por %p266, %p267
      %p270 = scmp.ne.s32.totalorder %s255, %s269
      %p271 = scmp.eq.s32.totalorder %s30, 0
      %p272 = por %p270, %p271
      %s274 = sadd.s32 %s273, 1
      %p277 = scmp.eq.s32.totalorder %s24, 1
      %p278 = scmp.ne.s32.totalorder %s273, %s275
      %p279 = scmp.eq.s32.totalorder %s24, 0
      %p280 = por %p278, %p279
      %p281 = scmp.ne.s32.totalorder %s273, %s275
      %p282 = scmp.eq.s32.totalorder %s29, 1
      %p283 = por %p281, %p282
      %p284 = scmp.ne.s32.totalorder %s275, %s276
      %p285 = scmp.eq.s32.totalorder %s29, 0
      %p286 = por %p284, %p285
      %p287 = scmp.ne.s32.totalorder %s275, %s276
      %p288 = scmp.eq.s32.totalorder %s30, 1
      %p289 = por %p287, %p288
      %p291 = scmp.ne.s32.totalorder %s276, %s290
      %p292 = scmp.eq.s32.totalorder %s30, 0
      %p293 = por %p291, %p292
      %s295 = sadd.s32 %s294, 1
      %p298 = scmp.eq.s32.totalorder %s24, 1
      %p299 = scmp.ne.s32.totalorder %s294, %s296
      %p300 = scmp.eq.s32.totalorder %s24, 0
      %p301 = por %p299, %p300
      %p302 = scmp.ne.s32.totalorder %s294, %s296
      %p303 = scmp.eq.s32.totalorder %s29, 1
      %p304 = por %p302, %p303
      %p305 = scmp.ne.s32.totalorder %s296, %s297
      %p306 = scmp.eq.s32.totalorder %s29, 0
      %p307 = por %p305, %p306
      %p308 = scmp.ne.s32.totalorder %s296, %s297
      %p309 = scmp.eq.s32.totalorder %s30, 1
      %p310 = por %p308, %p309
      %p312 = scmp.ne.s32.totalorder %s297, %s311
      %p313 = scmp.eq.s32.totalorder %s30, 0
      %p314 = por %p312, %p313
      %s315 = ssub.s32 %s24, %s31
      %p316 = scmp.eq.s32.totalorder %s315, 0
      %s318 = sadd.s32 %s317, 1
      %s319 = scalar_select %p316, %s317, %s318
      %p322 = pneg %p316
      %p323 = scmp.eq.s32.totalorder %s24, 1
      %p324 = por %p322, %p323
      %p325 = scmp.ne.s32.totalorder %s317, %s320
      %p326 = scmp.eq.s32.totalorder %s24, 0
      %p327 = por %p325, %p326
      %p328 = scmp.ne.s32.totalorder %s317, %s320
      %p329 = scmp.eq.s32.totalorder %s29, 1
      %p330 = por %p328, %p329
      %p331 = scmp.ne.s32.totalorder %s320, %s321
      %p332 = scmp.eq.s32.totalorder %s29, 0
      %p333 = por %p331, %p332
      %p334 = scmp.ne.s32.totalorder %s320, %s321
      %p335 = scmp.eq.s32.totalorder %s30, 1
      %p336 = por %p334, %p335
      %p338 = scmp.ne.s32.totalorder %s321, %s337
      %p339 = scmp.eq.s32.totalorder %s30, 0
      %p340 = por %p338, %p339
      %p341 = scmp.le.s32.totalorder 1, %s24
      %p342 = scmp.lt.s32.totalorder %s24, 3
      %p343 = pnand %p341, %p342
      %p344 = pneg %p343
      // Predicated region
      $region9: #{_lambda_.1} parent=5 // pred_check
        _
      $region10: #{_lambda_.1} parent=5 // pred_check_branch
        %346 = sbr.rel (%p343) target = $region12
      $region11: #{_lambda_.1} parent=5 // pred_region
        %s347 = ssub.s32 %s24, 1
        // Predicated region
        $region13: #{_lambda_.1} parent=11 // pred_check
          %p348 = pneg %p45
        $region14: #{_lambda_.1} parent=11 // pred_check_branch
          %350 = sbr.rel (%p348) target = $region16
        $region15: #{_lambda_.1} parent=11 // pred_region
          %s352 = ssub.s32 16, 16
          %353 = vsyncadd [#allocation5], %s352
          %s355 = sshll.u32 %s0, 4
          %s356 = int_to_ptr.vmem [resolvable:$true] %s355
          %358 = dma.vmem_to_smem %s356, 16, [#allocation4], [#allocation5]
        $region16: #{_lambda_.1} parent=11 // pred_fallthru
          _
        // Predicated region
        $region17: #{_lambda_.1} parent=11 // pred_check
          %p359 = pneg %p118
        $region18: #{_lambda_.1} parent=11 // pred_check_branch
          %361 = sbr.rel (%p359) target = $region20
        $region19: #{_lambda_.1} parent=11 // pred_region
          %s363 = ssub.s32 16, 16
          %364 = vsyncadd [#allocation7], %s363
          %s366 = sshll.u32 %s3, 4
          %s367 = int_to_ptr.vmem [resolvable:$true] %s366
          %369 = dma.vmem_to_smem %s367, 16, [#allocation6], [#allocation7]
        $region20: #{_lambda_.1} parent=11 // pred_fallthru
          _
        // Predicated region
        $region21: #{_lambda_.1} parent=11 // pred_check
          %p370 = pneg %p139
        $region22: #{_lambda_.1} parent=11 // pred_check_branch
          %372 = sbr.rel (%p370) target = $region24
        $region23: #{_lambda_.1} parent=11 // pred_region
          %s374 = ssub.s32 16, 16
          %375 = vsyncadd [#allocation7], %s374
          %s377 = sshll.u32 %s4, 4
          %s378 = int_to_ptr.vmem [resolvable:$true] %s377
          %380 = dma.vmem_to_smem %s378, 16, [#allocation8], [#allocation7]
        $region24: #{_lambda_.1} parent=11 // pred_fallthru
          _
        // Predicated region
        $region25: #{_lambda_.1} parent=11 // pred_check
          %p381 = pneg %p160
        $region26: #{_lambda_.1} parent=11 // pred_check_branch
          %383 = sbr.rel (%p381) target = $region28
        $region27: #{_lambda_.1} parent=11 // pred_region
          %s385 = ssub.s32 64, 64
          %386 = vsyncadd [#allocation10], %s385
          %s388 = sshll.u32 %s5, 4
          %s389 = int_to_ptr.vmem [resolvable:$true] %s388
          %391 = dma.vmem_to_smem %s389, 64, [#allocation9], [#allocation10]
        $region28: #{_lambda_.1} parent=11 // pred_fallthru
          _
        // Predicated region
        $region29: #{_lambda_.1} parent=11 // pred_check
          %p392 = pneg %p181
        $region30: #{_lambda_.1} parent=11 // pred_check_branch
          %394 = sbr.rel (%p392) target = $region32
        $region31: #{_lambda_.1} parent=11 // pred_region
          _
        $region32: #{_lambda_.1} parent=11 // pred_fallthru
          _
        // Predicated region
        $region33: #{_lambda_.1} parent=11 // pred_check
          %p395 = pneg %p202
        $region34: #{_lambda_.1} parent=11 // pred_check_branch
          %397 = sbr.rel (%p395) target = $region36
        $region35: #{_lambda_.1} parent=11 // pred_region
          %s399 = ssub.s32 64, 64
          %400 = vsyncadd [#allocation10], %s399
          %s402 = sshll.u32 %s7, 4
          %s403 = int_to_ptr.vmem [resolvable:$true] %s402
          %405 = dma.vmem_to_smem %s403, 64, [#allocation11], [#allocation10]
        $region36: #{_lambda_.1} parent=11 // pred_fallthru
          _
        // Predicated region
        $region37: #{_lambda_.1} parent=11 // pred_check
          %p406 = pneg %p223
        $region38: #{_lambda_.1} parent=11 // pred_check_branch
          %408 = sbr.rel (%p406) target = $region40
        $region39: #{_lambda_.1} parent=11 // pred_region
          _
        $region40: #{_lambda_.1} parent=11 // pred_fallthru
          _
        // Predicated region
        $region41: #{_lambda_.1} parent=11 // pred_check
          %p409 = pneg %p244
        $region42: #{_lambda_.1} parent=11 // pred_check_branch
          %411 = sbr.rel (%p409) target = $region44
        $region43: #{_lambda_.1} parent=11 // pred_region
          _
        $region44: #{_lambda_.1} parent=11 // pred_fallthru
          _
        // Predicated region
        $region45: #{_lambda_.1} parent=11 // pred_check
          %p412 = pneg %p265
        $region46: #{_lambda_.1} parent=11 // pred_check_branch
          %414 = sbr.rel (%p412) target = $region48
        $region47: #{_lambda_.1} parent=11 // pred_region
          _
        $region48: #{_lambda_.1} parent=11 // pred_fallthru
          _
        // Predicated region
        $region49: #{_lambda_.1} parent=11 // pred_check
          %p415 = pneg %p286
        $region50: #{_lambda_.1} parent=11 // pred_check_branch
          %417 = sbr.rel (%p415) target = $region52
        $region51: #{_lambda_.1} parent=11 // pred_region
          %s419 = ssub.s32 512, 512
          %420 = vsyncadd [#allocation13], %s419
          %s421 = sshll.u32 %s11, 4
          %s422 = int_to_ptr.vmem [resolvable:$true] %s421
          %427 = dma.vmem_to_smem %s422, 512, [#allocation12], [#allocation13], 128, 128, 8
        $region52: #{_lambda_.1} parent=11 // pred_fallthru
          _
        // Predicated region
        $region53: #{_lambda_.1} parent=11 // pred_check
          %p428 = pneg %p307
        $region54: #{_lambda_.1} parent=11 // pred_check_branch
          %430 = sbr.rel (%p428) target = $region56
        $region55: #{_lambda_.1} parent=11 // pred_region
          %s432 = ssub.s32 16, 16
          %433 = vsyncadd [#allocation13], %s432
          %s435 = sshll.u32 %s12, 4
          %s436 = int_to_ptr.vmem [resolvable:$true] %s435
          %438 = dma.vmem_to_smem %s436, 16, [#allocation14], [#allocation13]
        $region56: #{_lambda_.1} parent=11 // pred_fallthru
          _
      $region12: #{_lambda_.1} parent=5 // pred_fallthru
        _
      %p439 = scmp.lt.s32.totalorder %s24, 2
      // Predicated region
      $region57: #{_lambda_.1} parent=5 // pred_check
        %p440 = pneg %p439
      $region58: #{_lambda_.1} parent=5 // pred_check_branch
        %442 = sbr.rel (%p440) target = $region60
      $region59: #{_lambda_.1} parent=5 // pred_region
        // Predicated region
        $region61: #{_lambda_.1} parent=59 // pred_check
          %p443 = pneg %p65
        $region62: #{_lambda_.1} parent=59 // pred_check_branch
          %445 = sbr.rel (%p443) target = $region64
        $region63: #{_lambda_.1} parent=59 // pred_region
          %p446 = scmp.lt.s32.totalorder %s24, 1
          %s447 = scalar_select %p446, %s24, 1
          %s448 = smul.addr %s447, 2
          %s449 = smul.addr %s448, 8
          %s450 = scalar_lea.vmem %s1, %s449
        $region64: #{_lambda_.1} parent=59 // pred_fallthru
          _
        // Predicated region
        $region65: #{_lambda_.1} parent=59 // pred_check
          %p451 = pneg %p91
        $region66: #{_lambda_.1} parent=59 // pred_check_branch
          %453 = sbr.rel (%p451) target = $region68
        $region67: #{_lambda_.1} parent=59 // pred_region
          %p454 = scmp.lt.s32.totalorder %s24, 1
          %s455 = scalar_select %p454, %s24, 1
          %s456 = smul.addr %s455, 24
          %s457 = smul.addr %s456, 8
          %s458 = scalar_lea.vmem %s2, %s457
        $region68: #{_lambda_.1} parent=59 // pred_fallthru
          _
      $region60: #{_lambda_.1} parent=5 // pred_fallthru
        _
      %p459 = scmp.le.s32.totalorder 1, %s24
      %p460 = scmp.lt.s32.totalorder %s24, 3
      %p461 = pnand %p459, %p460
      %p462 = pneg %p461
      // Predicated region
      $region69: #{_lambda_.1} parent=5 // pred_check
        _
      $region70: #{_lambda_.1} parent=5 // pred_check_branch
        %464 = sbr.rel (%p461) target = $region72
      $region71: #{_lambda_.1} parent=5 // pred_region
        %s465 = ssub.s32 %s24, 1
        // Predicated region
        $region73: #{_lambda_.1} parent=71 // pred_check
          %p466 = pneg %p45
        $region74: #{_lambda_.1} parent=71 // pred_check_branch
          %468 = sbr.rel (%p466) target = $region76
        $region75: #{_lambda_.1} parent=71 // pred_region
          %469 = dma.done [#allocation5], 16
        $region76: #{_lambda_.1} parent=71 // pred_fallthru
          _
        // Predicated region
        $region77: #{_lambda_.1} parent=71 // pred_check
          %p470 = pneg %p118
        $region78: #{_lambda_.1} parent=71 // pred_check_branch
          %472 = sbr.rel (%p470) target = $region80
        $region79: #{_lambda_.1} parent=71 // pred_region
          %473 = dma.done [#allocation7], 16
        $region80: #{_lambda_.1} parent=71 // pred_fallthru
          _
        // Predicated region
        $region81: #{_lambda_.1} parent=71 // pred_check
          %p474 = pneg %p139
        $region82: #{_lambda_.1} parent=71 // pred_check_branch
          %476 = sbr.rel (%p474) target = $region84
        $region83: #{_lambda_.1} parent=71 // pred_region
          %477 = dma.done [#allocation7], 16
        $region84: #{_lambda_.1} parent=71 // pred_fallthru
          _
        // Predicated region
        $region85: #{_lambda_.1} parent=71 // pred_check
          %p478 = pneg %p160
        $region86: #{_lambda_.1} parent=71 // pred_check_branch
          %480 = sbr.rel (%p478) target = $region88
        $region87: #{_lambda_.1} parent=71 // pred_region
          %481 = dma.done [#allocation10], 64
        $region88: #{_lambda_.1} parent=71 // pred_fallthru
          _
        // Predicated region
        $region89: #{_lambda_.1} parent=71 // pred_check
          %p482 = pneg %p202
        $region90: #{_lambda_.1} parent=71 // pred_check_branch
          %484 = sbr.rel (%p482) target = $region92
        $region91: #{_lambda_.1} parent=71 // pred_region
          %485 = dma.done [#allocation10], 64
        $region92: #{_lambda_.1} parent=71 // pred_fallthru
          _
        // Predicated region
        $region93: #{_lambda_.1} parent=71 // pred_check
          %p486 = pneg %p286
        $region94: #{_lambda_.1} parent=71 // pred_check_branch
          %488 = sbr.rel (%p486) target = $region96
        $region95: #{_lambda_.1} parent=71 // pred_region
          %489 = dma.done [#allocation13], 512
        $region96: #{_lambda_.1} parent=71 // pred_fallthru
          _
        // Predicated region
        $region97: #{_lambda_.1} parent=71 // pred_check
          %p490 = pneg %p307
        $region98: #{_lambda_.1} parent=71 // pred_check_branch
          %492 = sbr.rel (%p490) target = $region100
        $region99: #{_lambda_.1} parent=71 // pred_region
          %493 = dma.done [#allocation13], 16
        $region100: #{_lambda_.1} parent=71 // pred_fallthru
          _
        %494 = sfence
        %p495 = pneg %p45
        %p496 = pneg %p42
        %p497 = scmp.lt.s32.totalorder %s29, 1
        %s498 = scalar_select %p497, %s29, 1
        %s499 = smul.addr %s498, 2
        %s500 = smul.addr %s499, 8
        %s501 = scalar_lea.vmem %s1, %s500
        %p502 = pneg %p71
        %p503 = pneg %p68
        %p504 = scmp.lt.s32.totalorder %s29, 1
        %s505 = scalar_select %p504, %s29, 1
        %s506 = smul.addr %s505, 24
        %s507 = smul.addr %s506, 8
        %s508 = scalar_lea.vmem %s2, %s507
        %p509 = pneg %p97
        %p510 = pneg %p94
        %p511 = pneg %p118
        %p512 = pneg %p115
        %p513 = pneg %p139
        %p514 = pneg %p136
        %p515 = pneg %p160
        %p516 = pneg %p157
        %p517 = pneg %p181
        %p518 = pneg %p178
        %p519 = pneg %p202
        %p520 = pneg %p199
        %p521 = pneg %p223
        %p522 = pneg %p220
        %p523 = pneg %p244
        %p524 = pneg %p241
        %p525 = pneg %p265
        %p526 = pneg %p262
        %p527 = pneg %p286
        %p528 = pneg %p283
        %p529 = pneg %p307
        %p530 = pneg %p304
        %p531 = pneg %p333
        %p532 = pneg %p330
        %p533 = scmp.lt.s32.totalorder %s29, 1
        %s534 = scalar_select %p533, %s29, 1
        %s535 = scalar_lea.vmem %s13, %s534
        %p536 = scmp.lt.s32.totalorder %s29, 1
        %s537 = scalar_select %p536, %s29, 1
        %s538 = smul.addr %s537, 2
        %s539 = smul.addr %s538, 8
        %s540 = scalar_lea.vmem %s1, %s539
        %p541 = scmp.lt.s32.totalorder %s29, 1
        %s542 = scalar_select %p541, %s29, 1
        %s543 = smul.addr %s542, 24
        %s544 = smul.addr %s543, 8
        %s545 = scalar_lea.vmem %s2, %s544
        %p546 = scmp.lt.s32.totalorder %s29, 1
        %s547 = scalar_select %p546, %s29, 1
        %s548 = scalar_lea.vmem %s13, %s547
        %s549 = sld [smem:[#allocation4 + %s29]]
        %s550 = ssub.f32 1.0, %s549
        %v551 = vld [vmem:[%s540] sm:$0xff]
        %v552 = vld [vmem:[%s540 + $0x8] sm:$0xff]
        %s553 = sld [smem:[#allocation6]]
        %v554 = vstv %s553
        %v555 = vmul.f32 %v551, %v554
        %v556 = vmul.f32 %v552, %v554
        %s557 = sld [smem:[#allocation6 + $0x4]]
        %v558 = vstv %s557
        %v559 = vmul.f32 %v551, %v558
        %v560 = vmul.f32 %v552, %v558
        %s561 = sld [smem:[#allocation8]]
        %v562 = vstv %s561
        %v563 = vadd.f32 %v555, %v562
        %v564 = vadd.f32 %v556, %v562
        %s565 = sld [smem:[#allocation8 + $0x4]]
        %v566 = vstv %s565
        %v567 = vadd.f32 %v559, %v566
        %v568 = vadd.f32 %v560, %v566
        %v569 = vmul.f32 %v567, 0.5
        %v570 = vmul.f32 %v568, 0.5
        %v571 = vmul.f32 %v569, 1.442695
        %v572 = vpow.pop %v571
        %v573 = vmul.f32 %v570, 1.442695
        %v574 = vpow.pop %v573
        %v575 = vld [vmem:[%s545] sm:$0xff]
        %v576 = vld [vmem:[%s545 + $0x8] sm:$0xff]
        %v577 = vmul.f32 %v572, %v575
        %v578 = vmul.f32 %v574, %v576
        %v579 = vadd.f32 %v563, %v577
        %v580 = vadd.f32 %v564, %v578
        %s581 = scalar_lea.vmem %s545, 32
        %v582 = vld [vmem:[%s581] ss:$8 sm:$0x3]
        %v584 = vlaneseq
        %v585 = vshrl.u32 %v584, 7
        %v586 = vsub.s32 0, %v585
        %v587 = vrot.slane %v582, %v586
        %v588 = vlaneseq
        %v589 = vshrl.u32 %v588, 7
        %v590 = vsub.s32 1, %v589
        %v591 = vrot.slane %v582, %v590
        %v594 = vmul.f32 %v572, %v587
        %v595 = vmul.f32 %v574, %v591
        %v596 = vadd.f32 %v563, %v594
        %v597 = vadd.f32 %v564, %v595
        %s598 = scalar_lea.vmem %s545, 33
        %v599 = vld [vmem:[%s598] ss:$8 sm:$0x3]
        %v601 = vlaneseq
        %v602 = vshrl.u32 %v601, 7
        %v603 = vsub.s32 0, %v602
        %v604 = vrot.slane %v599, %v603
        %v605 = vlaneseq
        %v606 = vshrl.u32 %v605, 7
        %v607 = vsub.s32 1, %v606
        %v608 = vrot.slane %v599, %v607
        %v611 = vmul.f32 %v572, %v604
        %v612 = vmul.f32 %v574, %v608
        %v613 = vadd.f32 %v563, %v611
        %v614 = vadd.f32 %v564, %v612
        %v615 = vadd.f32 %v567, 1.0
        %v616 = vadd.f32 %v568, 1.0
        %v617 = vmul.f32 %v563, %v563
        %v618 = vmul.f32 %v564, %v564
        %v619 = vsub.f32 %v615, %v617
        %v620 = vsub.f32 %v616, %v618
        %v621 = vmul.f32 %v567, 1.442695
        %v622 = vpow.pop %v621
        %v623 = vmul.f32 %v568, 1.442695
        %v624 = vpow.pop %v623
        %v625 = vsub.f32 %v619, %v622
        %v626 = vsub.f32 %v620, %v624
        %v627 = vadd.f32 %v625, 0.0
        %v628 = vadd.f32 %v626, 0.0
        %s629 = sld [smem:[#allocation6 + $0x1]]
        %v630 = vstv %s629
        %v631 = vmul.f32 %v551, %v630
        %v632 = vmul.f32 %v552, %v630
        %s633 = sld [smem:[#allocation6 + $0x5]]
        %v634 = vstv %s633
        %v635 = vmul.f32 %v551, %v634
        %v636 = vmul.f32 %v552, %v634
        %s637 = sld [smem:[#allocation8 + $0x1]]
        %v638 = vstv %s637
        %v639 = vadd.f32 %v631, %v638
        %v640 = vadd.f32 %v632, %v638
        %s641 = sld [smem:[#allocation8 + $0x5]]
        %v642 = vstv %s641
        %v643 = vadd.f32 %v635, %v642
        %v644 = vadd.f32 %v636, %v642
        %v645 = vmul.f32 %v643, 0.5
        %v646 = vmul.f32 %v644, 0.5
        %v647 = vmul.f32 %v645, 1.442695
        %v648 = vpow.pop %v647
        %v649 = vmul.f32 %v646, 1.442695
        %v650 = vpow.pop %v649
        %s651 = scalar_lea.vmem %s545, 48
        %v652 = vld [vmem:[%s651] sm:$0xff]
        %v653 = vld [vmem:[%s651 + $0x8] sm:$0xff]
        %v654 = vmul.f32 %v648, %v652
        %v655 = vmul.f32 %v650, %v653
        %v656 = vadd.f32 %v639, %v654
        %v657 = vadd.f32 %v640, %v655
        %s658 = scalar_lea.vmem %s651, 32
        %v659 = vld [vmem:[%s658] ss:$8 sm:$0x3]
        %v661 = vlaneseq
        %v662 = vshrl.u32 %v661, 7
        %v663 = vsub.s32 0, %v662
        %v664 = vrot.slane %v659, %v663
        %v665 = vlaneseq
        %v666 = vshrl.u32 %v665, 7
        %v667 = vsub.s32 1, %v666
        %v668 = vrot.slane %v659, %v667
        %v671 = vmul.f32 %v648, %v664
        %v672 = vmul.f32 %v650, %v668
        %v673 = vadd.f32 %v639, %v671
        %v674 = vadd.f32 %v640, %v672
        %s675 = scalar_lea.vmem %s651, 33
        %v676 = vld [vmem:[%s675] ss:$8 sm:$0x3]
        %v678 = vlaneseq
        %v679 = vshrl.u32 %v678, 7
        %v680 = vsub.s32 0, %v679
        %v681 = vrot.slane %v676, %v680
        %v682 = vlaneseq
        %v683 = vshrl.u32 %v682, 7
        %v684 = vsub.s32 1, %v683
        %v685 = vrot.slane %v676, %v684
        %v688 = vmul.f32 %v648, %v681
        %v689 = vmul.f32 %v650, %v685
        %v690 = vadd.f32 %v639, %v688
        %v691 = vadd.f32 %v640, %v689
        %v692 = vadd.f32 %v643, 1.0
        %v693 = vadd.f32 %v644, 1.0
        %v694 = vmul.f32 %v639, %v639
        %v695 = vmul.f32 %v640, %v640
        %v696 = vsub.f32 %v692, %v694
        %v697 = vsub.f32 %v693, %v695
        %v698 = vmul.f32 %v643, 1.442695
        %v699 = vpow.pop %v698
        %v700 = vmul.f32 %v644, 1.442695
        %v701 = vpow.pop %v700
        %v702 = vsub.f32 %v696, %v699
        %v703 = vsub.f32 %v697, %v701
        %v704 = vadd.f32 %v627, %v702
        %v705 = vadd.f32 %v628, %v703
        %s706 = sld [smem:[#allocation6 + $0x2]]
        %v707 = vstv %s706
        %v708 = vmul.f32 %v551, %v707
        %v709 = vmul.f32 %v552, %v707
        %s710 = sld [smem:[#allocation6 + $0x6]]
        %v711 = vstv %s710
        %v712 = vmul.f32 %v551, %v711
        %v713 = vmul.f32 %v552, %v711
        %s714 = sld [smem:[#allocation8 + $0x2]]
        %v715 = vstv %s714
        %v716 = vadd.f32 %v708, %v715
        %v717 = vadd.f32 %v709, %v715
        %s718 = sld [smem:[#allocation8 + $0x6]]
        %v719 = vstv %s718
        %v720 = vadd.f32 %v712, %v719
        %v721 = vadd.f32 %v713, %v719
        %v722 = vmul.f32 %v720, 0.5
        %v723 = vmul.f32 %v721, 0.5
        %v724 = vmul.f32 %v722, 1.442695
        %v725 = vpow.pop %v724
        %v726 = vmul.f32 %v723, 1.442695
        %v727 = vpow.pop %v726
        %s728 = scalar_lea.vmem %s545, 96
        %v729 = vld [vmem:[%s728] sm:$0xff]
        %v730 = vld [vmem:[%s728 + $0x8] sm:$0xff]
        %v731 = vmul.f32 %v725, %v729
        %v732 = vmul.f32 %v727, %v730
        %v733 = vadd.f32 %v716, %v731
        %v734 = vadd.f32 %v717, %v732
        %s735 = scalar_lea.vmem %s728, 32
        %v736 = vld [vmem:[%s735] ss:$8 sm:$0x3]
        %v738 = vlaneseq
        %v739 = vshrl.u32 %v738, 7
        %v740 = vsub.s32 0, %v739
        %v741 = vrot.slane %v736, %v740
        %v742 = vlaneseq
        %v743 = vshrl.u32 %v742, 7
        %v744 = vsub.s32 1, %v743
        %v745 = vrot.slane %v736, %v744
        %v748 = vmul.f32 %v725, %v741
        %v749 = vmul.f32 %v727, %v745
        %v750 = vadd.f32 %v716, %v748
        %v751 = vadd.f32 %v717, %v749
        %s752 = scalar_lea.vmem %s728, 33
        %v753 = vld [vmem:[%s752] ss:$8 sm:$0x3]
        %v755 = vlaneseq
        %v756 = vshrl.u32 %v755, 7
        %v757 = vsub.s32 0, %v756
        %v758 = vrot.slane %v753, %v757
        %v759 = vlaneseq
        %v760 = vshrl.u32 %v759, 7
        %v761 = vsub.s32 1, %v760
        %v762 = vrot.slane %v753, %v761
        %v765 = vmul.f32 %v725, %v758
        %v766 = vmul.f32 %v727, %v762
        %v767 = vadd.f32 %v716, %v765
        %v768 = vadd.f32 %v717, %v766
        %v769 = vadd.f32 %v720, 1.0
        %v770 = vadd.f32 %v721, 1.0
        %v771 = vmul.f32 %v716, %v716
        %v772 = vmul.f32 %v717, %v717
        %v773 = vsub.f32 %v769, %v771
        %v774 = vsub.f32 %v770, %v772
        %v775 = vmul.f32 %v720, 1.442695
        %v776 = vpow.pop %v775
        %v777 = vmul.f32 %v721, 1.442695
        %v778 = vpow.pop %v777
        %v779 = vsub.f32 %v773, %v776
        %v780 = vsub.f32 %v774, %v778
        %v781 = vadd.f32 %v704, %v779
        %v782 = vadd.f32 %v705, %v780
        %s783 = sld [smem:[#allocation6 + $0x3]]
        %v784 = vstv %s783
        %v785 = vmul.f32 %v551, %v784
        %v786 = vmul.f32 %v552, %v784
        %s787 = sld [smem:[#allocation6 + $0x7]]
        %v788 = vstv %s787
        %v789 = vmul.f32 %v551, %v788
        %v790 = vmul.f32 %v552, %v788
        %s791 = sld [smem:[#allocation8 + $0x3]]
        %v792 = vstv %s791
        %v793 = vadd.f32 %v785, %v792
        %v794 = vadd.f32 %v786, %v792
        %s795 = sld [smem:[#allocation8 + $0x7]]
        %v796 = vstv %s795
        %v797 = vadd.f32 %v789, %v796
        %v798 = vadd.f32 %v790, %v796
        %v799 = vmul.f32 %v797, 0.5
        %v800 = vmul.f32 %v798, 0.5
        %v801 = vmul.f32 %v799, 1.442695
        %v802 = vpow.pop %v801
        %v803 = vmul.f32 %v800, 1.442695
        %v804 = vpow.pop %v803
        %s805 = scalar_lea.vmem %s545, 144
        %v806 = vld [vmem:[%s805] sm:$0xff]
        %v807 = vld [vmem:[%s805 + $0x8] sm:$0xff]
        %v808 = vmul.f32 %v802, %v806
        %v809 = vmul.f32 %v804, %v807
        %v810 = vadd.f32 %v793, %v808
        %v811 = vadd.f32 %v794, %v809
        %s812 = scalar_lea.vmem %s805, 32
        %v813 = vld [vmem:[%s812] ss:$8 sm:$0x3]
        %v815 = vlaneseq
        %v816 = vshrl.u32 %v815, 7
        %v817 = vsub.s32 0, %v816
        %v818 = vrot.slane %v813, %v817
        %v819 = vlaneseq
        %v820 = vshrl.u32 %v819, 7
        %v821 = vsub.s32 1, %v820
        %v822 = vrot.slane %v813, %v821
        %v825 = vmul.f32 %v802, %v818
        %v826 = vmul.f32 %v804, %v822
        %v827 = vadd.f32 %v793, %v825
        %v828 = vadd.f32 %v794, %v826
        %s829 = scalar_lea.vmem %s805, 33
        %v830 = vld [vmem:[%s829] ss:$8 sm:$0x3]
        %v832 = vlaneseq
        %v833 = vshrl.u32 %v832, 7
        %v834 = vsub.s32 0, %v833
        %v835 = vrot.slane %v830, %v834
        %v836 = vlaneseq
        %v837 = vshrl.u32 %v836, 7
        %v838 = vsub.s32 1, %v837
        %v839 = vrot.slane %v830, %v838
        %v842 = vmul.f32 %v802, %v835
        %v843 = vmul.f32 %v804, %v839
        %v844 = vadd.f32 %v793, %v842
        %v845 = vadd.f32 %v794, %v843
        %v846 = vadd.f32 %v797, 1.0
        %v847 = vadd.f32 %v798, 1.0
        %v848 = vmul.f32 %v793, %v793
        %v849 = vmul.f32 %v794, %v794
        %v850 = vsub.f32 %v846, %v848
        %v851 = vsub.f32 %v847, %v849
        %v852 = vmul.f32 %v797, 1.442695
        %v853 = vpow.pop %v852
        %v854 = vmul.f32 %v798, 1.442695
        %v855 = vpow.pop %v854
        %v856 = vsub.f32 %v850, %v853
        %v857 = vsub.f32 %v851, %v855
        %v858 = vadd.f32 %v781, %v856
        %v859 = vadd.f32 %v782, %v857
        %v860 = vadd.f32 %v858, %v859
        %861 = vadd.xlane.f32.xlu0 %v860
        %v862 = vpop.xlane.xlu0 %861
        %v863 = vrot.slane %v862, 4
        %v864 = vadd.f32 %v862, %v863
        %v865 = vrot.slane %v864, 2
        %v866 = vadd.f32 %v864, %v865
        %v867 = vrot.slane %v866, 1
        %v868 = vadd.f32 %v866, %v867
        %s869 = vtos %v868
        %s870 = sld [smem:[#allocation9]]
        %v871 = vstv %s870
        %v872 = vmul.f32 %v579, %v871
        %v873 = vmul.f32 %v580, %v871
        %s874 = sld [smem:[#allocation9 + $0x80]]
        %v875 = vstv %s874
        %v876 = vmul.f32 %v656, %v875
        %v877 = vmul.f32 %v657, %v875
        %v878 = vadd.f32 %v872, %v876
        %v879 = vadd.f32 %v873, %v877
        %s880 = sld [smem:[#allocation9 + $0x100]]
        %v881 = vstv %s880
        %v882 = vmul.f32 %v733, %v881
        %v883 = vmul.f32 %v734, %v881
        %v884 = vadd.f32 %v878, %v882
        %v885 = vadd.f32 %v879, %v883
        %s886 = sld [smem:[#allocation9 + $0x180]]
        %v887 = vstv %s886
        %v888 = vmul.f32 %v810, %v887
        %v889 = vmul.f32 %v811, %v887
        %v890 = vadd.f32 %v884, %v888
        %v891 = vadd.f32 %v885, %v889
        %s892 = sld [smem:[#allocation3]]
        %v893 = vstv %s892
        %v894 = vadd.f32 %v890, %v893
        %v895 = vadd.f32 %v891, %v893
        %v896 = vsub.f32 %v894, %v551
        %v897 = vsub.f32 %v895, %v552
        %v898 = vmul.f32 %v896, %v896
        %v899 = vmul.f32 %v897, %v897
        %v900 = vadd.f32 %v898, 0.0
        %v901 = vadd.f32 %v899, 0.0
        %v904 = vrot.slane %v894, 7
        %v905 = vrot.slane %v895, 7
        %v908 = vsub.f32 %v894, %v904
        %v909 = vsub.f32 %v895, %v905
        %v912 = vrot.slane %v551, 7
        %v913 = vrot.slane %v552, 7
        %v916 = vsub.f32 %v551, %v912
        %v917 = vsub.f32 %v552, %v913
        %v918 = vsub.f32 %v908, %v916
        %v919 = vsub.f32 %v909, %v917
        %v920 = vmul.f32 %v918, %v918
        %v921 = vmul.f32 %v919, %v919
        %v922 = vadd.f32 %v920, 0.0
        %v923 = vadd.f32 %v921, 0.0
        %v924 = vadd.f32 %v900, %v901
        %925 = vadd.xlane.f32.xlu0 %v924
        %v926 = vpop.xlane.xlu0 %925
        %v927 = vrot.slane %v926, 4
        %v928 = vadd.f32 %v926, %v927
        %v929 = vrot.slane %v928, 2
        %v930 = vadd.f32 %v928, %v929
        %v931 = vrot.slane %v930, 1
        %v932 = vadd.f32 %v930, %v931
        %s933 = vtos %v932
        %v936 = vrot.slane %v922, 1
        %v937 = vrot.slane %v923, 1
        %vm940 = vcmask 1046528
        %v941 = vsel %vm940, %v936, 0.0
        %v942 = vsel %vm940, %v937, 0.0
        %v943 = vadd.f32 %v941, %v942
        %944 = vadd.xlane.f32.xlu0 %v943
        %v945 = vpop.xlane.xlu0 %944
        %v946 = vrot.slane %v945, 4
        %v947 = vadd.f32 %v945, %v946
        %v948 = vrot.slane %v947, 2
        %v949 = vadd.f32 %v947, %v948
        %v950 = vrot.slane %v949, 1
        %v951 = vadd.f32 %v949, %v950
        %s952 = vtos %v951
        %v953 = vld [vmem:[%s545 + $0x10] sm:$0xff]
        %v954 = vld [vmem:[%s545 + $0x18] sm:$0xff]
        %v955 = vld [vmem:[%s651 + $0x10] sm:$0xff]
        %v956 = vld [vmem:[%s651 + $0x18] sm:$0xff]
        %v957 = vld [vmem:[%s728 + $0x10] sm:$0xff]
        %v958 = vld [vmem:[%s728 + $0x18] sm:$0xff]
        %v959 = vld [vmem:[%s805 + $0x10] sm:$0xff]
        %v960 = vld [vmem:[%s805 + $0x18] sm:$0xff]
        %v961 = vstv %s550
        %v962 = vmul.f32 %v961, %v953
        %v963 = vmul.f32 %v961, %v954
        %v964 = vstv %s549
        %v965 = vmul.f32 %v964, %v579
        %v966 = vmul.f32 %v964, %v580
        %v967 = vadd.f32 %v962, %v965
        %v968 = vadd.f32 %v963, %v966
        %v969 = vmul.f32 %v961, %v955
        %v970 = vmul.f32 %v961, %v956
        %v971 = vmul.f32 %v964, %v656
        %v972 = vmul.f32 %v964, %v657
        %v973 = vadd.f32 %v969, %v971
        %v974 = vadd.f32 %v970, %v972
        %v975 = vmul.f32 %v961, %v957
        %v976 = vmul.f32 %v961, %v958
        %v977 = vmul.f32 %v964, %v733
        %v978 = vmul.f32 %v964, %v734
        %v979 = vadd.f32 %v975, %v977
        %v980 = vadd.f32 %v976, %v978
        %v981 = vmul.f32 %v961, %v959
        %v982 = vmul.f32 %v961, %v960
        %v983 = vmul.f32 %v964, %v810
        %v984 = vmul.f32 %v964, %v811
        %v985 = vadd.f32 %v981, %v983
        %v986 = vadd.f32 %v982, %v984
        %v987 = vld [vmem:[%s9] sm:$0xff]
        %v988 = vld [vmem:[%s9 + $0x8] sm:$0xff]
        %v989 = vld [vmem:[%s9 + $0x10] sm:$0xff]
        %v990 = vld [vmem:[%s9 + $0x18] sm:$0xff]
        %v991 = vmul.f32 %v987, %v964
        %v992 = vmul.f32 %v988, %v964
        %v993 = vmul.f32 %v989, %v964
        %v994 = vmul.f32 %v990, %v964
        %v995 = vld [vmem:[%s10] sm:$0xff]
        %v996 = vld [vmem:[%s10 + $0x8] sm:$0xff]
        %v997 = vld [vmem:[%s10 + $0x10] sm:$0xff]
        %v998 = vld [vmem:[%s10 + $0x18] sm:$0xff]
        %v999 = vadd.f32 %v991, %v995
        %v1000 = vadd.f32 %v992, %v996
        %v1001 = vadd.f32 %v993, %v997
        %v1002 = vadd.f32 %v994, %v998
        %v1003 = vld [vmem:[%s8] sm:$0xff]
        %v1004 = vld [vmem:[%s8 + $0x8] sm:$0xff]
        %v1005 = vld [vmem:[%s8 + $0x10] sm:$0xff]
        %v1006 = vld [vmem:[%s8 + $0x18] sm:$0xff]
        %1008 = vset.pattern.permute.xlu0 0
        %1009 = vperm.xlu0 %1008, %v1003
        %v1010 = vpop.permute.xlu0 %1009
        %1013 = vset.pattern.permute.xlu0 0
        %1014 = vperm.xlu0 %1013, %v1004
        %v1015 = vpop.permute.xlu0 %1014
        %1018 = vset.pattern.permute.xlu0 0
        %1019 = vperm.xlu0 %1018, %v1005
        %v1020 = vpop.permute.xlu0 %1019
        %1023 = vset.pattern.permute.xlu0 0
        %1024 = vperm.xlu0 %1023, %v1006
        %v1025 = vpop.permute.xlu0 %1024
        %v1027 = vlaneseq
        %v1028 = vshrl.u32 %v1027, 7
        %v1029 = vsub.s32 0, %v1028
        %v1030 = vrot.slane %v596, %v1029
        %v1031 = vlaneseq
        %v1032 = vshrl.u32 %v1031, 7
        %v1033 = vsub.s32 0, %v1032
        %v1034 = vrot.slane %v597, %v1033
        %v1035 = vmul.f32 %v1010, %v1030
        %v1036 = vmul.f32 %v1010, %v1034
        %v1037 = vmul.f32 %v1015, %v1030
        %v1038 = vmul.f32 %v1015, %v1034
        %v1039 = vmul.f32 %v1020, %v1030
        %v1040 = vmul.f32 %v1020, %v1034
        %v1041 = vmul.f32 %v1025, %v1030
        %v1042 = vmul.f32 %v1025, %v1034
        %1044 = vset.pattern.permute.xlu0 0
        %1045 = vperm.xlu0 %1044, %v999
        %v1046 = vpop.permute.xlu0 %1045
        %1049 = vset.pattern.permute.xlu0 0
        %1050 = vperm.xlu0 %1049, %v1000
        %v1051 = vpop.permute.xlu0 %1050
        %1054 = vset.pattern.permute.xlu0 0
        %1055 = vperm.xlu0 %1054, %v1001
        %v1056 = vpop.permute.xlu0 %1055
        %1059 = vset.pattern.permute.xlu0 0
        %1060 = vperm.xlu0 %1059, %v1002
        %v1061 = vpop.permute.xlu0 %1060
        %v1063 = vadd.f32 %v1046, %v1035
        %v1064 = vadd.f32 %v1046, %v1036
        %v1065 = vadd.f32 %v1051, %v1037
        %v1066 = vadd.f32 %v1051, %v1038
        %v1067 = vadd.f32 %v1056, %v1039
        %v1068 = vadd.f32 %v1056, %v1040
        %v1069 = vadd.f32 %v1061, %v1041
        %v1070 = vadd.f32 %v1061, %v1042
        %1071 = vset.pattern.permute.xlu0 4
        %1072 = vperm.xlu0 %1071, %v1003
        %v1073 = vpop.permute.xlu0 %1072
        %1075 = vset.pattern.permute.xlu0 4
        %1076 = vperm.xlu0 %1075, %v1004
        %v1077 = vpop.permute.xlu0 %1076
        %1079 = vset.pattern.permute.xlu0 4
        %1080 = vperm.xlu0 %1079, %v1005
        %v1081 = vpop.permute.xlu0 %1080
        %1083 = vset.pattern.permute.xlu0 4
        %1084 = vperm.xlu0 %1083, %v1006
        %v1085 = vpop.permute.xlu0 %1084
        %v1087 = vlaneseq
        %v1088 = vshrl.u32 %v1087, 7
        %v1089 = vsub.s32 7, %v1088
        %v1090 = vrot.slane %v613, %v1089
        %v1091 = vlaneseq
        %v1092 = vshrl.u32 %v1091, 7
        %v1093 = vsub.s32 7, %v1092
        %v1094 = vrot.slane %v614, %v1093
        %v1095 = vmul.f32 %v1073, %v1090
        %v1096 = vmul.f32 %v1073, %v1094
        %v1097 = vmul.f32 %v1077, %v1090
        %v1098 = vmul.f32 %v1077, %v1094
        %v1099 = vmul.f32 %v1081, %v1090
        %v1100 = vmul.f32 %v1081, %v1094
        %v1101 = vmul.f32 %v1085, %v1090
        %v1102 = vmul.f32 %v1085, %v1094
        %v1103 = vadd.f32 %v1063, %v1095
        %v1104 = vadd.f32 %v1064, %v1096
        %v1105 = vadd.f32 %v1065, %v1097
        %v1106 = vadd.f32 %v1066, %v1098
        %v1107 = vadd.f32 %v1067, %v1099
        %v1108 = vadd.f32 %v1068, %v1100
        %v1109 = vadd.f32 %v1069, %v1101
        %v1110 = vadd.f32 %v1070, %v1102
        %1111 = vset.pattern.permute.xlu0 1
        %1112 = vperm.xlu0 %1111, %v1003
        %v1113 = vpop.permute.xlu0 %1112
        %1115 = vset.pattern.permute.xlu0 1
        %1116 = vperm.xlu0 %1115, %v1004
        %v1117 = vpop.permute.xlu0 %1116
        %1119 = vset.pattern.permute.xlu0 1
        %1120 = vperm.xlu0 %1119, %v1005
        %v1121 = vpop.permute.xlu0 %1120
        %1123 = vset.pattern.permute.xlu0 1
        %1124 = vperm.xlu0 %1123, %v1006
        %v1125 = vpop.permute.xlu0 %1124
        %v1127 = vlaneseq
        %v1128 = vshrl.u32 %v1127, 7
        %v1129 = vsub.s32 0, %v1128
        %v1130 = vrot.slane %v673, %v1129
        %v1131 = vlaneseq
        %v1132 = vshrl.u32 %v1131, 7
        %v1133 = vsub.s32 0, %v1132
        %v1134 = vrot.slane %v674, %v1133
        %v1135 = vmul.f32 %v1113, %v1130
        %v1136 = vmul.f32 %v1113, %v1134
        %v1137 = vmul.f32 %v1117, %v1130
        %v1138 = vmul.f32 %v1117, %v1134
        %v1139 = vmul.f32 %v1121, %v1130
        %v1140 = vmul.f32 %v1121, %v1134
        %v1141 = vmul.f32 %v1125, %v1130
        %v1142 = vmul.f32 %v1125, %v1134
        %v1143 = vadd.f32 %v1103, %v1135
        %v1144 = vadd.f32 %v1104, %v1136
        %v1145 = vadd.f32 %v1105, %v1137
        %v1146 = vadd.f32 %v1106, %v1138
        %v1147 = vadd.f32 %v1107, %v1139
        %v1148 = vadd.f32 %v1108, %v1140
        %v1149 = vadd.f32 %v1109, %v1141
        %v1150 = vadd.f32 %v1110, %v1142
        %1151 = vset.pattern.permute.xlu0 5
        %1152 = vperm.xlu0 %1151, %v1003
        %v1153 = vpop.permute.xlu0 %1152
        %1155 = vset.pattern.permute.xlu0 5
        %1156 = vperm.xlu0 %1155, %v1004
        %v1157 = vpop.permute.xlu0 %1156
        %1159 = vset.pattern.permute.xlu0 5
        %1160 = vperm.xlu0 %1159, %v1005
        %v1161 = vpop.permute.xlu0 %1160
        %1163 = vset.pattern.permute.xlu0 5
        %1164 = vperm.xlu0 %1163, %v1006
        %v1165 = vpop.permute.xlu0 %1164
        %v1167 = vlaneseq
        %v1168 = vshrl.u32 %v1167, 7
        %v1169 = vsub.s32 7, %v1168
        %v1170 = vrot.slane %v690, %v1169
        %v1171 = vlaneseq
        %v1172 = vshrl.u32 %v1171, 7
        %v1173 = vsub.s32 7, %v1172
        %v1174 = vrot.slane %v691, %v1173
        %v1175 = vmul.f32 %v1153, %v1170
        %v1176 = vmul.f32 %v1153, %v1174
        %v1177 = vmul.f32 %v1157, %v1170
        %v1178 = vmul.f32 %v1157, %v1174
        %v1179 = vmul.f32 %v1161, %v1170
        %v1180 = vmul.f32 %v1161, %v1174
        %v1181 = vmul.f32 %v1165, %v1170
        %v1182 = vmul.f32 %v1165, %v1174
        %v1183 = vadd.f32 %v1143, %v1175
        %v1184 = vadd.f32 %v1144, %v1176
        %v1185 = vadd.f32 %v1145, %v1177
        %v1186 = vadd.f32 %v1146, %v1178
        %v1187 = vadd.f32 %v1147, %v1179
        %v1188 = vadd.f32 %v1148, %v1180
        %v1189 = vadd.f32 %v1149, %v1181
        %v1190 = vadd.f32 %v1150, %v1182
        %1191 = vset.pattern.permute.xlu0 2
        %1192 = vperm.xlu0 %1191, %v1003
        %v1193 = vpop.permute.xlu0 %1192
        %1195 = vset.pattern.permute.xlu0 2
        %1196 = vperm.xlu0 %1195, %v1004
        %v1197 = vpop.permute.xlu0 %1196
        %1199 = vset.pattern.permute.xlu0 2
        %1200 = vperm.xlu0 %1199, %v1005
        %v1201 = vpop.permute.xlu0 %1200
        %1203 = vset.pattern.permute.xlu0 2
        %1204 = vperm.xlu0 %1203, %v1006
        %v1205 = vpop.permute.xlu0 %1204
        %v1207 = vlaneseq
        %v1208 = vshrl.u32 %v1207, 7
        %v1209 = vsub.s32 0, %v1208
        %v1210 = vrot.slane %v750, %v1209
        %v1211 = vlaneseq
        %v1212 = vshrl.u32 %v1211, 7
        %v1213 = vsub.s32 0, %v1212
        %v1214 = vrot.slane %v751, %v1213
        %v1215 = vmul.f32 %v1193, %v1210
        %v1216 = vmul.f32 %v1193, %v1214
        %v1217 = vmul.f32 %v1197, %v1210
        %v1218 = vmul.f32 %v1197, %v1214
        %v1219 = vmul.f32 %v1201, %v1210
        %v1220 = vmul.f32 %v1201, %v1214
        %v1221 = vmul.f32 %v1205, %v1210
        %v1222 = vmul.f32 %v1205, %v1214
        %v1223 = vadd.f32 %v1183, %v1215
        %v1224 = vadd.f32 %v1184, %v1216
        %v1225 = vadd.f32 %v1185, %v1217
        %v1226 = vadd.f32 %v1186, %v1218
        %v1227 = vadd.f32 %v1187, %v1219
        %v1228 = vadd.f32 %v1188, %v1220
        %v1229 = vadd.f32 %v1189, %v1221
        %v1230 = vadd.f32 %v1190, %v1222
        %1231 = vset.pattern.permute.xlu0 6
        %1232 = vperm.xlu0 %1231, %v1003
        %v1233 = vpop.permute.xlu0 %1232
        %1235 = vset.pattern.permute.xlu0 6
        %1236 = vperm.xlu0 %1235, %v1004
        %v1237 = vpop.permute.xlu0 %1236
        %1239 = vset.pattern.permute.xlu0 6
        %1240 = vperm.xlu0 %1239, %v1005
        %v1241 = vpop.permute.xlu0 %1240
        %1243 = vset.pattern.permute.xlu0 6
        %1244 = vperm.xlu0 %1243, %v1006
        %v1245 = vpop.permute.xlu0 %1244
        %v1247 = vlaneseq
        %v1248 = vshrl.u32 %v1247, 7
        %v1249 = vsub.s32 7, %v1248
        %v1250 = vrot.slane %v767, %v1249
        %v1251 = vlaneseq
        %v1252 = vshrl.u32 %v1251, 7
        %v1253 = vsub.s32 7, %v1252
        %v1254 = vrot.slane %v768, %v1253
        %v1255 = vmul.f32 %v1233, %v1250
        %v1256 = vmul.f32 %v1233, %v1254
        %v1257 = vmul.f32 %v1237, %v1250
        %v1258 = vmul.f32 %v1237, %v1254
        %v1259 = vmul.f32 %v1241, %v1250
        %v1260 = vmul.f32 %v1241, %v1254
        %v1261 = vmul.f32 %v1245, %v1250
        %v1262 = vmul.f32 %v1245, %v1254
        %v1263 = vadd.f32 %v1223, %v1255
        %v1264 = vadd.f32 %v1224, %v1256
        %v1265 = vadd.f32 %v1225, %v1257
        %v1266 = vadd.f32 %v1226, %v1258
        %v1267 = vadd.f32 %v1227, %v1259
        %v1268 = vadd.f32 %v1228, %v1260
        %v1269 = vadd.f32 %v1229, %v1261
        %v1270 = vadd.f32 %v1230, %v1262
        %1271 = vset.pattern.permute.xlu0 3
        %1272 = vperm.xlu0 %1271, %v1003
        %v1273 = vpop.permute.xlu0 %1272
        %1275 = vset.pattern.permute.xlu0 3
        %1276 = vperm.xlu0 %1275, %v1004
        %v1277 = vpop.permute.xlu0 %1276
        %1279 = vset.pattern.permute.xlu0 3
        %1280 = vperm.xlu0 %1279, %v1005
        %v1281 = vpop.permute.xlu0 %1280
        %1283 = vset.pattern.permute.xlu0 3
        %1284 = vperm.xlu0 %1283, %v1006
        %v1285 = vpop.permute.xlu0 %1284
        %v1287 = vlaneseq
        %v1288 = vshrl.u32 %v1287, 7
        %v1289 = vsub.s32 0, %v1288
        %v1290 = vrot.slane %v827, %v1289
        %v1291 = vlaneseq
        %v1292 = vshrl.u32 %v1291, 7
        %v1293 = vsub.s32 0, %v1292
        %v1294 = vrot.slane %v828, %v1293
        %v1295 = vmul.f32 %v1273, %v1290
        %v1296 = vmul.f32 %v1273, %v1294
        %v1297 = vmul.f32 %v1277, %v1290
        %v1298 = vmul.f32 %v1277, %v1294
        %v1299 = vmul.f32 %v1281, %v1290
        %v1300 = vmul.f32 %v1281, %v1294
        %v1301 = vmul.f32 %v1285, %v1290
        %v1302 = vmul.f32 %v1285, %v1294
        %v1303 = vadd.f32 %v1263, %v1295
        %v1304 = vadd.f32 %v1264, %v1296
        %v1305 = vadd.f32 %v1265, %v1297
        %v1306 = vadd.f32 %v1266, %v1298
        %v1307 = vadd.f32 %v1267, %v1299
        %v1308 = vadd.f32 %v1268, %v1300
        %v1309 = vadd.f32 %v1269, %v1301
        %v1310 = vadd.f32 %v1270, %v1302
        %1311 = vset.pattern.permute.xlu0 7
        %1312 = vperm.xlu0 %1311, %v1003
        %v1313 = vpop.permute.xlu0 %1312
        %1315 = vset.pattern.permute.xlu0 7
        %1316 = vperm.xlu0 %1315, %v1004
        %v1317 = vpop.permute.xlu0 %1316
        %1319 = vset.pattern.permute.xlu0 7
        %1320 = vperm.xlu0 %1319, %v1005
        %v1321 = vpop.permute.xlu0 %1320
        %1323 = vset.pattern.permute.xlu0 7
        %1324 = vperm.xlu0 %1323, %v1006
        %v1325 = vpop.permute.xlu0 %1324
        %v1327 = vlaneseq
        %v1328 = vshrl.u32 %v1327, 7
        %v1329 = vsub.s32 7, %v1328
        %v1330 = vrot.slane %v844, %v1329
        %v1331 = vlaneseq
        %v1332 = vshrl.u32 %v1331, 7
        %v1333 = vsub.s32 7, %v1332
        %v1334 = vrot.slane %v845, %v1333
        %v1335 = vmul.f32 %v1313, %v1330
        %v1336 = vmul.f32 %v1313, %v1334
        %v1337 = vmul.f32 %v1317, %v1330
        %v1338 = vmul.f32 %v1317, %v1334
        %v1339 = vmul.f32 %v1321, %v1330
        %v1340 = vmul.f32 %v1321, %v1334
        %v1341 = vmul.f32 %v1325, %v1330
        %v1342 = vmul.f32 %v1325, %v1334
        %v1343 = vadd.f32 %v1303, %v1335
        %v1344 = vadd.f32 %v1304, %v1336
        %v1345 = vadd.f32 %v1305, %v1337
        %v1346 = vadd.f32 %v1306, %v1338
        %v1347 = vadd.f32 %v1307, %v1339
        %v1348 = vadd.f32 %v1308, %v1340
        %v1349 = vadd.f32 %v1309, %v1341
        %v1350 = vadd.f32 %v1310, %v1342
        %1351 = vst [vmem:[#allocation2] sm:$0xff] %v1343
        %1352 = vst [vmem:[#allocation2 + $0x8] sm:$0xff] %v1344
        %1353 = vst [vmem:[#allocation2 + $0x10] sm:$0xff] %v1345
        %1354 = vst [vmem:[#allocation2 + $0x18] sm:$0xff] %v1346
        %1355 = vst [vmem:[#allocation2 + $0x20] sm:$0xff] %v1347
        %1356 = vst [vmem:[#allocation2 + $0x28] sm:$0xff] %v1348
        %1357 = vst [vmem:[#allocation2 + $0x30] sm:$0xff] %v1349
        %1358 = vst [vmem:[#allocation2 + $0x38] sm:$0xff] %v1350
        %s1359 = sld [smem:[#allocation11]]
        %v1360 = vstv %s1359
        %v1361 = vmul.f32 %v967, %v1360
        %v1362 = vmul.f32 %v968, %v1360
        %s1363 = sld [smem:[#allocation11 + $0x80]]
        %v1364 = vstv %s1363
        %v1365 = vmul.f32 %v973, %v1364
        %v1366 = vmul.f32 %v974, %v1364
        %v1367 = vadd.f32 %v1361, %v1365
        %v1368 = vadd.f32 %v1362, %v1366
        %s1369 = sld [smem:[#allocation11 + $0x100]]
        %v1370 = vstv %s1369
        %v1371 = vmul.f32 %v979, %v1370
        %v1372 = vmul.f32 %v980, %v1370
        %v1373 = vadd.f32 %v1367, %v1371
        %v1374 = vadd.f32 %v1368, %v1372
        %s1375 = sld [smem:[#allocation11 + $0x180]]
        %v1376 = vstv %s1375
        %v1377 = vmul.f32 %v985, %v1376
        %v1378 = vmul.f32 %v986, %v1376
        %v1379 = vadd.f32 %v1373, %v1377
        %v1380 = vadd.f32 %v1374, %v1378
        %v1381 = vld [vmem:[#allocation2] ss:$8 sm:$0x3]
        %v1383 = vlaneseq
        %v1384 = vshrl.u32 %v1383, 7
        %v1385 = vsub.s32 0, %v1384
        %v1386 = vrot.slane %v1381, %v1385
        %v1387 = vlaneseq
        %v1388 = vshrl.u32 %v1387, 7
        %v1389 = vsub.s32 1, %v1388
        %v1390 = vrot.slane %v1381, %v1389
        %v1393 = vadd.f32 %v1379, %v1386
        %v1394 = vadd.f32 %v1380, %v1390
        %v1395 = vmul.f32 %v1393, %v1393
        %v1396 = vmul.f32 %v1394, %v1394
        %v1397 = vmul.f32 %v1393, %v1395
        %v1398 = vmul.f32 %v1394, %v1396
        %v1399 = vmul.f32 %v1397, 0.044715
        %v1400 = vmul.f32 %v1398, 0.044715
        %v1401 = vadd.f32 %v1393, %v1399
        %v1402 = vadd.f32 %v1394, %v1400
        %v1403 = vmul.f32 %v1401, 0.7978846
        %v1404 = vmul.f32 %v1402, 0.7978846
        %v1405 = vtanh.pop %v1403
        %v1406 = vtanh.pop %v1404
        %v1407 = vadd.f32 %v1405, 1.0
        %v1408 = vadd.f32 %v1406, 1.0
        %v1409 = vmul.f32 %v1407, 0.5
        %v1410 = vmul.f32 %v1408, 0.5
        %v1411 = vmul.f32 %v1393, %v1409
        %v1412 = vmul.f32 %v1394, %v1410
        %s1413 = sld [smem:[#allocation12]]
        %v1414 = vstv %s1413
        %v1415 = vmul.f32 %v1411, %v1414
        %v1416 = vmul.f32 %v1412, %v1414
        %v1417 = vadd.f32 %v1415, 0.0
        %v1418 = vadd.f32 %v1416, 0.0
        %s1419 = sld [smem:[#allocation12 + $0x1]]
        %v1420 = vstv %s1419
        %v1421 = vmul.f32 %v1411, %v1420
        %v1422 = vmul.f32 %v1412, %v1420
        %v1423 = vadd.f32 %v1421, 0.0
        %v1424 = vadd.f32 %v1422, 0.0
        %s1425 = sld [smem:[#allocation12 + $0x2]]
        %v1426 = vstv %s1425
        %v1427 = vmul.f32 %v1411, %v1426
        %v1428 = vmul.f32 %v1412, %v1426
        %v1429 = vadd.f32 %v1427, 0.0
        %v1430 = vadd.f32 %v1428, 0.0
        %s1431 = sld [smem:[#allocation12 + $0x3]]
        %v1432 = vstv %s1431
        %v1433 = vmul.f32 %v1411, %v1432
        %v1434 = vmul.f32 %v1412, %v1432
        %v1435 = vadd.f32 %v1433, 0.0
        %v1436 = vadd.f32 %v1434, 0.0
        %s1437 = sld [smem:[#allocation11 + $0x1]]
        %v1438 = vstv %s1437
        %v1439 = vmul.f32 %v967, %v1438
        %v1440 = vmul.f32 %v968, %v1438
        %s1441 = sld [smem:[#allocation11 + $0x81]]
        %v1442 = vstv %s1441
        %v1443 = vmul.f32 %v973, %v1442
        %v1444 = vmul.f32 %v974, %v1442
        %v1445 = vadd.f32 %v1439, %v1443
        %v1446 = vadd.f32 %v1440, %v1444
        %s1447 = sld [smem:[#allocation11 + $0x101]]
        %v1448 = vstv %s1447
        %v1449 = vmul.f32 %v979, %v1448
        %v1450 = vmul.f32 %v980, %v1448
        %v1451 = vadd.f32 %v1445, %v1449
        %v1452 = vadd.f32 %v1446, %v1450
        %s1453 = sld [smem:[#allocation11 + $0x181]]
        %v1454 = vstv %s1453
        %v1455 = vmul.f32 %v985, %v1454
        %v1456 = vmul.f32 %v986, %v1454
        %v1457 = vadd.f32 %v1451, %v1455
        %v1458 = vadd.f32 %v1452, %v1456
        %s1459 = scalar_lea.vmem [#allocation2], 1
        %v1460 = vld [vmem:[%s1459] ss:$8 sm:$0x3]
        %v1462 = vlaneseq
        %v1463 = vshrl.u32 %v1462, 7
        %v1464 = vsub.s32 0, %v1463
        %v1465 = vrot.slane %v1460, %v1464
        %v1466 = vlaneseq
        %v1467 = vshrl.u32 %v1466, 7
        %v1468 = vsub.s32 1, %v1467
        %v1469 = vrot.slane %v1460, %v1468
        %v1472 = vadd.f32 %v1457, %v1465
        %v1473 = vadd.f32 %v1458, %v1469
        %v1474 = vmul.f32 %v1472, %v1472
        %v1475 = vmul.f32 %v1473, %v1473
        %v1476 = vmul.f32 %v1472, %v1474
        %v1477 = vmul.f32 %v1473, %v1475
        %v1478 = vmul.f32 %v1476, 0.044715
        %v1479 = vmul.f32 %v1477, 0.044715
        %v1480 = vadd.f32 %v1472, %v1478
        %v1481 = vadd.f32 %v1473, %v1479
        %v1482 = vmul.f32 %v1480, 0.7978846
        %v1483 = vmul.f32 %v1481, 0.7978846
        %v1484 = vtanh.pop %v1482
        %v1485 = vtanh.pop %v1483
        %v1486 = vadd.f32 %v1484, 1.0
        %v1487 = vadd.f32 %v1485, 1.0
        %v1488 = vmul.f32 %v1486, 0.5
        %v1489 = vmul.f32 %v1487, 0.5
        %v1490 = vmul.f32 %v1472, %v1488
        %v1491 = vmul.f32 %v1473, %v1489
        %s1492 = sld [smem:[#allocation12 + $0x80]]
        %v1493 = vstv %s1492
        %v1494 = vmul.f32 %v1490, %v1493
        %v1495 = vmul.f32 %v1491, %v1493
        %v1496 = vadd.f32 %v1417, %v1494
        %v1497 = vadd.f32 %v1418, %v1495
        %s1498 = sld [smem:[#allocation12 + $0x81]]
        %v1499 = vstv %s1498
        %v1500 = vmul.f32 %v1490, %v1499
        %v1501 = vmul.f32 %v1491, %v1499
        %v1502 = vadd.f32 %v1423, %v1500
        %v1503 = vadd.f32 %v1424, %v1501
        %s1504 = sld [smem:[#allocation12 + $0x82]]
        %v1505 = vstv %s1504
        %v1506 = vmul.f32 %v1490, %v1505
        %v1507 = vmul.f32 %v1491, %v1505
        %v1508 = vadd.f32 %v1429, %v1506
        %v1509 = vadd.f32 %v1430, %v1507
        %s1510 = sld [smem:[#allocation12 + $0x83]]
        %v1511 = vstv %s1510
        %v1512 = vmul.f32 %v1490, %v1511
        %v1513 = vmul.f32 %v1491, %v1511
        %v1514 = vadd.f32 %v1435, %v1512
        %v1515 = vadd.f32 %v1436, %v1513
        %s1516 = sld [smem:[#allocation11 + $0x2]]
        %v1517 = vstv %s1516
        %v1518 = vmul.f32 %v967, %v1517
        %v1519 = vmul.f32 %v968, %v1517
        %s1520 = sld [smem:[#allocation11 + $0x82]]
        %v1521 = vstv %s1520
        %v1522 = vmul.f32 %v973, %v1521
        %v1523 = vmul.f32 %v974, %v1521
        %v1524 = vadd.f32 %v1518, %v1522
        %v1525 = vadd.f32 %v1519, %v1523
        %s1526 = sld [smem:[#allocation11 + $0x102]]
        %v1527 = vstv %s1526
        %v1528 = vmul.f32 %v979, %v1527
        %v1529 = vmul.f32 %v980, %v1527
        %v1530 = vadd.f32 %v1524, %v1528
        %v1531 = vadd.f32 %v1525, %v1529
        %s1532 = sld [smem:[#allocation11 + $0x182]]
        %v1533 = vstv %s1532
        %v1534 = vmul.f32 %v985, %v1533
        %v1535 = vmul.f32 %v986, %v1533
        %v1536 = vadd.f32 %v1530, %v1534
        %v1537 = vadd.f32 %v1531, %v1535
        %s1538 = scalar_lea.vmem [#allocation2], 2
        %v1539 = vld [vmem:[%s1538] ss:$8 sm:$0x3]
        %v1541 = vlaneseq
        %v1542 = vshrl.u32 %v1541, 7
        %v1543 = vsub.s32 0, %v1542
        %v1544 = vrot.slane %v1539, %v1543
        %v1545 = vlaneseq
        %v1546 = vshrl.u32 %v1545, 7
        %v1547 = vsub.s32 1, %v1546
        %v1548 = vrot.slane %v1539, %v1547
        %v1551 = vadd.f32 %v1536, %v1544
        %v1552 = vadd.f32 %v1537, %v1548
        %v1553 = vmul.f32 %v1551, %v1551
        %v1554 = vmul.f32 %v1552, %v1552
        %v1555 = vmul.f32 %v1551, %v1553
        %v1556 = vmul.f32 %v1552, %v1554
        %v1557 = vmul.f32 %v1555, 0.044715
        %v1558 = vmul.f32 %v1556, 0.044715
        %v1559 = vadd.f32 %v1551, %v1557
        %v1560 = vadd.f32 %v1552, %v1558
        %v1561 = vmul.f32 %v1559, 0.7978846
        %v1562 = vmul.f32 %v1560, 0.7978846
        %v1563 = vtanh.pop %v1561
        %v1564 = vtanh.pop %v1562
        %v1565 = vadd.f32 %v1563, 1.0
        %v1566 = vadd.f32 %v1564, 1.0
        %v1567 = vmul.f32 %v1565, 0.5
        %v1568 = vmul.f32 %v1566, 0.5
        %v1569 = vmul.f32 %v1551, %v1567
        %v1570 = vmul.f32 %v1552, %v1568
        %s1571 = sld [smem:[#allocation12 + $0x100]]
        %v1572 = vstv %s1571
        %v1573 = vmul.f32 %v1569, %v1572
        %v1574 = vmul.f32 %v1570, %v1572
        %v1575 = vadd.f32 %v1496, %v1573
        %v1576 = vadd.f32 %v1497, %v1574
        %s1577 = sld [smem:[#allocation12 + $0x101]]
        %v1578 = vstv %s1577
        %v1579 = vmul.f32 %v1569, %v1578
        %v1580 = vmul.f32 %v1570, %v1578
        %v1581 = vadd.f32 %v1502, %v1579
        %v1582 = vadd.f32 %v1503, %v1580
        %s1583 = sld [smem:[#allocation12 + $0x102]]
        %v1584 = vstv %s1583
        %v1585 = vmul.f32 %v1569, %v1584
        %v1586 = vmul.f32 %v1570, %v1584
        %v1587 = vadd.f32 %v1508, %v1585
        %v1588 = vadd.f32 %v1509, %v1586
        %s1589 = sld [smem:[#allocation12 + $0x103]]
        %v1590 = vstv %s1589
        %v1591 = vmul.f32 %v1569, %v1590
        %v1592 = vmul.f32 %v1570, %v1590
        %v1593 = vadd.f32 %v1514, %v1591
        %v1594 = vadd.f32 %v1515, %v1592
        %s1595 = sld [smem:[#allocation11 + $0x3]]
        %v1596 = vstv %s1595
        %v1597 = vmul.f32 %v967, %v1596
        %v1598 = vmul.f32 %v968, %v1596
        %s1599 = sld [smem:[#allocation11 + $0x83]]
        %v1600 = vstv %s1599
        %v1601 = vmul.f32 %v973, %v1600
        %v1602 = vmul.f32 %v974, %v1600
        %v1603 = vadd.f32 %v1597, %v1601
        %v1604 = vadd.f32 %v1598, %v1602
        %s1605 = sld [smem:[#allocation11 + $0x103]]
        %v1606 = vstv %s1605
        %v1607 = vmul.f32 %v979, %v1606
        %v1608 = vmul.f32 %v980, %v1606
        %v1609 = vadd.f32 %v1603, %v1607
        %v1610 = vadd.f32 %v1604, %v1608
        %s1611 = sld [smem:[#allocation11 + $0x183]]
        %v1612 = vstv %s1611
        %v1613 = vmul.f32 %v985, %v1612
        %v1614 = vmul.f32 %v986, %v1612
        %v1615 = vadd.f32 %v1609, %v1613
        %v1616 = vadd.f32 %v1610, %v1614
        %s1617 = scalar_lea.vmem [#allocation2], 3
        %v1618 = vld [vmem:[%s1617] ss:$8 sm:$0x3]
        %v1620 = vlaneseq
        %v1621 = vshrl.u32 %v1620, 7
        %v1622 = vsub.s32 0, %v1621
        %v1623 = vrot.slane %v1618, %v1622
        %v1624 = vlaneseq
        %v1625 = vshrl.u32 %v1624, 7
        %v1626 = vsub.s32 1, %v1625
        %v1627 = vrot.slane %v1618, %v1626
        %v1630 = vadd.f32 %v1615, %v1623
        %v1631 = vadd.f32 %v1616, %v1627
        %v1632 = vmul.f32 %v1630, %v1630
        %v1633 = vmul.f32 %v1631, %v1631
        %v1634 = vmul.f32 %v1630, %v1632
        %v1635 = vmul.f32 %v1631, %v1633
        %v1636 = vmul.f32 %v1634, 0.044715
        %v1637 = vmul.f32 %v1635, 0.044715
        %v1638 = vadd.f32 %v1630, %v1636
        %v1639 = vadd.f32 %v1631, %v1637
        %v1640 = vmul.f32 %v1638, 0.7978846
        %v1641 = vmul.f32 %v1639, 0.7978846
        %v1642 = vtanh.pop %v1640
        %v1643 = vtanh.pop %v1641
        %v1644 = vadd.f32 %v1642, 1.0
        %v1645 = vadd.f32 %v1643, 1.0
        %v1646 = vmul.f32 %v1644, 0.5
        %v1647 = vmul.f32 %v1645, 0.5
        %v1648 = vmul.f32 %v1630, %v1646
        %v1649 = vmul.f32 %v1631, %v1647
        %s1650 = sld [smem:[#allocation12 + $0x180]]
        %v1651 = vstv %s1650
        %v1652 = vmul.f32 %v1648, %v1651
        %v1653 = vmul.f32 %v1649, %v1651
        %v1654 = vadd.f32 %v1575, %v1652
        %v1655 = vadd.f32 %v1576, %v1653
        %s1656 = sld [smem:[#allocation12 + $0x181]]
        %v1657 = vstv %s1656
        %v1658 = vmul.f32 %v1648, %v1657
        %v1659 = vmul.f32 %v1649, %v1657
        %v1660 = vadd.f32 %v1581, %v1658
        %v1661 = vadd.f32 %v1582, %v1659
        %s1662 = sld [smem:[#allocation12 + $0x182]]
        %v1663 = vstv %s1662
        %v1664 = vmul.f32 %v1648, %v1663
        %v1665 = vmul.f32 %v1649, %v1663
        %v1666 = vadd.f32 %v1587, %v1664
        %v1667 = vadd.f32 %v1588, %v1665
        %s1668 = sld [smem:[#allocation12 + $0x183]]
        %v1669 = vstv %s1668
        %v1670 = vmul.f32 %v1648, %v1669
        %v1671 = vmul.f32 %v1649, %v1669
        %v1672 = vadd.f32 %v1593, %v1670
        %v1673 = vadd.f32 %v1594, %v1671
        %s1674 = sld [smem:[#allocation11 + $0x4]]
        %v1675 = vstv %s1674
        %v1676 = vmul.f32 %v967, %v1675
        %v1677 = vmul.f32 %v968, %v1675
        %s1678 = sld [smem:[#allocation11 + $0x84]]
        %v1679 = vstv %s1678
        %v1680 = vmul.f32 %v973, %v1679
        %v1681 = vmul.f32 %v974, %v1679
        %v1682 = vadd.f32 %v1676, %v1680
        %v1683 = vadd.f32 %v1677, %v1681
        %s1684 = sld [smem:[#allocation11 + $0x104]]
        %v1685 = vstv %s1684
        %v1686 = vmul.f32 %v979, %v1685
        %v1687 = vmul.f32 %v980, %v1685
        %v1688 = vadd.f32 %v1682, %v1686
        %v1689 = vadd.f32 %v1683, %v1687
        %s1690 = sld [smem:[#allocation11 + $0x184]]
        %v1691 = vstv %s1690
        %v1692 = vmul.f32 %v985, %v1691
        %v1693 = vmul.f32 %v986, %v1691
        %v1694 = vadd.f32 %v1688, %v1692
        %v1695 = vadd.f32 %v1689, %v1693
        %s1696 = scalar_lea.vmem [#allocation2], 4
        %v1697 = vld [vmem:[%s1696] ss:$8 sm:$0x3]
        %v1699 = vlaneseq
        %v1700 = vshrl.u32 %v1699, 7
        %v1701 = vsub.s32 0, %v1700
        %v1702 = vrot.slane %v1697, %v1701
        %v1703 = vlaneseq
        %v1704 = vshrl.u32 %v1703, 7
        %v1705 = vsub.s32 1, %v1704
        %v1706 = vrot.slane %v1697, %v1705
        %v1709 = vadd.f32 %v1694, %v1702
        %v1710 = vadd.f32 %v1695, %v1706
        %v1711 = vmul.f32 %v1709, %v1709
        %v1712 = vmul.f32 %v1710, %v1710
        %v1713 = vmul.f32 %v1709, %v1711
        %v1714 = vmul.f32 %v1710, %v1712
        %v1715 = vmul.f32 %v1713, 0.044715
        %v1716 = vmul.f32 %v1714, 0.044715
        %v1717 = vadd.f32 %v1709, %v1715
        %v1718 = vadd.f32 %v1710, %v1716
        %v1719 = vmul.f32 %v1717, 0.7978846
        %v1720 = vmul.f32 %v1718, 0.7978846
        %v1721 = vtanh.pop %v1719
        %v1722 = vtanh.pop %v1720
        %v1723 = vadd.f32 %v1721, 1.0
        %v1724 = vadd.f32 %v1722, 1.0
        %v1725 = vmul.f32 %v1723, 0.5
        %v1726 = vmul.f32 %v1724, 0.5
        %v1727 = vmul.f32 %v1709, %v1725
        %v1728 = vmul.f32 %v1710, %v1726
        %s1729 = sld [smem:[#allocation12 + $0x200]]
        %v1730 = vstv %s1729
        %v1731 = vmul.f32 %v1727, %v1730
        %v1732 = vmul.f32 %v1728, %v1730
        %v1733 = vadd.f32 %v1654, %v1731
        %v1734 = vadd.f32 %v1655, %v1732
        %s1735 = sld [smem:[#allocation12 + $0x201]]
        %v1736 = vstv %s1735
        %v1737 = vmul.f32 %v1727, %v1736
        %v1738 = vmul.f32 %v1728, %v1736
        %v1739 = vadd.f32 %v1660, %v1737
        %v1740 = vadd.f32 %v1661, %v1738
        %s1741 = sld [smem:[#allocation12 + $0x202]]
        %v1742 = vstv %s1741
        %v1743 = vmul.f32 %v1727, %v1742
        %v1744 = vmul.f32 %v1728, %v1742
        %v1745 = vadd.f32 %v1666, %v1743
        %v1746 = vadd.f32 %v1667, %v1744
        %s1747 = sld [smem:[#allocation12 + $0x203]]
        %v1748 = vstv %s1747
        %v1749 = vmul.f32 %v1727, %v1748
        %v1750 = vmul.f32 %v1728, %v1748
        %v1751 = vadd.f32 %v1672, %v1749
        %v1752 = vadd.f32 %v1673, %v1750
        %s1753 = sld [smem:[#allocation11 + $0x5]]
        %v1754 = vstv %s1753
        %v1755 = vmul.f32 %v967, %v1754
        %v1756 = vmul.f32 %v968, %v1754
        %s1757 = sld [smem:[#allocation11 + $0x85]]
        %v1758 = vstv %s1757
        %v1759 = vmul.f32 %v973, %v1758
        %v1760 = vmul.f32 %v974, %v1758
        %v1761 = vadd.f32 %v1755, %v1759
        %v1762 = vadd.f32 %v1756, %v1760
        %s1763 = sld [smem:[#allocation11 + $0x105]]
        %v1764 = vstv %s1763
        %v1765 = vmul.f32 %v979, %v1764
        %v1766 = vmul.f32 %v980, %v1764
        %v1767 = vadd.f32 %v1761, %v1765
        %v1768 = vadd.f32 %v1762, %v1766
        %s1769 = sld [smem:[#allocation11 + $0x185]]
        %v1770 = vstv %s1769
        %v1771 = vmul.f32 %v985, %v1770
        %v1772 = vmul.f32 %v986, %v1770
        %v1773 = vadd.f32 %v1767, %v1771
        %v1774 = vadd.f32 %v1768, %v1772
        %s1775 = scalar_lea.vmem [#allocation2], 5
        %v1776 = vld [vmem:[%s1775] ss:$8 sm:$0x3]
        %v1778 = vlaneseq
        %v1779 = vshrl.u32 %v1778, 7
        %v1780 = vsub.s32 0, %v1779
        %v1781 = vrot.slane %v1776, %v1780
        %v1782 = vlaneseq
        %v1783 = vshrl.u32 %v1782, 7
        %v1784 = vsub.s32 1, %v1783
        %v1785 = vrot.slane %v1776, %v1784
        %v1788 = vadd.f32 %v1773, %v1781
        %v1789 = vadd.f32 %v1774, %v1785
        %v1790 = vmul.f32 %v1788, %v1788
        %v1791 = vmul.f32 %v1789, %v1789
        %v1792 = vmul.f32 %v1788, %v1790
        %v1793 = vmul.f32 %v1789, %v1791
        %v1794 = vmul.f32 %v1792, 0.044715
        %v1795 = vmul.f32 %v1793, 0.044715
        %v1796 = vadd.f32 %v1788, %v1794
        %v1797 = vadd.f32 %v1789, %v1795
        %v1798 = vmul.f32 %v1796, 0.7978846
        %v1799 = vmul.f32 %v1797, 0.7978846
        %v1800 = vtanh.pop %v1798
        %v1801 = vtanh.pop %v1799
        %v1802 = vadd.f32 %v1800, 1.0
        %v1803 = vadd.f32 %v1801, 1.0
        %v1804 = vmul.f32 %v1802, 0.5
        %v1805 = vmul.f32 %v1803, 0.5
        %v1806 = vmul.f32 %v1788, %v1804
        %v1807 = vmul.f32 %v1789, %v1805
        %s1808 = sld [smem:[#allocation12 + $0x280]]
        %v1809 = vstv %s1808
        %v1810 = vmul.f32 %v1806, %v1809
        %v1811 = vmul.f32 %v1807, %v1809
        %v1812 = vadd.f32 %v1733, %v1810
        %v1813 = vadd.f32 %v1734, %v1811
        %s1814 = sld [smem:[#allocation12 + $0x281]]
        %v1815 = vstv %s1814
        %v1816 = vmul.f32 %v1806, %v1815
        %v1817 = vmul.f32 %v1807, %v1815
        %v1818 = vadd.f32 %v1739, %v1816
        %v1819 = vadd.f32 %v1740, %v1817
        %s1820 = sld [smem:[#allocation12 + $0x282]]
        %v1821 = vstv %s1820
        %v1822 = vmul.f32 %v1806, %v1821
        %v1823 = vmul.f32 %v1807, %v1821
        %v1824 = vadd.f32 %v1745, %v1822
        %v1825 = vadd.f32 %v1746, %v1823
        %s1826 = sld [smem:[#allocation12 + $0x283]]
        %v1827 = vstv %s1826
        %v1828 = vmul.f32 %v1806, %v1827
        %v1829 = vmul.f32 %v1807, %v1827
        %v1830 = vadd.f32 %v1751, %v1828
        %v1831 = vadd.f32 %v1752, %v1829
        %s1832 = sld [smem:[#allocation11 + $0x6]]
        %v1833 = vstv %s1832
        %v1834 = vmul.f32 %v967, %v1833
        %v1835 = vmul.f32 %v968, %v1833
        %s1836 = sld [smem:[#allocation11 + $0x86]]
        %v1837 = vstv %s1836
        %v1838 = vmul.f32 %v973, %v1837
        %v1839 = vmul.f32 %v974, %v1837
        %v1840 = vadd.f32 %v1834, %v1838
        %v1841 = vadd.f32 %v1835, %v1839
        %s1842 = sld [smem:[#allocation11 + $0x106]]
        %v1843 = vstv %s1842
        %v1844 = vmul.f32 %v979, %v1843
        %v1845 = vmul.f32 %v980, %v1843
        %v1846 = vadd.f32 %v1840, %v1844
        %v1847 = vadd.f32 %v1841, %v1845
        %s1848 = sld [smem:[#allocation11 + $0x186]]
        %v1849 = vstv %s1848
        %v1850 = vmul.f32 %v985, %v1849
        %v1851 = vmul.f32 %v986, %v1849
        %v1852 = vadd.f32 %v1846, %v1850
        %v1853 = vadd.f32 %v1847, %v1851
        %s1854 = scalar_lea.vmem [#allocation2], 6
        %v1855 = vld [vmem:[%s1854] ss:$8 sm:$0x3]
        %v1857 = vlaneseq
        %v1858 = vshrl.u32 %v1857, 7
        %v1859 = vsub.s32 0, %v1858
        %v1860 = vrot.slane %v1855, %v1859
        %v1861 = vlaneseq
        %v1862 = vshrl.u32 %v1861, 7
        %v1863 = vsub.s32 1, %v1862
        %v1864 = vrot.slane %v1855, %v1863
        %v1867 = vadd.f32 %v1852, %v1860
        %v1868 = vadd.f32 %v1853, %v1864
        %v1869 = vmul.f32 %v1867, %v1867
        %v1870 = vmul.f32 %v1868, %v1868
        %v1871 = vmul.f32 %v1867, %v1869
        %v1872 = vmul.f32 %v1868, %v1870
        %v1873 = vmul.f32 %v1871, 0.044715
        %v1874 = vmul.f32 %v1872, 0.044715
        %v1875 = vadd.f32 %v1867, %v1873
        %v1876 = vadd.f32 %v1868, %v1874
        %v1877 = vmul.f32 %v1875, 0.7978846
        %v1878 = vmul.f32 %v1876, 0.7978846
        %v1879 = vtanh.pop %v1877
        %v1880 = vtanh.pop %v1878
        %v1881 = vadd.f32 %v1879, 1.0
        %v1882 = vadd.f32 %v1880, 1.0
        %v1883 = vmul.f32 %v1881, 0.5
        %v1884 = vmul.f32 %v1882, 0.5
        %v1885 = vmul.f32 %v1867, %v1883
        %v1886 = vmul.f32 %v1868, %v1884
        %s1887 = sld [smem:[#allocation12 + $0x300]]
        %v1888 = vstv %s1887
        %v1889 = vmul.f32 %v1885, %v1888
        %v1890 = vmul.f32 %v1886, %v1888
        %v1891 = vadd.f32 %v1812, %v1889
        %v1892 = vadd.f32 %v1813, %v1890
        %s1893 = sld [smem:[#allocation12 + $0x301]]
        %v1894 = vstv %s1893
        %v1895 = vmul.f32 %v1885, %v1894
        %v1896 = vmul.f32 %v1886, %v1894
        %v1897 = vadd.f32 %v1818, %v1895
        %v1898 = vadd.f32 %v1819, %v1896
        %s1899 = sld [smem:[#allocation12 + $0x302]]
        %v1900 = vstv %s1899
        %v1901 = vmul.f32 %v1885, %v1900
        %v1902 = vmul.f32 %v1886, %v1900
        %v1903 = vadd.f32 %v1824, %v1901
        %v1904 = vadd.f32 %v1825, %v1902
        %s1905 = sld [smem:[#allocation12 + $0x303]]
        %v1906 = vstv %s1905
        %v1907 = vmul.f32 %v1885, %v1906
        %v1908 = vmul.f32 %v1886, %v1906
        %v1909 = vadd.f32 %v1830, %v1907
        %v1910 = vadd.f32 %v1831, %v1908
        %s1911 = sld [smem:[#allocation11 + $0x7]]
        %v1912 = vstv %s1911
        %v1913 = vmul.f32 %v967, %v1912
        %v1914 = vmul.f32 %v968, %v1912
        %s1915 = sld [smem:[#allocation11 + $0x87]]
        %v1916 = vstv %s1915
        %v1917 = vmul.f32 %v973, %v1916
        %v1918 = vmul.f32 %v974, %v1916
        %v1919 = vadd.f32 %v1913, %v1917
        %v1920 = vadd.f32 %v1914, %v1918
        %s1921 = sld [smem:[#allocation11 + $0x107]]
        %v1922 = vstv %s1921
        %v1923 = vmul.f32 %v979, %v1922
        %v1924 = vmul.f32 %v980, %v1922
        %v1925 = vadd.f32 %v1919, %v1923
        %v1926 = vadd.f32 %v1920, %v1924
        %s1927 = sld [smem:[#allocation11 + $0x187]]
        %v1928 = vstv %s1927
        %v1929 = vmul.f32 %v985, %v1928
        %v1930 = vmul.f32 %v986, %v1928
        %v1931 = vadd.f32 %v1925, %v1929
        %v1932 = vadd.f32 %v1926, %v1930
        %s1933 = scalar_lea.vmem [#allocation2], 7
        %v1934 = vld [vmem:[%s1933] ss:$8 sm:$0x3]
        %v1936 = vlaneseq
        %v1937 = vshrl.u32 %v1936, 7
        %v1938 = vsub.s32 0, %v1937
        %v1939 = vrot.slane %v1934, %v1938
        %v1940 = vlaneseq
        %v1941 = vshrl.u32 %v1940, 7
        %v1942 = vsub.s32 1, %v1941
        %v1943 = vrot.slane %v1934, %v1942
        %v1946 = vadd.f32 %v1931, %v1939
        %v1947 = vadd.f32 %v1932, %v1943
        %v1948 = vmul.f32 %v1946, %v1946
        %v1949 = vmul.f32 %v1947, %v1947
        %v1950 = vmul.f32 %v1946, %v1948
        %v1951 = vmul.f32 %v1947, %v1949
        %v1952 = vmul.f32 %v1950, 0.044715
        %v1953 = vmul.f32 %v1951, 0.044715
        %v1954 = vadd.f32 %v1946, %v1952
        %v1955 = vadd.f32 %v1947, %v1953
        %v1956 = vmul.f32 %v1954, 0.7978846
        %v1957 = vmul.f32 %v1955, 0.7978846
        %v1958 = vtanh.pop %v1956
        %v1959 = vtanh.pop %v1957
        %v1960 = vadd.f32 %v1958, 1.0
        %v1961 = vadd.f32 %v1959, 1.0
        %v1962 = vmul.f32 %v1960, 0.5
        %v1963 = vmul.f32 %v1961, 0.5
        %v1964 = vmul.f32 %v1946, %v1962
        %v1965 = vmul.f32 %v1947, %v1963
        %s1966 = sld [smem:[#allocation12 + $0x380]]
        %v1967 = vstv %s1966
        %v1968 = vmul.f32 %v1964, %v1967
        %v1969 = vmul.f32 %v1965, %v1967
        %v1970 = vadd.f32 %v1891, %v1968
        %v1971 = vadd.f32 %v1892, %v1969
        %s1972 = sld [smem:[#allocation12 + $0x381]]
        %v1973 = vstv %s1972
        %v1974 = vmul.f32 %v1964, %v1973
        %v1975 = vmul.f32 %v1965, %v1973
        %v1976 = vadd.f32 %v1897, %v1974
        %v1977 = vadd.f32 %v1898, %v1975
        %s1978 = sld [smem:[#allocation12 + $0x382]]
        %v1979 = vstv %s1978
        %v1980 = vmul.f32 %v1964, %v1979
        %v1981 = vmul.f32 %v1965, %v1979
        %v1982 = vadd.f32 %v1903, %v1980
        %v1983 = vadd.f32 %v1904, %v1981
        %s1984 = sld [smem:[#allocation12 + $0x383]]
        %v1985 = vstv %s1984
        %v1986 = vmul.f32 %v1964, %v1985
        %v1987 = vmul.f32 %v1965, %v1985
        %v1988 = vadd.f32 %v1909, %v1986
        %v1989 = vadd.f32 %v1910, %v1987
        %s1990 = sld [smem:[#allocation11 + $0x8]]
        %v1991 = vstv %s1990
        %v1992 = vmul.f32 %v967, %v1991
        %v1993 = vmul.f32 %v968, %v1991
        %s1994 = sld [smem:[#allocation11 + $0x88]]
        %v1995 = vstv %s1994
        %v1996 = vmul.f32 %v973, %v1995
        %v1997 = vmul.f32 %v974, %v1995
        %v1998 = vadd.f32 %v1992, %v1996
        %v1999 = vadd.f32 %v1993, %v1997
        %s2000 = sld [smem:[#allocation11 + $0x108]]
        %v2001 = vstv %s2000
        %v2002 = vmul.f32 %v979, %v2001
        %v2003 = vmul.f32 %v980, %v2001
        %v2004 = vadd.f32 %v1998, %v2002
        %v2005 = vadd.f32 %v1999, %v2003
        %s2006 = sld [smem:[#allocation11 + $0x188]]
        %v2007 = vstv %s2006
        %v2008 = vmul.f32 %v985, %v2007
        %v2009 = vmul.f32 %v986, %v2007
        %v2010 = vadd.f32 %v2004, %v2008
        %v2011 = vadd.f32 %v2005, %v2009
        %s2012 = scalar_lea.vmem [#allocation2], 16
        %v2013 = vld [vmem:[%s2012] ss:$8 sm:$0x3]
        %v2015 = vlaneseq
        %v2016 = vshrl.u32 %v2015, 7
        %v2017 = vsub.s32 0, %v2016
        %v2018 = vrot.slane %v2013, %v2017
        %v2019 = vlaneseq
        %v2020 = vshrl.u32 %v2019, 7
        %v2021 = vsub.s32 1, %v2020
        %v2022 = vrot.slane %v2013, %v2021
        %v2025 = vadd.f32 %v2010, %v2018
        %v2026 = vadd.f32 %v2011, %v2022
        %v2027 = vmul.f32 %v2025, %v2025
        %v2028 = vmul.f32 %v2026, %v2026
        %v2029 = vmul.f32 %v2025, %v2027
        %v2030 = vmul.f32 %v2026, %v2028
        %v2031 = vmul.f32 %v2029, 0.044715
        %v2032 = vmul.f32 %v2030, 0.044715
        %v2033 = vadd.f32 %v2025, %v2031
        %v2034 = vadd.f32 %v2026, %v2032
        %v2035 = vmul.f32 %v2033, 0.7978846
        %v2036 = vmul.f32 %v2034, 0.7978846
        %v2037 = vtanh.pop %v2035
        %v2038 = vtanh.pop %v2036
        %v2039 = vadd.f32 %v2037, 1.0
        %v2040 = vadd.f32 %v2038, 1.0
        %v2041 = vmul.f32 %v2039, 0.5
        %v2042 = vmul.f32 %v2040, 0.5
        %v2043 = vmul.f32 %v2025, %v2041
        %v2044 = vmul.f32 %v2026, %v2042
        %s2045 = sld [smem:[#allocation12 + $0x400]]
        %v2046 = vstv %s2045
        %v2047 = vmul.f32 %v2043, %v2046
        %v2048 = vmul.f32 %v2044, %v2046
        %v2049 = vadd.f32 %v1970, %v2047
        %v2050 = vadd.f32 %v1971, %v2048
        %s2051 = sld [smem:[#allocation12 + $0x401]]
        %v2052 = vstv %s2051
        %v2053 = vmul.f32 %v2043, %v2052
        %v2054 = vmul.f32 %v2044, %v2052
        %v2055 = vadd.f32 %v1976, %v2053
        %v2056 = vadd.f32 %v1977, %v2054
        %s2057 = sld [smem:[#allocation12 + $0x402]]
        %v2058 = vstv %s2057
        %v2059 = vmul.f32 %v2043, %v2058
        %v2060 = vmul.f32 %v2044, %v2058
        %v2061 = vadd.f32 %v1982, %v2059
        %v2062 = vadd.f32 %v1983, %v2060
        %s2063 = sld [smem:[#allocation12 + $0x403]]
        %v2064 = vstv %s2063
        %v2065 = vmul.f32 %v2043, %v2064
        %v2066 = vmul.f32 %v2044, %v2064
        %v2067 = vadd.f32 %v1988, %v2065
        %v2068 = vadd.f32 %v1989, %v2066
        %s2069 = sld [smem:[#allocation11 + $0x9]]
        %v2070 = vstv %s2069
        %v2071 = vmul.f32 %v967, %v2070
        %v2072 = vmul.f32 %v968, %v2070
        %s2073 = sld [smem:[#allocation11 + $0x89]]
        %v2074 = vstv %s2073
        %v2075 = vmul.f32 %v973, %v2074
        %v2076 = vmul.f32 %v974, %v2074
        %v2077 = vadd.f32 %v2071, %v2075
        %v2078 = vadd.f32 %v2072, %v2076
        %s2079 = sld [smem:[#allocation11 + $0x109]]
        %v2080 = vstv %s2079
        %v2081 = vmul.f32 %v979, %v2080
        %v2082 = vmul.f32 %v980, %v2080
        %v2083 = vadd.f32 %v2077, %v2081
        %v2084 = vadd.f32 %v2078, %v2082
        %s2085 = sld [smem:[#allocation11 + $0x189]]
        %v2086 = vstv %s2085
        %v2087 = vmul.f32 %v985, %v2086
        %v2088 = vmul.f32 %v986, %v2086
        %v2089 = vadd.f32 %v2083, %v2087
        %v2090 = vadd.f32 %v2084, %v2088
        %s2091 = scalar_lea.vmem [#allocation2], 17
        %v2092 = vld [vmem:[%s2091] ss:$8 sm:$0x3]
        %v2094 = vlaneseq
        %v2095 = vshrl.u32 %v2094, 7
        %v2096 = vsub.s32 0, %v2095
        %v2097 = vrot.slane %v2092, %v2096
        %v2098 = vlaneseq
        %v2099 = vshrl.u32 %v2098, 7
        %v2100 = vsub.s32 1, %v2099
        %v2101 = vrot.slane %v2092, %v2100
        %v2104 = vadd.f32 %v2089, %v2097
        %v2105 = vadd.f32 %v2090, %v2101
        %v2106 = vmul.f32 %v2104, %v2104
        %v2107 = vmul.f32 %v2105, %v2105
        %v2108 = vmul.f32 %v2104, %v2106
        %v2109 = vmul.f32 %v2105, %v2107
        %v2110 = vmul.f32 %v2108, 0.044715
        %v2111 = vmul.f32 %v2109, 0.044715
        %v2112 = vadd.f32 %v2104, %v2110
        %v2113 = vadd.f32 %v2105, %v2111
        %v2114 = vmul.f32 %v2112, 0.7978846
        %v2115 = vmul.f32 %v2113, 0.7978846
        %v2116 = vtanh.pop %v2114
        %v2117 = vtanh.pop %v2115
        %v2118 = vadd.f32 %v2116, 1.0
        %v2119 = vadd.f32 %v2117, 1.0
        %v2120 = vmul.f32 %v2118, 0.5
        %v2121 = vmul.f32 %v2119, 0.5
        %v2122 = vmul.f32 %v2104, %v2120
        %v2123 = vmul.f32 %v2105, %v2121
        %s2124 = sld [smem:[#allocation12 + $0x480]]
        %v2125 = vstv %s2124
        %v2126 = vmul.f32 %v2122, %v2125
        %v2127 = vmul.f32 %v2123, %v2125
        %v2128 = vadd.f32 %v2049, %v2126
        %v2129 = vadd.f32 %v2050, %v2127
        %s2130 = sld [smem:[#allocation12 + $0x481]]
        %v2131 = vstv %s2130
        %v2132 = vmul.f32 %v2122, %v2131
        %v2133 = vmul.f32 %v2123, %v2131
        %v2134 = vadd.f32 %v2055, %v2132
        %v2135 = vadd.f32 %v2056, %v2133
        %s2136 = sld [smem:[#allocation12 + $0x482]]
        %v2137 = vstv %s2136
        %v2138 = vmul.f32 %v2122, %v2137
        %v2139 = vmul.f32 %v2123, %v2137
        %v2140 = vadd.f32 %v2061, %v2138
        %v2141 = vadd.f32 %v2062, %v2139
        %s2142 = sld [smem:[#allocation12 + $0x483]]
        %v2143 = vstv %s2142
        %v2144 = vmul.f32 %v2122, %v2143
        %v2145 = vmul.f32 %v2123, %v2143
        %v2146 = vadd.f32 %v2067, %v2144
        %v2147 = vadd.f32 %v2068, %v2145
        %s2148 = sld [smem:[#allocation11 + $0xa]]
        %v2149 = vstv %s2148
        %v2150 = vmul.f32 %v967, %v2149
        %v2151 = vmul.f32 %v968, %v2149
        %s2152 = sld [smem:[#allocation11 + $0x8a]]
        %v2153 = vstv %s2152
        %v2154 = vmul.f32 %v973, %v2153
        %v2155 = vmul.f32 %v974, %v2153
        %v2156 = vadd.f32 %v2150, %v2154
        %v2157 = vadd.f32 %v2151, %v2155
        %s2158 = sld [smem:[#allocation11 + $0x10a]]
        %v2159 = vstv %s2158
        %v2160 = vmul.f32 %v979, %v2159
        %v2161 = vmul.f32 %v980, %v2159
        %v2162 = vadd.f32 %v2156, %v2160
        %v2163 = vadd.f32 %v2157, %v2161
        %s2164 = sld [smem:[#allocation11 + $0x18a]]
        %v2165 = vstv %s2164
        %v2166 = vmul.f32 %v985, %v2165
        %v2167 = vmul.f32 %v986, %v2165
        %v2168 = vadd.f32 %v2162, %v2166
        %v2169 = vadd.f32 %v2163, %v2167
        %s2170 = scalar_lea.vmem [#allocation2], 18
        %v2171 = vld [vmem:[%s2170] ss:$8 sm:$0x3]
        %v2173 = vlaneseq
        %v2174 = vshrl.u32 %v2173, 7
        %v2175 = vsub.s32 0, %v2174
        %v2176 = vrot.slane %v2171, %v2175
        %v2177 = vlaneseq
        %v2178 = vshrl.u32 %v2177, 7
        %v2179 = vsub.s32 1, %v2178
        %v2180 = vrot.slane %v2171, %v2179
        %v2183 = vadd.f32 %v2168, %v2176
        %v2184 = vadd.f32 %v2169, %v2180
        %v2185 = vmul.f32 %v2183, %v2183
        %v2186 = vmul.f32 %v2184, %v2184
        %v2187 = vmul.f32 %v2183, %v2185
        %v2188 = vmul.f32 %v2184, %v2186
        %v2189 = vmul.f32 %v2187, 0.044715
        %v2190 = vmul.f32 %v2188, 0.044715
        %v2191 = vadd.f32 %v2183, %v2189
        %v2192 = vadd.f32 %v2184, %v2190
        %v2193 = vmul.f32 %v2191, 0.7978846
        %v2194 = vmul.f32 %v2192, 0.7978846
        %v2195 = vtanh.pop %v2193
        %v2196 = vtanh.pop %v2194
        %v2197 = vadd.f32 %v2195, 1.0
        %v2198 = vadd.f32 %v2196, 1.0
        %v2199 = vmul.f32 %v2197, 0.5
        %v2200 = vmul.f32 %v2198, 0.5
        %v2201 = vmul.f32 %v2183, %v2199
        %v2202 = vmul.f32 %v2184, %v2200
        %s2203 = sld [smem:[#allocation12 + $0x500]]
        %v2204 = vstv %s2203
        %v2205 = vmul.f32 %v2201, %v2204
        %v2206 = vmul.f32 %v2202, %v2204
        %v2207 = vadd.f32 %v2128, %v2205
        %v2208 = vadd.f32 %v2129, %v2206
        %s2209 = sld [smem:[#allocation12 + $0x501]]
        %v2210 = vstv %s2209
        %v2211 = vmul.f32 %v2201, %v2210
        %v2212 = vmul.f32 %v2202, %v2210
        %v2213 = vadd.f32 %v2134, %v2211
        %v2214 = vadd.f32 %v2135, %v2212
        %s2215 = sld [smem:[#allocation12 + $0x502]]
        %v2216 = vstv %s2215
        %v2217 = vmul.f32 %v2201, %v2216
        %v2218 = vmul.f32 %v2202, %v2216
        %v2219 = vadd.f32 %v2140, %v2217
        %v2220 = vadd.f32 %v2141, %v2218
        %s2221 = sld [smem:[#allocation12 + $0x503]]
        %v2222 = vstv %s2221
        %v2223 = vmul.f32 %v2201, %v2222
        %v2224 = vmul.f32 %v2202, %v2222
        %v2225 = vadd.f32 %v2146, %v2223
        %v2226 = vadd.f32 %v2147, %v2224
        %s2227 = sld [smem:[#allocation11 + $0xb]]
        %v2228 = vstv %s2227
        %v2229 = vmul.f32 %v967, %v2228
        %v2230 = vmul.f32 %v968, %v2228
        %s2231 = sld [smem:[#allocation11 + $0x8b]]
        %v2232 = vstv %s2231
        %v2233 = vmul.f32 %v973, %v2232
        %v2234 = vmul.f32 %v974, %v2232
        %v2235 = vadd.f32 %v2229, %v2233
        %v2236 = vadd.f32 %v2230, %v2234
        %s2237 = sld [smem:[#allocation11 + $0x10b]]
        %v2238 = vstv %s2237
        %v2239 = vmul.f32 %v979, %v2238
        %v2240 = vmul.f32 %v980, %v2238
        %v2241 = vadd.f32 %v2235, %v2239
        %v2242 = vadd.f32 %v2236, %v2240
        %s2243 = sld [smem:[#allocation11 + $0x18b]]
        %v2244 = vstv %s2243
        %v2245 = vmul.f32 %v985, %v2244
        %v2246 = vmul.f32 %v986, %v2244
        %v2247 = vadd.f32 %v2241, %v2245
        %v2248 = vadd.f32 %v2242, %v2246
        %s2249 = scalar_lea.vmem [#allocation2], 19
        %v2250 = vld [vmem:[%s2249] ss:$8 sm:$0x3]
        %v2252 = vlaneseq
        %v2253 = vshrl.u32 %v2252, 7
        %v2254 = vsub.s32 0, %v2253
        %v2255 = vrot.slane %v2250, %v2254
        %v2256 = vlaneseq
        %v2257 = vshrl.u32 %v2256, 7
        %v2258 = vsub.s32 1, %v2257
        %v2259 = vrot.slane %v2250, %v2258
        %v2262 = vadd.f32 %v2247, %v2255
        %v2263 = vadd.f32 %v2248, %v2259
        %v2264 = vmul.f32 %v2262, %v2262
        %v2265 = vmul.f32 %v2263, %v2263
        %v2266 = vmul.f32 %v2262, %v2264
        %v2267 = vmul.f32 %v2263, %v2265
        %v2268 = vmul.f32 %v2266, 0.044715
        %v2269 = vmul.f32 %v2267, 0.044715
        %v2270 = vadd.f32 %v2262, %v2268
        %v2271 = vadd.f32 %v2263, %v2269
        %v2272 = vmul.f32 %v2270, 0.7978846
        %v2273 = vmul.f32 %v2271, 0.7978846
        %v2274 = vtanh.pop %v2272
        %v2275 = vtanh.pop %v2273
        %v2276 = vadd.f32 %v2274, 1.0
        %v2277 = vadd.f32 %v2275, 1.0
        %v2278 = vmul.f32 %v2276, 0.5
        %v2279 = vmul.f32 %v2277, 0.5
        %v2280 = vmul.f32 %v2262, %v2278
        %v2281 = vmul.f32 %v2263, %v2279
        %s2282 = sld [smem:[#allocation12 + $0x580]]
        %v2283 = vstv %s2282
        %v2284 = vmul.f32 %v2280, %v2283
        %v2285 = vmul.f32 %v2281, %v2283
        %v2286 = vadd.f32 %v2207, %v2284
        %v2287 = vadd.f32 %v2208, %v2285
        %s2288 = sld [smem:[#allocation12 + $0x581]]
        %v2289 = vstv %s2288
        %v2290 = vmul.f32 %v2280, %v2289
        %v2291 = vmul.f32 %v2281, %v2289
        %v2292 = vadd.f32 %v2213, %v2290
        %v2293 = vadd.f32 %v2214, %v2291
        %s2294 = sld [smem:[#allocation12 + $0x582]]
        %v2295 = vstv %s2294
        %v2296 = vmul.f32 %v2280, %v2295
        %v2297 = vmul.f32 %v2281, %v2295
        %v2298 = vadd.f32 %v2219, %v2296
        %v2299 = vadd.f32 %v2220, %v2297
        %s2300 = sld [smem:[#allocation12 + $0x583]]
        %v2301 = vstv %s2300
        %v2302 = vmul.f32 %v2280, %v2301
        %v2303 = vmul.f32 %v2281, %v2301
        %v2304 = vadd.f32 %v2225, %v2302
        %v2305 = vadd.f32 %v2226, %v2303
        %s2306 = sld [smem:[#allocation11 + $0xc]]
        %v2307 = vstv %s2306
        %v2308 = vmul.f32 %v967, %v2307
        %v2309 = vmul.f32 %v968, %v2307
        %s2310 = sld [smem:[#allocation11 + $0x8c]]
        %v2311 = vstv %s2310
        %v2312 = vmul.f32 %v973, %v2311
        %v2313 = vmul.f32 %v974, %v2311
        %v2314 = vadd.f32 %v2308, %v2312
        %v2315 = vadd.f32 %v2309, %v2313
        %s2316 = sld [smem:[#allocation11 + $0x10c]]
        %v2317 = vstv %s2316
        %v2318 = vmul.f32 %v979, %v2317
        %v2319 = vmul.f32 %v980, %v2317
        %v2320 = vadd.f32 %v2314, %v2318
        %v2321 = vadd.f32 %v2315, %v2319
        %s2322 = sld [smem:[#allocation11 + $0x18c]]
        %v2323 = vstv %s2322
        %v2324 = vmul.f32 %v985, %v2323
        %v2325 = vmul.f32 %v986, %v2323
        %v2326 = vadd.f32 %v2320, %v2324
        %v2327 = vadd.f32 %v2321, %v2325
        %s2328 = scalar_lea.vmem [#allocation2], 20
        %v2329 = vld [vmem:[%s2328] ss:$8 sm:$0x3]
        %v2331 = vlaneseq
        %v2332 = vshrl.u32 %v2331, 7
        %v2333 = vsub.s32 0, %v2332
        %v2334 = vrot.slane %v2329, %v2333
        %v2335 = vlaneseq
        %v2336 = vshrl.u32 %v2335, 7
        %v2337 = vsub.s32 1, %v2336
        %v2338 = vrot.slane %v2329, %v2337
        %v2341 = vadd.f32 %v2326, %v2334
        %v2342 = vadd.f32 %v2327, %v2338
        %v2343 = vmul.f32 %v2341, %v2341
        %v2344 = vmul.f32 %v2342, %v2342
        %v2345 = vmul.f32 %v2341, %v2343
        %v2346 = vmul.f32 %v2342, %v2344
        %v2347 = vmul.f32 %v2345, 0.044715
        %v2348 = vmul.f32 %v2346, 0.044715
        %v2349 = vadd.f32 %v2341, %v2347
        %v2350 = vadd.f32 %v2342, %v2348
        %v2351 = vmul.f32 %v2349, 0.7978846
        %v2352 = vmul.f32 %v2350, 0.7978846
        %v2353 = vtanh.pop %v2351
        %v2354 = vtanh.pop %v2352
        %v2355 = vadd.f32 %v2353, 1.0
        %v2356 = vadd.f32 %v2354, 1.0
        %v2357 = vmul.f32 %v2355, 0.5
        %v2358 = vmul.f32 %v2356, 0.5
        %v2359 = vmul.f32 %v2341, %v2357
        %v2360 = vmul.f32 %v2342, %v2358
        %s2361 = sld [smem:[#allocation12 + $0x600]]
        %v2362 = vstv %s2361
        %v2363 = vmul.f32 %v2359, %v2362
        %v2364 = vmul.f32 %v2360, %v2362
        %v2365 = vadd.f32 %v2286, %v2363
        %v2366 = vadd.f32 %v2287, %v2364
        %s2367 = sld [smem:[#allocation12 + $0x601]]
        %v2368 = vstv %s2367
        %v2369 = vmul.f32 %v2359, %v2368
        %v2370 = vmul.f32 %v2360, %v2368
        %v2371 = vadd.f32 %v2292, %v2369
        %v2372 = vadd.f32 %v2293, %v2370
        %s2373 = sld [smem:[#allocation12 + $0x602]]
        %v2374 = vstv %s2373
        %v2375 = vmul.f32 %v2359, %v2374
        %v2376 = vmul.f32 %v2360, %v2374
        %v2377 = vadd.f32 %v2298, %v2375
        %v2378 = vadd.f32 %v2299, %v2376
        %s2379 = sld [smem:[#allocation12 + $0x603]]
        %v2380 = vstv %s2379
        %v2381 = vmul.f32 %v2359, %v2380
        %v2382 = vmul.f32 %v2360, %v2380
        %v2383 = vadd.f32 %v2304, %v2381
        %v2384 = vadd.f32 %v2305, %v2382
        %s2385 = sld [smem:[#allocation11 + $0xd]]
        %v2386 = vstv %s2385
        %v2387 = vmul.f32 %v967, %v2386
        %v2388 = vmul.f32 %v968, %v2386
        %s2389 = sld [smem:[#allocation11 + $0x8d]]
        %v2390 = vstv %s2389
        %v2391 = vmul.f32 %v973, %v2390
        %v2392 = vmul.f32 %v974, %v2390
        %v2393 = vadd.f32 %v2387, %v2391
        %v2394 = vadd.f32 %v2388, %v2392
        %s2395 = sld [smem:[#allocation11 + $0x10d]]
        %v2396 = vstv %s2395
        %v2397 = vmul.f32 %v979, %v2396
        %v2398 = vmul.f32 %v980, %v2396
        %v2399 = vadd.f32 %v2393, %v2397
        %v2400 = vadd.f32 %v2394, %v2398
        %s2401 = sld [smem:[#allocation11 + $0x18d]]
        %v2402 = vstv %s2401
        %v2403 = vmul.f32 %v985, %v2402
        %v2404 = vmul.f32 %v986, %v2402
        %v2405 = vadd.f32 %v2399, %v2403
        %v2406 = vadd.f32 %v2400, %v2404
        %s2407 = scalar_lea.vmem [#allocation2], 21
        %v2408 = vld [vmem:[%s2407] ss:$8 sm:$0x3]
        %v2410 = vlaneseq
        %v2411 = vshrl.u32 %v2410, 7
        %v2412 = vsub.s32 0, %v2411
        %v2413 = vrot.slane %v2408, %v2412
        %v2414 = vlaneseq
        %v2415 = vshrl.u32 %v2414, 7
        %v2416 = vsub.s32 1, %v2415
        %v2417 = vrot.slane %v2408, %v2416
        %v2420 = vadd.f32 %v2405, %v2413
        %v2421 = vadd.f32 %v2406, %v2417
        %v2422 = vmul.f32 %v2420, %v2420
        %v2423 = vmul.f32 %v2421, %v2421
        %v2424 = vmul.f32 %v2420, %v2422
        %v2425 = vmul.f32 %v2421, %v2423
        %v2426 = vmul.f32 %v2424, 0.044715
        %v2427 = vmul.f32 %v2425, 0.044715
        %v2428 = vadd.f32 %v2420, %v2426
        %v2429 = vadd.f32 %v2421, %v2427
        %v2430 = vmul.f32 %v2428, 0.7978846
        %v2431 = vmul.f32 %v2429, 0.7978846
        %v2432 = vtanh.pop %v2430
        %v2433 = vtanh.pop %v2431
        %v2434 = vadd.f32 %v2432, 1.0
        %v2435 = vadd.f32 %v2433, 1.0
        %v2436 = vmul.f32 %v2434, 0.5
        %v2437 = vmul.f32 %v2435, 0.5
        %v2438 = vmul.f32 %v2420, %v2436
        %v2439 = vmul.f32 %v2421, %v2437
        %s2440 = sld [smem:[#allocation12 + $0x680]]
        %v2441 = vstv %s2440
        %v2442 = vmul.f32 %v2438, %v2441
        %v2443 = vmul.f32 %v2439, %v2441
        %v2444 = vadd.f32 %v2365, %v2442
        %v2445 = vadd.f32 %v2366, %v2443
        %s2446 = sld [smem:[#allocation12 + $0x681]]
        %v2447 = vstv %s2446
        %v2448 = vmul.f32 %v2438, %v2447
        %v2449 = vmul.f32 %v2439, %v2447
        %v2450 = vadd.f32 %v2371, %v2448
        %v2451 = vadd.f32 %v2372, %v2449
        %s2452 = sld [smem:[#allocation12 + $0x682]]
        %v2453 = vstv %s2452
        %v2454 = vmul.f32 %v2438, %v2453
        %v2455 = vmul.f32 %v2439, %v2453
        %v2456 = vadd.f32 %v2377, %v2454
        %v2457 = vadd.f32 %v2378, %v2455
        %s2458 = sld [smem:[#allocation12 + $0x683]]
        %v2459 = vstv %s2458
        %v2460 = vmul.f32 %v2438, %v2459
        %v2461 = vmul.f32 %v2439, %v2459
        %v2462 = vadd.f32 %v2383, %v2460
        %v2463 = vadd.f32 %v2384, %v2461
        %s2464 = sld [smem:[#allocation11 + $0xe]]
        %v2465 = vstv %s2464
        %v2466 = vmul.f32 %v967, %v2465
        %v2467 = vmul.f32 %v968, %v2465
        %s2468 = sld [smem:[#allocation11 + $0x8e]]
        %v2469 = vstv %s2468
        %v2470 = vmul.f32 %v973, %v2469
        %v2471 = vmul.f32 %v974, %v2469
        %v2472 = vadd.f32 %v2466, %v2470
        %v2473 = vadd.f32 %v2467, %v2471
        %s2474 = sld [smem:[#allocation11 + $0x10e]]
        %v2475 = vstv %s2474
        %v2476 = vmul.f32 %v979, %v2475
        %v2477 = vmul.f32 %v980, %v2475
        %v2478 = vadd.f32 %v2472, %v2476
        %v2479 = vadd.f32 %v2473, %v2477
        %s2480 = sld [smem:[#allocation11 + $0x18e]]
        %v2481 = vstv %s2480
        %v2482 = vmul.f32 %v985, %v2481
        %v2483 = vmul.f32 %v986, %v2481
        %v2484 = vadd.f32 %v2478, %v2482
        %v2485 = vadd.f32 %v2479, %v2483
        %s2486 = scalar_lea.vmem [#allocation2], 22
        %v2487 = vld [vmem:[%s2486] ss:$8 sm:$0x3]
        %v2489 = vlaneseq
        %v2490 = vshrl.u32 %v2489, 7
        %v2491 = vsub.s32 0, %v2490
        %v2492 = vrot.slane %v2487, %v2491
        %v2493 = vlaneseq
        %v2494 = vshrl.u32 %v2493, 7
        %v2495 = vsub.s32 1, %v2494
        %v2496 = vrot.slane %v2487, %v2495
        %v2499 = vadd.f32 %v2484, %v2492
        %v2500 = vadd.f32 %v2485, %v2496
        %v2501 = vmul.f32 %v2499, %v2499
        %v2502 = vmul.f32 %v2500, %v2500
        %v2503 = vmul.f32 %v2499, %v2501
        %v2504 = vmul.f32 %v2500, %v2502
        %v2505 = vmul.f32 %v2503, 0.044715
        %v2506 = vmul.f32 %v2504, 0.044715
        %v2507 = vadd.f32 %v2499, %v2505
        %v2508 = vadd.f32 %v2500, %v2506
        %v2509 = vmul.f32 %v2507, 0.7978846
        %v2510 = vmul.f32 %v2508, 0.7978846
        %v2511 = vtanh.pop %v2509
        %v2512 = vtanh.pop %v2510
        %v2513 = vadd.f32 %v2511, 1.0
        %v2514 = vadd.f32 %v2512, 1.0
        %v2515 = vmul.f32 %v2513, 0.5
        %v2516 = vmul.f32 %v2514, 0.5
        %v2517 = vmul.f32 %v2499, %v2515
        %v2518 = vmul.f32 %v2500, %v2516
        %s2519 = sld [smem:[#allocation12 + $0x700]]
        %v2520 = vstv %s2519
        %v2521 = vmul.f32 %v2517, %v2520
        %v2522 = vmul.f32 %v2518, %v2520
        %v2523 = vadd.f32 %v2444, %v2521
        %v2524 = vadd.f32 %v2445, %v2522
        %s2525 = sld [smem:[#allocation12 + $0x701]]
        %v2526 = vstv %s2525
        %v2527 = vmul.f32 %v2517, %v2526
        %v2528 = vmul.f32 %v2518, %v2526
        %v2529 = vadd.f32 %v2450, %v2527
        %v2530 = vadd.f32 %v2451, %v2528
        %s2531 = sld [smem:[#allocation12 + $0x702]]
        %v2532 = vstv %s2531
        %v2533 = vmul.f32 %v2517, %v2532
        %v2534 = vmul.f32 %v2518, %v2532
        %v2535 = vadd.f32 %v2456, %v2533
        %v2536 = vadd.f32 %v2457, %v2534
        %s2537 = sld [smem:[#allocation12 + $0x703]]
        %v2538 = vstv %s2537
        %v2539 = vmul.f32 %v2517, %v2538
        %v2540 = vmul.f32 %v2518, %v2538
        %v2541 = vadd.f32 %v2462, %v2539
        %v2542 = vadd.f32 %v2463, %v2540
        %s2543 = sld [smem:[#allocation11 + $0xf]]
        %v2544 = vstv %s2543
        %v2545 = vmul.f32 %v967, %v2544
        %v2546 = vmul.f32 %v968, %v2544
        %s2547 = sld [smem:[#allocation11 + $0x8f]]
        %v2548 = vstv %s2547
        %v2549 = vmul.f32 %v973, %v2548
        %v2550 = vmul.f32 %v974, %v2548
        %v2551 = vadd.f32 %v2545, %v2549
        %v2552 = vadd.f32 %v2546, %v2550
        %s2553 = sld [smem:[#allocation11 + $0x10f]]
        %v2554 = vstv %s2553
        %v2555 = vmul.f32 %v979, %v2554
        %v2556 = vmul.f32 %v980, %v2554
        %v2557 = vadd.f32 %v2551, %v2555
        %v2558 = vadd.f32 %v2552, %v2556
        %s2559 = sld [smem:[#allocation11 + $0x18f]]
        %v2560 = vstv %s2559
        %v2561 = vmul.f32 %v985, %v2560
        %v2562 = vmul.f32 %v986, %v2560
        %v2563 = vadd.f32 %v2557, %v2561
        %v2564 = vadd.f32 %v2558, %v2562
        %s2565 = scalar_lea.vmem [#allocation2], 23
        %v2566 = vld [vmem:[%s2565] ss:$8 sm:$0x3]
        %v2568 = vlaneseq
        %v2569 = vshrl.u32 %v2568, 7
        %v2570 = vsub.s32 0, %v2569
        %v2571 = vrot.slane %v2566, %v2570
        %v2572 = vlaneseq
        %v2573 = vshrl.u32 %v2572, 7
        %v2574 = vsub.s32 1, %v2573
        %v2575 = vrot.slane %v2566, %v2574
        %v2578 = vadd.f32 %v2563, %v2571
        %v2579 = vadd.f32 %v2564, %v2575
        %v2580 = vmul.f32 %v2578, %v2578
        %v2581 = vmul.f32 %v2579, %v2579
        %v2582 = vmul.f32 %v2578, %v2580
        %v2583 = vmul.f32 %v2579, %v2581
        %v2584 = vmul.f32 %v2582, 0.044715
        %v2585 = vmul.f32 %v2583, 0.044715
        %v2586 = vadd.f32 %v2578, %v2584
        %v2587 = vadd.f32 %v2579, %v2585
        %v2588 = vmul.f32 %v2586, 0.7978846
        %v2589 = vmul.f32 %v2587, 0.7978846
        %v2590 = vtanh.pop %v2588
        %v2591 = vtanh.pop %v2589
        %v2592 = vadd.f32 %v2590, 1.0
        %v2593 = vadd.f32 %v2591, 1.0
        %v2594 = vmul.f32 %v2592, 0.5
        %v2595 = vmul.f32 %v2593, 0.5
        %v2596 = vmul.f32 %v2578, %v2594
        %v2597 = vmul.f32 %v2579, %v2595
        %s2598 = sld [smem:[#allocation12 + $0x780]]
        %v2599 = vstv %s2598
        %v2600 = vmul.f32 %v2596, %v2599
        %v2601 = vmul.f32 %v2597, %v2599
        %v2602 = vadd.f32 %v2523, %v2600
        %v2603 = vadd.f32 %v2524, %v2601
        %s2604 = sld [smem:[#allocation12 + $0x781]]
        %v2605 = vstv %s2604
        %v2606 = vmul.f32 %v2596, %v2605
        %v2607 = vmul.f32 %v2597, %v2605
        %v2608 = vadd.f32 %v2529, %v2606
        %v2609 = vadd.f32 %v2530, %v2607
        %s2610 = sld [smem:[#allocation12 + $0x782]]
        %v2611 = vstv %s2610
        %v2612 = vmul.f32 %v2596, %v2611
        %v2613 = vmul.f32 %v2597, %v2611
        %v2614 = vadd.f32 %v2535, %v2612
        %v2615 = vadd.f32 %v2536, %v2613
        %s2616 = sld [smem:[#allocation12 + $0x783]]
        %v2617 = vstv %s2616
        %v2618 = vmul.f32 %v2596, %v2617
        %v2619 = vmul.f32 %v2597, %v2617
        %v2620 = vadd.f32 %v2541, %v2618
        %v2621 = vadd.f32 %v2542, %v2619
        %s2622 = sld [smem:[#allocation11 + $0x10]]
        %v2623 = vstv %s2622
        %v2624 = vmul.f32 %v967, %v2623
        %v2625 = vmul.f32 %v968, %v2623
        %s2626 = sld [smem:[#allocation11 + $0x90]]
        %v2627 = vstv %s2626
        %v2628 = vmul.f32 %v973, %v2627
        %v2629 = vmul.f32 %v974, %v2627
        %v2630 = vadd.f32 %v2624, %v2628
        %v2631 = vadd.f32 %v2625, %v2629
        %s2632 = sld [smem:[#allocation11 + $0x110]]
        %v2633 = vstv %s2632
        %v2634 = vmul.f32 %v979, %v2633
        %v2635 = vmul.f32 %v980, %v2633
        %v2636 = vadd.f32 %v2630, %v2634
        %v2637 = vadd.f32 %v2631, %v2635
        %s2638 = sld [smem:[#allocation11 + $0x190]]
        %v2639 = vstv %s2638
        %v2640 = vmul.f32 %v985, %v2639
        %v2641 = vmul.f32 %v986, %v2639
        %v2642 = vadd.f32 %v2636, %v2640
        %v2643 = vadd.f32 %v2637, %v2641
        %s2644 = scalar_lea.vmem [#allocation2], 32
        %v2645 = vld [vmem:[%s2644] ss:$8 sm:$0x3]
        %v2647 = vlaneseq
        %v2648 = vshrl.u32 %v2647, 7
        %v2649 = vsub.s32 0, %v2648
        %v2650 = vrot.slane %v2645, %v2649
        %v2651 = vlaneseq
        %v2652 = vshrl.u32 %v2651, 7
        %v2653 = vsub.s32 1, %v2652
        %v2654 = vrot.slane %v2645, %v2653
        %v2657 = vadd.f32 %v2642, %v2650
        %v2658 = vadd.f32 %v2643, %v2654
        %v2659 = vmul.f32 %v2657, %v2657
        %v2660 = vmul.f32 %v2658, %v2658
        %v2661 = vmul.f32 %v2657, %v2659
        %v2662 = vmul.f32 %v2658, %v2660
        %v2663 = vmul.f32 %v2661, 0.044715
        %v2664 = vmul.f32 %v2662, 0.044715
        %v2665 = vadd.f32 %v2657, %v2663
        %v2666 = vadd.f32 %v2658, %v2664
        %v2667 = vmul.f32 %v2665, 0.7978846
        %v2668 = vmul.f32 %v2666, 0.7978846
        %v2669 = vtanh.pop %v2667
        %v2670 = vtanh.pop %v2668
        %v2671 = vadd.f32 %v2669, 1.0
        %v2672 = vadd.f32 %v2670, 1.0
        %v2673 = vmul.f32 %v2671, 0.5
        %v2674 = vmul.f32 %v2672, 0.5
        %v2675 = vmul.f32 %v2657, %v2673
        %v2676 = vmul.f32 %v2658, %v2674
        %s2677 = sld [smem:[#allocation12 + $0x800]]
        %v2678 = vstv %s2677
        %v2679 = vmul.f32 %v2675, %v2678
        %v2680 = vmul.f32 %v2676, %v2678
        %v2681 = vadd.f32 %v2602, %v2679
        %v2682 = vadd.f32 %v2603, %v2680
        %s2683 = sld [smem:[#allocation12 + $0x801]]
        %v2684 = vstv %s2683
        %v2685 = vmul.f32 %v2675, %v2684
        %v2686 = vmul.f32 %v2676, %v2684
        %v2687 = vadd.f32 %v2608, %v2685
        %v2688 = vadd.f32 %v2609, %v2686
        %s2689 = sld [smem:[#allocation12 + $0x802]]
        %v2690 = vstv %s2689
        %v2691 = vmul.f32 %v2675, %v2690
        %v2692 = vmul.f32 %v2676, %v2690
        %v2693 = vadd.f32 %v2614, %v2691
        %v2694 = vadd.f32 %v2615, %v2692
        %s2695 = sld [smem:[#allocation12 + $0x803]]
        %v2696 = vstv %s2695
        %v2697 = vmul.f32 %v2675, %v2696
        %v2698 = vmul.f32 %v2676, %v2696
        %v2699 = vadd.f32 %v2620, %v2697
        %v2700 = vadd.f32 %v2621, %v2698
        %s2701 = sld [smem:[#allocation11 + $0x11]]
        %v2702 = vstv %s2701
        %v2703 = vmul.f32 %v967, %v2702
        %v2704 = vmul.f32 %v968, %v2702
        %s2705 = sld [smem:[#allocation11 + $0x91]]
        %v2706 = vstv %s2705
        %v2707 = vmul.f32 %v973, %v2706
        %v2708 = vmul.f32 %v974, %v2706
        %v2709 = vadd.f32 %v2703, %v2707
        %v2710 = vadd.f32 %v2704, %v2708
        %s2711 = sld [smem:[#allocation11 + $0x111]]
        %v2712 = vstv %s2711
        %v2713 = vmul.f32 %v979, %v2712
        %v2714 = vmul.f32 %v980, %v2712
        %v2715 = vadd.f32 %v2709, %v2713
        %v2716 = vadd.f32 %v2710, %v2714
        %s2717 = sld [smem:[#allocation11 + $0x191]]
        %v2718 = vstv %s2717
        %v2719 = vmul.f32 %v985, %v2718
        %v2720 = vmul.f32 %v986, %v2718
        %v2721 = vadd.f32 %v2715, %v2719
        %v2722 = vadd.f32 %v2716, %v2720
        %s2723 = scalar_lea.vmem [#allocation2], 33
        %v2724 = vld [vmem:[%s2723] ss:$8 sm:$0x3]
        %v2726 = vlaneseq
        %v2727 = vshrl.u32 %v2726, 7
        %v2728 = vsub.s32 0, %v2727
        %v2729 = vrot.slane %v2724, %v2728
        %v2730 = vlaneseq
        %v2731 = vshrl.u32 %v2730, 7
        %v2732 = vsub.s32 1, %v2731
        %v2733 = vrot.slane %v2724, %v2732
        %v2736 = vadd.f32 %v2721, %v2729
        %v2737 = vadd.f32 %v2722, %v2733
        %v2738 = vmul.f32 %v2736, %v2736
        %v2739 = vmul.f32 %v2737, %v2737
        %v2740 = vmul.f32 %v2736, %v2738
        %v2741 = vmul.f32 %v2737, %v2739
        %v2742 = vmul.f32 %v2740, 0.044715
        %v2743 = vmul.f32 %v2741, 0.044715
        %v2744 = vadd.f32 %v2736, %v2742
        %v2745 = vadd.f32 %v2737, %v2743
        %v2746 = vmul.f32 %v2744, 0.7978846
        %v2747 = vmul.f32 %v2745, 0.7978846
        %v2748 = vtanh.pop %v2746
        %v2749 = vtanh.pop %v2747
        %v2750 = vadd.f32 %v2748, 1.0
        %v2751 = vadd.f32 %v2749, 1.0
        %v2752 = vmul.f32 %v2750, 0.5
        %v2753 = vmul.f32 %v2751, 0.5
        %v2754 = vmul.f32 %v2736, %v2752
        %v2755 = vmul.f32 %v2737, %v2753
        %s2756 = sld [smem:[#allocation12 + $0x880]]
        %v2757 = vstv %s2756
        %v2758 = vmul.f32 %v2754, %v2757
        %v2759 = vmul.f32 %v2755, %v2757
        %v2760 = vadd.f32 %v2681, %v2758
        %v2761 = vadd.f32 %v2682, %v2759
        %s2762 = sld [smem:[#allocation12 + $0x881]]
        %v2763 = vstv %s2762
        %v2764 = vmul.f32 %v2754, %v2763
        %v2765 = vmul.f32 %v2755, %v2763
        %v2766 = vadd.f32 %v2687, %v2764
        %v2767 = vadd.f32 %v2688, %v2765
        %s2768 = sld [smem:[#allocation12 + $0x882]]
        %v2769 = vstv %s2768
        %v2770 = vmul.f32 %v2754, %v2769
        %v2771 = vmul.f32 %v2755, %v2769
        %v2772 = vadd.f32 %v2693, %v2770
        %v2773 = vadd.f32 %v2694, %v2771
        %s2774 = sld [smem:[#allocation12 + $0x883]]
        %v2775 = vstv %s2774
        %v2776 = vmul.f32 %v2754, %v2775
        %v2777 = vmul.f32 %v2755, %v2775
        %v2778 = vadd.f32 %v2699, %v2776
        %v2779 = vadd.f32 %v2700, %v2777
        %s2780 = sld [smem:[#allocation11 + $0x12]]
        %v2781 = vstv %s2780
        %v2782 = vmul.f32 %v967, %v2781
        %v2783 = vmul.f32 %v968, %v2781
        %s2784 = sld [smem:[#allocation11 + $0x92]]
        %v2785 = vstv %s2784
        %v2786 = vmul.f32 %v973, %v2785
        %v2787 = vmul.f32 %v974, %v2785
        %v2788 = vadd.f32 %v2782, %v2786
        %v2789 = vadd.f32 %v2783, %v2787
        %s2790 = sld [smem:[#allocation11 + $0x112]]
        %v2791 = vstv %s2790
        %v2792 = vmul.f32 %v979, %v2791
        %v2793 = vmul.f32 %v980, %v2791
        %v2794 = vadd.f32 %v2788, %v2792
        %v2795 = vadd.f32 %v2789, %v2793
        %s2796 = sld [smem:[#allocation11 + $0x192]]
        %v2797 = vstv %s2796
        %v2798 = vmul.f32 %v985, %v2797
        %v2799 = vmul.f32 %v986, %v2797
        %v2800 = vadd.f32 %v2794, %v2798
        %v2801 = vadd.f32 %v2795, %v2799
        %s2802 = scalar_lea.vmem [#allocation2], 34
        %v2803 = vld [vmem:[%s2802] ss:$8 sm:$0x3]
        %v2805 = vlaneseq
        %v2806 = vshrl.u32 %v2805, 7
        %v2807 = vsub.s32 0, %v2806
        %v2808 = vrot.slane %v2803, %v2807
        %v2809 = vlaneseq
        %v2810 = vshrl.u32 %v2809, 7
        %v2811 = vsub.s32 1, %v2810
        %v2812 = vrot.slane %v2803, %v2811
        %v2815 = vadd.f32 %v2800, %v2808
        %v2816 = vadd.f32 %v2801, %v2812
        %v2817 = vmul.f32 %v2815, %v2815
        %v2818 = vmul.f32 %v2816, %v2816
        %v2819 = vmul.f32 %v2815, %v2817
        %v2820 = vmul.f32 %v2816, %v2818
        %v2821 = vmul.f32 %v2819, 0.044715
        %v2822 = vmul.f32 %v2820, 0.044715
        %v2823 = vadd.f32 %v2815, %v2821
        %v2824 = vadd.f32 %v2816, %v2822
        %v2825 = vmul.f32 %v2823, 0.7978846
        %v2826 = vmul.f32 %v2824, 0.7978846
        %v2827 = vtanh.pop %v2825
        %v2828 = vtanh.pop %v2826
        %v2829 = vadd.f32 %v2827, 1.0
        %v2830 = vadd.f32 %v2828, 1.0
        %v2831 = vmul.f32 %v2829, 0.5
        %v2832 = vmul.f32 %v2830, 0.5
        %v2833 = vmul.f32 %v2815, %v2831
        %v2834 = vmul.f32 %v2816, %v2832
        %s2835 = sld [smem:[#allocation12 + $0x900]]
        %v2836 = vstv %s2835
        %v2837 = vmul.f32 %v2833, %v2836
        %v2838 = vmul.f32 %v2834, %v2836
        %v2839 = vadd.f32 %v2760, %v2837
        %v2840 = vadd.f32 %v2761, %v2838
        %s2841 = sld [smem:[#allocation12 + $0x901]]
        %v2842 = vstv %s2841
        %v2843 = vmul.f32 %v2833, %v2842
        %v2844 = vmul.f32 %v2834, %v2842
        %v2845 = vadd.f32 %v2766, %v2843
        %v2846 = vadd.f32 %v2767, %v2844
        %s2847 = sld [smem:[#allocation12 + $0x902]]
        %v2848 = vstv %s2847
        %v2849 = vmul.f32 %v2833, %v2848
        %v2850 = vmul.f32 %v2834, %v2848
        %v2851 = vadd.f32 %v2772, %v2849
        %v2852 = vadd.f32 %v2773, %v2850
        %s2853 = sld [smem:[#allocation12 + $0x903]]
        %v2854 = vstv %s2853
        %v2855 = vmul.f32 %v2833, %v2854
        %v2856 = vmul.f32 %v2834, %v2854
        %v2857 = vadd.f32 %v2778, %v2855
        %v2858 = vadd.f32 %v2779, %v2856
        %s2859 = sld [smem:[#allocation11 + $0x13]]
        %v2860 = vstv %s2859
        %v2861 = vmul.f32 %v967, %v2860
        %v2862 = vmul.f32 %v968, %v2860
        %s2863 = sld [smem:[#allocation11 + $0x93]]
        %v2864 = vstv %s2863
        %v2865 = vmul.f32 %v973, %v2864
        %v2866 = vmul.f32 %v974, %v2864
        %v2867 = vadd.f32 %v2861, %v2865
        %v2868 = vadd.f32 %v2862, %v2866
        %s2869 = sld [smem:[#allocation11 + $0x113]]
        %v2870 = vstv %s2869
        %v2871 = vmul.f32 %v979, %v2870
        %v2872 = vmul.f32 %v980, %v2870
        %v2873 = vadd.f32 %v2867, %v2871
        %v2874 = vadd.f32 %v2868, %v2872
        %s2875 = sld [smem:[#allocation11 + $0x193]]
        %v2876 = vstv %s2875
        %v2877 = vmul.f32 %v985, %v2876
        %v2878 = vmul.f32 %v986, %v2876
        %v2879 = vadd.f32 %v2873, %v2877
        %v2880 = vadd.f32 %v2874, %v2878
        %s2881 = scalar_lea.vmem [#allocation2], 35
        %v2882 = vld [vmem:[%s2881] ss:$8 sm:$0x3]
        %v2884 = vlaneseq
        %v2885 = vshrl.u32 %v2884, 7
        %v2886 = vsub.s32 0, %v2885
        %v2887 = vrot.slane %v2882, %v2886
        %v2888 = vlaneseq
        %v2889 = vshrl.u32 %v2888, 7
        %v2890 = vsub.s32 1, %v2889
        %v2891 = vrot.slane %v2882, %v2890
        %v2894 = vadd.f32 %v2879, %v2887
        %v2895 = vadd.f32 %v2880, %v2891
        %v2896 = vmul.f32 %v2894, %v2894
        %v2897 = vmul.f32 %v2895, %v2895
        %v2898 = vmul.f32 %v2894, %v2896
        %v2899 = vmul.f32 %v2895, %v2897
        %v2900 = vmul.f32 %v2898, 0.044715
        %v2901 = vmul.f32 %v2899, 0.044715
        %v2902 = vadd.f32 %v2894, %v2900
        %v2903 = vadd.f32 %v2895, %v2901
        %v2904 = vmul.f32 %v2902, 0.7978846
        %v2905 = vmul.f32 %v2903, 0.7978846
        %v2906 = vtanh.pop %v2904
        %v2907 = vtanh.pop %v2905
        %v2908 = vadd.f32 %v2906, 1.0
        %v2909 = vadd.f32 %v2907, 1.0
        %v2910 = vmul.f32 %v2908, 0.5
        %v2911 = vmul.f32 %v2909, 0.5
        %v2912 = vmul.f32 %v2894, %v2910
        %v2913 = vmul.f32 %v2895, %v2911
        %s2914 = sld [smem:[#allocation12 + $0x980]]
        %v2915 = vstv %s2914
        %v2916 = vmul.f32 %v2912, %v2915
        %v2917 = vmul.f32 %v2913, %v2915
        %v2918 = vadd.f32 %v2839, %v2916
        %v2919 = vadd.f32 %v2840, %v2917
        %s2920 = sld [smem:[#allocation12 + $0x981]]
        %v2921 = vstv %s2920
        %v2922 = vmul.f32 %v2912, %v2921
        %v2923 = vmul.f32 %v2913, %v2921
        %v2924 = vadd.f32 %v2845, %v2922
        %v2925 = vadd.f32 %v2846, %v2923
        %s2926 = sld [smem:[#allocation12 + $0x982]]
        %v2927 = vstv %s2926
        %v2928 = vmul.f32 %v2912, %v2927
        %v2929 = vmul.f32 %v2913, %v2927
        %v2930 = vadd.f32 %v2851, %v2928
        %v2931 = vadd.f32 %v2852, %v2929
        %s2932 = sld [smem:[#allocation12 + $0x983]]
        %v2933 = vstv %s2932
        %v2934 = vmul.f32 %v2912, %v2933
        %v2935 = vmul.f32 %v2913, %v2933
        %v2936 = vadd.f32 %v2857, %v2934
        %v2937 = vadd.f32 %v2858, %v2935
        %s2938 = sld [smem:[#allocation11 + $0x14]]
        %v2939 = vstv %s2938
        %v2940 = vmul.f32 %v967, %v2939
        %v2941 = vmul.f32 %v968, %v2939
        %s2942 = sld [smem:[#allocation11 + $0x94]]
        %v2943 = vstv %s2942
        %v2944 = vmul.f32 %v973, %v2943
        %v2945 = vmul.f32 %v974, %v2943
        %v2946 = vadd.f32 %v2940, %v2944
        %v2947 = vadd.f32 %v2941, %v2945
        %s2948 = sld [smem:[#allocation11 + $0x114]]
        %v2949 = vstv %s2948
        %v2950 = vmul.f32 %v979, %v2949
        %v2951 = vmul.f32 %v980, %v2949
        %v2952 = vadd.f32 %v2946, %v2950
        %v2953 = vadd.f32 %v2947, %v2951
        %s2954 = sld [smem:[#allocation11 + $0x194]]
        %v2955 = vstv %s2954
        %v2956 = vmul.f32 %v985, %v2955
        %v2957 = vmul.f32 %v986, %v2955
        %v2958 = vadd.f32 %v2952, %v2956
        %v2959 = vadd.f32 %v2953, %v2957
        %s2960 = scalar_lea.vmem [#allocation2], 36
        %v2961 = vld [vmem:[%s2960] ss:$8 sm:$0x3]
        %v2963 = vlaneseq
        %v2964 = vshrl.u32 %v2963, 7
        %v2965 = vsub.s32 0, %v2964
        %v2966 = vrot.slane %v2961, %v2965
        %v2967 = vlaneseq
        %v2968 = vshrl.u32 %v2967, 7
        %v2969 = vsub.s32 1, %v2968
        %v2970 = vrot.slane %v2961, %v2969
        %v2973 = vadd.f32 %v2958, %v2966
        %v2974 = vadd.f32 %v2959, %v2970
        %v2975 = vmul.f32 %v2973, %v2973
        %v2976 = vmul.f32 %v2974, %v2974
        %v2977 = vmul.f32 %v2973, %v2975
        %v2978 = vmul.f32 %v2974, %v2976
        %v2979 = vmul.f32 %v2977, 0.044715
        %v2980 = vmul.f32 %v2978, 0.044715
        %v2981 = vadd.f32 %v2973, %v2979
        %v2982 = vadd.f32 %v2974, %v2980
        %v2983 = vmul.f32 %v2981, 0.7978846
        %v2984 = vmul.f32 %v2982, 0.7978846
        %v2985 = vtanh.pop %v2983
        %v2986 = vtanh.pop %v2984
        %v2987 = vadd.f32 %v2985, 1.0
        %v2988 = vadd.f32 %v2986, 1.0
        %v2989 = vmul.f32 %v2987, 0.5
        %v2990 = vmul.f32 %v2988, 0.5
        %v2991 = vmul.f32 %v2973, %v2989
        %v2992 = vmul.f32 %v2974, %v2990
        %s2993 = sld [smem:[#allocation12 + $0xa00]]
        %v2994 = vstv %s2993
        %v2995 = vmul.f32 %v2991, %v2994
        %v2996 = vmul.f32 %v2992, %v2994
        %v2997 = vadd.f32 %v2918, %v2995
        %v2998 = vadd.f32 %v2919, %v2996
        %s2999 = sld [smem:[#allocation12 + $0xa01]]
        %v3000 = vstv %s2999
        %v3001 = vmul.f32 %v2991, %v3000
        %v3002 = vmul.f32 %v2992, %v3000
        %v3003 = vadd.f32 %v2924, %v3001
        %v3004 = vadd.f32 %v2925, %v3002
        %s3005 = sld [smem:[#allocation12 + $0xa02]]
        %v3006 = vstv %s3005
        %v3007 = vmul.f32 %v2991, %v3006
        %v3008 = vmul.f32 %v2992, %v3006
        %v3009 = vadd.f32 %v2930, %v3007
        %v3010 = vadd.f32 %v2931, %v3008
        %s3011 = sld [smem:[#allocation12 + $0xa03]]
        %v3012 = vstv %s3011
        %v3013 = vmul.f32 %v2991, %v3012
        %v3014 = vmul.f32 %v2992, %v3012
        %v3015 = vadd.f32 %v2936, %v3013
        %v3016 = vadd.f32 %v2937, %v3014
        %s3017 = sld [smem:[#allocation11 + $0x15]]
        %v3018 = vstv %s3017
        %v3019 = vmul.f32 %v967, %v3018
        %v3020 = vmul.f32 %v968, %v3018
        %s3021 = sld [smem:[#allocation11 + $0x95]]
        %v3022 = vstv %s3021
        %v3023 = vmul.f32 %v973, %v3022
        %v3024 = vmul.f32 %v974, %v3022
        %v3025 = vadd.f32 %v3019, %v3023
        %v3026 = vadd.f32 %v3020, %v3024
        %s3027 = sld [smem:[#allocation11 + $0x115]]
        %v3028 = vstv %s3027
        %v3029 = vmul.f32 %v979, %v3028
        %v3030 = vmul.f32 %v980, %v3028
        %v3031 = vadd.f32 %v3025, %v3029
        %v3032 = vadd.f32 %v3026, %v3030
        %s3033 = sld [smem:[#allocation11 + $0x195]]
        %v3034 = vstv %s3033
        %v3035 = vmul.f32 %v985, %v3034
        %v3036 = vmul.f32 %v986, %v3034
        %v3037 = vadd.f32 %v3031, %v3035
        %v3038 = vadd.f32 %v3032, %v3036
        %s3039 = scalar_lea.vmem [#allocation2], 37
        %v3040 = vld [vmem:[%s3039] ss:$8 sm:$0x3]
        %v3042 = vlaneseq
        %v3043 = vshrl.u32 %v3042, 7
        %v3044 = vsub.s32 0, %v3043
        %v3045 = vrot.slane %v3040, %v3044
        %v3046 = vlaneseq
        %v3047 = vshrl.u32 %v3046, 7
        %v3048 = vsub.s32 1, %v3047
        %v3049 = vrot.slane %v3040, %v3048
        %v3052 = vadd.f32 %v3037, %v3045
        %v3053 = vadd.f32 %v3038, %v3049
        %v3054 = vmul.f32 %v3052, %v3052
        %v3055 = vmul.f32 %v3053, %v3053
        %v3056 = vmul.f32 %v3052, %v3054
        %v3057 = vmul.f32 %v3053, %v3055
        %v3058 = vmul.f32 %v3056, 0.044715
        %v3059 = vmul.f32 %v3057, 0.044715
        %v3060 = vadd.f32 %v3052, %v3058
        %v3061 = vadd.f32 %v3053, %v3059
        %v3062 = vmul.f32 %v3060, 0.7978846
        %v3063 = vmul.f32 %v3061, 0.7978846
        %v3064 = vtanh.pop %v3062
        %v3065 = vtanh.pop %v3063
        %v3066 = vadd.f32 %v3064, 1.0
        %v3067 = vadd.f32 %v3065, 1.0
        %v3068 = vmul.f32 %v3066, 0.5
        %v3069 = vmul.f32 %v3067, 0.5
        %v3070 = vmul.f32 %v3052, %v3068
        %v3071 = vmul.f32 %v3053, %v3069
        %s3072 = sld [smem:[#allocation12 + $0xa80]]
        %v3073 = vstv %s3072
        %v3074 = vmul.f32 %v3070, %v3073
        %v3075 = vmul.f32 %v3071, %v3073
        %v3076 = vadd.f32 %v2997, %v3074
        %v3077 = vadd.f32 %v2998, %v3075
        %s3078 = sld [smem:[#allocation12 + $0xa81]]
        %v3079 = vstv %s3078
        %v3080 = vmul.f32 %v3070, %v3079
        %v3081 = vmul.f32 %v3071, %v3079
        %v3082 = vadd.f32 %v3003, %v3080
        %v3083 = vadd.f32 %v3004, %v3081
        %s3084 = sld [smem:[#allocation12 + $0xa82]]
        %v3085 = vstv %s3084
        %v3086 = vmul.f32 %v3070, %v3085
        %v3087 = vmul.f32 %v3071, %v3085
        %v3088 = vadd.f32 %v3009, %v3086
        %v3089 = vadd.f32 %v3010, %v3087
        %s3090 = sld [smem:[#allocation12 + $0xa83]]
        %v3091 = vstv %s3090
        %v3092 = vmul.f32 %v3070, %v3091
        %v3093 = vmul.f32 %v3071, %v3091
        %v3094 = vadd.f32 %v3015, %v3092
        %v3095 = vadd.f32 %v3016, %v3093
        %s3096 = sld [smem:[#allocation11 + $0x16]]
        %v3097 = vstv %s3096
        %v3098 = vmul.f32 %v967, %v3097
        %v3099 = vmul.f32 %v968, %v3097
        %s3100 = sld [smem:[#allocation11 + $0x96]]
        %v3101 = vstv %s3100
        %v3102 = vmul.f32 %v973, %v3101
        %v3103 = vmul.f32 %v974, %v3101
        %v3104 = vadd.f32 %v3098, %v3102
        %v3105 = vadd.f32 %v3099, %v3103
        %s3106 = sld [smem:[#allocation11 + $0x116]]
        %v3107 = vstv %s3106
        %v3108 = vmul.f32 %v979, %v3107
        %v3109 = vmul.f32 %v980, %v3107
        %v3110 = vadd.f32 %v3104, %v3108
        %v3111 = vadd.f32 %v3105, %v3109
        %s3112 = sld [smem:[#allocation11 + $0x196]]
        %v3113 = vstv %s3112
        %v3114 = vmul.f32 %v985, %v3113
        %v3115 = vmul.f32 %v986, %v3113
        %v3116 = vadd.f32 %v3110, %v3114
        %v3117 = vadd.f32 %v3111, %v3115
        %s3118 = scalar_lea.vmem [#allocation2], 38
        %v3119 = vld [vmem:[%s3118] ss:$8 sm:$0x3]
        %v3121 = vlaneseq
        %v3122 = vshrl.u32 %v3121, 7
        %v3123 = vsub.s32 0, %v3122
        %v3124 = vrot.slane %v3119, %v3123
        %v3125 = vlaneseq
        %v3126 = vshrl.u32 %v3125, 7
        %v3127 = vsub.s32 1, %v3126
        %v3128 = vrot.slane %v3119, %v3127
        %v3131 = vadd.f32 %v3116, %v3124
        %v3132 = vadd.f32 %v3117, %v3128
        %v3133 = vmul.f32 %v3131, %v3131
        %v3134 = vmul.f32 %v3132, %v3132
        %v3135 = vmul.f32 %v3131, %v3133
        %v3136 = vmul.f32 %v3132, %v3134
        %v3137 = vmul.f32 %v3135, 0.044715
        %v3138 = vmul.f32 %v3136, 0.044715
        %v3139 = vadd.f32 %v3131, %v3137
        %v3140 = vadd.f32 %v3132, %v3138
        %v3141 = vmul.f32 %v3139, 0.7978846
        %v3142 = vmul.f32 %v3140, 0.7978846
        %v3143 = vtanh.pop %v3141
        %v3144 = vtanh.pop %v3142
        %v3145 = vadd.f32 %v3143, 1.0
        %v3146 = vadd.f32 %v3144, 1.0
        %v3147 = vmul.f32 %v3145, 0.5
        %v3148 = vmul.f32 %v3146, 0.5
        %v3149 = vmul.f32 %v3131, %v3147
        %v3150 = vmul.f32 %v3132, %v3148
        %s3151 = sld [smem:[#allocation12 + $0xb00]]
        %v3152 = vstv %s3151
        %v3153 = vmul.f32 %v3149, %v3152
        %v3154 = vmul.f32 %v3150, %v3152
        %v3155 = vadd.f32 %v3076, %v3153
        %v3156 = vadd.f32 %v3077, %v3154
        %s3157 = sld [smem:[#allocation12 + $0xb01]]
        %v3158 = vstv %s3157
        %v3159 = vmul.f32 %v3149, %v3158
        %v3160 = vmul.f32 %v3150, %v3158
        %v3161 = vadd.f32 %v3082, %v3159
        %v3162 = vadd.f32 %v3083, %v3160
        %s3163 = sld [smem:[#allocation12 + $0xb02]]
        %v3164 = vstv %s3163
        %v3165 = vmul.f32 %v3149, %v3164
        %v3166 = vmul.f32 %v3150, %v3164
        %v3167 = vadd.f32 %v3088, %v3165
        %v3168 = vadd.f32 %v3089, %v3166
        %s3169 = sld [smem:[#allocation12 + $0xb03]]
        %v3170 = vstv %s3169
        %v3171 = vmul.f32 %v3149, %v3170
        %v3172 = vmul.f32 %v3150, %v3170
        %v3173 = vadd.f32 %v3094, %v3171
        %v3174 = vadd.f32 %v3095, %v3172
        %s3175 = sld [smem:[#allocation11 + $0x17]]
        %v3176 = vstv %s3175
        %v3177 = vmul.f32 %v967, %v3176
        %v3178 = vmul.f32 %v968, %v3176
        %s3179 = sld [smem:[#allocation11 + $0x97]]
        %v3180 = vstv %s3179
        %v3181 = vmul.f32 %v973, %v3180
        %v3182 = vmul.f32 %v974, %v3180
        %v3183 = vadd.f32 %v3177, %v3181
        %v3184 = vadd.f32 %v3178, %v3182
        %s3185 = sld [smem:[#allocation11 + $0x117]]
        %v3186 = vstv %s3185
        %v3187 = vmul.f32 %v979, %v3186
        %v3188 = vmul.f32 %v980, %v3186
        %v3189 = vadd.f32 %v3183, %v3187
        %v3190 = vadd.f32 %v3184, %v3188
        %s3191 = sld [smem:[#allocation11 + $0x197]]
        %v3192 = vstv %s3191
        %v3193 = vmul.f32 %v985, %v3192
        %v3194 = vmul.f32 %v986, %v3192
        %v3195 = vadd.f32 %v3189, %v3193
        %v3196 = vadd.f32 %v3190, %v3194
        %s3197 = scalar_lea.vmem [#allocation2], 39
        %v3198 = vld [vmem:[%s3197] ss:$8 sm:$0x3]
        %v3200 = vlaneseq
        %v3201 = vshrl.u32 %v3200, 7
        %v3202 = vsub.s32 0, %v3201
        %v3203 = vrot.slane %v3198, %v3202
        %v3204 = vlaneseq
        %v3205 = vshrl.u32 %v3204, 7
        %v3206 = vsub.s32 1, %v3205
        %v3207 = vrot.slane %v3198, %v3206
        %v3210 = vadd.f32 %v3195, %v3203
        %v3211 = vadd.f32 %v3196, %v3207
        %v3212 = vmul.f32 %v3210, %v3210
        %v3213 = vmul.f32 %v3211, %v3211
        %v3214 = vmul.f32 %v3210, %v3212
        %v3215 = vmul.f32 %v3211, %v3213
        %v3216 = vmul.f32 %v3214, 0.044715
        %v3217 = vmul.f32 %v3215, 0.044715
        %v3218 = vadd.f32 %v3210, %v3216
        %v3219 = vadd.f32 %v3211, %v3217
        %v3220 = vmul.f32 %v3218, 0.7978846
        %v3221 = vmul.f32 %v3219, 0.7978846
        %v3222 = vtanh.pop %v3220
        %v3223 = vtanh.pop %v3221
        %v3224 = vadd.f32 %v3222, 1.0
        %v3225 = vadd.f32 %v3223, 1.0
        %v3226 = vmul.f32 %v3224, 0.5
        %v3227 = vmul.f32 %v3225, 0.5
        %v3228 = vmul.f32 %v3210, %v3226
        %v3229 = vmul.f32 %v3211, %v3227
        %s3230 = sld [smem:[#allocation12 + $0xb80]]
        %v3231 = vstv %s3230
        %v3232 = vmul.f32 %v3228, %v3231
        %v3233 = vmul.f32 %v3229, %v3231
        %v3234 = vadd.f32 %v3155, %v3232
        %v3235 = vadd.f32 %v3156, %v3233
        %s3236 = sld [smem:[#allocation12 + $0xb81]]
        %v3237 = vstv %s3236
        %v3238 = vmul.f32 %v3228, %v3237
        %v3239 = vmul.f32 %v3229, %v3237
        %v3240 = vadd.f32 %v3161, %v3238
        %v3241 = vadd.f32 %v3162, %v3239
        %s3242 = sld [smem:[#allocation12 + $0xb82]]
        %v3243 = vstv %s3242
        %v3244 = vmul.f32 %v3228, %v3243
        %v3245 = vmul.f32 %v3229, %v3243
        %v3246 = vadd.f32 %v3167, %v3244
        %v3247 = vadd.f32 %v3168, %v3245
        %s3248 = sld [smem:[#allocation12 + $0xb83]]
        %v3249 = vstv %s3248
        %v3250 = vmul.f32 %v3228, %v3249
        %v3251 = vmul.f32 %v3229, %v3249
        %v3252 = vadd.f32 %v3173, %v3250
        %v3253 = vadd.f32 %v3174, %v3251
        %s3254 = sld [smem:[#allocation11 + $0x18]]
        %v3255 = vstv %s3254
        %v3256 = vmul.f32 %v967, %v3255
        %v3257 = vmul.f32 %v968, %v3255
        %s3258 = sld [smem:[#allocation11 + $0x98]]
        %v3259 = vstv %s3258
        %v3260 = vmul.f32 %v973, %v3259
        %v3261 = vmul.f32 %v974, %v3259
        %v3262 = vadd.f32 %v3256, %v3260
        %v3263 = vadd.f32 %v3257, %v3261
        %s3264 = sld [smem:[#allocation11 + $0x118]]
        %v3265 = vstv %s3264
        %v3266 = vmul.f32 %v979, %v3265
        %v3267 = vmul.f32 %v980, %v3265
        %v3268 = vadd.f32 %v3262, %v3266
        %v3269 = vadd.f32 %v3263, %v3267
        %s3270 = sld [smem:[#allocation11 + $0x198]]
        %v3271 = vstv %s3270
        %v3272 = vmul.f32 %v985, %v3271
        %v3273 = vmul.f32 %v986, %v3271
        %v3274 = vadd.f32 %v3268, %v3272
        %v3275 = vadd.f32 %v3269, %v3273
        %s3276 = scalar_lea.vmem [#allocation2], 48
        %v3277 = vld [vmem:[%s3276] ss:$8 sm:$0x3]
        %v3279 = vlaneseq
        %v3280 = vshrl.u32 %v3279, 7
        %v3281 = vsub.s32 0, %v3280
        %v3282 = vrot.slane %v3277, %v3281
        %v3283 = vlaneseq
        %v3284 = vshrl.u32 %v3283, 7
        %v3285 = vsub.s32 1, %v3284
        %v3286 = vrot.slane %v3277, %v3285
        %v3289 = vadd.f32 %v3274, %v3282
        %v3290 = vadd.f32 %v3275, %v3286
        %v3291 = vmul.f32 %v3289, %v3289
        %v3292 = vmul.f32 %v3290, %v3290
        %v3293 = vmul.f32 %v3289, %v3291
        %v3294 = vmul.f32 %v3290, %v3292
        %v3295 = vmul.f32 %v3293, 0.044715
        %v3296 = vmul.f32 %v3294, 0.044715
        %v3297 = vadd.f32 %v3289, %v3295
        %v3298 = vadd.f32 %v3290, %v3296
        %v3299 = vmul.f32 %v3297, 0.7978846
        %v3300 = vmul.f32 %v3298, 0.7978846
        %v3301 = vtanh.pop %v3299
        %v3302 = vtanh.pop %v3300
        %v3303 = vadd.f32 %v3301, 1.0
        %v3304 = vadd.f32 %v3302, 1.0
        %v3305 = vmul.f32 %v3303, 0.5
        %v3306 = vmul.f32 %v3304, 0.5
        %v3307 = vmul.f32 %v3289, %v3305
        %v3308 = vmul.f32 %v3290, %v3306
        %s3309 = sld [smem:[#allocation12 + $0xc00]]
        %v3310 = vstv %s3309
        %v3311 = vmul.f32 %v3307, %v3310
        %v3312 = vmul.f32 %v3308, %v3310
        %v3313 = vadd.f32 %v3234, %v3311
        %v3314 = vadd.f32 %v3235, %v3312
        %s3315 = sld [smem:[#allocation12 + $0xc01]]
        %v3316 = vstv %s3315
        %v3317 = vmul.f32 %v3307, %v3316
        %v3318 = vmul.f32 %v3308, %v3316
        %v3319 = vadd.f32 %v3240, %v3317
        %v3320 = vadd.f32 %v3241, %v3318
        %s3321 = sld [smem:[#allocation12 + $0xc02]]
        %v3322 = vstv %s3321
        %v3323 = vmul.f32 %v3307, %v3322
        %v3324 = vmul.f32 %v3308, %v3322
        %v3325 = vadd.f32 %v3246, %v3323
        %v3326 = vadd.f32 %v3247, %v3324
        %s3327 = sld [smem:[#allocation12 + $0xc03]]
        %v3328 = vstv %s3327
        %v3329 = vmul.f32 %v3307, %v3328
        %v3330 = vmul.f32 %v3308, %v3328
        %v3331 = vadd.f32 %v3252, %v3329
        %v3332 = vadd.f32 %v3253, %v3330
        %s3333 = sld [smem:[#allocation11 + $0x19]]
        %v3334 = vstv %s3333
        %v3335 = vmul.f32 %v967, %v3334
        %v3336 = vmul.f32 %v968, %v3334
        %s3337 = sld [smem:[#allocation11 + $0x99]]
        %v3338 = vstv %s3337
        %v3339 = vmul.f32 %v973, %v3338
        %v3340 = vmul.f32 %v974, %v3338
        %v3341 = vadd.f32 %v3335, %v3339
        %v3342 = vadd.f32 %v3336, %v3340
        %s3343 = sld [smem:[#allocation11 + $0x119]]
        %v3344 = vstv %s3343
        %v3345 = vmul.f32 %v979, %v3344
        %v3346 = vmul.f32 %v980, %v3344
        %v3347 = vadd.f32 %v3341, %v3345
        %v3348 = vadd.f32 %v3342, %v3346
        %s3349 = sld [smem:[#allocation11 + $0x199]]
        %v3350 = vstv %s3349
        %v3351 = vmul.f32 %v985, %v3350
        %v3352 = vmul.f32 %v986, %v3350
        %v3353 = vadd.f32 %v3347, %v3351
        %v3354 = vadd.f32 %v3348, %v3352
        %s3355 = scalar_lea.vmem [#allocation2], 49
        %v3356 = vld [vmem:[%s3355] ss:$8 sm:$0x3]
        %v3358 = vlaneseq
        %v3359 = vshrl.u32 %v3358, 7
        %v3360 = vsub.s32 0, %v3359
        %v3361 = vrot.slane %v3356, %v3360
        %v3362 = vlaneseq
        %v3363 = vshrl.u32 %v3362, 7
        %v3364 = vsub.s32 1, %v3363
        %v3365 = vrot.slane %v3356, %v3364
        %v3368 = vadd.f32 %v3353, %v3361
        %v3369 = vadd.f32 %v3354, %v3365
        %v3370 = vmul.f32 %v3368, %v3368
        %v3371 = vmul.f32 %v3369, %v3369
        %v3372 = vmul.f32 %v3368, %v3370
        %v3373 = vmul.f32 %v3369, %v3371
        %v3374 = vmul.f32 %v3372, 0.044715
        %v3375 = vmul.f32 %v3373, 0.044715
        %v3376 = vadd.f32 %v3368, %v3374
        %v3377 = vadd.f32 %v3369, %v3375
        %v3378 = vmul.f32 %v3376, 0.7978846
        %v3379 = vmul.f32 %v3377, 0.7978846
        %v3380 = vtanh.pop %v3378
        %v3381 = vtanh.pop %v3379
        %v3382 = vadd.f32 %v3380, 1.0
        %v3383 = vadd.f32 %v3381, 1.0
        %v3384 = vmul.f32 %v3382, 0.5
        %v3385 = vmul.f32 %v3383, 0.5
        %v3386 = vmul.f32 %v3368, %v3384
        %v3387 = vmul.f32 %v3369, %v3385
        %s3388 = sld [smem:[#allocation12 + $0xc80]]
        %v3389 = vstv %s3388
        %v3390 = vmul.f32 %v3386, %v3389
        %v3391 = vmul.f32 %v3387, %v3389
        %v3392 = vadd.f32 %v3313, %v3390
        %v3393 = vadd.f32 %v3314, %v3391
        %s3394 = sld [smem:[#allocation12 + $0xc81]]
        %v3395 = vstv %s3394
        %v3396 = vmul.f32 %v3386, %v3395
        %v3397 = vmul.f32 %v3387, %v3395
        %v3398 = vadd.f32 %v3319, %v3396
        %v3399 = vadd.f32 %v3320, %v3397
        %s3400 = sld [smem:[#allocation12 + $0xc82]]
        %v3401 = vstv %s3400
        %v3402 = vmul.f32 %v3386, %v3401
        %v3403 = vmul.f32 %v3387, %v3401
        %v3404 = vadd.f32 %v3325, %v3402
        %v3405 = vadd.f32 %v3326, %v3403
        %s3406 = sld [smem:[#allocation12 + $0xc83]]
        %v3407 = vstv %s3406
        %v3408 = vmul.f32 %v3386, %v3407
        %v3409 = vmul.f32 %v3387, %v3407
        %v3410 = vadd.f32 %v3331, %v3408
        %v3411 = vadd.f32 %v3332, %v3409
        %s3412 = sld [smem:[#allocation11 + $0x1a]]
        %v3413 = vstv %s3412
        %v3414 = vmul.f32 %v967, %v3413
        %v3415 = vmul.f32 %v968, %v3413
        %s3416 = sld [smem:[#allocation11 + $0x9a]]
        %v3417 = vstv %s3416
        %v3418 = vmul.f32 %v973, %v3417
        %v3419 = vmul.f32 %v974, %v3417
        %v3420 = vadd.f32 %v3414, %v3418
        %v3421 = vadd.f32 %v3415, %v3419
        %s3422 = sld [smem:[#allocation11 + $0x11a]]
        %v3423 = vstv %s3422
        %v3424 = vmul.f32 %v979, %v3423
        %v3425 = vmul.f32 %v980, %v3423
        %v3426 = vadd.f32 %v3420, %v3424
        %v3427 = vadd.f32 %v3421, %v3425
        %s3428 = sld [smem:[#allocation11 + $0x19a]]
        %v3429 = vstv %s3428
        %v3430 = vmul.f32 %v985, %v3429
        %v3431 = vmul.f32 %v986, %v3429
        %v3432 = vadd.f32 %v3426, %v3430
        %v3433 = vadd.f32 %v3427, %v3431
        %s3434 = scalar_lea.vmem [#allocation2], 50
        %v3435 = vld [vmem:[%s3434] ss:$8 sm:$0x3]
        %v3437 = vlaneseq
        %v3438 = vshrl.u32 %v3437, 7
        %v3439 = vsub.s32 0, %v3438
        %v3440 = vrot.slane %v3435, %v3439
        %v3441 = vlaneseq
        %v3442 = vshrl.u32 %v3441, 7
        %v3443 = vsub.s32 1, %v3442
        %v3444 = vrot.slane %v3435, %v3443
        %v3447 = vadd.f32 %v3432, %v3440
        %v3448 = vadd.f32 %v3433, %v3444
        %v3449 = vmul.f32 %v3447, %v3447
        %v3450 = vmul.f32 %v3448, %v3448
        %v3451 = vmul.f32 %v3447, %v3449
        %v3452 = vmul.f32 %v3448, %v3450
        %v3453 = vmul.f32 %v3451, 0.044715
        %v3454 = vmul.f32 %v3452, 0.044715
        %v3455 = vadd.f32 %v3447, %v3453
        %v3456 = vadd.f32 %v3448, %v3454
        %v3457 = vmul.f32 %v3455, 0.7978846
        %v3458 = vmul.f32 %v3456, 0.7978846
        %v3459 = vtanh.pop %v3457
        %v3460 = vtanh.pop %v3458
        %v3461 = vadd.f32 %v3459, 1.0
        %v3462 = vadd.f32 %v3460, 1.0
        %v3463 = vmul.f32 %v3461, 0.5
        %v3464 = vmul.f32 %v3462, 0.5
        %v3465 = vmul.f32 %v3447, %v3463
        %v3466 = vmul.f32 %v3448, %v3464
        %s3467 = sld [smem:[#allocation12 + $0xd00]]
        %v3468 = vstv %s3467
        %v3469 = vmul.f32 %v3465, %v3468
        %v3470 = vmul.f32 %v3466, %v3468
        %v3471 = vadd.f32 %v3392, %v3469
        %v3472 = vadd.f32 %v3393, %v3470
        %s3473 = sld [smem:[#allocation12 + $0xd01]]
        %v3474 = vstv %s3473
        %v3475 = vmul.f32 %v3465, %v3474
        %v3476 = vmul.f32 %v3466, %v3474
        %v3477 = vadd.f32 %v3398, %v3475
        %v3478 = vadd.f32 %v3399, %v3476
        %s3479 = sld [smem:[#allocation12 + $0xd02]]
        %v3480 = vstv %s3479
        %v3481 = vmul.f32 %v3465, %v3480
        %v3482 = vmul.f32 %v3466, %v3480
        %v3483 = vadd.f32 %v3404, %v3481
        %v3484 = vadd.f32 %v3405, %v3482
        %s3485 = sld [smem:[#allocation12 + $0xd03]]
        %v3486 = vstv %s3485
        %v3487 = vmul.f32 %v3465, %v3486
        %v3488 = vmul.f32 %v3466, %v3486
        %v3489 = vadd.f32 %v3410, %v3487
        %v3490 = vadd.f32 %v3411, %v3488
        %s3491 = sld [smem:[#allocation11 + $0x1b]]
        %v3492 = vstv %s3491
        %v3493 = vmul.f32 %v967, %v3492
        %v3494 = vmul.f32 %v968, %v3492
        %s3495 = sld [smem:[#allocation11 + $0x9b]]
        %v3496 = vstv %s3495
        %v3497 = vmul.f32 %v973, %v3496
        %v3498 = vmul.f32 %v974, %v3496
        %v3499 = vadd.f32 %v3493, %v3497
        %v3500 = vadd.f32 %v3494, %v3498
        %s3501 = sld [smem:[#allocation11 + $0x11b]]
        %v3502 = vstv %s3501
        %v3503 = vmul.f32 %v979, %v3502
        %v3504 = vmul.f32 %v980, %v3502
        %v3505 = vadd.f32 %v3499, %v3503
        %v3506 = vadd.f32 %v3500, %v3504
        %s3507 = sld [smem:[#allocation11 + $0x19b]]
        %v3508 = vstv %s3507
        %v3509 = vmul.f32 %v985, %v3508
        %v3510 = vmul.f32 %v986, %v3508
        %v3511 = vadd.f32 %v3505, %v3509
        %v3512 = vadd.f32 %v3506, %v3510
        %s3513 = scalar_lea.vmem [#allocation2], 51
        %v3514 = vld [vmem:[%s3513] ss:$8 sm:$0x3]
        %v3516 = vlaneseq
        %v3517 = vshrl.u32 %v3516, 7
        %v3518 = vsub.s32 0, %v3517
        %v3519 = vrot.slane %v3514, %v3518
        %v3520 = vlaneseq
        %v3521 = vshrl.u32 %v3520, 7
        %v3522 = vsub.s32 1, %v3521
        %v3523 = vrot.slane %v3514, %v3522
        %v3526 = vadd.f32 %v3511, %v3519
        %v3527 = vadd.f32 %v3512, %v3523
        %v3528 = vmul.f32 %v3526, %v3526
        %v3529 = vmul.f32 %v3527, %v3527
        %v3530 = vmul.f32 %v3526, %v3528
        %v3531 = vmul.f32 %v3527, %v3529
        %v3532 = vmul.f32 %v3530, 0.044715
        %v3533 = vmul.f32 %v3531, 0.044715
        %v3534 = vadd.f32 %v3526, %v3532
        %v3535 = vadd.f32 %v3527, %v3533
        %v3536 = vmul.f32 %v3534, 0.7978846
        %v3537 = vmul.f32 %v3535, 0.7978846
        %v3538 = vtanh.pop %v3536
        %v3539 = vtanh.pop %v3537
        %v3540 = vadd.f32 %v3538, 1.0
        %v3541 = vadd.f32 %v3539, 1.0
        %v3542 = vmul.f32 %v3540, 0.5
        %v3543 = vmul.f32 %v3541, 0.5
        %v3544 = vmul.f32 %v3526, %v3542
        %v3545 = vmul.f32 %v3527, %v3543
        %s3546 = sld [smem:[#allocation12 + $0xd80]]
        %v3547 = vstv %s3546
        %v3548 = vmul.f32 %v3544, %v3547
        %v3549 = vmul.f32 %v3545, %v3547
        %v3550 = vadd.f32 %v3471, %v3548
        %v3551 = vadd.f32 %v3472, %v3549
        %s3552 = sld [smem:[#allocation12 + $0xd81]]
        %v3553 = vstv %s3552
        %v3554 = vmul.f32 %v3544, %v3553
        %v3555 = vmul.f32 %v3545, %v3553
        %v3556 = vadd.f32 %v3477, %v3554
        %v3557 = vadd.f32 %v3478, %v3555
        %s3558 = sld [smem:[#allocation12 + $0xd82]]
        %v3559 = vstv %s3558
        %v3560 = vmul.f32 %v3544, %v3559
        %v3561 = vmul.f32 %v3545, %v3559
        %v3562 = vadd.f32 %v3483, %v3560
        %v3563 = vadd.f32 %v3484, %v3561
        %s3564 = sld [smem:[#allocation12 + $0xd83]]
        %v3565 = vstv %s3564
        %v3566 = vmul.f32 %v3544, %v3565
        %v3567 = vmul.f32 %v3545, %v3565
        %v3568 = vadd.f32 %v3489, %v3566
        %v3569 = vadd.f32 %v3490, %v3567
        %s3570 = sld [smem:[#allocation11 + $0x1c]]
        %v3571 = vstv %s3570
        %v3572 = vmul.f32 %v967, %v3571
        %v3573 = vmul.f32 %v968, %v3571
        %s3574 = sld [smem:[#allocation11 + $0x9c]]
        %v3575 = vstv %s3574
        %v3576 = vmul.f32 %v973, %v3575
        %v3577 = vmul.f32 %v974, %v3575
        %v3578 = vadd.f32 %v3572, %v3576
        %v3579 = vadd.f32 %v3573, %v3577
        %s3580 = sld [smem:[#allocation11 + $0x11c]]
        %v3581 = vstv %s3580
        %v3582 = vmul.f32 %v979, %v3581
        %v3583 = vmul.f32 %v980, %v3581
        %v3584 = vadd.f32 %v3578, %v3582
        %v3585 = vadd.f32 %v3579, %v3583
        %s3586 = sld [smem:[#allocation11 + $0x19c]]
        %v3587 = vstv %s3586
        %v3588 = vmul.f32 %v985, %v3587
        %v3589 = vmul.f32 %v986, %v3587
        %v3590 = vadd.f32 %v3584, %v3588
        %v3591 = vadd.f32 %v3585, %v3589
        %s3592 = scalar_lea.vmem [#allocation2], 52
        %v3593 = vld [vmem:[%s3592] ss:$8 sm:$0x3]
        %v3595 = vlaneseq
        %v3596 = vshrl.u32 %v3595, 7
        %v3597 = vsub.s32 0, %v3596
        %v3598 = vrot.slane %v3593, %v3597
        %v3599 = vlaneseq
        %v3600 = vshrl.u32 %v3599, 7
        %v3601 = vsub.s32 1, %v3600
        %v3602 = vrot.slane %v3593, %v3601
        %v3605 = vadd.f32 %v3590, %v3598
        %v3606 = vadd.f32 %v3591, %v3602
        %v3607 = vmul.f32 %v3605, %v3605
        %v3608 = vmul.f32 %v3606, %v3606
        %v3609 = vmul.f32 %v3605, %v3607
        %v3610 = vmul.f32 %v3606, %v3608
        %v3611 = vmul.f32 %v3609, 0.044715
        %v3612 = vmul.f32 %v3610, 0.044715
        %v3613 = vadd.f32 %v3605, %v3611
        %v3614 = vadd.f32 %v3606, %v3612
        %v3615 = vmul.f32 %v3613, 0.7978846
        %v3616 = vmul.f32 %v3614, 0.7978846
        %v3617 = vtanh.pop %v3615
        %v3618 = vtanh.pop %v3616
        %v3619 = vadd.f32 %v3617, 1.0
        %v3620 = vadd.f32 %v3618, 1.0
        %v3621 = vmul.f32 %v3619, 0.5
        %v3622 = vmul.f32 %v3620, 0.5
        %v3623 = vmul.f32 %v3605, %v3621
        %v3624 = vmul.f32 %v3606, %v3622
        %s3625 = sld [smem:[#allocation12 + $0xe00]]
        %v3626 = vstv %s3625
        %v3627 = vmul.f32 %v3623, %v3626
        %v3628 = vmul.f32 %v3624, %v3626
        %v3629 = vadd.f32 %v3550, %v3627
        %v3630 = vadd.f32 %v3551, %v3628
        %s3631 = sld [smem:[#allocation12 + $0xe01]]
        %v3632 = vstv %s3631
        %v3633 = vmul.f32 %v3623, %v3632
        %v3634 = vmul.f32 %v3624, %v3632
        %v3635 = vadd.f32 %v3556, %v3633
        %v3636 = vadd.f32 %v3557, %v3634
        %s3637 = sld [smem:[#allocation12 + $0xe02]]
        %v3638 = vstv %s3637
        %v3639 = vmul.f32 %v3623, %v3638
        %v3640 = vmul.f32 %v3624, %v3638
        %v3641 = vadd.f32 %v3562, %v3639
        %v3642 = vadd.f32 %v3563, %v3640
        %s3643 = sld [smem:[#allocation12 + $0xe03]]
        %v3644 = vstv %s3643
        %v3645 = vmul.f32 %v3623, %v3644
        %v3646 = vmul.f32 %v3624, %v3644
        %v3647 = vadd.f32 %v3568, %v3645
        %v3648 = vadd.f32 %v3569, %v3646
        %s3649 = sld [smem:[#allocation11 + $0x1d]]
        %v3650 = vstv %s3649
        %v3651 = vmul.f32 %v967, %v3650
        %v3652 = vmul.f32 %v968, %v3650
        %s3653 = sld [smem:[#allocation11 + $0x9d]]
        %v3654 = vstv %s3653
        %v3655 = vmul.f32 %v973, %v3654
        %v3656 = vmul.f32 %v974, %v3654
        %v3657 = vadd.f32 %v3651, %v3655
        %v3658 = vadd.f32 %v3652, %v3656
        %s3659 = sld [smem:[#allocation11 + $0x11d]]
        %v3660 = vstv %s3659
        %v3661 = vmul.f32 %v979, %v3660
        %v3662 = vmul.f32 %v980, %v3660
        %v3663 = vadd.f32 %v3657, %v3661
        %v3664 = vadd.f32 %v3658, %v3662
        %s3665 = sld [smem:[#allocation11 + $0x19d]]
        %v3666 = vstv %s3665
        %v3667 = vmul.f32 %v985, %v3666
        %v3668 = vmul.f32 %v986, %v3666
        %v3669 = vadd.f32 %v3663, %v3667
        %v3670 = vadd.f32 %v3664, %v3668
        %s3671 = scalar_lea.vmem [#allocation2], 53
        %v3672 = vld [vmem:[%s3671] ss:$8 sm:$0x3]
        %v3674 = vlaneseq
        %v3675 = vshrl.u32 %v3674, 7
        %v3676 = vsub.s32 0, %v3675
        %v3677 = vrot.slane %v3672, %v3676
        %v3678 = vlaneseq
        %v3679 = vshrl.u32 %v3678, 7
        %v3680 = vsub.s32 1, %v3679
        %v3681 = vrot.slane %v3672, %v3680
        %v3684 = vadd.f32 %v3669, %v3677
        %v3685 = vadd.f32 %v3670, %v3681
        %v3686 = vmul.f32 %v3684, %v3684
        %v3687 = vmul.f32 %v3685, %v3685
        %v3688 = vmul.f32 %v3684, %v3686
        %v3689 = vmul.f32 %v3685, %v3687
        %v3690 = vmul.f32 %v3688, 0.044715
        %v3691 = vmul.f32 %v3689, 0.044715
        %v3692 = vadd.f32 %v3684, %v3690
        %v3693 = vadd.f32 %v3685, %v3691
        %v3694 = vmul.f32 %v3692, 0.7978846
        %v3695 = vmul.f32 %v3693, 0.7978846
        %v3696 = vtanh.pop %v3694
        %v3697 = vtanh.pop %v3695
        %v3698 = vadd.f32 %v3696, 1.0
        %v3699 = vadd.f32 %v3697, 1.0
        %v3700 = vmul.f32 %v3698, 0.5
        %v3701 = vmul.f32 %v3699, 0.5
        %v3702 = vmul.f32 %v3684, %v3700
        %v3703 = vmul.f32 %v3685, %v3701
        %s3704 = sld [smem:[#allocation12 + $0xe80]]
        %v3705 = vstv %s3704
        %v3706 = vmul.f32 %v3702, %v3705
        %v3707 = vmul.f32 %v3703, %v3705
        %v3708 = vadd.f32 %v3629, %v3706
        %v3709 = vadd.f32 %v3630, %v3707
        %s3710 = sld [smem:[#allocation12 + $0xe81]]
        %v3711 = vstv %s3710
        %v3712 = vmul.f32 %v3702, %v3711
        %v3713 = vmul.f32 %v3703, %v3711
        %v3714 = vadd.f32 %v3635, %v3712
        %v3715 = vadd.f32 %v3636, %v3713
        %s3716 = sld [smem:[#allocation12 + $0xe82]]
        %v3717 = vstv %s3716
        %v3718 = vmul.f32 %v3702, %v3717
        %v3719 = vmul.f32 %v3703, %v3717
        %v3720 = vadd.f32 %v3641, %v3718
        %v3721 = vadd.f32 %v3642, %v3719
        %s3722 = sld [smem:[#allocation12 + $0xe83]]
        %v3723 = vstv %s3722
        %v3724 = vmul.f32 %v3702, %v3723
        %v3725 = vmul.f32 %v3703, %v3723
        %v3726 = vadd.f32 %v3647, %v3724
        %v3727 = vadd.f32 %v3648, %v3725
        %s3728 = sld [smem:[#allocation11 + $0x1e]]
        %v3729 = vstv %s3728
        %v3730 = vmul.f32 %v967, %v3729
        %v3731 = vmul.f32 %v968, %v3729
        %s3732 = sld [smem:[#allocation11 + $0x9e]]
        %v3733 = vstv %s3732
        %v3734 = vmul.f32 %v973, %v3733
        %v3735 = vmul.f32 %v974, %v3733
        %v3736 = vadd.f32 %v3730, %v3734
        %v3737 = vadd.f32 %v3731, %v3735
        %s3738 = sld [smem:[#allocation11 + $0x11e]]
        %v3739 = vstv %s3738
        %v3740 = vmul.f32 %v979, %v3739
        %v3741 = vmul.f32 %v980, %v3739
        %v3742 = vadd.f32 %v3736, %v3740
        %v3743 = vadd.f32 %v3737, %v3741
        %s3744 = sld [smem:[#allocation11 + $0x19e]]
        %v3745 = vstv %s3744
        %v3746 = vmul.f32 %v985, %v3745
        %v3747 = vmul.f32 %v986, %v3745
        %v3748 = vadd.f32 %v3742, %v3746
        %v3749 = vadd.f32 %v3743, %v3747
        %s3750 = scalar_lea.vmem [#allocation2], 54
        %v3751 = vld [vmem:[%s3750] ss:$8 sm:$0x3]
        %v3753 = vlaneseq
        %v3754 = vshrl.u32 %v3753, 7
        %v3755 = vsub.s32 0, %v3754
        %v3756 = vrot.slane %v3751, %v3755
        %v3757 = vlaneseq
        %v3758 = vshrl.u32 %v3757, 7
        %v3759 = vsub.s32 1, %v3758
        %v3760 = vrot.slane %v3751, %v3759
        %v3763 = vadd.f32 %v3748, %v3756
        %v3764 = vadd.f32 %v3749, %v3760
        %v3765 = vmul.f32 %v3763, %v3763
        %v3766 = vmul.f32 %v3764, %v3764
        %v3767 = vmul.f32 %v3763, %v3765
        %v3768 = vmul.f32 %v3764, %v3766
        %v3769 = vmul.f32 %v3767, 0.044715
        %v3770 = vmul.f32 %v3768, 0.044715
        %v3771 = vadd.f32 %v3763, %v3769
        %v3772 = vadd.f32 %v3764, %v3770
        %v3773 = vmul.f32 %v3771, 0.7978846
        %v3774 = vmul.f32 %v3772, 0.7978846
        %v3775 = vtanh.pop %v3773
        %v3776 = vtanh.pop %v3774
        %v3777 = vadd.f32 %v3775, 1.0
        %v3778 = vadd.f32 %v3776, 1.0
        %v3779 = vmul.f32 %v3777, 0.5
        %v3780 = vmul.f32 %v3778, 0.5
        %v3781 = vmul.f32 %v3763, %v3779
        %v3782 = vmul.f32 %v3764, %v3780
        %s3783 = sld [smem:[#allocation12 + $0xf00]]
        %v3784 = vstv %s3783
        %v3785 = vmul.f32 %v3781, %v3784
        %v3786 = vmul.f32 %v3782, %v3784
        %v3787 = vadd.f32 %v3708, %v3785
        %v3788 = vadd.f32 %v3709, %v3786
        %s3789 = sld [smem:[#allocation12 + $0xf01]]
        %v3790 = vstv %s3789
        %v3791 = vmul.f32 %v3781, %v3790
        %v3792 = vmul.f32 %v3782, %v3790
        %v3793 = vadd.f32 %v3714, %v3791
        %v3794 = vadd.f32 %v3715, %v3792
        %s3795 = sld [smem:[#allocation12 + $0xf02]]
        %v3796 = vstv %s3795
        %v3797 = vmul.f32 %v3781, %v3796
        %v3798 = vmul.f32 %v3782, %v3796
        %v3799 = vadd.f32 %v3720, %v3797
        %v3800 = vadd.f32 %v3721, %v3798
        %s3801 = sld [smem:[#allocation12 + $0xf03]]
        %v3802 = vstv %s3801
        %v3803 = vmul.f32 %v3781, %v3802
        %v3804 = vmul.f32 %v3782, %v3802
        %v3805 = vadd.f32 %v3726, %v3803
        %v3806 = vadd.f32 %v3727, %v3804
        %s3807 = sld [smem:[#allocation11 + $0x1f]]
        %v3808 = vstv %s3807
        %v3809 = vmul.f32 %v967, %v3808
        %v3810 = vmul.f32 %v968, %v3808
        %s3811 = sld [smem:[#allocation11 + $0x9f]]
        %v3812 = vstv %s3811
        %v3813 = vmul.f32 %v973, %v3812
        %v3814 = vmul.f32 %v974, %v3812
        %v3815 = vadd.f32 %v3809, %v3813
        %v3816 = vadd.f32 %v3810, %v3814
        %s3817 = sld [smem:[#allocation11 + $0x11f]]
        %v3818 = vstv %s3817
        %v3819 = vmul.f32 %v979, %v3818
        %v3820 = vmul.f32 %v980, %v3818
        %v3821 = vadd.f32 %v3815, %v3819
        %v3822 = vadd.f32 %v3816, %v3820
        %s3823 = sld [smem:[#allocation11 + $0x19f]]
        %v3824 = vstv %s3823
        %v3825 = vmul.f32 %v985, %v3824
        %v3826 = vmul.f32 %v986, %v3824
        %v3827 = vadd.f32 %v3821, %v3825
        %v3828 = vadd.f32 %v3822, %v3826
        %s3829 = scalar_lea.vmem [#allocation2], 55
        %v3830 = vld [vmem:[%s3829] ss:$8 sm:$0x3]
        %v3832 = vlaneseq
        %v3833 = vshrl.u32 %v3832, 7
        %v3834 = vsub.s32 0, %v3833
        %v3835 = vrot.slane %v3830, %v3834
        %v3836 = vlaneseq
        %v3837 = vshrl.u32 %v3836, 7
        %v3838 = vsub.s32 1, %v3837
        %v3839 = vrot.slane %v3830, %v3838
        %v3842 = vadd.f32 %v3827, %v3835
        %v3843 = vadd.f32 %v3828, %v3839
        %v3844 = vmul.f32 %v3842, %v3842
        %v3845 = vmul.f32 %v3843, %v3843
        %v3846 = vmul.f32 %v3842, %v3844
        %v3847 = vmul.f32 %v3843, %v3845
        %v3848 = vmul.f32 %v3846, 0.044715
        %v3849 = vmul.f32 %v3847, 0.044715
        %v3850 = vadd.f32 %v3842, %v3848
        %v3851 = vadd.f32 %v3843, %v3849
        %v3852 = vmul.f32 %v3850, 0.7978846
        %v3853 = vmul.f32 %v3851, 0.7978846
        %v3854 = vtanh.pop %v3852
        %v3855 = vtanh.pop %v3853
        %v3856 = vadd.f32 %v3854, 1.0
        %v3857 = vadd.f32 %v3855, 1.0
        %v3858 = vmul.f32 %v3856, 0.5
        %v3859 = vmul.f32 %v3857, 0.5
        %v3860 = vmul.f32 %v3842, %v3858
        %v3861 = vmul.f32 %v3843, %v3859
        %s3862 = sld [smem:[#allocation12 + $0xf80]]
        %v3863 = vstv %s3862
        %v3864 = vmul.f32 %v3860, %v3863
        %v3865 = vmul.f32 %v3861, %v3863
        %v3866 = vadd.f32 %v3787, %v3864
        %v3867 = vadd.f32 %v3788, %v3865
        %s3868 = sld [smem:[#allocation12 + $0xf81]]
        %v3869 = vstv %s3868
        %v3870 = vmul.f32 %v3860, %v3869
        %v3871 = vmul.f32 %v3861, %v3869
        %v3872 = vadd.f32 %v3793, %v3870
        %v3873 = vadd.f32 %v3794, %v3871
        %s3874 = sld [smem:[#allocation12 + $0xf82]]
        %v3875 = vstv %s3874
        %v3876 = vmul.f32 %v3860, %v3875
        %v3877 = vmul.f32 %v3861, %v3875
        %v3878 = vadd.f32 %v3799, %v3876
        %v3879 = vadd.f32 %v3800, %v3877
        %s3880 = sld [smem:[#allocation12 + $0xf83]]
        %v3881 = vstv %s3880
        %v3882 = vmul.f32 %v3860, %v3881
        %v3883 = vmul.f32 %v3861, %v3881
        %v3884 = vadd.f32 %v3805, %v3882
        %v3885 = vadd.f32 %v3806, %v3883
        %s3886 = sld [smem:[#allocation14]]
        %v3887 = vstv %s3886
        %v3888 = vadd.f32 %v3866, %v3887
        %v3889 = vadd.f32 %v3867, %v3887
        %v3890 = vsub.f32 %v579, %v953
        %v3891 = vsub.f32 %v580, %v954
        %v3892 = vsub.f32 %v3888, %v3890
        %v3893 = vsub.f32 %v3889, %v3891
        %v3894 = vmul.f32 %v3892, %v3892
        %v3895 = vmul.f32 %v3893, %v3893
        %v3896 = vadd.f32 %v3894, 0.0
        %v3897 = vadd.f32 %v3895, 0.0
        %v3898 = vmul.f32 %v961, %v3888
        %v3899 = vmul.f32 %v961, %v3889
        %v3900 = vadd.f32 %v967, %v3898
        %v3901 = vadd.f32 %v968, %v3899
        %v3902 = vsub.f32 %v3900, %v579
        %v3903 = vsub.f32 %v3901, %v580
        %v3904 = vmul.f32 %v3902, %v3902
        %v3905 = vmul.f32 %v3903, %v3903
        %v3906 = vadd.f32 %v3904, 0.0
        %v3907 = vadd.f32 %v3905, 0.0
        %v3910 = vrot.slane %v3900, 7
        %v3911 = vrot.slane %v3901, 7
        %v3914 = vsub.f32 %v3900, %v3910
        %v3915 = vsub.f32 %v3901, %v3911
        %v3916 = vmul.f32 %v3914, %v3914
        %v3917 = vmul.f32 %v3915, %v3915
        %v3918 = vadd.f32 %v3916, 0.0
        %v3919 = vadd.f32 %v3917, 0.0
        %v3920 = vsub.f32 %v3900, %v596
        %v3921 = vsub.f32 %v3901, %v597
        %v3922 = vmul.f32 %v3920, %v3920
        %v3923 = vmul.f32 %v3921, %v3921
        %v3924 = vadd.f32 %v3922, 0.0
        %v3925 = vadd.f32 %v3923, 0.0
        %v3926 = vsub.f32 %v3900, %v613
        %v3927 = vsub.f32 %v3901, %v614
        %v3928 = vmul.f32 %v3926, %v3926
        %v3929 = vmul.f32 %v3927, %v3927
        %v3930 = vadd.f32 %v3928, 0.0
        %v3931 = vadd.f32 %v3929, 0.0
        %s3932 = sld [smem:[#allocation14 + $0x1]]
        %v3933 = vstv %s3932
        %v3934 = vadd.f32 %v3872, %v3933
        %v3935 = vadd.f32 %v3873, %v3933
        %v3936 = vsub.f32 %v656, %v955
        %v3937 = vsub.f32 %v657, %v956
        %v3938 = vsub.f32 %v3934, %v3936
        %v3939 = vsub.f32 %v3935, %v3937
        %v3940 = vmul.f32 %v3938, %v3938
        %v3941 = vmul.f32 %v3939, %v3939
        %v3942 = vadd.f32 %v3896, %v3940
        %v3943 = vadd.f32 %v3897, %v3941
        %v3944 = vmul.f32 %v961, %v3934
        %v3945 = vmul.f32 %v961, %v3935
        %v3946 = vadd.f32 %v973, %v3944
        %v3947 = vadd.f32 %v974, %v3945
        %v3948 = vsub.f32 %v3946, %v656
        %v3949 = vsub.f32 %v3947, %v657
        %v3950 = vmul.f32 %v3948, %v3948
        %v3951 = vmul.f32 %v3949, %v3949
        %v3952 = vadd.f32 %v3906, %v3950
        %v3953 = vadd.f32 %v3907, %v3951
        %v3956 = vrot.slane %v3946, 7
        %v3957 = vrot.slane %v3947, 7
        %v3960 = vsub.f32 %v3946, %v3956
        %v3961 = vsub.f32 %v3947, %v3957
        %v3962 = vmul.f32 %v3960, %v3960
        %v3963 = vmul.f32 %v3961, %v3961
        %v3964 = vadd.f32 %v3918, %v3962
        %v3965 = vadd.f32 %v3919, %v3963
        %v3966 = vsub.f32 %v3946, %v673
        %v3967 = vsub.f32 %v3947, %v674
        %v3968 = vmul.f32 %v3966, %v3966
        %v3969 = vmul.f32 %v3967, %v3967
        %v3970 = vadd.f32 %v3924, %v3968
        %v3971 = vadd.f32 %v3925, %v3969
        %v3972 = vsub.f32 %v3946, %v690
        %v3973 = vsub.f32 %v3947, %v691
        %v3974 = vmul.f32 %v3972, %v3972
        %v3975 = vmul.f32 %v3973, %v3973
        %v3976 = vadd.f32 %v3930, %v3974
        %v3977 = vadd.f32 %v3931, %v3975
        %s3978 = sld [smem:[#allocation14 + $0x2]]
        %v3979 = vstv %s3978
        %v3980 = vadd.f32 %v3878, %v3979
        %v3981 = vadd.f32 %v3879, %v3979
        %v3982 = vsub.f32 %v733, %v957
        %v3983 = vsub.f32 %v734, %v958
        %v3984 = vsub.f32 %v3980, %v3982
        %v3985 = vsub.f32 %v3981, %v3983
        %v3986 = vmul.f32 %v3984, %v3984
        %v3987 = vmul.f32 %v3985, %v3985
        %v3988 = vadd.f32 %v3942, %v3986
        %v3989 = vadd.f32 %v3943, %v3987
        %v3990 = vmul.f32 %v961, %v3980
        %v3991 = vmul.f32 %v961, %v3981
        %v3992 = vadd.f32 %v979, %v3990
        %v3993 = vadd.f32 %v980, %v3991
        %v3994 = vsub.f32 %v3992, %v733
        %v3995 = vsub.f32 %v3993, %v734
        %v3996 = vmul.f32 %v3994, %v3994
        %v3997 = vmul.f32 %v3995, %v3995
        %v3998 = vadd.f32 %v3952, %v3996
        %v3999 = vadd.f32 %v3953, %v3997
        %v4002 = vrot.slane %v3992, 7
        %v4003 = vrot.slane %v3993, 7
        %v4006 = vsub.f32 %v3992, %v4002
        %v4007 = vsub.f32 %v3993, %v4003
        %v4008 = vmul.f32 %v4006, %v4006
        %v4009 = vmul.f32 %v4007, %v4007
        %v4010 = vadd.f32 %v3964, %v4008
        %v4011 = vadd.f32 %v3965, %v4009
        %v4012 = vsub.f32 %v3992, %v750
        %v4013 = vsub.f32 %v3993, %v751
        %v4014 = vmul.f32 %v4012, %v4012
        %v4015 = vmul.f32 %v4013, %v4013
        %v4016 = vadd.f32 %v3970, %v4014
        %v4017 = vadd.f32 %v3971, %v4015
        %v4018 = vsub.f32 %v3992, %v767
        %v4019 = vsub.f32 %v3993, %v768
        %v4020 = vmul.f32 %v4018, %v4018
        %v4021 = vmul.f32 %v4019, %v4019
        %v4022 = vadd.f32 %v3976, %v4020
        %v4023 = vadd.f32 %v3977, %v4021
        %s4024 = sld [smem:[#allocation14 + $0x3]]
        %v4025 = vstv %s4024
        %v4026 = vadd.f32 %v3884, %v4025
        %v4027 = vadd.f32 %v3885, %v4025
        %v4028 = vsub.f32 %v810, %v959
        %v4029 = vsub.f32 %v811, %v960
        %v4030 = vsub.f32 %v4026, %v4028
        %v4031 = vsub.f32 %v4027, %v4029
        %v4032 = vmul.f32 %v4030, %v4030
        %v4033 = vmul.f32 %v4031, %v4031
        %v4034 = vadd.f32 %v3988, %v4032
        %v4035 = vadd.f32 %v3989, %v4033
        %v4036 = vmul.f32 %v961, %v4026
        %v4037 = vmul.f32 %v961, %v4027
        %v4038 = vadd.f32 %v985, %v4036
        %v4039 = vadd.f32 %v986, %v4037
        %v4040 = vsub.f32 %v4038, %v810
        %v4041 = vsub.f32 %v4039, %v811
        %v4042 = vmul.f32 %v4040, %v4040
        %v4043 = vmul.f32 %v4041, %v4041
        %v4044 = vadd.f32 %v3998, %v4042
        %v4045 = vadd.f32 %v3999, %v4043
        %v4048 = vrot.slane %v4038, 7
        %v4049 = vrot.slane %v4039, 7
        %v4052 = vsub.f32 %v4038, %v4048
        %v4053 = vsub.f32 %v4039, %v4049
        %v4054 = vmul.f32 %v4052, %v4052
        %v4055 = vmul.f32 %v4053, %v4053
        %v4056 = vadd.f32 %v4010, %v4054
        %v4057 = vadd.f32 %v4011, %v4055
        %v4058 = vsub.f32 %v4038, %v827
        %v4059 = vsub.f32 %v4039, %v828
        %v4060 = vmul.f32 %v4058, %v4058
        %v4061 = vmul.f32 %v4059, %v4059
        %v4062 = vadd.f32 %v4016, %v4060
        %v4063 = vadd.f32 %v4017, %v4061
        %v4064 = vsub.f32 %v4038, %v844
        %v4065 = vsub.f32 %v4039, %v845
        %v4066 = vmul.f32 %v4064, %v4064
        %v4067 = vmul.f32 %v4065, %v4065
        %v4068 = vadd.f32 %v4022, %v4066
        %v4069 = vadd.f32 %v4023, %v4067
        %v4070 = vadd.f32 %v4034, %v4035
        %4071 = vadd.xlane.f32.xlu0 %v4070
        %v4072 = vpop.xlane.xlu0 %4071
        %v4073 = vrot.slane %v4072, 4
        %v4074 = vadd.f32 %v4072, %v4073
        %v4075 = vrot.slane %v4074, 2
        %v4076 = vadd.f32 %v4074, %v4075
        %v4077 = vrot.slane %v4076, 1
        %v4078 = vadd.f32 %v4076, %v4077
        %s4079 = vtos %v4078
        %v4080 = vadd.f32 %v4044, %v4045
        %4081 = vadd.xlane.f32.xlu0 %v4080
        %v4082 = vpop.xlane.xlu0 %4081
        %v4083 = vrot.slane %v4082, 4
        %v4084 = vadd.f32 %v4082, %v4083
        %v4085 = vrot.slane %v4084, 2
        %v4086 = vadd.f32 %v4084, %v4085
        %v4087 = vrot.slane %v4086, 1
        %v4088 = vadd.f32 %v4086, %v4087
        %s4089 = vtos %v4088
        %v4092 = vrot.slane %v4056, 1
        %v4093 = vrot.slane %v4057, 1
        %v4096 = vsel %vm940, %v4092, 0.0
        %v4097 = vsel %vm940, %v4093, 0.0
        %v4098 = vadd.f32 %v4096, %v4097
        %4099 = vadd.xlane.f32.xlu0 %v4098
        %v4100 = vpop.xlane.xlu0 %4099
        %v4101 = vrot.slane %v4100, 4
        %v4102 = vadd.f32 %v4100, %v4101
        %v4103 = vrot.slane %v4102, 2
        %v4104 = vadd.f32 %v4102, %v4103
        %v4105 = vrot.slane %v4104, 1
        %v4106 = vadd.f32 %v4104, %v4105
        %s4107 = vtos %v4106
        %vm4108 = vcmask 1040384
        %v4109 = vsel %vm4108, %v4062, 0.0
        %v4110 = vsel %vm4108, %v4063, 0.0
        %v4111 = vadd.f32 %v4109, %v4110
        %4112 = vadd.xlane.f32.xlu0 %v4111
        %v4113 = vpop.xlane.xlu0 %4112
        %v4114 = vrot.slane %v4113, 4
        %v4115 = vadd.f32 %v4113, %v4114
        %v4116 = vrot.slane %v4115, 2
        %v4117 = vadd.f32 %v4115, %v4116
        %v4118 = vrot.slane %v4117, 1
        %v4119 = vadd.f32 %v4117, %v4118
        %s4120 = vtos %v4119
        %v4123 = vrot.slane %v4068, 7
        %v4124 = vrot.slane %v4069, 7
        %v4127 = vsel %vm4108, %v4123, 0.0
        %v4128 = vsel %vm4108, %v4124, 0.0
        %v4129 = vadd.f32 %v4127, %v4128
        %4130 = vadd.xlane.f32.xlu0 %v4129
        %v4131 = vpop.xlane.xlu0 %4130
        %v4132 = vrot.slane %v4131, 4
        %v4133 = vadd.f32 %v4131, %v4132
        %v4134 = vrot.slane %v4133, 2
        %v4135 = vadd.f32 %v4133, %v4134
        %v4136 = vrot.slane %v4135, 1
        %v4137 = vadd.f32 %v4135, %v4136
        %s4138 = vtos %v4137
        %v4139 = vlaneseq
        %v4140 = vand.u32 %v4139, 127
        %vm4141 = vcmp.eq.s32.totalorder %v4140, 0
        %v4142 = vstv %s869
        %v4143 = vsel %vm4141, %v4142, 0.0
        %vm4144 = vcmp.eq.s32.totalorder %v4140, 1
        %v4145 = vstv %s933
        %v4146 = vsel %vm4144, %v4145, %v4143
        %vm4147 = vcmp.eq.s32.totalorder %v4140, 2
        %v4148 = vstv %s952
        %v4149 = vsel %vm4147, %v4148, %v4146
        %vm4150 = vcmp.eq.s32.totalorder %v4140, 3
        %v4151 = vstv %s4079
        %v4152 = vsel %vm4150, %v4151, %v4149
        %vm4153 = vcmp.eq.s32.totalorder %v4140, 4
        %v4154 = vstv %s4089
        %v4155 = vsel %vm4153, %v4154, %v4152
        %vm4156 = vcmp.eq.s32.totalorder %v4140, 5
        %v4157 = vstv %s4107
        %v4158 = vsel %vm4156, %v4157, %v4155
        %vm4159 = vcmp.eq.s32.totalorder %v4140, 6
        %v4160 = vstv %s4120
        %v4161 = vsel %vm4159, %v4160, %v4158
        %vm4162 = vcmp.eq.s32.totalorder %v4140, 7
        %v4163 = vstv %s4138
        %v4164 = vsel %vm4162, %v4163, %v4161
        %4165 = vst [vmem:[%s548] sm:$0x1] %v4164
        %p4166 = scmp.lt.s32.totalorder %s29, 1
        %s4167 = scalar_select %p4166, %s29, 1
        %s4168 = scalar_lea.vmem %s13, %s4167
        // Predicated region
        $region101: #{_lambda_.1} parent=71 // pred_check
          %p4169 = pneg %p330
        $region102: #{_lambda_.1} parent=71 // pred_check_branch
          %4171 = sbr.rel (%p4169) target = $region104
        $region103: #{_lambda_.1} parent=71 // pred_region
          _
        $region104: #{_lambda_.1} parent=71 // pred_fallthru
          _
      $region72: #{_lambda_.1} parent=5 // pred_fallthru
        _
      %p4172 = scmp.le.s32.totalorder 2, %s24
      // Predicated region
      $region105: #{_lambda_.1} parent=5 // pred_check
        %p4173 = pneg %p4172
      $region106: #{_lambda_.1} parent=5 // pred_check_branch
        %4175 = sbr.rel (%p4173) target = $region108
      $region107: #{_lambda_.1} parent=5 // pred_region
        %s4176 = ssub.s32 %s24, 2
        // Predicated region
        $region109: #{_lambda_.1} parent=107 // pred_check
          %p4177 = pneg %p336
        $region110: #{_lambda_.1} parent=107 // pred_check_branch
          %4179 = sbr.rel (%p4177) target = $region112
        $region111: #{_lambda_.1} parent=107 // pred_region
          %p4180 = scmp.lt.s32.totalorder %s30, 1
          %s4181 = scalar_select %p4180, %s30, 1
          %s4182 = scalar_lea.vmem %s13, %s4181
        $region112: #{_lambda_.1} parent=107 // pred_fallthru
          _
      $region108: #{_lambda_.1} parent=5 // pred_fallthru
        _
    $region6: #{_lambda_.1} parent=1 // loop_footer
      %s28 = sadd.s32 1, %s24
    $region7: #{_lambda_.1} parent=1 // loop_footer_branch
      %23 = sbr.rel target = $region3
    $region8: #{_lambda_.1} parent=1 // loop_exit
      _
    %4183 = vsyncpa [#allocation5], 1
    %s4184 = scalar_lea.sflag [#allocation5], 1
    %4185 = vsyncpa %s4184, 1
    %4186 = vsyncpa [#allocation7], 1
    %4187 = vsyncpa [#allocation10], 1
    %4188 = vsyncpa [#allocation13], 1

</llo_original>
